<compile_context>
chip_gen: v5e
topology: v5e:2x2
jax: 0.10.0
libtpu: 0.0.40
codegen_flags: <defaults>
</compile_context>

<pallas_src>
import math
import functools

import jax
import jax.numpy as jnp
from jax.experimental import pallas as pl
from jax.experimental.pallas import tpu as pltpu


_EPS = 1e-5
_VMEM_LIMIT = 32 * 1024 * 1024   # explicit: raises v5e's 16 MiB default, < v7x's 64 MiB


# ----------------------------------------------------------------------------
# Small helpers
# ----------------------------------------------------------------------------

def _row_tile(M, cap=128):
    """Row tile: multiple of 8 dividing M, <= cap, preferring >= 2 grid steps."""
    half = min(cap, M // 2)
    for t in range(half - half % 8, 7, -8):
        if M % t == 0:
            return t
    return M


def _pick_batch_split(B, S):
    """>=2 'parallel' grid steps (both v7x TensorCores busy) when batch allows,
    while keeping each chunk's flattened row count (Bt*S) >= 8 sublanes."""
    for nb in (2, 1):
        if B % nb == 0 and (B // nb) * S >= 8:
            return nb
    return 1


def _layernorm(y, g, b, eps):
    mu = jnp.mean(y, axis=-1, keepdims=True)
    var = jnp.mean((y - mu) * (y - mu), axis=-1, keepdims=True)
    return (y - mu) * jax.lax.rsqrt(var + eps) * g + b


def _attn_mask(Mq, Mk, Sq, Sk, Bt, causal):
    """Block-diagonal same-batch mask (+ causal within batch) over flattened
    (Bt*Sq, Bt*Sk) scores. Built once per grid step, reused by every head.
    Returns None when trivially all-True."""
    if Bt == 1 and not causal:
        return None
    row = jax.lax.broadcasted_iota(jnp.int32, (Mq, Mk), 0)
    col = jax.lax.broadcasted_iota(jnp.int32, (Mq, Mk), 1)
    keep = None
    if Bt > 1:
        keep = (row // Sq) == (col // Sk)
    if causal:
        c = (col % Sk) <= (row % Sq)
        keep = c if keep is None else (keep & c)
    return keep


def _softmax(s, mask):
    if mask is not None:
        s = jnp.where(mask, s, -1e9)
    m = jnp.max(s, axis=-1, keepdims=True)
    p = jnp.exp(s - m)
    return p * pl.reciprocal(jnp.sum(p, axis=-1, keepdims=True), approx=True)


# ----------------------------------------------------------------------------
# In-kernel building blocks (operate on f32 (M, D) values held in VMEM)
# ----------------------------------------------------------------------------

def _mha_core(q, k, v, wo, bo, x_res, *, nhead, mask):
    """Per-head attention; head outputs accumulated against sublane slices of
    wo (no lane concat). Returns residual + bias + attention output (f32)."""
    Mq, D = q.shape
    hd = D // nhead
    attn = x_res + bo                                    # fold residual + out-bias
    for h in range(nhead):                               # static unroll
        sl = slice(h * hd, (h + 1) * hd)
        qh = q[:, sl].astype(jnp.bfloat16)
        kh = k[:, sl].astype(jnp.bfloat16)
        vh = v[:, sl].astype(jnp.bfloat16)
        s = jax.lax.dot_general(qh, kh, (((1,), (1,)), ((), ())),
                                preferred_element_type=jnp.float32)   # (Mq, Mk)
        p = _softmax(s, mask)
        pv = jnp.dot(p.astype(jnp.bfloat16), vh,
                     preferred_element_type=jnp.float32)              # (Mq, hd)
        attn = attn + jnp.dot(pv.astype(jnp.bfloat16), wo[sl, :],
                              preferred_element_type=jnp.float32)     # (Mq, D)
    return attn


def _self_attn_block(x, wqkv, bqkv, wo, bo, g, b, *, nhead, mask, eps):
    D = x.shape[1]
    qkv = jnp.dot(x.astype(jnp.bfloat16), wqkv,
                  preferred_element_type=jnp.float32) + bqkv          # (M, 3D)
    y = _mha_core(qkv[:, :D], qkv[:, D:2 * D], qkv[:, 2 * D:],
                  wo, bo, x, nhead=nhead, mask=mask)
    return _layernorm(y, g, b, eps)


def _cross_attn_block(x, mem_bf16, wq, bq, wkv, bkv, wo, bo, g, b,
                      *, nhead, mask, eps):
    D = x.shape[1]
    q = jnp.dot(x.astype(jnp.bfloat16), wq,
                preferred_element_type=jnp.float32) + bq
    kv = jnp.dot(mem_bf16, wkv, preferred_element_type=jnp.float32) + bkv
    y = _mha_core(q, kv[:, :D], kv[:, D:], wo, bo, x, nhead=nhead, mask=mask)
    return _layernorm(y, g, b, eps)


def _ffn_block(x, w1, b1, w2, b2, g, b, *, eps):
    h = jnp.dot(x.astype(jnp.bfloat16), w1,
                preferred_element_type=jnp.float32) + b1
    h = jnp.maximum(h, 0.0)                                           # ReLU (f32 VPU)
    y = jnp.dot(h.astype(jnp.bfloat16), w2,
                preferred_element_type=jnp.float32) + b2 + x
    return _layernorm(y, g, b, eps)


# ----------------------------------------------------------------------------
# Kernel 1: full encoder stack (all layers + final encoder LayerNorm)
# ----------------------------------------------------------------------------

def _encoder_stack_kernel(x_ref,
                          wqkv_ref, bqkv_ref, wo_ref, bo_ref, ln1g_ref, ln1b_ref,
                          w1_ref, b1_ref, w2_ref, b2_ref, ln2g_ref, ln2b_ref,
                          fng_ref, fnb_ref,
                          o_ref, act_ref, *, nhead, eps):
    l = pl.program_id(1)
    Bt, S, D = x_ref.shape
    M = Bt * S

    @pl.when(l == 0)
    def _():
        act_ref[...] = x_ref[...].reshape(M, D).astype(jnp.float32)

    x = act_ref[...]                                                  # (M, D) f32
    mask = _attn_mask(M, M, S, S, Bt, causal=False)                   # once per step
    x = _self_attn_block(x, wqkv_ref[0], bqkv_ref[0], wo_ref[0], bo_ref[0],
                         ln1g_ref[0], ln1b_ref[0], nhead=nhead, mask=mask, eps=eps)
    x = _ffn_block(x, w1_ref[0], b1_ref[0], w2_ref[0], b2_ref[0],
                   ln2g_ref[0], ln2b_ref[0], eps=eps)
    act_ref[...] = x

    @pl.when(l == pl.num_programs(1) - 1)
    def _():
        y = _layernorm(x, fng_ref[...], fnb_ref[...], eps)
        o_ref[...] = y.reshape(Bt, S, D).astype(o_ref.dtype)


def pallas_encoder(x, enc, norm_g, norm_b, *, nhead):
    B, S, D = x.shape
    L = enc["wqkv"].shape[0]
    dff = enc["w1"].shape[2]
    nb = _pick_batch_split(B, S)
    Bt = B // nb

    xmap = lambda b, l: (b, 0, 0)
    wmap = lambda b, l: (l, 0, 0)
    nmap = lambda b, l: (0, 0)

    kern = functools.partial(_encoder_stack_kernel, nhead=nhead, eps=_EPS)
    return pl.pallas_call(
        kern,
        out_shape=jax.ShapeDtypeStruct((B, S, D), jnp.bfloat16),
        grid=(nb, L),
        in_specs=[
            pl.BlockSpec((Bt, S, D), xmap),
            pl.BlockSpec((1, D, 3 * D), wmap),
            pl.BlockSpec((1, 1, 3 * D), wmap),
            pl.BlockSpec((1, D, D), wmap),
            pl.BlockSpec((1, 1, D), wmap),
            pl.BlockSpec((1, 1, D), wmap),
            pl.BlockSpec((1, 1, D), wmap),
            pl.BlockSpec((1, D, dff), wmap),
            pl.BlockSpec((1, 1, dff), wmap),
            pl.BlockSpec((1, dff, D), wmap),
            pl.BlockSpec((1, 1, D), wmap),
            pl.BlockSpec((1, 1, D), wmap),
            pl.BlockSpec((1, 1, D), wmap),
            pl.BlockSpec((1, D), nmap),
            pl.BlockSpec((1, D), nmap),
        ],
        out_specs=pl.BlockSpec((Bt, S, D), xmap),
        scratch_shapes=[pltpu.VMEM((Bt * S, D), jnp.float32)],
        compiler_params=pltpu.CompilerParams(
            dimension_semantics=("parallel", "arbitrary"),
            vmem_limit_bytes=_VMEM_LIMIT),
    )(x, enc["wqkv"], enc["bqkv"], enc["wo"], enc["bo"],
      enc["ln1_g"], enc["ln1_b"],
      enc["w1"], enc["b1"], enc["w2"], enc["b2"],
      enc["ln2_g"], enc["ln2_b"],
      norm_g, norm_b)


# ----------------------------------------------------------------------------
# Kernel 2: full decoder stack (self-attn + cross-attn + FFN per layer, final LN)
# ----------------------------------------------------------------------------

def _decoder_stack_kernel(x_ref, mem_ref,
                          s_wqkv, s_bqkv, s_wo, s_bo, s_lng, s_lnb,
                          c_wq, c_bq, c_wkv, c_bkv, c_wo, c_bo, c_lng, c_lnb,
                          w1_ref, b1_ref, w2_ref, b2_ref, f_lng, f_lnb,
                          dng_ref, dnb_ref,
                          o_ref, act_ref, *, nhead, eps):
    l = pl.program_id(1)
    Bt, St, D = x_ref.shape
    Ss = mem_ref.shape[1]
    Mq = Bt * St
    Mk = Bt * Ss

    @pl.when(l == 0)
    def _():
        act_ref[...] = x_ref[...].reshape(Mq, D).astype(jnp.float32)

    x = act_ref[...]                                                  # (Mq, D) f32
    mem = mem_ref[...].reshape(Mk, D)                                 # bf16, MXU-ready

    self_mask = _attn_mask(Mq, Mq, St, St, Bt, causal=True)
    cross_mask = _attn_mask(Mq, Mk, St, Ss, Bt, causal=False)

    x = _self_attn_block(x, s_wqkv[0], s_bqkv[0], s_wo[0], s_bo[0],
                         s_lng[0], s_lnb[0], nhead=nhead, mask=self_mask, eps=eps)
    x = _cross_attn_block(x, mem, c_wq[0], c_bq[0], c_wkv[0], c_bkv[0],
                          c_wo[0], c_bo[0], c_lng[0], c_lnb[0],
                          nhead=nhead, mask=cross_mask, eps=eps)
    x = _ffn_block(x, w1_ref[0], b1_ref[0], w2_ref[0], b2_ref[0],
                   f_lng[0], f_lnb[0], eps=eps)
    act_ref[...] = x

    @pl.when(l == pl.num_programs(1) - 1)
    def _():
        y = _layernorm(x, dng_ref[...], dnb_ref[...], eps)
        o_ref[...] = y.reshape(Bt, St, D).astype(o_ref.dtype)


def pallas_decoder(x, memory, dec, norm_g, norm_b, *, nhead):
    B, St, D = x.shape
    Ss = memory.shape[1]
    L = dec["s_wqkv"].shape[0]
    dff = dec["w1"].shape[2]
    nb = _pick_batch_split(B, St)
    Bt = B // nb

    xmap = lambda b, l: (b, 0, 0)
    wmap = lambda b, l: (l, 0, 0)
    nmap = lambda b, l: (0, 0)

    kern = functools.partial(_decoder_stack_kernel, nhead=nhead, eps=_EPS)
    return pl.pallas_call(
        kern,
        out_shape=jax.ShapeDtypeStruct((B, St, D), jnp.bfloat16),
        grid=(nb, L),
        in_specs=[
            pl.BlockSpec((Bt, St, D), xmap),
            pl.BlockSpec((Bt, Ss, D), xmap),
            # self-attention
            pl.BlockSpec((1, D, 3 * D), wmap),
            pl.BlockSpec((1, 1, 3 * D), wmap),
            pl.BlockSpec((1, D, D), wmap),
            pl.BlockSpec((1, 1, D), wmap),
            pl.BlockSpec((1, 1, D), wmap),
            pl.BlockSpec((1, 1, D), wmap),
            # cross-attention
            pl.BlockSpec((1, D, D), wmap),
            pl.BlockSpec((1, 1, D), wmap),
            pl.BlockSpec((1, D, 2 * D), wmap),
            pl.BlockSpec((1, 1, 2 * D), wmap),
            pl.BlockSpec((1, D, D), wmap),
            pl.BlockSpec((1, 1, D), wmap),
            pl.BlockSpec((1, 1, D), wmap),
            pl.BlockSpec((1, 1, D), wmap),
            # FFN
            pl.BlockSpec((1, D, dff), wmap),
            pl.BlockSpec((1, 1, dff), wmap),
            pl.BlockSpec((1, dff, D), wmap),
            pl.BlockSpec((1, 1, D), wmap),
            pl.BlockSpec((1, 1, D), wmap),
            pl.BlockSpec((1, 1, D), wmap),
            # final decoder norm
            pl.BlockSpec((1, D), nmap),
            pl.BlockSpec((1, D), nmap),
        ],
        out_specs=pl.BlockSpec((Bt, St, D), xmap),
        scratch_shapes=[pltpu.VMEM((Bt * St, D), jnp.float32)],
        compiler_params=pltpu.CompilerParams(
            dimension_semantics=("parallel", "arbitrary"),
            vmem_limit_bytes=_VMEM_LIMIT),
    )(x, memory,
      dec["s_wqkv"], dec["s_bqkv"], dec["s_wo"], dec["s_bo"],
      dec["s_ln_g"], dec["s_ln_b"],
      dec["c_wq"], dec["c_bq"], dec["c_wkv"], dec["c_bkv"],
      dec["c_wo"], dec["c_bo"], dec["c_ln_g"], dec["c_ln_b"],
      dec["w1"], dec["b1"], dec["w2"], dec["b2"],
      dec["f_ln_g"], dec["f_ln_b"],
      norm_g, norm_b)


# ----------------------------------------------------------------------------
# Kernel 3: output projection (bf16 activations, vocab padded to 256 lanes)
# ----------------------------------------------------------------------------

def _proj_kernel(x_ref, w_ref, b_ref, o_ref):
    y = jnp.dot(x_ref[...], w_ref[...],
                preferred_element_type=jnp.float32) + b_ref[...]
    o_ref[...] = y.astype(o_ref.dtype)


def pallas_output_proj(x_bf16, w, b):
    """x: (M, D) bf16, w: (D, Np) bf16 with Np a multiple of 256, b: (1, Np) f32."""
    M, D = x_bf16.shape
    Np = w.shape[1]
    tn = 512 if Np % 512 == 0 else 256      # wide, MXU-column friendly lane tile
    tm = _row_tile(M)
    return pl.pallas_call(
        _proj_kernel,
        out_shape=jax.ShapeDtypeStruct((M, Np), jnp.float32),
        grid=(M // tm, Np // tn),
        in_specs=[
            pl.BlockSpec((tm, D), lambda i, j: (i, 0)),
            pl.BlockSpec((D, tn), lambda i, j: (0, j)),
            pl.BlockSpec((1, tn), lambda i, j: (0, j)),
        ],
        out_specs=pl.BlockSpec((tm, tn), lambda i, j: (i, j)),
        compiler_params=pltpu.CompilerParams(
            dimension_semantics=("parallel", "parallel"),
            vmem_limit_bytes=_VMEM_LIMIT),
    )(x_bf16, w, b)


# ----------------------------------------------------------------------------
# Model glue (plain JAX: embeddings, positional encoding)
# ----------------------------------------------------------------------------

def positional_encoding(seq_len, d_model):
    pos = jnp.arange(seq_len, dtype=jnp.float32)[:, None]
    div = jnp.exp(jnp.arange(0, d_model, 2, dtype=jnp.float32)
                  * (-math.log(10000.0) / d_model))
    pe = jnp.zeros((seq_len, d_model), jnp.float32)
    pe = pe.at[:, 0::2].set(jnp.sin(pos * div))
    pe = pe.at[:, 1::2].set(jnp.cos(pos * div))
    return pe


def seq2seq_forward(params, src, tgt, *, d_model, nhead, tgt_vocab):
    B, Ss = src.shape
    _, St = tgt.shape
    scale = math.sqrt(d_model)

    # Embedding lookup + scale + positional encoding (glue; dropout = identity).
    x_src = (jnp.take(params["src_emb"], src, axis=0) * scale
             + positional_encoding(Ss, d_model)[None]).astype(jnp.bfloat16)
    x_tgt = (jnp.take(params["tgt_emb"], tgt, axis=0) * scale
             + positional_encoding(St, d_model)[None]).astype(jnp.bfloat16)

    mem = pallas_encoder(x_src, params["enc"],
                         params["enc_norm_g"], params["enc_norm_b"], nhead=nhead)
    y = pallas_decoder(x_tgt, mem, params["dec"],
                       params["dec_norm_g"], params["dec_norm_b"], nhead=nhead)

    logits = pallas_output_proj(y.reshape(B * St, d_model),
                                params["fc_w"], params["fc_b"])
    return logits.reshape(B, St, -1)[:, :, :tgt_vocab]


# ----------------------------------------------------------------------------
# Deterministic parameter initialization (synthetic, matches module shapes;
# weights stored per-stack with a leading layer axis, bf16 for MXU operands)
# ----------------------------------------------------------------------------

def _init_encoder(key, L, D, nhead, dff):
    s = 0.02
    inv = 1.0 / math.sqrt(D // nhead)      # attention scale folded into Q weights
    kq, kk, kv, ko, k1, k2 = jax.random.split(key, 6)
    wq = s * jax.random.normal(kq, (L, D, D), jnp.float32) * inv
    wk = s * jax.random.normal(kk, (L, D, D), jnp.float32)
    wv = s * jax.random.normal(kv, (L, D, D), jnp.float32)
    return {
        "wqkv": jnp.concatenate([wq, wk, wv], axis=2).astype(jnp.bfloat16),
        # NOTE: if real checkpoint biases are loaded, the Q-bias must also be *inv.
        "bqkv": jnp.zeros((L, 1, 3 * D), jnp.float32),
        "wo": (s * jax.random.normal(ko, (L, D, D), jnp.float32)).astype(jnp.bfloat16),
        "bo": jnp.zeros((L, 1, D), jnp.float32),
        "ln1_g": jnp.ones((L, 1, D), jnp.float32),
        "ln1_b": jnp.zeros((L, 1, D), jnp.float32),
        "w1": (s * jax.random.normal(k1, (L, D, dff), jnp.float32)).astype(jnp.bfloat16),
        "b1": jnp.zeros((L, 1, dff), jnp.float32),
        "w2": (s * jax.random.normal(k2, (L, dff, D), jnp.float32)).astype(jnp.bfloat16),
        "b2": jnp.zeros((L, 1, D), jnp.float32),
        "ln2_g": jnp.ones((L, 1, D), jnp.float32),
        "ln2_b": jnp.zeros((L, 1, D), jnp.float32),
    }


def _init_decoder(key, L, D, nhead, dff):
    s = 0.02
    inv = 1.0 / math.sqrt(D // nhead)
    keys = jax.random.split(key, 10)
    sq, sk, sv, so, cq, ck, cv, co, k1, k2 = keys
    s_wq = s * jax.random.normal(sq, (L, D, D), jnp.float32) * inv
    s_wk = s * jax.random.normal(sk, (L, D, D), jnp.float32)
    s_wv = s * jax.random.normal(sv, (L, D, D), jnp.float32)
    c_wk = s * jax.random.normal(ck, (L, D, D), jnp.float32)
    c_wv = s * jax.random.normal(cv, (L, D, D), jnp.float32)
    return {
        "s_wqkv": jnp.concatenate([s_wq, s_wk, s_wv], axis=2).astype(jnp.bfloat16),
        "s_bqkv": jnp.zeros((L, 1, 3 * D), jnp.float32),
        "s_wo": (s * jax.random.normal(so, (L, D, D), jnp.float32)).astype(jnp.bfloat16),
        "s_bo": jnp.zeros((L, 1, D), jnp.float32),
        "s_ln_g": jnp.ones((L, 1, D), jnp.float32),
        "s_ln_b": jnp.zeros((L, 1, D), jnp.float32),
        "c_wq": (s * jax.random.normal(cq, (L, D, D), jnp.float32)
                 * inv).astype(jnp.bfloat16),
        "c_bq": jnp.zeros((L, 1, D), jnp.float32),
        "c_wkv": jnp.concatenate([c_wk, c_wv], axis=2).astype(jnp.bfloat16),
        "c_bkv": jnp.zeros((L, 1, 2 * D), jnp.float32),
        "c_wo": (s * jax.random.normal(co, (L, D, D), jnp.float32)).astype(jnp.bfloat16),
        "c_bo": jnp.zeros((L, 1, D), jnp.float32),
        "c_ln_g": jnp.ones((L, 1, D), jnp.float32),
        "c_ln_b": jnp.zeros((L, 1, D), jnp.float32),
        "w1": (s * jax.random.normal(k1, (L, D, dff), jnp.float32)).astype(jnp.bfloat16),
        "b1": jnp.zeros((L, 1, dff), jnp.float32),
        "w2": (s * jax.random.normal(k2, (L, dff, D), jnp.float32)).astype(jnp.bfloat16),
        "b2": jnp.zeros((L, 1, D), jnp.float32),
        "f_ln_g": jnp.ones((L, 1, D), jnp.float32),
        "f_ln_b": jnp.zeros((L, 1, D), jnp.float32),
    }


def init_params(key, src_vocab, tgt_vocab, d_model, nhead, num_layers, dff):
    keys = jax.random.split(key, 5)
    s = 0.02
    v_pad = ((tgt_vocab + 255) // 256) * 256   # lane-dense, MXU-column friendly
    fc_w = s * jax.random.normal(keys[2], (d_model, tgt_vocab), jnp.float32)
    fc_w = jnp.pad(fc_w, ((0, 0), (0, v_pad - tgt_vocab)))
    return {
        "src_emb": s * jax.random.normal(keys[0], (src_vocab, d_model), jnp.float32),
        "tgt_emb": s * jax.random.normal(keys[1], (tgt_vocab, d_model), jnp.float32),
        "enc": _init_encoder(keys[3], num_layers, d_model, nhead, dff),
        "dec": _init_decoder(keys[4], num_layers, d_model, nhead, dff),
        "enc_norm_g": jnp.ones((1, d_model), jnp.float32),
        "enc_norm_b": jnp.zeros((1, d_model), jnp.float32),
        "dec_norm_g": jnp.ones((1, d_model), jnp.float32),
        "dec_norm_b": jnp.zeros((1, d_model), jnp.float32),
        "fc_w": fc_w.astype(jnp.bfloat16),
        "fc_b": jnp.zeros((1, v_pad), jnp.float32),
    }


# ----------------------------------------------------------------------------
# Main
# ----------------------------------------------------------------------------

if __name__ == "__main__":
    SRC_VOCAB, TGT_VOCAB = 64, 96
    D_MODEL, NHEAD, NUM_LAYERS, DFF = 128, 4, 2, 512
    B, S_SRC, S_TGT = 2, 8, 8

    root = jax.random.PRNGKey(0)
    k_param, k_src, k_tgt = jax.random.split(root, 3)

    params = init_params(k_param, SRC_VOCAB, TGT_VOCAB, D_MODEL, NHEAD,
                         NUM_LAYERS, DFF)
    src = jax.random.randint(k_src, (B, S_SRC), 0, SRC_VOCAB, dtype=jnp.int32)
    tgt = jax.random.randint(k_tgt, (B, S_TGT), 0, TGT_VOCAB, dtype=jnp.int32)

    fwd = jax.jit(functools.partial(seq2seq_forward, d_model=D_MODEL,
                                    nhead=NHEAD, tgt_vocab=TGT_VOCAB))
    logits = fwd(params, src, tgt)
    logits = jax.block_until_ready(logits)

    assert logits.shape == (B, S_TGT, TGT_VOCAB)
    assert bool(jnp.all(jnp.isfinite(logits)))
    print("KERNEL_OK")
</pallas_src>

<mosaic_0001>
module attributes {stable_mosaic.version = 11 : i64} {
  func.func @_encoder_stack_kernel(%arg0: i32, %arg1: i32, %arg2: memref<1x8x128xbf16, #tpu.memory_space<vmem>>, %arg3: memref<1x128x384xbf16, #tpu.memory_space<vmem>>, %arg4: memref<1x1x384xf32, #tpu.memory_space<vmem>>, %arg5: memref<1x128x128xbf16, #tpu.memory_space<vmem>>, %arg6: memref<1x1x128xf32, #tpu.memory_space<vmem>>, %arg7: memref<1x1x128xf32, #tpu.memory_space<vmem>>, %arg8: memref<1x1x128xf32, #tpu.memory_space<vmem>>, %arg9: memref<1x128x512xbf16, #tpu.memory_space<vmem>>, %arg10: memref<1x1x512xf32, #tpu.memory_space<vmem>>, %arg11: memref<1x512x128xbf16, #tpu.memory_space<vmem>>, %arg12: memref<1x1x128xf32, #tpu.memory_space<vmem>>, %arg13: memref<1x1x128xf32, #tpu.memory_space<vmem>>, %arg14: memref<1x1x128xf32, #tpu.memory_space<vmem>>, %arg15: memref<1x128xf32, #tpu.memory_space<vmem>>, %arg16: memref<1x128xf32, #tpu.memory_space<vmem>>, %arg17: memref<1x8x128xbf16, #tpu.memory_space<vmem>>, %arg18: memref<8x128xf32, #tpu.memory_space<vmem>>) attributes {dimension_semantics = [#tpu.dimension_semantics<parallel>, #tpu.dimension_semantics<arbitrary>], iteration_bounds = array<i64: 2, 2>, scalar_prefetch = 0 : i64, scratch_operands = 1 : i64, tpu.core_type = #tpu.core_type<tc>, window_params = [{transform_indices = @transform_0, window_bounds = array<i64: 1, 8, 128>}, {transform_indices = @transform_1, window_bounds = array<i64: 1, 128, 384>}, {transform_indices = @transform_2, window_bounds = array<i64: 1, 1, 384>}, {transform_indices = @transform_3, window_bounds = array<i64: 1, 128, 128>}, {transform_indices = @transform_4, window_bounds = array<i64: 1, 1, 128>}, {transform_indices = @transform_5, window_bounds = array<i64: 1, 1, 128>}, {transform_indices = @transform_6, window_bounds = array<i64: 1, 1, 128>}, {transform_indices = @transform_7, window_bounds = array<i64: 1, 128, 512>}, {transform_indices = @transform_8, window_bounds = array<i64: 1, 1, 512>}, {transform_indices = @transform_9, window_bounds = array<i64: 1, 512, 128>}, {transform_indices = @transform_10, window_bounds = array<i64: 1, 1, 128>}, {transform_indices = @transform_11, window_bounds = array<i64: 1, 1, 128>}, {transform_indices = @transform_12, window_bounds = array<i64: 1, 1, 128>}, {pipeline_mode = #tpu.pipeline_mode<synchronous>, transform_indices = @transform_13, window_bounds = array<i64: 1, 128>}, {pipeline_mode = #tpu.pipeline_mode<synchronous>, transform_indices = @transform_14, window_bounds = array<i64: 1, 128>}, {transform_indices = @transform_15, window_bounds = array<i64: 1, 8, 128>}]} {
    %c0_i32 = arith.constant 0 : i32
    %0 = arith.cmpi eq, %arg1, %c0_i32 : i32
    %1 = arith.extui %0 : i1 to i32
    %c0_i32_0 = arith.constant 0 : i32
    %2 = arith.cmpi ne, %1, %c0_i32_0 : i32
    scf.if %2 {
      %c0_74 = arith.constant 0 : index
      %c0_75 = arith.constant 0 : index
      %c0_76 = arith.constant 0 : index
      %192 = vector.load %arg2[%c0_74, %c0_75, %c0_76] : memref<1x8x128xbf16, #tpu.memory_space<vmem>>, vector<1x8x128xbf16>
      %193 = vector.shape_cast %192 : vector<1x8x128xbf16> to vector<8x128xbf16>
      %194 = arith.extf %193 : vector<8x128xbf16> to vector<8x128xf32>
      %c0_77 = arith.constant 0 : index
      %c0_78 = arith.constant 0 : index
      %195 = vector.load %arg18[%c0_77, %c0_78] : memref<8x128xf32, #tpu.memory_space<vmem>>, vector<8x128xf32>
      tpu.vector_store %arg18[%c0_77, %c0_78], %194 {strides = array<i32>} : memref<8x128xf32, #tpu.memory_space<vmem>>, vector<8x128xf32>,
    } else {
    }
    %c0 = arith.constant 0 : index
    %c0_1 = arith.constant 0 : index
    %3 = vector.load %arg18[%c0, %c0_1] : memref<8x128xf32, #tpu.memory_space<vmem>>, vector<8x128xf32>
    %c0_2 = arith.constant 0 : index
    %c0_3 = arith.constant 0 : index
    %c0_4 = arith.constant 0 : index
    %4 = vector.load %arg3[%c0_2, %c0_3, %c0_4] : memref<1x128x384xbf16, #tpu.memory_space<vmem>>, vector<1x128x384xbf16>
    %5 = vector.shape_cast %4 : vector<1x128x384xbf16> to vector<128x384xbf16>
    %c0_5 = arith.constant 0 : index
    %c0_6 = arith.constant 0 : index
    %c0_7 = arith.constant 0 : index
    %6 = vector.load %arg4[%c0_5, %c0_6, %c0_7] : memref<1x1x384xf32, #tpu.memory_space<vmem>>, vector<1x1x384xf32>
    %7 = vector.shape_cast %6 : vector<1x1x384xf32> to vector<1x384xf32>
    %c0_8 = arith.constant 0 : index
    %c0_9 = arith.constant 0 : index
    %c0_10 = arith.constant 0 : index
    %8 = vector.load %arg5[%c0_8, %c0_9, %c0_10] : memref<1x128x128xbf16, #tpu.memory_space<vmem>>, vector<1x128x128xbf16>
    %9 = vector.shape_cast %8 : vector<1x128x128xbf16> to vector<128x128xbf16>
    %c0_11 = arith.constant 0 : index
    %c0_12 = arith.constant 0 : index
    %c0_13 = arith.constant 0 : index
    %10 = vector.load %arg6[%c0_11, %c0_12, %c0_13] : memref<1x1x128xf32, #tpu.memory_space<vmem>>, vector<1x1x128xf32>
    %11 = vector.shape_cast %10 : vector<1x1x128xf32> to vector<1x128xf32>
    %c0_14 = arith.constant 0 : index
    %c0_15 = arith.constant 0 : index
    %c0_16 = arith.constant 0 : index
    %12 = vector.load %arg7[%c0_14, %c0_15, %c0_16] : memref<1x1x128xf32, #tpu.memory_space<vmem>>, vector<1x1x128xf32>
    %13 = vector.shape_cast %12 : vector<1x1x128xf32> to vector<1x128xf32>
    %c0_17 = arith.constant 0 : index
    %c0_18 = arith.constant 0 : index
    %c0_19 = arith.constant 0 : index
    %14 = vector.load %arg8[%c0_17, %c0_18, %c0_19] : memref<1x1x128xf32, #tpu.memory_space<vmem>>, vector<1x1x128xf32>
    %15 = vector.shape_cast %14 : vector<1x1x128xf32> to vector<1x128xf32>
    %16 = arith.truncf %3 : vector<8x128xf32> to vector<8x128xbf16>
    %cst = arith.constant dense<0.000000e+00> : vector<8x384xf32>
    %17 = tpu.matmul %16, %5, %cst {dimension_numbers = #tpu.dot_dimension_numbers<[1], [0], [0], [1], [0, 0, 1, 1], [], []>} : vector<8x128xbf16>, vector<128x384xbf16>, vector<8x384xf32> -> vector<8x384xf32>
    %18 = vector.broadcast %7 : vector<1x384xf32> to vector<8x384xf32>
    %19 = arith.addf %17, %18 : vector<8x384xf32>
    %20 = vector.extract_strided_slice %19 {offsets = [0, 0], sizes = [8, 128], strides = [1, 1]} : vector<8x384xf32> to vector<8x128xf32>
    %21 = vector.extract_strided_slice %19 {offsets = [0, 128], sizes = [8, 128], strides = [1, 1]} : vector<8x384xf32> to vector<8x128xf32>
    %22 = vector.extract_strided_slice %19 {offsets = [0, 256], sizes = [8, 128], strides = [1, 1]} : vector<8x384xf32> to vector<8x128xf32>
    %23 = vector.broadcast %11 : vector<1x128xf32> to vector<8x128xf32>
    %24 = arith.addf %3, %23 : vector<8x128xf32>
    %25 = vector.extract_strided_slice %20 {offsets = [0, 0], sizes = [8, 32], strides = [1, 1]} : vector<8x128xf32> to vector<8x32xf32>
    %26 = arith.truncf %25 : vector<8x32xf32> to vector<8x32xbf16>
    %27 = vector.extract_strided_slice %21 {offsets = [0, 0], sizes = [8, 32], strides = [1, 1]} : vector<8x128xf32> to vector<8x32xf32>
    %28 = arith.truncf %27 : vector<8x32xf32> to vector<8x32xbf16>
    %29 = vector.extract_strided_slice %22 {offsets = [0, 0], sizes = [8, 32], strides = [1, 1]} : vector<8x128xf32> to vector<8x32xf32>
    %30 = arith.truncf %29 : vector<8x32xf32> to vector<8x32xbf16>
    %cst_20 = arith.constant dense<0.000000e+00> : vector<8x8xf32>
    %31 = tpu.matmul %26, %28, %cst_20 {dimension_numbers = #tpu.dot_dimension_numbers<[1], [1], [0], [0], [0, 0, 1, 0], [], []>} : vector<8x32xbf16>, vector<8x32xbf16>, vector<8x8xf32> -> vector<8x8xf32>
    %cst_21 = arith.constant dense<0xFF800000> : vector<8xf32>
    %32 = vector.multi_reduction <maximumf>, %31, %cst_21 [1] : vector<8x8xf32> to vector<8xf32>
    %33 = vector.shape_cast %32 : vector<8xf32> to vector<8x1xf32>
    %34 = vector.broadcast %33 : vector<8x1xf32> to vector<8x8xf32>
    %35 = arith.subf %31, %34 : vector<8x8xf32>
    %36 = math.exp %35 : vector<8x8xf32>
    %cst_22 = arith.constant dense<0.000000e+00> : vector<8xf32>
    %37 = vector.multi_reduction <add>, %36, %cst_22 [1] : vector<8x8xf32> to vector<8xf32>
    %38 = vector.shape_cast %37 : vector<8xf32> to vector<8x1xf32>
    %39 = tpu.reciprocal %38 {approx = true} : vector<8x1xf32> -> vector<8x1xf32>
    %40 = vector.broadcast %39 : vector<8x1xf32> to vector<8x8xf32>
    %41 = arith.mulf %36, %40 : vector<8x8xf32>
    %42 = arith.truncf %41 : vector<8x8xf32> to vector<8x8xbf16>
    %cst_23 = arith.constant dense<0.000000e+00> : vector<8x32xf32>
    %43 = tpu.matmul %42, %30, %cst_23 {dimension_numbers = #tpu.dot_dimension_numbers<[1], [0], [0], [1], [0, 0, 1, 1], [], []>} : vector<8x8xbf16>, vector<8x32xbf16>, vector<8x32xf32> -> vector<8x32xf32>
    %44 = arith.truncf %43 : vector<8x32xf32> to vector<8x32xbf16>
    %45 = vector.extract_strided_slice %9 {offsets = [0, 0], sizes = [32, 128], strides = [1, 1]} : vector<128x128xbf16> to vector<32x128xbf16>
    %cst_24 = arith.constant dense<0.000000e+00> : vector<8x128xf32>
    %46 = tpu.matmul %44, %45, %cst_24 {dimension_numbers = #tpu.dot_dimension_numbers<[1], [0], [0], [1], [0, 0, 1, 1], [], []>} : vector<8x32xbf16>, vector<32x128xbf16>, vector<8x128xf32> -> vector<8x128xf32>
    %47 = arith.addf %24, %46 : vector<8x128xf32>
    %48 = vector.extract_strided_slice %20 {offsets = [0, 32], sizes = [8, 32], strides = [1, 1]} : vector<8x128xf32> to vector<8x32xf32>
    %49 = arith.truncf %48 : vector<8x32xf32> to vector<8x32xbf16>
    %50 = vector.extract_strided_slice %21 {offsets = [0, 32], sizes = [8, 32], strides = [1, 1]} : vector<8x128xf32> to vector<8x32xf32>
    %51 = arith.truncf %50 : vector<8x32xf32> to vector<8x32xbf16>
    %52 = vector.extract_strided_slice %22 {offsets = [0, 32], sizes = [8, 32], strides = [1, 1]} : vector<8x128xf32> to vector<8x32xf32>
    %53 = arith.truncf %52 : vector<8x32xf32> to vector<8x32xbf16>
    %cst_25 = arith.constant dense<0.000000e+00> : vector<8x8xf32>
    %54 = tpu.matmul %49, %51, %cst_25 {dimension_numbers = #tpu.dot_dimension_numbers<[1], [1], [0], [0], [0, 0, 1, 0], [], []>} : vector<8x32xbf16>, vector<8x32xbf16>, vector<8x8xf32> -> vector<8x8xf32>
    %cst_26 = arith.constant dense<0xFF800000> : vector<8xf32>
    %55 = vector.multi_reduction <maximumf>, %54, %cst_26 [1] : vector<8x8xf32> to vector<8xf32>
    %56 = vector.shape_cast %55 : vector<8xf32> to vector<8x1xf32>
    %57 = vector.broadcast %56 : vector<8x1xf32> to vector<8x8xf32>
    %58 = arith.subf %54, %57 : vector<8x8xf32>
    %59 = math.exp %58 : vector<8x8xf32>
    %cst_27 = arith.constant dense<0.000000e+00> : vector<8xf32>
    %60 = vector.multi_reduction <add>, %59, %cst_27 [1] : vector<8x8xf32> to vector<8xf32>
    %61 = vector.shape_cast %60 : vector<8xf32> to vector<8x1xf32>
    %62 = tpu.reciprocal %61 {approx = true} : vector<8x1xf32> -> vector<8x1xf32>
    %63 = vector.broadcast %62 : vector<8x1xf32> to vector<8x8xf32>
    %64 = arith.mulf %59, %63 : vector<8x8xf32>
    %65 = arith.truncf %64 : vector<8x8xf32> to vector<8x8xbf16>
    %cst_28 = arith.constant dense<0.000000e+00> : vector<8x32xf32>
    %66 = tpu.matmul %65, %53, %cst_28 {dimension_numbers = #tpu.dot_dimension_numbers<[1], [0], [0], [1], [0, 0, 1, 1], [], []>} : vector<8x8xbf16>, vector<8x32xbf16>, vector<8x32xf32> -> vector<8x32xf32>
    %67 = arith.truncf %66 : vector<8x32xf32> to vector<8x32xbf16>
    %68 = vector.extract_strided_slice %9 {offsets = [32, 0], sizes = [32, 128], strides = [1, 1]} : vector<128x128xbf16> to vector<32x128xbf16>
    %cst_29 = arith.constant dense<0.000000e+00> : vector<8x128xf32>
    %69 = tpu.matmul %67, %68, %cst_29 {dimension_numbers = #tpu.dot_dimension_numbers<[1], [0], [0], [1], [0, 0, 1, 1], [], []>} : vector<8x32xbf16>, vector<32x128xbf16>, vector<8x128xf32> -> vector<8x128xf32>
    %70 = arith.addf %47, %69 : vector<8x128xf32>
    %71 = vector.extract_strided_slice %20 {offsets = [0, 64], sizes = [8, 32], strides = [1, 1]} : vector<8x128xf32> to vector<8x32xf32>
    %72 = arith.truncf %71 : vector<8x32xf32> to vector<8x32xbf16>
    %73 = vector.extract_strided_slice %21 {offsets = [0, 64], sizes = [8, 32], strides = [1, 1]} : vector<8x128xf32> to vector<8x32xf32>
    %74 = arith.truncf %73 : vector<8x32xf32> to vector<8x32xbf16>
    %75 = vector.extract_strided_slice %22 {offsets = [0, 64], sizes = [8, 32], strides = [1, 1]} : vector<8x128xf32> to vector<8x32xf32>
    %76 = arith.truncf %75 : vector<8x32xf32> to vector<8x32xbf16>
    %cst_30 = arith.constant dense<0.000000e+00> : vector<8x8xf32>
    %77 = tpu.matmul %72, %74, %cst_30 {dimension_numbers = #tpu.dot_dimension_numbers<[1], [1], [0], [0], [0, 0, 1, 0], [], []>} : vector<8x32xbf16>, vector<8x32xbf16>, vector<8x8xf32> -> vector<8x8xf32>
    %cst_31 = arith.constant dense<0xFF800000> : vector<8xf32>
    %78 = vector.multi_reduction <maximumf>, %77, %cst_31 [1] : vector<8x8xf32> to vector<8xf32>
    %79 = vector.shape_cast %78 : vector<8xf32> to vector<8x1xf32>
    %80 = vector.broadcast %79 : vector<8x1xf32> to vector<8x8xf32>
    %81 = arith.subf %77, %80 : vector<8x8xf32>
    %82 = math.exp %81 : vector<8x8xf32>
    %cst_32 = arith.constant dense<0.000000e+00> : vector<8xf32>
    %83 = vector.multi_reduction <add>, %82, %cst_32 [1] : vector<8x8xf32> to vector<8xf32>
    %84 = vector.shape_cast %83 : vector<8xf32> to vector<8x1xf32>
    %85 = tpu.reciprocal %84 {approx = true} : vector<8x1xf32> -> vector<8x1xf32>
    %86 = vector.broadcast %85 : vector<8x1xf32> to vector<8x8xf32>
    %87 = arith.mulf %82, %86 : vector<8x8xf32>
    %88 = arith.truncf %87 : vector<8x8xf32> to vector<8x8xbf16>
    %cst_33 = arith.constant dense<0.000000e+00> : vector<8x32xf32>
    %89 = tpu.matmul %88, %76, %cst_33 {dimension_numbers = #tpu.dot_dimension_numbers<[1], [0], [0], [1], [0, 0, 1, 1], [], []>} : vector<8x8xbf16>, vector<8x32xbf16>, vector<8x32xf32> -> vector<8x32xf32>
    %90 = arith.truncf %89 : vector<8x32xf32> to vector<8x32xbf16>
    %91 = vector.extract_strided_slice %9 {offsets = [64, 0], sizes = [32, 128], strides = [1, 1]} : vector<128x128xbf16> to vector<32x128xbf16>
    %cst_34 = arith.constant dense<0.000000e+00> : vector<8x128xf32>
    %92 = tpu.matmul %90, %91, %cst_34 {dimension_numbers = #tpu.dot_dimension_numbers<[1], [0], [0], [1], [0, 0, 1, 1], [], []>} : vector<8x32xbf16>, vector<32x128xbf16>, vector<8x128xf32> -> vector<8x128xf32>
    %93 = arith.addf %70, %92 : vector<8x128xf32>
    %94 = vector.extract_strided_slice %20 {offsets = [0, 96], sizes = [8, 32], strides = [1, 1]} : vector<8x128xf32> to vector<8x32xf32>
    %95 = arith.truncf %94 : vector<8x32xf32> to vector<8x32xbf16>
    %96 = vector.extract_strided_slice %21 {offsets = [0, 96], sizes = [8, 32], strides = [1, 1]} : vector<8x128xf32> to vector<8x32xf32>
    %97 = arith.truncf %96 : vector<8x32xf32> to vector<8x32xbf16>
    %98 = vector.extract_strided_slice %22 {offsets = [0, 96], sizes = [8, 32], strides = [1, 1]} : vector<8x128xf32> to vector<8x32xf32>
    %99 = arith.truncf %98 : vector<8x32xf32> to vector<8x32xbf16>
    %cst_35 = arith.constant dense<0.000000e+00> : vector<8x8xf32>
    %100 = tpu.matmul %95, %97, %cst_35 {dimension_numbers = #tpu.dot_dimension_numbers<[1], [1], [0], [0], [0, 0, 1, 0], [], []>} : vector<8x32xbf16>, vector<8x32xbf16>, vector<8x8xf32> -> vector<8x8xf32>
    %cst_36 = arith.constant dense<0xFF800000> : vector<8xf32>
    %101 = vector.multi_reduction <maximumf>, %100, %cst_36 [1] : vector<8x8xf32> to vector<8xf32>
    %102 = vector.shape_cast %101 : vector<8xf32> to vector<8x1xf32>
    %103 = vector.broadcast %102 : vector<8x1xf32> to vector<8x8xf32>
    %104 = arith.subf %100, %103 : vector<8x8xf32>
    %105 = math.exp %104 : vector<8x8xf32>
    %cst_37 = arith.constant dense<0.000000e+00> : vector<8xf32>
    %106 = vector.multi_reduction <add>, %105, %cst_37 [1] : vector<8x8xf32> to vector<8xf32>
    %107 = vector.shape_cast %106 : vector<8xf32> to vector<8x1xf32>
    %108 = tpu.reciprocal %107 {approx = true} : vector<8x1xf32> -> vector<8x1xf32>
    %109 = vector.broadcast %108 : vector<8x1xf32> to vector<8x8xf32>
    %110 = arith.mulf %105, %109 : vector<8x8xf32>
    %111 = arith.truncf %110 : vector<8x8xf32> to vector<8x8xbf16>
    %cst_38 = arith.constant dense<0.000000e+00> : vector<8x32xf32>
    %112 = tpu.matmul %111, %99, %cst_38 {dimension_numbers = #tpu.dot_dimension_numbers<[1], [0], [0], [1], [0, 0, 1, 1], [], []>} : vector<8x8xbf16>, vector<8x32xbf16>, vector<8x32xf32> -> vector<8x32xf32>
    %113 = arith.truncf %112 : vector<8x32xf32> to vector<8x32xbf16>
    %114 = vector.extract_strided_slice %9 {offsets = [96, 0], sizes = [32, 128], strides = [1, 1]} : vector<128x128xbf16> to vector<32x128xbf16>
    %cst_39 = arith.constant dense<0.000000e+00> : vector<8x128xf32>
    %115 = tpu.matmul %113, %114, %cst_39 {dimension_numbers = #tpu.dot_dimension_numbers<[1], [0], [0], [1], [0, 0, 1, 1], [], []>} : vector<8x32xbf16>, vector<32x128xbf16>, vector<8x128xf32> -> vector<8x128xf32>
    %116 = arith.addf %93, %115 : vector<8x128xf32>
    %cst_40 = arith.constant dense<0.000000e+00> : vector<8xf32>
    %117 = vector.multi_reduction <add>, %116, %cst_40 [1] : vector<8x128xf32> to vector<8xf32>
    %118 = vector.shape_cast %117 : vector<8xf32> to vector<8x1xf32>
    %cst_41 = arith.constant 1.280000e+02 : f32
    %119 = vector.broadcast %cst_41 : f32 to vector<8x1xf32>
    %120 = arith.divf %118, %119 : vector<8x1xf32>
    %121 = vector.broadcast %120 : vector<8x1xf32> to vector<8x128xf32>
    %122 = arith.subf %116, %121 : vector<8x128xf32>
    %123 = vector.broadcast %120 : vector<8x1xf32> to vector<8x128xf32>
    %124 = arith.subf %116, %123 : vector<8x128xf32>
    %125 = arith.mulf %122, %124 : vector<8x128xf32>
    %cst_42 = arith.constant dense<0.000000e+00> : vector<8xf32>
    %126 = vector.multi_reduction <add>, %125, %cst_42 [1] : vector<8x128xf32> to vector<8xf32>
    %127 = vector.shape_cast %126 : vector<8xf32> to vector<8x1xf32>
    %cst_43 = arith.constant 1.280000e+02 : f32
    %128 = vector.broadcast %cst_43 : f32 to vector<8x1xf32>
    %129 = arith.divf %127, %128 : vector<8x1xf32>
    %130 = vector.broadcast %120 : vector<8x1xf32> to vector<8x128xf32>
    %131 = arith.subf %116, %130 : vector<8x128xf32>
    %cst_44 = arith.constant 9.99999974E-6 : f32
    %132 = vector.broadcast %cst_44 : f32 to vector<8x1xf32>
    %133 = arith.addf %129, %132 : vector<8x1xf32>
    %134 = math.rsqrt %133 : vector<8x1xf32>
    %135 = vector.broadcast %134 : vector<8x1xf32> to vector<8x128xf32>
    %136 = arith.mulf %131, %135 : vector<8x128xf32>
    %137 = vector.broadcast %13 : vector<1x128xf32> to vector<8x128xf32>
    %138 = arith.mulf %136, %137 : vector<8x128xf32>
    %139 = vector.broadcast %15 : vector<1x128xf32> to vector<8x128xf32>
    %140 = arith.addf %138, %139 : vector<8x128xf32>
    %c0_45 = arith.constant 0 : index
    %c0_46 = arith.constant 0 : index
    %c0_47 = arith.constant 0 : index
    %141 = vector.load %arg9[%c0_45, %c0_46, %c0_47] : memref<1x128x512xbf16, #tpu.memory_space<vmem>>, vector<1x128x512xbf16>
    %142 = vector.shape_cast %141 : vector<1x128x512xbf16> to vector<128x512xbf16>
    %c0_48 = arith.constant 0 : index
    %c0_49 = arith.constant 0 : index
    %c0_50 = arith.constant 0 : index
    %143 = vector.load %arg10[%c0_48, %c0_49, %c0_50] : memref<1x1x512xf32, #tpu.memory_space<vmem>>, vector<1x1x512xf32>
    %144 = vector.shape_cast %143 : vector<1x1x512xf32> to vector<1x512xf32>
    %c0_51 = arith.constant 0 : index
    %c0_52 = arith.constant 0 : index
    %c0_53 = arith.constant 0 : index
    %145 = vector.load %arg11[%c0_51, %c0_52, %c0_53] : memref<1x512x128xbf16, #tpu.memory_space<vmem>>, vector<1x512x128xbf16>
    %146 = vector.shape_cast %145 : vector<1x512x128xbf16> to vector<512x128xbf16>
    %c0_54 = arith.constant 0 : index
    %c0_55 = arith.constant 0 : index
    %c0_56 = arith.constant 0 : index
    %147 = vector.load %arg12[%c0_54, %c0_55, %c0_56] : memref<1x1x128xf32, #tpu.memory_space<vmem>>, vector<1x1x128xf32>
    %148 = vector.shape_cast %147 : vector<1x1x128xf32> to vector<1x128xf32>
    %c0_57 = arith.constant 0 : index
    %c0_58 = arith.constant 0 : index
    %c0_59 = arith.constant 0 : index
    %149 = vector.load %arg13[%c0_57, %c0_58, %c0_59] : memref<1x1x128xf32, #tpu.memory_space<vmem>>, vector<1x1x128xf32>
    %150 = vector.shape_cast %149 : vector<1x1x128xf32> to vector<1x128xf32>
    %c0_60 = arith.constant 0 : index
    %c0_61 = arith.constant 0 : index
    %c0_62 = arith.constant 0 : index
    %151 = vector.load %arg14[%c0_60, %c0_61, %c0_62] : memref<1x1x128xf32, #tpu.memory_space<vmem>>, vector<1x1x128xf32>
    %152 = vector.shape_cast %151 : vector<1x1x128xf32> to vector<1x128xf32>
    %153 = arith.truncf %140 : vector<8x128xf32> to vector<8x128xbf16>
    %cst_63 = arith.constant dense<0.000000e+00> : vector<8x512xf32>
    %154 = tpu.matmul %153, %142, %cst_63 {dimension_numbers = #tpu.dot_dimension_numbers<[1], [0], [0], [1], [0, 0, 1, 1], [], []>} : vector<8x128xbf16>, vector<128x512xbf16>, vector<8x512xf32> -> vector<8x512xf32>
    %155 = vector.broadcast %144 : vector<1x512xf32> to vector<8x512xf32>
    %156 = arith.addf %154, %155 : vector<8x512xf32>
    %cst_64 = arith.constant 0.000000e+00 : f32
    %157 = vector.broadcast %cst_64 : f32 to vector<8x512xf32>
    %158 = arith.maximumf %156, %157 : vector<8x512xf32>
    %159 = arith.truncf %158 : vector<8x512xf32> to vector<8x512xbf16>
    %cst_65 = arith.constant dense<0.000000e+00> : vector<8x128xf32>
    %160 = tpu.matmul %159, %146, %cst_65 {dimension_numbers = #tpu.dot_dimension_numbers<[1], [0], [0], [1], [0, 0, 1, 1], [], []>} : vector<8x512xbf16>, vector<512x128xbf16>, vector<8x128xf32> -> vector<8x128xf32>
    %161 = vector.broadcast %148 : vector<1x128xf32> to vector<8x128xf32>
    %162 = arith.addf %160, %161 : vector<8x128xf32>
    %163 = arith.addf %162, %140 : vector<8x128xf32>
    %cst_66 = arith.constant dense<0.000000e+00> : vector<8xf32>
    %164 = vector.multi_reduction <add>, %163, %cst_66 [1] : vector<8x128xf32> to vector<8xf32>
    %165 = vector.shape_cast %164 : vector<8xf32> to vector<8x1xf32>
    %cst_67 = arith.constant 1.280000e+02 : f32
    %166 = vector.broadcast %cst_67 : f32 to vector<8x1xf32>
    %167 = arith.divf %165, %166 : vector<8x1xf32>
    %168 = vector.broadcast %167 : vector<8x1xf32> to vector<8x128xf32>
    %169 = arith.subf %163, %168 : vector<8x128xf32>
    %170 = vector.broadcast %167 : vector<8x1xf32> to vector<8x128xf32>
    %171 = arith.subf %163, %170 : vector<8x128xf32>
    %172 = arith.mulf %169, %171 : vector<8x128xf32>
    %cst_68 = arith.constant dense<0.000000e+00> : vector<8xf32>
    %173 = vector.multi_reduction <add>, %172, %cst_68 [1] : vector<8x128xf32> to vector<8xf32>
    %174 = vector.shape_cast %173 : vector<8xf32> to vector<8x1xf32>
    %cst_69 = arith.constant 1.280000e+02 : f32
    %175 = vector.broadcast %cst_69 : f32 to vector<8x1xf32>
    %176 = arith.divf %174, %175 : vector<8x1xf32>
    %177 = vector.broadcast %167 : vector<8x1xf32> to vector<8x128xf32>
    %178 = arith.subf %163, %177 : vector<8x128xf32>
    %cst_70 = arith.constant 9.99999974E-6 : f32
    %179 = vector.broadcast %cst_70 : f32 to vector<8x1xf32>
    %180 = arith.addf %176, %179 : vector<8x1xf32>
    %181 = math.rsqrt %180 : vector<8x1xf32>
    %182 = vector.broadcast %181 : vector<8x1xf32> to vector<8x128xf32>
    %183 = arith.mulf %178, %182 : vector<8x128xf32>
    %184 = vector.broadcast %150 : vector<1x128xf32> to vector<8x128xf32>
    %185 = arith.mulf %183, %184 : vector<8x128xf32>
    %186 = vector.broadcast %152 : vector<1x128xf32> to vector<8x128xf32>
    %187 = arith.addf %185, %186 : vector<8x128xf32>
    %c0_71 = arith.constant 0 : index
    %c0_72 = arith.constant 0 : index
    %188 = vector.load %arg18[%c0_71, %c0_72] : memref<8x128xf32, #tpu.memory_space<vmem>>, vector<8x128xf32>
    tpu.vector_store %arg18[%c0_71, %c0_72], %187 {strides = array<i32>} : memref<8x128xf32, #tpu.memory_space<vmem>>, vector<8x128xf32>,
    %c1_i32 = arith.constant 1 : i32
    %189 = arith.cmpi eq, %arg1, %c1_i32 : i32
    %190 = arith.extui %189 : i1 to i32
    %c0_i32_73 = arith.constant 0 : i32
    %191 = arith.cmpi ne, %190, %c0_i32_73 : i32
    scf.if %191 {
      %c0_74 = arith.constant 0 : index
      %c0_75 = arith.constant 0 : index
      %192 = vector.load %arg15[%c0_74, %c0_75] : memref<1x128xf32, #tpu.memory_space<vmem>>, vector<1x128xf32>
      %c0_76 = arith.constant 0 : index
      %c0_77 = arith.constant 0 : index
      %193 = vector.load %arg16[%c0_76, %c0_77] : memref<1x128xf32, #tpu.memory_space<vmem>>, vector<1x128xf32>
      %cst_78 = arith.constant dense<0.000000e+00> : vector<8xf32>
      %194 = vector.multi_reduction <add>, %187, %cst_78 [1] : vector<8x128xf32> to vector<8xf32>
      %195 = vector.shape_cast %194 : vector<8xf32> to vector<8x1xf32>
      %cst_79 = arith.constant 1.280000e+02 : f32
      %196 = vector.broadcast %cst_79 : f32 to vector<8x1xf32>
      %197 = arith.divf %195, %196 : vector<8x1xf32>
      %198 = vector.broadcast %197 : vector<8x1xf32> to vector<8x128xf32>
      %199 = arith.subf %187, %198 : vector<8x128xf32>
      %200 = vector.broadcast %197 : vector<8x1xf32> to vector<8x128xf32>
      %201 = arith.subf %187, %200 : vector<8x128xf32>
      %202 = arith.mulf %199, %201 : vector<8x128xf32>
      %cst_80 = arith.constant dense<0.000000e+00> : vector<8xf32>
      %203 = vector.multi_reduction <add>, %202, %cst_80 [1] : vector<8x128xf32> to vector<8xf32>
      %204 = vector.shape_cast %203 : vector<8xf32> to vector<8x1xf32>
      %cst_81 = arith.constant 1.280000e+02 : f32
      %205 = vector.broadcast %cst_81 : f32 to vector<8x1xf32>
      %206 = arith.divf %204, %205 : vector<8x1xf32>
      %207 = vector.broadcast %197 : vector<8x1xf32> to vector<8x128xf32>
      %208 = arith.subf %187, %207 : vector<8x128xf32>
      %cst_82 = arith.constant 9.99999974E-6 : f32
      %209 = vector.broadcast %cst_82 : f32 to vector<8x1xf32>
      %210 = arith.addf %206, %209 : vector<8x1xf32>
      %211 = math.rsqrt %210 : vector<8x1xf32>
      %212 = vector.broadcast %211 : vector<8x1xf32> to vector<8x128xf32>
      %213 = arith.mulf %208, %212 : vector<8x128xf32>
      %214 = vector.broadcast %192 : vector<1x128xf32> to vector<8x128xf32>
      %215 = arith.mulf %213, %214 : vector<8x128xf32>
      %216 = vector.broadcast %193 : vector<1x128xf32> to vector<8x128xf32>
      %217 = arith.addf %215, %216 : vector<8x128xf32>
      %218 = vector.shape_cast %217 : vector<8x128xf32> to vector<1x8x128xf32>
      %219 = arith.truncf %218 : vector<1x8x128xf32> to vector<1x8x128xbf16>
      %c0_83 = arith.constant 0 : index
      %c0_84 = arith.constant 0 : index
      %c0_85 = arith.constant 0 : index
      %220 = vector.load %arg17[%c0_83, %c0_84, %c0_85] : memref<1x8x128xbf16, #tpu.memory_space<vmem>>, vector<1x8x128xbf16>
      tpu.vector_store %arg17[%c0_83, %c0_84, %c0_85], %219 {strides = array<i32>} : memref<1x8x128xbf16, #tpu.memory_space<vmem>>, vector<1x8x128xbf16>,
    } else {
    }
    return
  }
  func.func @transform_0(%arg0: i32, %arg1: i32) -> (i32, i32, i32) {
    %c0_i32 = arith.constant 0 : i32
    %c0_i32_0 = arith.constant 0 : i32
    %c0_i32_1 = arith.constant 0 : i32
    return %arg0, %c0_i32, %c0_i32_0 : i32, i32, i32
  }
  func.func @transform_1(%arg0: i32, %arg1: i32) -> (i32, i32, i32) {
    %c0_i32 = arith.constant 0 : i32
    %c0_i32_0 = arith.constant 0 : i32
    %c0_i32_1 = arith.constant 0 : i32
    return %arg1, %c0_i32, %c0_i32_0 : i32, i32, i32
  }
  func.func @transform_2(%arg0: i32, %arg1: i32) -> (i32, i32, i32) {
    %c0_i32 = arith.constant 0 : i32
    %c0_i32_0 = arith.constant 0 : i32
    %c0_i32_1 = arith.constant 0 : i32
    return %arg1, %c0_i32, %c0_i32_0 : i32, i32, i32
  }
  func.func @transform_3(%arg0: i32, %arg1: i32) -> (i32, i32, i32) {
    %c0_i32 = arith.constant 0 : i32
    %c0_i32_0 = arith.constant 0 : i32
    %c0_i32_1 = arith.constant 0 : i32
    return %arg1, %c0_i32, %c0_i32_0 : i32, i32, i32
  }
  func.func @transform_4(%arg0: i32, %arg1: i32) -> (i32, i32, i32) {
    %c0_i32 = arith.constant 0 : i32
    %c0_i32_0 = arith.constant 0 : i32
    %c0_i32_1 = arith.constant 0 : i32
    return %arg1, %c0_i32, %c0_i32_0 : i32, i32, i32
  }
  func.func @transform_5(%arg0: i32, %arg1: i32) -> (i32, i32, i32) {
    %c0_i32 = arith.constant 0 : i32
    %c0_i32_0 = arith.constant 0 : i32
    %c0_i32_1 = arith.constant 0 : i32
    return %arg1, %c0_i32, %c0_i32_0 : i32, i32, i32
  }
  func.func @transform_6(%arg0: i32, %arg1: i32) -> (i32, i32, i32) {
    %c0_i32 = arith.constant 0 : i32
    %c0_i32_0 = arith.constant 0 : i32
    %c0_i32_1 = arith.constant 0 : i32
    return %arg1, %c0_i32, %c0_i32_0 : i32, i32, i32
  }
  func.func @transform_7(%arg0: i32, %arg1: i32) -> (i32, i32, i32) {
    %c0_i32 = arith.constant 0 : i32
    %c0_i32_0 = arith.constant 0 : i32
    %c0_i32_1 = arith.constant 0 : i32
    return %arg1, %c0_i32, %c0_i32_0 : i32, i32, i32
  }
  func.func @transform_8(%arg0: i32, %arg1: i32) -> (i32, i32, i32) {
    %c0_i32 = arith.constant 0 : i32
    %c0_i32_0 = arith.constant 0 : i32
    %c0_i32_1 = arith.constant 0 : i32
    return %arg1, %c0_i32, %c0_i32_0 : i32, i32, i32
  }
  func.func @transform_9(%arg0: i32, %arg1: i32) -> (i32, i32, i32) {
    %c0_i32 = arith.constant 0 : i32
    %c0_i32_0 = arith.constant 0 : i32
    %c0_i32_1 = arith.constant 0 : i32
    return %arg1, %c0_i32, %c0_i32_0 : i32, i32, i32
  }
  func.func @transform_10(%arg0: i32, %arg1: i32) -> (i32, i32, i32) {
    %c0_i32 = arith.constant 0 : i32
    %c0_i32_0 = arith.constant 0 : i32
    %c0_i32_1 = arith.constant 0 : i32
    return %arg1, %c0_i32, %c0_i32_0 : i32, i32, i32
  }
  func.func @transform_11(%arg0: i32, %arg1: i32) -> (i32, i32, i32) {
    %c0_i32 = arith.constant 0 : i32
    %c0_i32_0 = arith.constant 0 : i32
    %c0_i32_1 = arith.constant 0 : i32
    return %arg1, %c0_i32, %c0_i32_0 : i32, i32, i32
  }
  func.func @transform_12(%arg0: i32, %arg1: i32) -> (i32, i32, i32) {
    %c0_i32 = arith.constant 0 : i32
    %c0_i32_0 = arith.constant 0 : i32
    %c0_i32_1 = arith.constant 0 : i32
    return %arg1, %c0_i32, %c0_i32_0 : i32, i32, i32
  }
  func.func @transform_13(%arg0: i32, %arg1: i32) -> (i32, i32) {
    %c0_i32 = arith.constant 0 : i32
    %c0_i32_0 = arith.constant 0 : i32
    %c0_i32_1 = arith.constant 0 : i32
    return %c0_i32, %c0_i32_0 : i32, i32
  }
  func.func @transform_14(%arg0: i32, %arg1: i32) -> (i32, i32) {
    %c0_i32 = arith.constant 0 : i32
    %c0_i32_0 = arith.constant 0 : i32
    %c0_i32_1 = arith.constant 0 : i32
    return %c0_i32, %c0_i32_0 : i32, i32
  }
  func.func @transform_15(%arg0: i32, %arg1: i32) -> (i32, i32, i32) {
    %c0_i32 = arith.constant 0 : i32
    %c0_i32_0 = arith.constant 0 : i32
    %c0_i32_1 = arith.constant 0 : i32
    return %arg0, %c0_i32, %c0_i32_0 : i32, i32, i32
  }
}

module attributes {stable_mosaic.version = 11 : i64} {
  func.func @_proj_kernel(%arg0: i32, %arg1: i32, %arg2: memref<8x128xbf16, #tpu.memory_space<vmem>>, %arg3: memref<128x256xbf16, #tpu.memory_space<vmem>>, %arg4: memref<1x256xf32, #tpu.memory_space<vmem>>, %arg5: memref<8x256xf32, #tpu.memory_space<vmem>>) attributes {dimension_semantics = [#tpu.dimension_semantics<parallel>, #tpu.dimension_semantics<parallel>], iteration_bounds = array<i64: 2, 1>, scalar_prefetch = 0 : i64, scratch_operands = 0 : i64, tpu.core_type = #tpu.core_type<tc>, window_params = [{transform_indices = @transform_0, window_bounds = array<i64: 8, 128>}, {transform_indices = @transform_1, window_bounds = array<i64: 128, 256>}, {transform_indices = @transform_2, window_bounds = array<i64: 1, 256>}, {transform_indices = @transform_3, window_bounds = array<i64: 8, 256>}]} {
    %c0 = arith.constant 0 : index
    %c0_0 = arith.constant 0 : index
    %0 = vector.load %arg2[%c0, %c0_0] : memref<8x128xbf16, #tpu.memory_space<vmem>>, vector<8x128xbf16>
    %c0_1 = arith.constant 0 : index
    %c0_2 = arith.constant 0 : index
    %1 = vector.load %arg3[%c0_1, %c0_2] : memref<128x256xbf16, #tpu.memory_space<vmem>>, vector<128x256xbf16>
    %cst = arith.constant dense<0.000000e+00> : vector<8x256xf32>
    %2 = tpu.matmul %0, %1, %cst {dimension_numbers = #tpu.dot_dimension_numbers<[1], [0], [0], [1], [0, 0, 1, 1], [], []>} : vector<8x128xbf16>, vector<128x256xbf16>, vector<8x256xf32> -> vector<8x256xf32>
    %c0_3 = arith.constant 0 : index
    %c0_4 = arith.constant 0 : index
    %3 = vector.load %arg4[%c0_3, %c0_4] : memref<1x256xf32, #tpu.memory_space<vmem>>, vector<1x256xf32>
    %4 = vector.broadcast %3 : vector<1x256xf32> to vector<8x256xf32>
    %5 = arith.addf %2, %4 : vector<8x256xf32>
    %c0_5 = arith.constant 0 : index
    %c0_6 = arith.constant 0 : index
    %6 = vector.load %arg5[%c0_5, %c0_6] : memref<8x256xf32, #tpu.memory_space<vmem>>, vector<8x256xf32>
    tpu.vector_store %arg5[%c0_5, %c0_6], %5 {strides = array<i32>} : memref<8x256xf32, #tpu.memory_space<vmem>>, vector<8x256xf32>,
    return
  }
  func.func @transform_0(%arg0: i32, %arg1: i32) -> (i32, i32) {
    %c0_i32 = arith.constant 0 : i32
    %c0_i32_0 = arith.constant 0 : i32
    return %arg0, %c0_i32 : i32, i32
  }
  func.func @transform_1(%arg0: i32, %arg1: i32) -> (i32, i32) {
    %c0_i32 = arith.constant 0 : i32
    %c0_i32_0 = arith.constant 0 : i32
    return %c0_i32, %arg1 : i32, i32
  }
  func.func @transform_2(%arg0: i32, %arg1: i32) -> (i32, i32) {
    %c0_i32 = arith.constant 0 : i32
    %c0_i32_0 = arith.constant 0 : i32
    return %c0_i32, %arg1 : i32, i32
  }
  func.func @transform_3(%arg0: i32, %arg1: i32) -> (i32, i32) {
    %c0_i32 = arith.constant 0 : i32
    return %arg0, %arg1 : i32, i32
  }
}

module attributes {stable_mosaic.version = 11 : i64} {
  func.func @_decoder_stack_kernel(%arg0: i32, %arg1: i32, %arg2: memref<1x8x128xbf16, #tpu.memory_space<vmem>>, %arg3: memref<1x8x128xbf16, #tpu.memory_space<vmem>>, %arg4: memref<1x128x384xbf16, #tpu.memory_space<vmem>>, %arg5: memref<1x1x384xf32, #tpu.memory_space<vmem>>, %arg6: memref<1x128x128xbf16, #tpu.memory_space<vmem>>, %arg7: memref<1x1x128xf32, #tpu.memory_space<vmem>>, %arg8: memref<1x1x128xf32, #tpu.memory_space<vmem>>, %arg9: memref<1x1x128xf32, #tpu.memory_space<vmem>>, %arg10: memref<1x128x128xbf16, #tpu.memory_space<vmem>>, %arg11: memref<1x1x128xf32, #tpu.memory_space<vmem>>, %arg12: memref<1x128x256xbf16, #tpu.memory_space<vmem>>, %arg13: memref<1x1x256xf32, #tpu.memory_space<vmem>>, %arg14: memref<1x128x128xbf16, #tpu.memory_space<vmem>>, %arg15: memref<1x1x128xf32, #tpu.memory_space<vmem>>, %arg16: memref<1x1x128xf32, #tpu.memory_space<vmem>>, %arg17: memref<1x1x128xf32, #tpu.memory_space<vmem>>, %arg18: memref<1x128x512xbf16, #tpu.memory_space<vmem>>, %arg19: memref<1x1x512xf32, #tpu.memory_space<vmem>>, %arg20: memref<1x512x128xbf16, #tpu.memory_space<vmem>>, %arg21: memref<1x1x128xf32, #tpu.memory_space<vmem>>, %arg22: memref<1x1x128xf32, #tpu.memory_space<vmem>>, %arg23: memref<1x1x128xf32, #tpu.memory_space<vmem>>, %arg24: memref<1x128xf32, #tpu.memory_space<vmem>>, %arg25: memref<1x128xf32, #tpu.memory_space<vmem>>, %arg26: memref<1x8x128xbf16, #tpu.memory_space<vmem>>, %arg27: memref<8x128xf32, #tpu.memory_space<vmem>>) attributes {dimension_semantics = [#tpu.dimension_semantics<parallel>, #tpu.dimension_semantics<arbitrary>], iteration_bounds = array<i64: 2, 2>, scalar_prefetch = 0 : i64, scratch_operands = 1 : i64, tpu.core_type = #tpu.core_type<tc>, window_params = [{transform_indices = @transform_0, window_bounds = array<i64: 1, 8, 128>}, {transform_indices = @transform_1, window_bounds = array<i64: 1, 8, 128>}, {transform_indices = @transform_2, window_bounds = array<i64: 1, 128, 384>}, {transform_indices = @transform_3, window_bounds = array<i64: 1, 1, 384>}, {transform_indices = @transform_4, window_bounds = array<i64: 1, 128, 128>}, {transform_indices = @transform_5, window_bounds = array<i64: 1, 1, 128>}, {transform_indices = @transform_6, window_bounds = array<i64: 1, 1, 128>}, {transform_indices = @transform_7, window_bounds = array<i64: 1, 1, 128>}, {transform_indices = @transform_8, window_bounds = array<i64: 1, 128, 128>}, {transform_indices = @transform_9, window_bounds = array<i64: 1, 1, 128>}, {transform_indices = @transform_10, window_bounds = array<i64: 1, 128, 256>}, {transform_indices = @transform_11, window_bounds = array<i64: 1, 1, 256>}, {transform_indices = @transform_12, window_bounds = array<i64: 1, 128, 128>}, {transform_indices = @transform_13, window_bounds = array<i64: 1, 1, 128>}, {transform_indices = @transform_14, window_bounds = array<i64: 1, 1, 128>}, {transform_indices = @transform_15, window_bounds = array<i64: 1, 1, 128>}, {transform_indices = @transform_16, window_bounds = array<i64: 1, 128, 512>}, {transform_indices = @transform_17, window_bounds = array<i64: 1, 1, 512>}, {transform_indices = @transform_18, window_bounds = array<i64: 1, 512, 128>}, {transform_indices = @transform_19, window_bounds = array<i64: 1, 1, 128>}, {transform_indices = @transform_20, window_bounds = array<i64: 1, 1, 128>}, {transform_indices = @transform_21, window_bounds = array<i64: 1, 1, 128>}, {pipeline_mode = #tpu.pipeline_mode<synchronous>, transform_indices = @transform_22, window_bounds = array<i64: 1, 128>}, {pipeline_mode = #tpu.pipeline_mode<synchronous>, transform_indices = @transform_23, window_bounds = array<i64: 1, 128>}, {transform_indices = @transform_24, window_bounds = array<i64: 1, 8, 128>}]} {
    %c0_i32 = arith.constant 0 : i32
    %0 = arith.cmpi eq, %arg1, %c0_i32 : i32
    %1 = arith.extui %0 : i1 to i32
    %c0_i32_0 = arith.constant 0 : i32
    %2 = arith.cmpi ne, %1, %c0_i32_0 : i32
    scf.if %2 {
      %c0_143 = arith.constant 0 : index
      %c0_144 = arith.constant 0 : index
      %c0_145 = arith.constant 0 : index
      %380 = vector.load %arg2[%c0_143, %c0_144, %c0_145] : memref<1x8x128xbf16, #tpu.memory_space<vmem>>, vector<1x8x128xbf16>
      %381 = vector.shape_cast %380 : vector<1x8x128xbf16> to vector<8x128xbf16>
      %382 = arith.extf %381 : vector<8x128xbf16> to vector<8x128xf32>
      %c0_146 = arith.constant 0 : index
      %c0_147 = arith.constant 0 : index
      %383 = vector.load %arg27[%c0_146, %c0_147] : memref<8x128xf32, #tpu.memory_space<vmem>>, vector<8x128xf32>
      tpu.vector_store %arg27[%c0_146, %c0_147], %382 {strides = array<i32>} : memref<8x128xf32, #tpu.memory_space<vmem>>, vector<8x128xf32>,
    } else {
    }
    %c0 = arith.constant 0 : index
    %c0_1 = arith.constant 0 : index
    %3 = vector.load %arg27[%c0, %c0_1] : memref<8x128xf32, #tpu.memory_space<vmem>>, vector<8x128xf32>
    %c0_2 = arith.constant 0 : index
    %c0_3 = arith.constant 0 : index
    %c0_4 = arith.constant 0 : index
    %4 = vector.load %arg3[%c0_2, %c0_3, %c0_4] : memref<1x8x128xbf16, #tpu.memory_space<vmem>>, vector<1x8x128xbf16>
    %5 = vector.shape_cast %4 : vector<1x8x128xbf16> to vector<8x128xbf16>
    %6 = tpu.iota {dimensions = array<i32: 0>} : vector<8x8xi32>
    %7 = tpu.iota {dimensions = array<i32: 1>} : vector<8x8xi32>
    %c8_i32 = arith.constant 8 : i32
    %c0_i32_5 = arith.constant 0 : i32
    %8 = arith.cmpi eq, %c8_i32, %c0_i32_5 : i32
    %c1_i32 = arith.constant 1 : i32
    %9 = arith.select %8, %c1_i32, %c8_i32 : i32
    %10 = vector.broadcast %9 : i32 to vector<8x8xi32>
    %11 = arith.remsi %7, %10 : vector<8x8xi32>
    %c0_i32_6 = arith.constant 0 : i32
    %12 = vector.broadcast %c0_i32_6 : i32 to vector<8x8xi32>
    %13 = arith.cmpi ne, %11, %12 : vector<8x8xi32>
    %c0_i32_7 = arith.constant 0 : i32
    %14 = vector.broadcast %c0_i32_7 : i32 to vector<8x8xi32>
    %15 = arith.cmpi slt, %11, %14 : vector<8x8xi32>
    %c0_i32_8 = arith.constant 0 : i32
    %16 = arith.cmpi slt, %9, %c0_i32_8 : i32
    %17 = vector.broadcast %16 : i1 to vector<8x8xi1>
    %18 = vector.broadcast %17 : vector<8x8xi1> to vector<8x8xi1>
    %19 = arith.xori %15, %18 : vector<8x8xi1>
    %20 = arith.andi %19, %13 : vector<8x8xi1>
    %21 = vector.broadcast %9 : i32 to vector<8x8xi32>
    %22 = arith.addi %11, %21 : vector<8x8xi32>
    %23 = arith.select %20, %22, %11 : vector<8x8xi1>, vector<8x8xi32>
    %c8_i32_9 = arith.constant 8 : i32
    %c0_i32_10 = arith.constant 0 : i32
    %24 = arith.cmpi eq, %c8_i32_9, %c0_i32_10 : i32
    %c1_i32_11 = arith.constant 1 : i32
    %25 = arith.select %24, %c1_i32_11, %c8_i32_9 : i32
    %26 = vector.broadcast %25 : i32 to vector<8x8xi32>
    %27 = arith.remsi %6, %26 : vector<8x8xi32>
    %c0_i32_12 = arith.constant 0 : i32
    %28 = vector.broadcast %c0_i32_12 : i32 to vector<8x8xi32>
    %29 = arith.cmpi ne, %27, %28 : vector<8x8xi32>
    %c0_i32_13 = arith.constant 0 : i32
    %30 = vector.broadcast %c0_i32_13 : i32 to vector<8x8xi32>
    %31 = arith.cmpi slt, %27, %30 : vector<8x8xi32>
    %c0_i32_14 = arith.constant 0 : i32
    %32 = arith.cmpi slt, %25, %c0_i32_14 : i32
    %33 = vector.broadcast %32 : i1 to vector<8x8xi1>
    %34 = vector.broadcast %33 : vector<8x8xi1> to vector<8x8xi1>
    %35 = arith.xori %31, %34 : vector<8x8xi1>
    %36 = arith.andi %35, %29 : vector<8x8xi1>
    %37 = vector.broadcast %25 : i32 to vector<8x8xi32>
    %38 = arith.addi %27, %37 : vector<8x8xi32>
    %39 = arith.select %36, %38, %27 : vector<8x8xi1>, vector<8x8xi32>
    %40 = arith.cmpi sle, %23, %39 : vector<8x8xi32>
    %c0_15 = arith.constant 0 : index
    %c0_16 = arith.constant 0 : index
    %c0_17 = arith.constant 0 : index
    %41 = vector.load %arg4[%c0_15, %c0_16, %c0_17] : memref<1x128x384xbf16, #tpu.memory_space<vmem>>, vector<1x128x384xbf16>
    %42 = vector.shape_cast %41 : vector<1x128x384xbf16> to vector<128x384xbf16>
    %c0_18 = arith.constant 0 : index
    %c0_19 = arith.constant 0 : index
    %c0_20 = arith.constant 0 : index
    %43 = vector.load %arg5[%c0_18, %c0_19, %c0_20] : memref<1x1x384xf32, #tpu.memory_space<vmem>>, vector<1x1x384xf32>
    %44 = vector.shape_cast %43 : vector<1x1x384xf32> to vector<1x384xf32>
    %c0_21 = arith.constant 0 : index
    %c0_22 = arith.constant 0 : index
    %c0_23 = arith.constant 0 : index
    %45 = vector.load %arg6[%c0_21, %c0_22, %c0_23] : memref<1x128x128xbf16, #tpu.memory_space<vmem>>, vector<1x128x128xbf16>
    %46 = vector.shape_cast %45 : vector<1x128x128xbf16> to vector<128x128xbf16>
    %c0_24 = arith.constant 0 : index
    %c0_25 = arith.constant 0 : index
    %c0_26 = arith.constant 0 : index
    %47 = vector.load %arg7[%c0_24, %c0_25, %c0_26] : memref<1x1x128xf32, #tpu.memory_space<vmem>>, vector<1x1x128xf32>
    %48 = vector.shape_cast %47 : vector<1x1x128xf32> to vector<1x128xf32>
    %c0_27 = arith.constant 0 : index
    %c0_28 = arith.constant 0 : index
    %c0_29 = arith.constant 0 : index
    %49 = vector.load %arg8[%c0_27, %c0_28, %c0_29] : memref<1x1x128xf32, #tpu.memory_space<vmem>>, vector<1x1x128xf32>
    %50 = vector.shape_cast %49 : vector<1x1x128xf32> to vector<1x128xf32>
    %c0_30 = arith.constant 0 : index
    %c0_31 = arith.constant 0 : index
    %c0_32 = arith.constant 0 : index
    %51 = vector.load %arg9[%c0_30, %c0_31, %c0_32] : memref<1x1x128xf32, #tpu.memory_space<vmem>>, vector<1x1x128xf32>
    %52 = vector.shape_cast %51 : vector<1x1x128xf32> to vector<1x128xf32>
    %53 = arith.truncf %3 : vector<8x128xf32> to vector<8x128xbf16>
    %cst = arith.constant dense<0.000000e+00> : vector<8x384xf32>
    %54 = tpu.matmul %53, %42, %cst {dimension_numbers = #tpu.dot_dimension_numbers<[1], [0], [0], [1], [0, 0, 1, 1], [], []>} : vector<8x128xbf16>, vector<128x384xbf16>, vector<8x384xf32> -> vector<8x384xf32>
    %55 = vector.broadcast %44 : vector<1x384xf32> to vector<8x384xf32>
    %56 = arith.addf %54, %55 : vector<8x384xf32>
    %57 = vector.extract_strided_slice %56 {offsets = [0, 0], sizes = [8, 128], strides = [1, 1]} : vector<8x384xf32> to vector<8x128xf32>
    %58 = vector.extract_strided_slice %56 {offsets = [0, 128], sizes = [8, 128], strides = [1, 1]} : vector<8x384xf32> to vector<8x128xf32>
    %59 = vector.extract_strided_slice %56 {offsets = [0, 256], sizes = [8, 128], strides = [1, 1]} : vector<8x384xf32> to vector<8x128xf32>
    %60 = vector.broadcast %48 : vector<1x128xf32> to vector<8x128xf32>
    %61 = arith.addf %3, %60 : vector<8x128xf32>
    %62 = vector.extract_strided_slice %57 {offsets = [0, 0], sizes = [8, 32], strides = [1, 1]} : vector<8x128xf32> to vector<8x32xf32>
    %63 = arith.truncf %62 : vector<8x32xf32> to vector<8x32xbf16>
    %64 = vector.extract_strided_slice %58 {offsets = [0, 0], sizes = [8, 32], strides = [1, 1]} : vector<8x128xf32> to vector<8x32xf32>
    %65 = arith.truncf %64 : vector<8x32xf32> to vector<8x32xbf16>
    %66 = vector.extract_strided_slice %59 {offsets = [0, 0], sizes = [8, 32], strides = [1, 1]} : vector<8x128xf32> to vector<8x32xf32>
    %67 = arith.truncf %66 : vector<8x32xf32> to vector<8x32xbf16>
    %cst_33 = arith.constant dense<0.000000e+00> : vector<8x8xf32>
    %68 = tpu.matmul %63, %65, %cst_33 {dimension_numbers = #tpu.dot_dimension_numbers<[1], [1], [0], [0], [0, 0, 1, 0], [], []>} : vector<8x32xbf16>, vector<8x32xbf16>, vector<8x8xf32> -> vector<8x8xf32>
    %cst_34 = arith.constant -1.000000e+09 : f32
    %69 = vector.broadcast %cst_34 : f32 to vector<8x8xf32>
    %70 = arith.select %40, %68, %69 : vector<8x8xi1>, vector<8x8xf32>
    %cst_35 = arith.constant dense<0xFF800000> : vector<8xf32>
    %71 = vector.multi_reduction <maximumf>, %70, %cst_35 [1] : vector<8x8xf32> to vector<8xf32>
    %72 = vector.shape_cast %71 : vector<8xf32> to vector<8x1xf32>
    %73 = vector.broadcast %72 : vector<8x1xf32> to vector<8x8xf32>
    %74 = arith.subf %70, %73 : vector<8x8xf32>
    %75 = math.exp %74 : vector<8x8xf32>
    %cst_36 = arith.constant dense<0.000000e+00> : vector<8xf32>
    %76 = vector.multi_reduction <add>, %75, %cst_36 [1] : vector<8x8xf32> to vector<8xf32>
    %77 = vector.shape_cast %76 : vector<8xf32> to vector<8x1xf32>
    %78 = tpu.reciprocal %77 {approx = true} : vector<8x1xf32> -> vector<8x1xf32>
    %79 = vector.broadcast %78 : vector<8x1xf32> to vector<8x8xf32>
    %80 = arith.mulf %75, %79 : vector<8x8xf32>
    %81 = arith.truncf %80 : vector<8x8xf32> to vector<8x8xbf16>
    %cst_37 = arith.constant dense<0.000000e+00> : vector<8x32xf32>
    %82 = tpu.matmul %81, %67, %cst_37 {dimension_numbers = #tpu.dot_dimension_numbers<[1], [0], [0], [1], [0, 0, 1, 1], [], []>} : vector<8x8xbf16>, vector<8x32xbf16>, vector<8x32xf32> -> vector<8x32xf32>
    %83 = arith.truncf %82 : vector<8x32xf32> to vector<8x32xbf16>
    %84 = vector.extract_strided_slice %46 {offsets = [0, 0], sizes = [32, 128], strides = [1, 1]} : vector<128x128xbf16> to vector<32x128xbf16>
    %cst_38 = arith.constant dense<0.000000e+00> : vector<8x128xf32>
    %85 = tpu.matmul %83, %84, %cst_38 {dimension_numbers = #tpu.dot_dimension_numbers<[1], [0], [0], [1], [0, 0, 1, 1], [], []>} : vector<8x32xbf16>, vector<32x128xbf16>, vector<8x128xf32> -> vector<8x128xf32>
    %86 = arith.addf %61, %85 : vector<8x128xf32>
    %87 = vector.extract_strided_slice %57 {offsets = [0, 32], sizes = [8, 32], strides = [1, 1]} : vector<8x128xf32> to vector<8x32xf32>
    %88 = arith.truncf %87 : vector<8x32xf32> to vector<8x32xbf16>
    %89 = vector.extract_strided_slice %58 {offsets = [0, 32], sizes = [8, 32], strides = [1, 1]} : vector<8x128xf32> to vector<8x32xf32>
    %90 = arith.truncf %89 : vector<8x32xf32> to vector<8x32xbf16>
    %91 = vector.extract_strided_slice %59 {offsets = [0, 32], sizes = [8, 32], strides = [1, 1]} : vector<8x128xf32> to vector<8x32xf32>
    %92 = arith.truncf %91 : vector<8x32xf32> to vector<8x32xbf16>
    %cst_39 = arith.constant dense<0.000000e+00> : vector<8x8xf32>
    %93 = tpu.matmul %88, %90, %cst_39 {dimension_numbers = #tpu.dot_dimension_numbers<[1], [1], [0], [0], [0, 0, 1, 0], [], []>} : vector<8x32xbf16>, vector<8x32xbf16>, vector<8x8xf32> -> vector<8x8xf32>
    %cst_40 = arith.constant -1.000000e+09 : f32
    %94 = vector.broadcast %cst_40 : f32 to vector<8x8xf32>
    %95 = arith.select %40, %93, %94 : vector<8x8xi1>, vector<8x8xf32>
    %cst_41 = arith.constant dense<0xFF800000> : vector<8xf32>
    %96 = vector.multi_reduction <maximumf>, %95, %cst_41 [1] : vector<8x8xf32> to vector<8xf32>
    %97 = vector.shape_cast %96 : vector<8xf32> to vector<8x1xf32>
    %98 = vector.broadcast %97 : vector<8x1xf32> to vector<8x8xf32>
    %99 = arith.subf %95, %98 : vector<8x8xf32>
    %100 = math.exp %99 : vector<8x8xf32>
    %cst_42 = arith.constant dense<0.000000e+00> : vector<8xf32>
    %101 = vector.multi_reduction <add>, %100, %cst_42 [1] : vector<8x8xf32> to vector<8xf32>
    %102 = vector.shape_cast %101 : vector<8xf32> to vector<8x1xf32>
    %103 = tpu.reciprocal %102 {approx = true} : vector<8x1xf32> -> vector<8x1xf32>
    %104 = vector.broadcast %103 : vector<8x1xf32> to vector<8x8xf32>
    %105 = arith.mulf %100, %104 : vector<8x8xf32>
    %106 = arith.truncf %105 : vector<8x8xf32> to vector<8x8xbf16>
    %cst_43 = arith.constant dense<0.000000e+00> : vector<8x32xf32>
    %107 = tpu.matmul %106, %92, %cst_43 {dimension_numbers = #tpu.dot_dimension_numbers<[1], [0], [0], [1], [0, 0, 1, 1], [], []>} : vector<8x8xbf16>, vector<8x32xbf16>, vector<8x32xf32> -> vector<8x32xf32>
    %108 = arith.truncf %107 : vector<8x32xf32> to vector<8x32xbf16>
    %109 = vector.extract_strided_slice %46 {offsets = [32, 0], sizes = [32, 128], strides = [1, 1]} : vector<128x128xbf16> to vector<32x128xbf16>
    %cst_44 = arith.constant dense<0.000000e+00> : vector<8x128xf32>
    %110 = tpu.matmul %108, %109, %cst_44 {dimension_numbers = #tpu.dot_dimension_numbers<[1], [0], [0], [1], [0, 0, 1, 1], [], []>} : vector<8x32xbf16>, vector<32x128xbf16>, vector<8x128xf32> -> vector<8x128xf32>
    %111 = arith.addf %86, %110 : vector<8x128xf32>
    %112 = vector.extract_strided_slice %57 {offsets = [0, 64], sizes = [8, 32], strides = [1, 1]} : vector<8x128xf32> to vector<8x32xf32>
    %113 = arith.truncf %112 : vector<8x32xf32> to vector<8x32xbf16>
    %114 = vector.extract_strided_slice %58 {offsets = [0, 64], sizes = [8, 32], strides = [1, 1]} : vector<8x128xf32> to vector<8x32xf32>
    %115 = arith.truncf %114 : vector<8x32xf32> to vector<8x32xbf16>
    %116 = vector.extract_strided_slice %59 {offsets = [0, 64], sizes = [8, 32], strides = [1, 1]} : vector<8x128xf32> to vector<8x32xf32>
    %117 = arith.truncf %116 : vector<8x32xf32> to vector<8x32xbf16>
    %cst_45 = arith.constant dense<0.000000e+00> : vector<8x8xf32>
    %118 = tpu.matmul %113, %115, %cst_45 {dimension_numbers = #tpu.dot_dimension_numbers<[1], [1], [0], [0], [0, 0, 1, 0], [], []>} : vector<8x32xbf16>, vector<8x32xbf16>, vector<8x8xf32> -> vector<8x8xf32>
    %cst_46 = arith.constant -1.000000e+09 : f32
    %119 = vector.broadcast %cst_46 : f32 to vector<8x8xf32>
    %120 = arith.select %40, %118, %119 : vector<8x8xi1>, vector<8x8xf32>
    %cst_47 = arith.constant dense<0xFF800000> : vector<8xf32>
    %121 = vector.multi_reduction <maximumf>, %120, %cst_47 [1] : vector<8x8xf32> to vector<8xf32>
    %122 = vector.shape_cast %121 : vector<8xf32> to vector<8x1xf32>
    %123 = vector.broadcast %122 : vector<8x1xf32> to vector<8x8xf32>
    %124 = arith.subf %120, %123 : vector<8x8xf32>
    %125 = math.exp %124 : vector<8x8xf32>
    %cst_48 = arith.constant dense<0.000000e+00> : vector<8xf32>
    %126 = vector.multi_reduction <add>, %125, %cst_48 [1] : vector<8x8xf32> to vector<8xf32>
    %127 = vector.shape_cast %126 : vector<8xf32> to vector<8x1xf32>
    %128 = tpu.reciprocal %127 {approx = true} : vector<8x1xf32> -> vector<8x1xf32>
    %129 = vector.broadcast %128 : vector<8x1xf32> to vector<8x8xf32>
    %130 = arith.mulf %125, %129 : vector<8x8xf32>
    %131 = arith.truncf %130 : vector<8x8xf32> to vector<8x8xbf16>
    %cst_49 = arith.constant dense<0.000000e+00> : vector<8x32xf32>
    %132 = tpu.matmul %131, %117, %cst_49 {dimension_numbers = #tpu.dot_dimension_numbers<[1], [0], [0], [1], [0, 0, 1, 1], [], []>} : vector<8x8xbf16>, vector<8x32xbf16>, vector<8x32xf32> -> vector<8x32xf32>
    %133 = arith.truncf %132 : vector<8x32xf32> to vector<8x32xbf16>
    %134 = vector.extract_strided_slice %46 {offsets = [64, 0], sizes = [32, 128], strides = [1, 1]} : vector<128x128xbf16> to vector<32x128xbf16>
    %cst_50 = arith.constant dense<0.000000e+00> : vector<8x128xf32>
    %135 = tpu.matmul %133, %134, %cst_50 {dimension_numbers = #tpu.dot_dimension_numbers<[1], [0], [0], [1], [0, 0, 1, 1], [], []>} : vector<8x32xbf16>, vector<32x128xbf16>, vector<8x128xf32> -> vector<8x128xf32>
    %136 = arith.addf %111, %135 : vector<8x128xf32>
    %137 = vector.extract_strided_slice %57 {offsets = [0, 96], sizes = [8, 32], strides = [1, 1]} : vector<8x128xf32> to vector<8x32xf32>
    %138 = arith.truncf %137 : vector<8x32xf32> to vector<8x32xbf16>
    %139 = vector.extract_strided_slice %58 {offsets = [0, 96], sizes = [8, 32], strides = [1, 1]} : vector<8x128xf32> to vector<8x32xf32>
    %140 = arith.truncf %139 : vector<8x32xf32> to vector<8x32xbf16>
    %141 = vector.extract_strided_slice %59 {offsets = [0, 96], sizes = [8, 32], strides = [1, 1]} : vector<8x128xf32> to vector<8x32xf32>
    %142 = arith.truncf %141 : vector<8x32xf32> to vector<8x32xbf16>
    %cst_51 = arith.constant dense<0.000000e+00> : vector<8x8xf32>
    %143 = tpu.matmul %138, %140, %cst_51 {dimension_numbers = #tpu.dot_dimension_numbers<[1], [1], [0], [0], [0, 0, 1, 0], [], []>} : vector<8x32xbf16>, vector<8x32xbf16>, vector<8x8xf32> -> vector<8x8xf32>
    %cst_52 = arith.constant -1.000000e+09 : f32
    %144 = vector.broadcast %cst_52 : f32 to vector<8x8xf32>
    %145 = arith.select %40, %143, %144 : vector<8x8xi1>, vector<8x8xf32>
    %cst_53 = arith.constant dense<0xFF800000> : vector<8xf32>
    %146 = vector.multi_reduction <maximumf>, %145, %cst_53 [1] : vector<8x8xf32> to vector<8xf32>
    %147 = vector.shape_cast %146 : vector<8xf32> to vector<8x1xf32>
    %148 = vector.broadcast %147 : vector<8x1xf32> to vector<8x8xf32>
    %149 = arith.subf %145, %148 : vector<8x8xf32>
    %150 = math.exp %149 : vector<8x8xf32>
    %cst_54 = arith.constant dense<0.000000e+00> : vector<8xf32>
    %151 = vector.multi_reduction <add>, %150, %cst_54 [1] : vector<8x8xf32> to vector<8xf32>
    %152 = vector.shape_cast %151 : vector<8xf32> to vector<8x1xf32>
    %153 = tpu.reciprocal %152 {approx = true} : vector<8x1xf32> -> vector<8x1xf32>
    %154 = vector.broadcast %153 : vector<8x1xf32> to vector<8x8xf32>
    %155 = arith.mulf %150, %154 : vector<8x8xf32>
    %156 = arith.truncf %155 : vector<8x8xf32> to vector<8x8xbf16>
    %cst_55 = arith.constant dense<0.000000e+00> : vector<8x32xf32>
    %157 = tpu.matmul %156, %142, %cst_55 {dimension_numbers = #tpu.dot_dimension_numbers<[1], [0], [0], [1], [0, 0, 1, 1], [], []>} : vector<8x8xbf16>, vector<8x32xbf16>, vector<8x32xf32> -> vector<8x32xf32>
    %158 = arith.truncf %157 : vector<8x32xf32> to vector<8x32xbf16>
    %159 = vector.extract_strided_slice %46 {offsets = [96, 0], sizes = [32, 128], strides = [1, 1]} : vector<128x128xbf16> to vector<32x128xbf16>
    %cst_56 = arith.constant dense<0.000000e+00> : vector<8x128xf32>
    %160 = tpu.matmul %158, %159, %cst_56 {dimension_numbers = #tpu.dot_dimension_numbers<[1], [0], [0], [1], [0, 0, 1, 1], [], []>} : vector<8x32xbf16>, vector<32x128xbf16>, vector<8x128xf32> -> vector<8x128xf32>
    %161 = arith.addf %136, %160 : vector<8x128xf32>
    %cst_57 = arith.constant dense<0.000000e+00> : vector<8xf32>
    %162 = vector.multi_reduction <add>, %161, %cst_57 [1] : vector<8x128xf32> to vector<8xf32>
    %163 = vector.shape_cast %162 : vector<8xf32> to vector<8x1xf32>
    %cst_58 = arith.constant 1.280000e+02 : f32
    %164 = vector.broadcast %cst_58 : f32 to vector<8x1xf32>
    %165 = arith.divf %163, %164 : vector<8x1xf32>
    %166 = vector.broadcast %165 : vector<8x1xf32> to vector<8x128xf32>
    %167 = arith.subf %161, %166 : vector<8x128xf32>
    %168 = vector.broadcast %165 : vector<8x1xf32> to vector<8x128xf32>
    %169 = arith.subf %161, %168 : vector<8x128xf32>
    %170 = arith.mulf %167, %169 : vector<8x128xf32>
    %cst_59 = arith.constant dense<0.000000e+00> : vector<8xf32>
    %171 = vector.multi_reduction <add>, %170, %cst_59 [1] : vector<8x128xf32> to vector<8xf32>
    %172 = vector.shape_cast %171 : vector<8xf32> to vector<8x1xf32>
    %cst_60 = arith.constant 1.280000e+02 : f32
    %173 = vector.broadcast %cst_60 : f32 to vector<8x1xf32>
    %174 = arith.divf %172, %173 : vector<8x1xf32>
    %175 = vector.broadcast %165 : vector<8x1xf32> to vector<8x128xf32>
    %176 = arith.subf %161, %175 : vector<8x128xf32>
    %cst_61 = arith.constant 9.99999974E-6 : f32
    %177 = vector.broadcast %cst_61 : f32 to vector<8x1xf32>
    %178 = arith.addf %174, %177 : vector<8x1xf32>
    %179 = math.rsqrt %178 : vector<8x1xf32>
    %180 = vector.broadcast %179 : vector<8x1xf32> to vector<8x128xf32>
    %181 = arith.mulf %176, %180 : vector<8x128xf32>
    %182 = vector.broadcast %50 : vector<1x128xf32> to vector<8x128xf32>
    %183 = arith.mulf %181, %182 : vector<8x128xf32>
    %184 = vector.broadcast %52 : vector<1x128xf32> to vector<8x128xf32>
    %185 = arith.addf %183, %184 : vector<8x128xf32>
    %c0_62 = arith.constant 0 : index
    %c0_63 = arith.constant 0 : index
    %c0_64 = arith.constant 0 : index
    %186 = vector.load %arg10[%c0_62, %c0_63, %c0_64] : memref<1x128x128xbf16, #tpu.memory_space<vmem>>, vector<1x128x128xbf16>
    %187 = vector.shape_cast %186 : vector<1x128x128xbf16> to vector<128x128xbf16>
    %c0_65 = arith.constant 0 : index
    %c0_66 = arith.constant 0 : index
    %c0_67 = arith.constant 0 : index
    %188 = vector.load %arg11[%c0_65, %c0_66, %c0_67] : memref<1x1x128xf32, #tpu.memory_space<vmem>>, vector<1x1x128xf32>
    %189 = vector.shape_cast %188 : vector<1x1x128xf32> to vector<1x128xf32>
    %c0_68 = arith.constant 0 : index
    %c0_69 = arith.constant 0 : index
    %c0_70 = arith.constant 0 : index
    %190 = vector.load %arg12[%c0_68, %c0_69, %c0_70] : memref<1x128x256xbf16, #tpu.memory_space<vmem>>, vector<1x128x256xbf16>
    %191 = vector.shape_cast %190 : vector<1x128x256xbf16> to vector<128x256xbf16>
    %c0_71 = arith.constant 0 : index
    %c0_72 = arith.constant 0 : index
    %c0_73 = arith.constant 0 : index
    %192 = vector.load %arg13[%c0_71, %c0_72, %c0_73] : memref<1x1x256xf32, #tpu.memory_space<vmem>>, vector<1x1x256xf32>
    %193 = vector.shape_cast %192 : vector<1x1x256xf32> to vector<1x256xf32>
    %c0_74 = arith.constant 0 : index
    %c0_75 = arith.constant 0 : index
    %c0_76 = arith.constant 0 : index
    %194 = vector.load %arg14[%c0_74, %c0_75, %c0_76] : memref<1x128x128xbf16, #tpu.memory_space<vmem>>, vector<1x128x128xbf16>
    %195 = vector.shape_cast %194 : vector<1x128x128xbf16> to vector<128x128xbf16>
    %c0_77 = arith.constant 0 : index
    %c0_78 = arith.constant 0 : index
    %c0_79 = arith.constant 0 : index
    %196 = vector.load %arg15[%c0_77, %c0_78, %c0_79] : memref<1x1x128xf32, #tpu.memory_space<vmem>>, vector<1x1x128xf32>
    %197 = vector.shape_cast %196 : vector<1x1x128xf32> to vector<1x128xf32>
    %c0_80 = arith.constant 0 : index
    %c0_81 = arith.constant 0 : index
    %c0_82 = arith.constant 0 : index
    %198 = vector.load %arg16[%c0_80, %c0_81, %c0_82] : memref<1x1x128xf32, #tpu.memory_space<vmem>>, vector<1x1x128xf32>
    %199 = vector.shape_cast %198 : vector<1x1x128xf32> to vector<1x128xf32>
    %c0_83 = arith.constant 0 : index
    %c0_84 = arith.constant 0 : index
    %c0_85 = arith.constant 0 : index
    %200 = vector.load %arg17[%c0_83, %c0_84, %c0_85] : memref<1x1x128xf32, #tpu.memory_space<vmem>>, vector<1x1x128xf32>
    %201 = vector.shape_cast %200 : vector<1x1x128xf32> to vector<1x128xf32>
    %202 = arith.truncf %185 : vector<8x128xf32> to vector<8x128xbf16>
    %cst_86 = arith.constant dense<0.000000e+00> : vector<8x128xf32>
    %203 = tpu.matmul %202, %187, %cst_86 {dimension_numbers = #tpu.dot_dimension_numbers<[1], [0], [0], [1], [0, 0, 1, 1], [], []>} : vector<8x128xbf16>, vector<128x128xbf16>, vector<8x128xf32> -> vector<8x128xf32>
    %204 = vector.broadcast %189 : vector<1x128xf32> to vector<8x128xf32>
    %205 = arith.addf %203, %204 : vector<8x128xf32>
    %cst_87 = arith.constant dense<0.000000e+00> : vector<8x256xf32>
    %206 = tpu.matmul %5, %191, %cst_87 {dimension_numbers = #tpu.dot_dimension_numbers<[1], [0], [0], [1], [0, 0, 1, 1], [], []>} : vector<8x128xbf16>, vector<128x256xbf16>, vector<8x256xf32> -> vector<8x256xf32>
    %207 = vector.broadcast %193 : vector<1x256xf32> to vector<8x256xf32>
    %208 = arith.addf %206, %207 : vector<8x256xf32>
    %209 = vector.extract_strided_slice %208 {offsets = [0, 0], sizes = [8, 128], strides = [1, 1]} : vector<8x256xf32> to vector<8x128xf32>
    %210 = vector.extract_strided_slice %208 {offsets = [0, 128], sizes = [8, 128], strides = [1, 1]} : vector<8x256xf32> to vector<8x128xf32>
    %211 = vector.broadcast %197 : vector<1x128xf32> to vector<8x128xf32>
    %212 = arith.addf %185, %211 : vector<8x128xf32>
    %213 = vector.extract_strided_slice %205 {offsets = [0, 0], sizes = [8, 32], strides = [1, 1]} : vector<8x128xf32> to vector<8x32xf32>
    %214 = arith.truncf %213 : vector<8x32xf32> to vector<8x32xbf16>
    %215 = vector.extract_strided_slice %209 {offsets = [0, 0], sizes = [8, 32], strides = [1, 1]} : vector<8x128xf32> to vector<8x32xf32>
    %216 = arith.truncf %215 : vector<8x32xf32> to vector<8x32xbf16>
    %217 = vector.extract_strided_slice %210 {offsets = [0, 0], sizes = [8, 32], strides = [1, 1]} : vector<8x128xf32> to vector<8x32xf32>
    %218 = arith.truncf %217 : vector<8x32xf32> to vector<8x32xbf16>
    %cst_88 = arith.constant dense<0.000000e+00> : vector<8x8xf32>
    %219 = tpu.matmul %214, %216, %cst_88 {dimension_numbers = #tpu.dot_dimension_numbers<[1], [1], [0], [0], [0, 0, 1, 0], [], []>} : vector<8x32xbf16>, vector<8x32xbf16>, vector<8x8xf32> -> vector<8x8xf32>
    %cst_89 = arith.constant dense<0xFF800000> : vector<8xf32>
    %220 = vector.multi_reduction <maximumf>, %219, %cst_89 [1] : vector<8x8xf32> to vector<8xf32>
    %221 = vector.shape_cast %220 : vector<8xf32> to vector<8x1xf32>
    %222 = vector.broadcast %221 : vector<8x1xf32> to vector<8x8xf32>
    %223 = arith.subf %219, %222 : vector<8x8xf32>
    %224 = math.exp %223 : vector<8x8xf32>
    %cst_90 = arith.constant dense<0.000000e+00> : vector<8xf32>
    %225 = vector.multi_reduction <add>, %224, %cst_90 [1] : vector<8x8xf32> to vector<8xf32>
    %226 = vector.shape_cast %225 : vector<8xf32> to vector<8x1xf32>
    %227 = tpu.reciprocal %226 {approx = true} : vector<8x1xf32> -> vector<8x1xf32>
    %228 = vector.broadcast %227 : vector<8x1xf32> to vector<8x8xf32>
    %229 = arith.mulf %224, %228 : vector<8x8xf32>
    %230 = arith.truncf %229 : vector<8x8xf32> to vector<8x8xbf16>
    %cst_91 = arith.constant dense<0.000000e+00> : vector<8x32xf32>
    %231 = tpu.matmul %230, %218, %cst_91 {dimension_numbers = #tpu.dot_dimension_numbers<[1], [0], [0], [1], [0, 0, 1, 1], [], []>} : vector<8x8xbf16>, vector<8x32xbf16>, vector<8x32xf32> -> vector<8x32xf32>
    %232 = arith.truncf %231 : vector<8x32xf32> to vector<8x32xbf16>
    %233 = vector.extract_strided_slice %195 {offsets = [0, 0], sizes = [32, 128], strides = [1, 1]} : vector<128x128xbf16> to vector<32x128xbf16>
    %cst_92 = arith.constant dense<0.000000e+00> : vector<8x128xf32>
    %234 = tpu.matmul %232, %233, %cst_92 {dimension_numbers = #tpu.dot_dimension_numbers<[1], [0], [0], [1], [0, 0, 1, 1], [], []>} : vector<8x32xbf16>, vector<32x128xbf16>, vector<8x128xf32> -> vector<8x128xf32>
    %235 = arith.addf %212, %234 : vector<8x128xf32>
    %236 = vector.extract_strided_slice %205 {offsets = [0, 32], sizes = [8, 32], strides = [1, 1]} : vector<8x128xf32> to vector<8x32xf32>
    %237 = arith.truncf %236 : vector<8x32xf32> to vector<8x32xbf16>
    %238 = vector.extract_strided_slice %209 {offsets = [0, 32], sizes = [8, 32], strides = [1, 1]} : vector<8x128xf32> to vector<8x32xf32>
    %239 = arith.truncf %238 : vector<8x32xf32> to vector<8x32xbf16>
    %240 = vector.extract_strided_slice %210 {offsets = [0, 32], sizes = [8, 32], strides = [1, 1]} : vector<8x128xf32> to vector<8x32xf32>
    %241 = arith.truncf %240 : vector<8x32xf32> to vector<8x32xbf16>
    %cst_93 = arith.constant dense<0.000000e+00> : vector<8x8xf32>
    %242 = tpu.matmul %237, %239, %cst_93 {dimension_numbers = #tpu.dot_dimension_numbers<[1], [1], [0], [0], [0, 0, 1, 0], [], []>} : vector<8x32xbf16>, vector<8x32xbf16>, vector<8x8xf32> -> vector<8x8xf32>
    %cst_94 = arith.constant dense<0xFF800000> : vector<8xf32>
    %243 = vector.multi_reduction <maximumf>, %242, %cst_94 [1] : vector<8x8xf32> to vector<8xf32>
    %244 = vector.shape_cast %243 : vector<8xf32> to vector<8x1xf32>
    %245 = vector.broadcast %244 : vector<8x1xf32> to vector<8x8xf32>
    %246 = arith.subf %242, %245 : vector<8x8xf32>
    %247 = math.exp %246 : vector<8x8xf32>
    %cst_95 = arith.constant dense<0.000000e+00> : vector<8xf32>
    %248 = vector.multi_reduction <add>, %247, %cst_95 [1] : vector<8x8xf32> to vector<8xf32>
    %249 = vector.shape_cast %248 : vector<8xf32> to vector<8x1xf32>
    %250 = tpu.reciprocal %249 {approx = true} : vector<8x1xf32> -> vector<8x1xf32>
    %251 = vector.broadcast %250 : vector<8x1xf32> to vector<8x8xf32>
    %252 = arith.mulf %247, %251 : vector<8x8xf32>
    %253 = arith.truncf %252 : vector<8x8xf32> to vector<8x8xbf16>
    %cst_96 = arith.constant dense<0.000000e+00> : vector<8x32xf32>
    %254 = tpu.matmul %253, %241, %cst_96 {dimension_numbers = #tpu.dot_dimension_numbers<[1], [0], [0], [1], [0, 0, 1, 1], [], []>} : vector<8x8xbf16>, vector<8x32xbf16>, vector<8x32xf32> -> vector<8x32xf32>
    %255 = arith.truncf %254 : vector<8x32xf32> to vector<8x32xbf16>
    %256 = vector.extract_strided_slice %195 {offsets = [32, 0], sizes = [32, 128], strides = [1, 1]} : vector<128x128xbf16> to vector<32x128xbf16>
    %cst_97 = arith.constant dense<0.000000e+00> : vector<8x128xf32>
    %257 = tpu.matmul %255, %256, %cst_97 {dimension_numbers = #tpu.dot_dimension_numbers<[1], [0], [0], [1], [0, 0, 1, 1], [], []>} : vector<8x32xbf16>, vector<32x128xbf16>, vector<8x128xf32> -> vector<8x128xf32>
    %258 = arith.addf %235, %257 : vector<8x128xf32>
    %259 = vector.extract_strided_slice %205 {offsets = [0, 64], sizes = [8, 32], strides = [1, 1]} : vector<8x128xf32> to vector<8x32xf32>
    %260 = arith.truncf %259 : vector<8x32xf32> to vector<8x32xbf16>
    %261 = vector.extract_strided_slice %209 {offsets = [0, 64], sizes = [8, 32], strides = [1, 1]} : vector<8x128xf32> to vector<8x32xf32>
    %262 = arith.truncf %261 : vector<8x32xf32> to vector<8x32xbf16>
    %263 = vector.extract_strided_slice %210 {offsets = [0, 64], sizes = [8, 32], strides = [1, 1]} : vector<8x128xf32> to vector<8x32xf32>
    %264 = arith.truncf %263 : vector<8x32xf32> to vector<8x32xbf16>
    %cst_98 = arith.constant dense<0.000000e+00> : vector<8x8xf32>
    %265 = tpu.matmul %260, %262, %cst_98 {dimension_numbers = #tpu.dot_dimension_numbers<[1], [1], [0], [0], [0, 0, 1, 0], [], []>} : vector<8x32xbf16>, vector<8x32xbf16>, vector<8x8xf32> -> vector<8x8xf32>
    %cst_99 = arith.constant dense<0xFF800000> : vector<8xf32>
    %266 = vector.multi_reduction <maximumf>, %265, %cst_99 [1] : vector<8x8xf32> to vector<8xf32>
    %267 = vector.shape_cast %266 : vector<8xf32> to vector<8x1xf32>
    %268 = vector.broadcast %267 : vector<8x1xf32> to vector<8x8xf32>
    %269 = arith.subf %265, %268 : vector<8x8xf32>
    %270 = math.exp %269 : vector<8x8xf32>
    %cst_100 = arith.constant dense<0.000000e+00> : vector<8xf32>
    %271 = vector.multi_reduction <add>, %270, %cst_100 [1] : vector<8x8xf32> to vector<8xf32>
    %272 = vector.shape_cast %271 : vector<8xf32> to vector<8x1xf32>
    %273 = tpu.reciprocal %272 {approx = true} : vector<8x1xf32> -> vector<8x1xf32>
    %274 = vector.broadcast %273 : vector<8x1xf32> to vector<8x8xf32>
    %275 = arith.mulf %270, %274 : vector<8x8xf32>
    %276 = arith.truncf %275 : vector<8x8xf32> to vector<8x8xbf16>
    %cst_101 = arith.constant dense<0.000000e+00> : vector<8x32xf32>
    %277 = tpu.matmul %276, %264, %cst_101 {dimension_numbers = #tpu.dot_dimension_numbers<[1], [0], [0], [1], [0, 0, 1, 1], [], []>} : vector<8x8xbf16>, vector<8x32xbf16>, vector<8x32xf32> -> vector<8x32xf32>
    %278 = arith.truncf %277 : vector<8x32xf32> to vector<8x32xbf16>
    %279 = vector.extract_strided_slice %195 {offsets = [64, 0], sizes = [32, 128], strides = [1, 1]} : vector<128x128xbf16> to vector<32x128xbf16>
    %cst_102 = arith.constant dense<0.000000e+00> : vector<8x128xf32>
    %280 = tpu.matmul %278, %279, %cst_102 {dimension_numbers = #tpu.dot_dimension_numbers<[1], [0], [0], [1], [0, 0, 1, 1], [], []>} : vector<8x32xbf16>, vector<32x128xbf16>, vector<8x128xf32> -> vector<8x128xf32>
    %281 = arith.addf %258, %280 : vector<8x128xf32>
    %282 = vector.extract_strided_slice %205 {offsets = [0, 96], sizes = [8, 32], strides = [1, 1]} : vector<8x128xf32> to vector<8x32xf32>
    %283 = arith.truncf %282 : vector<8x32xf32> to vector<8x32xbf16>
    %284 = vector.extract_strided_slice %209 {offsets = [0, 96], sizes = [8, 32], strides = [1, 1]} : vector<8x128xf32> to vector<8x32xf32>
    %285 = arith.truncf %284 : vector<8x32xf32> to vector<8x32xbf16>
    %286 = vector.extract_strided_slice %210 {offsets = [0, 96], sizes = [8, 32], strides = [1, 1]} : vector<8x128xf32> to vector<8x32xf32>
    %287 = arith.truncf %286 : vector<8x32xf32> to vector<8x32xbf16>
    %cst_103 = arith.constant dense<0.000000e+00> : vector<8x8xf32>
    %288 = tpu.matmul %283, %285, %cst_103 {dimension_numbers = #tpu.dot_dimension_numbers<[1], [1], [0], [0], [0, 0, 1, 0], [], []>} : vector<8x32xbf16>, vector<8x32xbf16>, vector<8x8xf32> -> vector<8x8xf32>
    %cst_104 = arith.constant dense<0xFF800000> : vector<8xf32>
    %289 = vector.multi_reduction <maximumf>, %288, %cst_104 [1] : vector<8x8xf32> to vector<8xf32>
    %290 = vector.shape_cast %289 : vector<8xf32> to vector<8x1xf32>
    %291 = vector.broadcast %290 : vector<8x1xf32> to vector<8x8xf32>
    %292 = arith.subf %288, %291 : vector<8x8xf32>
    %293 = math.exp %292 : vector<8x8xf32>
    %cst_105 = arith.constant dense<0.000000e+00> : vector<8xf32>
    %294 = vector.multi_reduction <add>, %293, %cst_105 [1] : vector<8x8xf32> to vector<8xf32>
    %295 = vector.shape_cast %294 : vector<8xf32> to vector<8x1xf32>
    %296 = tpu.reciprocal %295 {approx = true} : vector<8x1xf32> -> vector<8x1xf32>
    %297 = vector.broadcast %296 : vector<8x1xf32> to vector<8x8xf32>
    %298 = arith.mulf %293, %297 : vector<8x8xf32>
    %299 = arith.truncf %298 : vector<8x8xf32> to vector<8x8xbf16>
    %cst_106 = arith.constant dense<0.000000e+00> : vector<8x32xf32>
    %300 = tpu.matmul %299, %287, %cst_106 {dimension_numbers = #tpu.dot_dimension_numbers<[1], [0], [0], [1], [0, 0, 1, 1], [], []>} : vector<8x8xbf16>, vector<8x32xbf16>, vector<8x32xf32> -> vector<8x32xf32>
    %301 = arith.truncf %300 : vector<8x32xf32> to vector<8x32xbf16>
    %302 = vector.extract_strided_slice %195 {offsets = [96, 0], sizes = [32, 128], strides = [1, 1]} : vector<128x128xbf16> to vector<32x128xbf16>
    %cst_107 = arith.constant dense<0.000000e+00> : vector<8x128xf32>
    %303 = tpu.matmul %301, %302, %cst_107 {dimension_numbers = #tpu.dot_dimension_numbers<[1], [0], [0], [1], [0, 0, 1, 1], [], []>} : vector<8x32xbf16>, vector<32x128xbf16>, vector<8x128xf32> -> vector<8x128xf32>
    %304 = arith.addf %281, %303 : vector<8x128xf32>
    %cst_108 = arith.constant dense<0.000000e+00> : vector<8xf32>
    %305 = vector.multi_reduction <add>, %304, %cst_108 [1] : vector<8x128xf32> to vector<8xf32>
    %306 = vector.shape_cast %305 : vector<8xf32> to vector<8x1xf32>
    %cst_109 = arith.constant 1.280000e+02 : f32
    %307 = vector.broadcast %cst_109 : f32 to vector<8x1xf32>
    %308 = arith.divf %306, %307 : vector<8x1xf32>
    %309 = vector.broadcast %308 : vector<8x1xf32> to vector<8x128xf32>
    %310 = arith.subf %304, %309 : vector<8x128xf32>
    %311 = vector.broadcast %308 : vector<8x1xf32> to vector<8x128xf32>
    %312 = arith.subf %304, %311 : vector<8x128xf32>
    %313 = arith.mulf %310, %312 : vector<8x128xf32>
    %cst_110 = arith.constant dense<0.000000e+00> : vector<8xf32>
    %314 = vector.multi_reduction <add>, %313, %cst_110 [1] : vector<8x128xf32> to vector<8xf32>
    %315 = vector.shape_cast %314 : vector<8xf32> to vector<8x1xf32>
    %cst_111 = arith.constant 1.280000e+02 : f32
    %316 = vector.broadcast %cst_111 : f32 to vector<8x1xf32>
    %317 = arith.divf %315, %316 : vector<8x1xf32>
    %318 = vector.broadcast %308 : vector<8x1xf32> to vector<8x128xf32>
    %319 = arith.subf %304, %318 : vector<8x128xf32>
    %cst_112 = arith.constant 9.99999974E-6 : f32
    %320 = vector.broadcast %cst_112 : f32 to vector<8x1xf32>
    %321 = arith.addf %317, %320 : vector<8x1xf32>
    %322 = math.rsqrt %321 : vector<8x1xf32>
    %323 = vector.broadcast %322 : vector<8x1xf32> to vector<8x128xf32>
    %324 = arith.mulf %319, %323 : vector<8x128xf32>
    %325 = vector.broadcast %199 : vector<1x128xf32> to vector<8x128xf32>
    %326 = arith.mulf %324, %325 : vector<8x128xf32>
    %327 = vector.broadcast %201 : vector<1x128xf32> to vector<8x128xf32>
    %328 = arith.addf %326, %327 : vector<8x128xf32>
    %c0_113 = arith.constant 0 : index
    %c0_114 = arith.constant 0 : index
    %c0_115 = arith.constant 0 : index
    %329 = vector.load %arg18[%c0_113, %c0_114, %c0_115] : memref<1x128x512xbf16, #tpu.memory_space<vmem>>, vector<1x128x512xbf16>
    %330 = vector.shape_cast %329 : vector<1x128x512xbf16> to vector<128x512xbf16>
    %c0_116 = arith.constant 0 : index
    %c0_117 = arith.constant 0 : index
    %c0_118 = arith.constant 0 : index
    %331 = vector.load %arg19[%c0_116, %c0_117, %c0_118] : memref<1x1x512xf32, #tpu.memory_space<vmem>>, vector<1x1x512xf32>
    %332 = vector.shape_cast %331 : vector<1x1x512xf32> to vector<1x512xf32>
    %c0_119 = arith.constant 0 : index
    %c0_120 = arith.constant 0 : index
    %c0_121 = arith.constant 0 : index
    %333 = vector.load %arg20[%c0_119, %c0_120, %c0_121] : memref<1x512x128xbf16, #tpu.memory_space<vmem>>, vector<1x512x128xbf16>
    %334 = vector.shape_cast %333 : vector<1x512x128xbf16> to vector<512x128xbf16>
    %c0_122 = arith.constant 0 : index
    %c0_123 = arith.constant 0 : index
    %c0_124 = arith.constant 0 : index
    %335 = vector.load %arg21[%c0_122, %c0_123, %c0_124] : memref<1x1x128xf32, #tpu.memory_space<vmem>>, vector<1x1x128xf32>
    %336 = vector.shape_cast %335 : vector<1x1x128xf32> to vector<1x128xf32>
    %c0_125 = arith.constant 0 : index
    %c0_126 = arith.constant 0 : index
    %c0_127 = arith.constant 0 : index
    %337 = vector.load %arg22[%c0_125, %c0_126, %c0_127] : memref<1x1x128xf32, #tpu.memory_space<vmem>>, vector<1x1x128xf32>
    %338 = vector.shape_cast %337 : vector<1x1x128xf32> to vector<1x128xf32>
    %c0_128 = arith.constant 0 : index
    %c0_129 = arith.constant 0 : index
    %c0_130 = arith.constant 0 : index
    %339 = vector.load %arg23[%c0_128, %c0_129, %c0_130] : memref<1x1x128xf32, #tpu.memory_space<vmem>>, vector<1x1x128xf32>
    %340 = vector.shape_cast %339 : vector<1x1x128xf32> to vector<1x128xf32>
    %341 = arith.truncf %328 : vector<8x128xf32> to vector<8x128xbf16>
    %cst_131 = arith.constant dense<0.000000e+00> : vector<8x512xf32>
    %342 = tpu.matmul %341, %330, %cst_131 {dimension_numbers = #tpu.dot_dimension_numbers<[1], [0], [0], [1], [0, 0, 1, 1], [], []>} : vector<8x128xbf16>, vector<128x512xbf16>, vector<8x512xf32> -> vector<8x512xf32>
    %343 = vector.broadcast %332 : vector<1x512xf32> to vector<8x512xf32>
    %344 = arith.addf %342, %343 : vector<8x512xf32>
    %cst_132 = arith.constant 0.000000e+00 : f32
    %345 = vector.broadcast %cst_132 : f32 to vector<8x512xf32>
    %346 = arith.maximumf %344, %345 : vector<8x512xf32>
    %347 = arith.truncf %346 : vector<8x512xf32> to vector<8x512xbf16>
    %cst_133 = arith.constant dense<0.000000e+00> : vector<8x128xf32>
    %348 = tpu.matmul %347, %334, %cst_133 {dimension_numbers = #tpu.dot_dimension_numbers<[1], [0], [0], [1], [0, 0, 1, 1], [], []>} : vector<8x512xbf16>, vector<512x128xbf16>, vector<8x128xf32> -> vector<8x128xf32>
    %349 = vector.broadcast %336 : vector<1x128xf32> to vector<8x128xf32>
    %350 = arith.addf %348, %349 : vector<8x128xf32>
    %351 = arith.addf %350, %328 : vector<8x128xf32>
    %cst_134 = arith.constant dense<0.000000e+00> : vector<8xf32>
    %352 = vector.multi_reduction <add>, %351, %cst_134 [1] : vector<8x128xf32> to vector<8xf32>
    %353 = vector.shape_cast %352 : vector<8xf32> to vector<8x1xf32>
    %cst_135 = arith.constant 1.280000e+02 : f32
    %354 = vector.broadcast %cst_135 : f32 to vector<8x1xf32>
    %355 = arith.divf %353, %354 : vector<8x1xf32>
    %356 = vector.broadcast %355 : vector<8x1xf32> to vector<8x128xf32>
    %357 = arith.subf %351, %356 : vector<8x128xf32>
    %358 = vector.broadcast %355 : vector<8x1xf32> to vector<8x128xf32>
    %359 = arith.subf %351, %358 : vector<8x128xf32>
    %360 = arith.mulf %357, %359 : vector<8x128xf32>
    %cst_136 = arith.constant dense<0.000000e+00> : vector<8xf32>
    %361 = vector.multi_reduction <add>, %360, %cst_136 [1] : vector<8x128xf32> to vector<8xf32>
    %362 = vector.shape_cast %361 : vector<8xf32> to vector<8x1xf32>
    %cst_137 = arith.constant 1.280000e+02 : f32
    %363 = vector.broadcast %cst_137 : f32 to vector<8x1xf32>
    %364 = arith.divf %362, %363 : vector<8x1xf32>
    %365 = vector.broadcast %355 : vector<8x1xf32> to vector<8x128xf32>
    %366 = arith.subf %351, %365 : vector<8x128xf32>
    %cst_138 = arith.constant 9.99999974E-6 : f32
    %367 = vector.broadcast %cst_138 : f32 to vector<8x1xf32>
    %368 = arith.addf %364, %367 : vector<8x1xf32>
    %369 = math.rsqrt %368 : vector<8x1xf32>
    %370 = vector.broadcast %369 : vector<8x1xf32> to vector<8x128xf32>
    %371 = arith.mulf %366, %370 : vector<8x128xf32>
    %372 = vector.broadcast %338 : vector<1x128xf32> to vector<8x128xf32>
    %373 = arith.mulf %371, %372 : vector<8x128xf32>
    %374 = vector.broadcast %340 : vector<1x128xf32> to vector<8x128xf32>
    %375 = arith.addf %373, %374 : vector<8x128xf32>
    %c0_139 = arith.constant 0 : index
    %c0_140 = arith.constant 0 : index
    %376 = vector.load %arg27[%c0_139, %c0_140] : memref<8x128xf32, #tpu.memory_space<vmem>>, vector<8x128xf32>
    tpu.vector_store %arg27[%c0_139, %c0_140], %375 {strides = array<i32>} : memref<8x128xf32, #tpu.memory_space<vmem>>, vector<8x128xf32>,
    %c1_i32_141 = arith.constant 1 : i32
    %377 = arith.cmpi eq, %arg1, %c1_i32_141 : i32
    %378 = arith.extui %377 : i1 to i32
    %c0_i32_142 = arith.constant 0 : i32
    %379 = arith.cmpi ne, %378, %c0_i32_142 : i32
    scf.if %379 {
      %c0_143 = arith.constant 0 : index
      %c0_144 = arith.constant 0 : index
      %380 = vector.load %arg24[%c0_143, %c0_144] : memref<1x128xf32, #tpu.memory_space<vmem>>, vector<1x128xf32>
      %c0_145 = arith.constant 0 : index
      %c0_146 = arith.constant 0 : index
      %381 = vector.load %arg25[%c0_145, %c0_146] : memref<1x128xf32, #tpu.memory_space<vmem>>, vector<1x128xf32>
      %cst_147 = arith.constant dense<0.000000e+00> : vector<8xf32>
      %382 = vector.multi_reduction <add>, %375, %cst_147 [1] : vector<8x128xf32> to vector<8xf32>
      %383 = vector.shape_cast %382 : vector<8xf32> to vector<8x1xf32>
      %cst_148 = arith.constant 1.280000e+02 : f32
      %384 = vector.broadcast %cst_148 : f32 to vector<8x1xf32>
      %385 = arith.divf %383, %384 : vector<8x1xf32>
      %386 = vector.broadcast %385 : vector<8x1xf32> to vector<8x128xf32>
      %387 = arith.subf %375, %386 : vector<8x128xf32>
      %388 = vector.broadcast %385 : vector<8x1xf32> to vector<8x128xf32>
      %389 = arith.subf %375, %388 : vector<8x128xf32>
      %390 = arith.mulf %387, %389 : vector<8x128xf32>
      %cst_149 = arith.constant dense<0.000000e+00> : vector<8xf32>
      %391 = vector.multi_reduction <add>, %390, %cst_149 [1] : vector<8x128xf32> to vector<8xf32>
      %392 = vector.shape_cast %391 : vector<8xf32> to vector<8x1xf32>
      %cst_150 = arith.constant 1.280000e+02 : f32
      %393 = vector.broadcast %cst_150 : f32 to vector<8x1xf32>
      %394 = arith.divf %392, %393 : vector<8x1xf32>
      %395 = vector.broadcast %385 : vector<8x1xf32> to vector<8x128xf32>
      %396 = arith.subf %375, %395 : vector<8x128xf32>
      %cst_151 = arith.constant 9.99999974E-6 : f32
      %397 = vector.broadcast %cst_151 : f32 to vector<8x1xf32>
      %398 = arith.addf %394, %397 : vector<8x1xf32>
      %399 = math.rsqrt %398 : vector<8x1xf32>
      %400 = vector.broadcast %399 : vector<8x1xf32> to vector<8x128xf32>
      %401 = arith.mulf %396, %400 : vector<8x128xf32>
      %402 = vector.broadcast %380 : vector<1x128xf32> to vector<8x128xf32>
      %403 = arith.mulf %401, %402 : vector<8x128xf32>
      %404 = vector.broadcast %381 : vector<1x128xf32> to vector<8x128xf32>
      %405 = arith.addf %403, %404 : vector<8x128xf32>
      %406 = vector.shape_cast %405 : vector<8x128xf32> to vector<1x8x128xf32>
      %407 = arith.truncf %406 : vector<1x8x128xf32> to vector<1x8x128xbf16>
      %c0_152 = arith.constant 0 : index
      %c0_153 = arith.constant 0 : index
      %c0_154 = arith.constant 0 : index
      %408 = vector.load %arg26[%c0_152, %c0_153, %c0_154] : memref<1x8x128xbf16, #tpu.memory_space<vmem>>, vector<1x8x128xbf16>
      tpu.vector_store %arg26[%c0_152, %c0_153, %c0_154], %407 {strides = array<i32>} : memref<1x8x128xbf16, #tpu.memory_space<vmem>>, vector<1x8x128xbf16>,
    } else {
    }
    return
  }
  func.func @transform_0(%arg0: i32, %arg1: i32) -> (i32, i32, i32) {
    %c0_i32 = arith.constant 0 : i32
    %c0_i32_0 = arith.constant 0 : i32
    %c0_i32_1 = arith.constant 0 : i32
    return %arg0, %c0_i32, %c0_i32_0 : i32, i32, i32
  }
  func.func @transform_1(%arg0: i32, %arg1: i32) -> (i32, i32, i32) {
    %c0_i32 = arith.constant 0 : i32
    %c0_i32_0 = arith.constant 0 : i32
    %c0_i32_1 = arith.constant 0 : i32
    return %arg0, %c0_i32, %c0_i32_0 : i32, i32, i32
  }
  func.func @transform_2(%arg0: i32, %arg1: i32) -> (i32, i32, i32) {
    %c0_i32 = arith.constant 0 : i32
    %c0_i32_0 = arith.constant 0 : i32
    %c0_i32_1 = arith.constant 0 : i32
    return %arg1, %c0_i32, %c0_i32_0 : i32, i32, i32
  }
  func.func @transform_3(%arg0: i32, %arg1: i32) -> (i32, i32, i32) {
    %c0_i32 = arith.constant 0 : i32
    %c0_i32_0 = arith.constant 0 : i32
    %c0_i32_1 = arith.constant 0 : i32
    return %arg1, %c0_i32, %c0_i32_0 : i32, i32, i32
  }
  func.func @transform_4(%arg0: i32, %arg1: i32) -> (i32, i32, i32) {
    %c0_i32 = arith.constant 0 : i32
    %c0_i32_0 = arith.constant 0 : i32
    %c0_i32_1 = arith.constant 0 : i32
    return %arg1, %c0_i32, %c0_i32_0 : i32, i32, i32
  }
  func.func @transform_5(%arg0: i32, %arg1: i32) -> (i32, i32, i32) {
    %c0_i32 = arith.constant 0 : i32
    %c0_i32_0 = arith.constant 0 : i32
    %c0_i32_1 = arith.constant 0 : i32
    return %arg1, %c0_i32, %c0_i32_0 : i32, i32, i32
  }
  func.func @transform_6(%arg0: i32, %arg1: i32) -> (i32, i32, i32) {
    %c0_i32 = arith.constant 0 : i32
    %c0_i32_0 = arith.constant 0 : i32
    %c0_i32_1 = arith.constant 0 : i32
    return %arg1, %c0_i32, %c0_i32_0 : i32, i32, i32
  }
  func.func @transform_7(%arg0: i32, %arg1: i32) -> (i32, i32, i32) {
    %c0_i32 = arith.constant 0 : i32
    %c0_i32_0 = arith.constant 0 : i32
    %c0_i32_1 = arith.constant 0 : i32
    return %arg1, %c0_i32, %c0_i32_0 : i32, i32, i32
  }
  func.func @transform_8(%arg0: i32, %arg1: i32) -> (i32, i32, i32) {
    %c0_i32 = arith.constant 0 : i32
    %c0_i32_0 = arith.constant 0 : i32
    %c0_i32_1 = arith.constant 0 : i32
    return %arg1, %c0_i32, %c0_i32_0 : i32, i32, i32
  }
  func.func @transform_9(%arg0: i32, %arg1: i32) -> (i32, i32, i32) {
    %c0_i32 = arith.constant 0 : i32
    %c0_i32_0 = arith.constant 0 : i32
    %c0_i32_1 = arith.constant 0 : i32
    return %arg1, %c0_i32, %c0_i32_0 : i32, i32, i32
  }
  func.func @transform_10(%arg0: i32, %arg1: i32) -> (i32, i32, i32) {
    %c0_i32 = arith.constant 0 : i32
    %c0_i32_0 = arith.constant 0 : i32
    %c0_i32_1 = arith.constant 0 : i32
    return %arg1, %c0_i32, %c0_i32_0 : i32, i32, i32
  }
  func.func @transform_11(%arg0: i32, %arg1: i32) -> (i32, i32, i32) {
    %c0_i32 = arith.constant 0 : i32
    %c0_i32_0 = arith.constant 0 : i32
    %c0_i32_1 = arith.constant 0 : i32
    return %arg1, %c0_i32, %c0_i32_0 : i32, i32, i32
  }
  func.func @transform_12(%arg0: i32, %arg1: i32) -> (i32, i32, i32) {
    %c0_i32 = arith.constant 0 : i32
    %c0_i32_0 = arith.constant 0 : i32
    %c0_i32_1 = arith.constant 0 : i32
    return %arg1, %c0_i32, %c0_i32_0 : i32, i32, i32
  }
  func.func @transform_13(%arg0: i32, %arg1: i32) -> (i32, i32, i32) {
    %c0_i32 = arith.constant 0 : i32
    %c0_i32_0 = arith.constant 0 : i32
    %c0_i32_1 = arith.constant 0 : i32
    return %arg1, %c0_i32, %c0_i32_0 : i32, i32, i32
  }
  func.func @transform_14(%arg0: i32, %arg1: i32) -> (i32, i32, i32) {
    %c0_i32 = arith.constant 0 : i32
    %c0_i32_0 = arith.constant 0 : i32
    %c0_i32_1 = arith.constant 0 : i32
    return %arg1, %c0_i32, %c0_i32_0 : i32, i32, i32
  }
  func.func @transform_15(%arg0: i32, %arg1: i32) -> (i32, i32, i32) {
    %c0_i32 = arith.constant 0 : i32
    %c0_i32_0 = arith.constant 0 : i32
    %c0_i32_1 = arith.constant 0 : i32
    return %arg1, %c0_i32, %c0_i32_0 : i32, i32, i32
  }
  func.func @transform_16(%arg0: i32, %arg1: i32) -> (i32, i32, i32) {
    %c0_i32 = arith.constant 0 : i32
    %c0_i32_0 = arith.constant 0 : i32
    %c0_i32_1 = arith.constant 0 : i32
    return %arg1, %c0_i32, %c0_i32_0 : i32, i32, i32
  }
  func.func @transform_17(%arg0: i32, %arg1: i32) -> (i32, i32, i32) {
    %c0_i32 = arith.constant 0 : i32
    %c0_i32_0 = arith.constant 0 : i32
    %c0_i32_1 = arith.constant 0 : i32
    return %arg1, %c0_i32, %c0_i32_0 : i32, i32, i32
  }
  func.func @transform_18(%arg0: i32, %arg1: i32) -> (i32, i32, i32) {
    %c0_i32 = arith.constant 0 : i32
    %c0_i32_0 = arith.constant 0 : i32
    %c0_i32_1 = arith.constant 0 : i32
    return %arg1, %c0_i32, %c0_i32_0 : i32, i32, i32
  }
  func.func @transform_19(%arg0: i32, %arg1: i32) -> (i32, i32, i32) {
    %c0_i32 = arith.constant 0 : i32
    %c0_i32_0 = arith.constant 0 : i32
    %c0_i32_1 = arith.constant 0 : i32
    return %arg1, %c0_i32, %c0_i32_0 : i32, i32, i32
  }
  func.func @transform_20(%arg0: i32, %arg1: i32) -> (i32, i32, i32) {
    %c0_i32 = arith.constant 0 : i32
    %c0_i32_0 = arith.constant 0 : i32
    %c0_i32_1 = arith.constant 0 : i32
    return %arg1, %c0_i32, %c0_i32_0 : i32, i32, i32
  }
  func.func @transform_21(%arg0: i32, %arg1: i32) -> (i32, i32, i32) {
    %c0_i32 = arith.constant 0 : i32
    %c0_i32_0 = arith.constant 0 : i32
    %c0_i32_1 = arith.constant 0 : i32
    return %arg1, %c0_i32, %c0_i32_0 : i32, i32, i32
  }
  func.func @transform_22(%arg0: i32, %arg1: i32) -> (i32, i32) {
    %c0_i32 = arith.constant 0 : i32
    %c0_i32_0 = arith.constant 0 : i32
    %c0_i32_1 = arith.constant 0 : i32
    return %c0_i32, %c0_i32_0 : i32, i32
  }
  func.func @transform_23(%arg0: i32, %arg1: i32) -> (i32, i32) {
    %c0_i32 = arith.constant 0 : i32
    %c0_i32_0 = arith.constant 0 : i32
    %c0_i32_1 = arith.constant 0 : i32
    return %c0_i32, %c0_i32_0 : i32, i32
  }
  func.func @transform_24(%arg0: i32, %arg1: i32) -> (i32, i32, i32) {
    %c0_i32 = arith.constant 0 : i32
    %c0_i32_0 = arith.constant 0 : i32
    %c0_i32_1 = arith.constant 0 : i32
    return %arg0, %c0_i32, %c0_i32_0 : i32, i32, i32
  }
}

</mosaic_0001>

<llo_original>
// kernel: seq2seq_forward.5
$region0: #{seq2seq_forward.5}
  #allocation0 [shape = 'u32[]', space=smem, size = 0x4, offset = 0x4, fixed_abs, tag = 'smem constant byte address 0x4 - core index']
  #allocation1 [shape = 'u32[72,128]{1,0:T(1,128)}', space=vmem, size = 0x9000, scoped, tag = 'internal scratch']
  %s0 = inlined_call_operand.vmem [shape: bf16[16,128], index: 0, kind: input, shape index: {}]
  %s1 = inlined_call_operand.hbm [shape: bf16[128,256], index: 1, kind: input, shape index: {}]
  %s2 = inlined_call_operand.vmem [shape: f32[1,256], index: 2, kind: input, shape index: {}]
  %s3 = inlined_call_operand.vmem [shape: f32[16,256], index: 3, kind: output, shape index: {}]
  %s4 = sld [smem:[#allocation0]]
  $region49: #{seq2seq_forward.5} parent=0
    _
  %s6 = ssub.s32 1, %s4
  %s7 = scalar_select 0, %s6, %s4
  $region1: #{seq2seq_forward.5} parent=0
    #allocation2 [shape = 'u8[65536]{0}', space=vmem, size = 0x10000, scoped, tag = 'input window, operand 1, single buffered']
    #allocation3 [shape = 's32[2]{0}', space=sflag, size = 0x8, scoped, tag = 'scoped memory for seq2seq_forward.5']
    %8 = vsyncpa [#allocation3], 0
    loop: start=0, step=1, limit=4
    $region2: #{seq2seq_forward.5} parent=1 // loop_pre_header
      _
    $region3: #{seq2seq_forward.5} parent=1 // loop_header
      %s10 = sphi 0, %s14
      %p11 = scmp.ge.s32.totalorder %s10, 4
      %s17 = sphi 0, %s29
      %s18 = sphi 0, %s25
      %s19 = sphi 0, %s17
      %s20 = sphi 0, %s18
      %s21 = sphi 0, %s19
      %s22 = sphi 0, %s20
      %s32 = sphi 0, %s34
      %s35 = sphi 0, %s32
      %s36 = sphi 0, %s35
      %s52 = sphi 0, %s36
      %s58 = sphi 0, %s60
      %s61 = sphi 0, %s58
      %s62 = sphi 0, %s61
      %s78 = sphi 0, %s62
      %s84 = sphi 0, %s86
      %s87 = sphi 0, %s84
      %s88 = sphi 0, %s87
      %s104 = sphi 0, %s88
      %s112 = sphi 0, %s114
      %s115 = sphi 0, %s112
      %s116 = sphi 0, %s115
      %s132 = sphi 0, %s116
    $region4: #{seq2seq_forward.5} parent=1 // loop_header_branch
      %13 = sbr.rel (%p11) target = $region8
    $region5: #{seq2seq_forward.5} parent=1 // loop_body
      %s15 = ssub.s32 %s10, 1
      %s16 = ssub.s32 %s10, 2
      %s23 = sadd.s32 1, %s18
      %p24 = scmp.ge.s32.totalorder %s23, 1
      %s25 = scalar_select %p24, 0, %s23
      %s26 = sadd.s32 1, %s17
      %s27 = scalar_select %p24, %s26, %s17
      %p28 = scmp.ge.s32.totalorder %s27, 2
      %s29 = scalar_select %p28, 0, %s27
      %s30 = ssub.s32 %s17, %s29
      %p31 = scmp.eq.s32.totalorder %s30, 0
      %s33 = sadd.s32 %s32, 1
      %s34 = scalar_select %p31, %s32, %s33
      %p37 = pneg %p31
      %p38 = scmp.eq.s32.totalorder %s10, 1
      %p39 = por %p37, %p38
      %p40 = scmp.ne.s32.totalorder %s32, %s35
      %p41 = scmp.eq.s32.totalorder %s10, 0
      %p42 = por %p40, %p41
      %p43 = scmp.ne.s32.totalorder %s32, %s35
      %p44 = scmp.eq.s32.totalorder %s15, 1
      %p45 = por %p43, %p44
      %p46 = scmp.ne.s32.totalorder %s35, %s36
      %p47 = scmp.eq.s32.totalorder %s15, 0
      %p48 = por %p46, %p47
      %p49 = scmp.ne.s32.totalorder %s35, %s36
      %p50 = scmp.eq.s32.totalorder %s16, 1
      %p51 = por %p49, %p50
      %p53 = scmp.ne.s32.totalorder %s36, %s52
      %p54 = scmp.eq.s32.totalorder %s16, 0
      %p55 = por %p53, %p54
      %s56 = ssub.s32 %s18, %s25
      %p57 = scmp.eq.s32.totalorder %s56, 0
      %s59 = sadd.s32 %s58, 1
      %s60 = scalar_select %p57, %s58, %s59
      %p63 = pneg %p57
      %p64 = scmp.eq.s32.totalorder %s10, 1
      %p65 = por %p63, %p64
      %p66 = scmp.ne.s32.totalorder %s58, %s61
      %p67 = scmp.eq.s32.totalorder %s10, 0
      %p68 = por %p66, %p67
      %p69 = scmp.ne.s32.totalorder %s58, %s61
      %p70 = scmp.eq.s32.totalorder %s15, 1
      %p71 = por %p69, %p70
      %p72 = scmp.ne.s32.totalorder %s61, %s62
      %p73 = scmp.eq.s32.totalorder %s15, 0
      %p74 = por %p72, %p73
      %p75 = scmp.ne.s32.totalorder %s61, %s62
      %p76 = scmp.eq.s32.totalorder %s16, 1
      %p77 = por %p75, %p76
      %p79 = scmp.ne.s32.totalorder %s62, %s78
      %p80 = scmp.eq.s32.totalorder %s16, 0
      %p81 = por %p79, %p80
      %s82 = ssub.s32 %s18, %s25
      %p83 = scmp.eq.s32.totalorder %s82, 0
      %s85 = sadd.s32 %s84, 1
      %s86 = scalar_select %p83, %s84, %s85
      %p89 = pneg %p83
      %p90 = scmp.eq.s32.totalorder %s10, 1
      %p91 = por %p89, %p90
      %p92 = scmp.ne.s32.totalorder %s84, %s87
      %p93 = scmp.eq.s32.totalorder %s10, 0
      %p94 = por %p92, %p93
      %p95 = scmp.ne.s32.totalorder %s84, %s87
      %p96 = scmp.eq.s32.totalorder %s15, 1
      %p97 = por %p95, %p96
      %p98 = scmp.ne.s32.totalorder %s87, %s88
      %p99 = scmp.eq.s32.totalorder %s15, 0
      %p100 = por %p98, %p99
      %p101 = scmp.ne.s32.totalorder %s87, %s88
      %p102 = scmp.eq.s32.totalorder %s16, 1
      %p103 = por %p101, %p102
      %p105 = scmp.ne.s32.totalorder %s88, %s104
      %p106 = scmp.eq.s32.totalorder %s16, 0
      %p107 = por %p105, %p106
      %s108 = ssub.s32 %s17, %s29
      %s109 = ssub.s32 %s18, %s25
      %s110 = sor.u32 %s108, %s109
      %p111 = scmp.eq.s32.totalorder %s110, 0
      %s113 = sadd.s32 %s112, 1
      %s114 = scalar_select %p111, %s112, %s113
      %p117 = pneg %p111
      %p118 = scmp.eq.s32.totalorder %s10, 1
      %p119 = por %p117, %p118
      %p120 = scmp.ne.s32.totalorder %s112, %s115
      %p121 = scmp.eq.s32.totalorder %s10, 0
      %p122 = por %p120, %p121
      %p123 = scmp.ne.s32.totalorder %s112, %s115
      %p124 = scmp.eq.s32.totalorder %s15, 1
      %p125 = por %p123, %p124
      %p126 = scmp.ne.s32.totalorder %s115, %s116
      %p127 = scmp.eq.s32.totalorder %s15, 0
      %p128 = por %p126, %p127
      %p129 = scmp.ne.s32.totalorder %s115, %s116
      %p130 = scmp.eq.s32.totalorder %s16, 1
      %p131 = por %p129, %p130
      %p133 = scmp.ne.s32.totalorder %s116, %s132
      %p134 = scmp.eq.s32.totalorder %s16, 0
      %p135 = por %p133, %p134
      %p136 = scmp.le.s32.totalorder 1, %s10
      %p137 = scmp.lt.s32.totalorder %s10, 3
      %p138 = pnand %p136, %p137
      %p139 = pneg %p138
      // Predicated region
      $region9: #{seq2seq_forward.5} parent=5 // pred_check
        _
      $region10: #{seq2seq_forward.5} parent=5 // pred_check_branch
        %141 = sbr.rel (%p138) target = $region12
      $region11: #{seq2seq_forward.5} parent=5 // pred_region
        %s142 = ssub.s32 %s10, 1
        // Predicated region
        $region13: #{seq2seq_forward.5} parent=11 // pred_check
          %p143 = pneg %p74
        $region14: #{seq2seq_forward.5} parent=11 // pred_check_branch
          %145 = sbr.rel (%p143) target = $region16
        $region15: #{seq2seq_forward.5} parent=11 // pred_region
          %s146 = smul.u32 2, %s20
          %148 = vsyncadd [#allocation3], 0
          %s149 = smul.addr %s146, 4
          %s150 = scalar_lea.hbm %s1, %s149
          %s151 = sshll.u32 %s150, 4
          %s152 = int_to_ptr.hbm [resolvable:$true] %s151
          %s153 = sshll.u32 [#allocation2], 4
          %s154 = int_to_ptr.vmem [resolvable:$true] %s153
          %159 = dma.hbm_to_vmem [thread:$0]  %s152, 2048, %s154, [#allocation3], 128, 128, 8
        $region16: #{seq2seq_forward.5} parent=11 // pred_fallthru
          _
        // Predicated region
        $region17: #{seq2seq_forward.5} parent=11 // pred_check
          %p160 = pneg %p100
        $region18: #{seq2seq_forward.5} parent=11 // pred_check_branch
          %162 = sbr.rel (%p160) target = $region20
        $region19: #{seq2seq_forward.5} parent=11 // pred_region
          %s163 = smul.u32 2, %s20
          %p164 = scmp.lt.s32.totalorder %s163, 1
          %s165 = scalar_select %p164, %s163, 1
          %s166 = scalar_lea.vmem %s2, %s165
          %s167 = smul.u32 2, %s20
        $region20: #{seq2seq_forward.5} parent=11 // pred_fallthru
          _
      $region12: #{seq2seq_forward.5} parent=5 // pred_fallthru
        _
      %p168 = scmp.lt.s32.totalorder %s10, 2
      // Predicated region
      $region21: #{seq2seq_forward.5} parent=5 // pred_check
        %p169 = pneg %p168
      $region22: #{seq2seq_forward.5} parent=5 // pred_check_branch
        %171 = sbr.rel (%p169) target = $region24
      $region23: #{seq2seq_forward.5} parent=5 // pred_region
        // Predicated region
        $region25: #{seq2seq_forward.5} parent=23 // pred_check
          %p172 = pneg %p42
        $region26: #{seq2seq_forward.5} parent=23 // pred_check_branch
          %174 = sbr.rel (%p172) target = $region28
        $region27: #{seq2seq_forward.5} parent=23 // pred_region
          %p175 = scmp.lt.s32.totalorder %s17, 1
          %s176 = scalar_select %p175, %s17, 1
          %s177 = smul.addr %s176, 4
          %s178 = scalar_lea.vmem %s0, %s177
        $region28: #{seq2seq_forward.5} parent=23 // pred_fallthru
          _
      $region24: #{seq2seq_forward.5} parent=5 // pred_fallthru
        _
      %p179 = scmp.le.s32.totalorder 1, %s10
      %p180 = scmp.lt.s32.totalorder %s10, 3
      %p181 = pnand %p179, %p180
      %p182 = pneg %p181
      // Predicated region
      $region29: #{seq2seq_forward.5} parent=5 // pred_check
        _
      $region30: #{seq2seq_forward.5} parent=5 // pred_check_branch
        %184 = sbr.rel (%p181) target = $region32
      $region31: #{seq2seq_forward.5} parent=5 // pred_region
        %s185 = ssub.s32 %s10, 1
        // Predicated region
        $region33: #{seq2seq_forward.5} parent=31 // pred_check
          %p186 = pneg %p74
        $region34: #{seq2seq_forward.5} parent=31 // pred_check_branch
          %188 = sbr.rel (%p186) target = $region36
        $region35: #{seq2seq_forward.5} parent=31 // pred_region
          %190 = dma.done [#allocation3], 2048
        $region36: #{seq2seq_forward.5} parent=31 // pred_fallthru
          _
        %p191 = scmp.lt.s32.totalorder %s19, 1
        %s192 = scalar_select %p191, %s19, 1
        %s193 = smul.addr %s192, 4
        %s194 = scalar_lea.vmem %s0, %s193
        %p195 = pneg %p48
        %p196 = pneg %p45
        %p197 = pneg %p74
        %p198 = pneg %p71
        %s199 = smul.u32 2, %s20
        %p200 = scmp.lt.s32.totalorder %s199, 1
        %s201 = scalar_select %p200, %s199, 1
        %s202 = scalar_lea.vmem %s2, %s201
        %p203 = pneg %p100
        %p204 = pneg %p97
        %p205 = pneg %p128
        %p206 = pneg %p125
        %s207 = smul.u32 2, %s20
        %p208 = scmp.lt.s32.totalorder %s19, 1
        %s209 = scalar_select %p208, %s19, 1
        %p210 = scmp.lt.s32.totalorder %s207, 1
        %s211 = scalar_select %p210, %s207, 1
        %s212 = smul.addr %s209, 2
        %s213 = sadd.s32 %s211, %s212
        %s214 = smul.addr %s213, 8
        %s215 = scalar_lea.vmem %s3, %s214
        %p216 = scmp.lt.s32.totalorder %s19, 1
        %s217 = scalar_select %p216, %s19, 1
        %s218 = smul.addr %s217, 4
        %s219 = scalar_lea.vmem %s0, %s218
        %s220 = smul.u32 2, %s20
        %s221 = smul.u32 2, %s20
        %p222 = scmp.lt.s32.totalorder %s221, 1
        %s223 = scalar_select %p222, %s221, 1
        %s224 = scalar_lea.vmem %s2, %s223
        %s225 = smul.u32 2, %s20
        %s226 = smul.u32 2, %s20
        %p227 = scmp.lt.s32.totalorder %s19, 1
        %s228 = scalar_select %p227, %s19, 1
        %p229 = scmp.lt.s32.totalorder %s226, 1
        %s230 = scalar_select %p229, %s226, 1
        %s231 = smul.addr %s228, 2
        %s232 = sadd.s32 %s230, %s231
        %s233 = smul.addr %s232, 8
        %s234 = scalar_lea.vmem %s3, %s233
        %s235 = smul.u32 2, %s20
        %v236 = vld [vmem:[%s219] sm:$0xf]
        %v237 = vld [vmem:[#allocation2] sm:$0xff]
        %v238 = vld [vmem:[#allocation2 + $0x8] sm:$0xff]
        %v239 = vld [vmem:[#allocation2 + $0x10] sm:$0xff]
        %v240 = vld [vmem:[#allocation2 + $0x18] sm:$0xff]
        %v241 = vld [vmem:[#allocation2 + $0x20] sm:$0xff]
        %v242 = vld [vmem:[#allocation2 + $0x28] sm:$0xff]
        %v243 = vld [vmem:[#allocation2 + $0x30] sm:$0xff]
        %v244 = vld [vmem:[#allocation2 + $0x38] sm:$0xff]
        %v245 = vld [vmem:[#allocation2 + $0x40] sm:$0xff]
        %v246 = vld [vmem:[#allocation2 + $0x48] sm:$0xff]
        %v247 = vld [vmem:[#allocation2 + $0x50] sm:$0xff]
        %v248 = vld [vmem:[#allocation2 + $0x58] sm:$0xff]
        %v249 = vld [vmem:[#allocation2 + $0x60] sm:$0xff]
        %v250 = vld [vmem:[#allocation2 + $0x68] sm:$0xff]
        %v251 = vld [vmem:[#allocation2 + $0x70] sm:$0xff]
        %v252 = vld [vmem:[#allocation2 + $0x78] sm:$0xff]
        %v253 = vld [vmem:[%s224] sm:$0x3]
        %v255 = vperm.slane %v253, 0
        %v256 = vperm.slane %v253, 1
        %v275 = vunpack.c.l.b16 %v237
        %v276 = vunpack.c.h.b16 %v237
        %v277 = vunpack.c.l.b16 %v238
        %v278 = vunpack.c.h.b16 %v238
        %v279 = vunpack.c.l.b16 %v239
        %v280 = vunpack.c.h.b16 %v239
        %v281 = vunpack.c.l.b16 %v240
        %v282 = vunpack.c.h.b16 %v240
        %v283 = vunpack.c.l.b16 %v241
        %v284 = vunpack.c.h.b16 %v241
        %v285 = vunpack.c.l.b16 %v242
        %v286 = vunpack.c.h.b16 %v242
        %v287 = vunpack.c.l.b16 %v243
        %v288 = vunpack.c.h.b16 %v243
        %v289 = vunpack.c.l.b16 %v244
        %v290 = vunpack.c.h.b16 %v244
        %v291 = vunpack.c.l.b16 %v245
        %v292 = vunpack.c.h.b16 %v245
        %v293 = vunpack.c.l.b16 %v246
        %v294 = vunpack.c.h.b16 %v246
        %v295 = vunpack.c.l.b16 %v247
        %v296 = vunpack.c.h.b16 %v247
        %v297 = vunpack.c.l.b16 %v248
        %v298 = vunpack.c.h.b16 %v248
        %v299 = vunpack.c.l.b16 %v249
        %v300 = vunpack.c.h.b16 %v249
        %v301 = vunpack.c.l.b16 %v250
        %v302 = vunpack.c.h.b16 %v250
        %v303 = vunpack.c.l.b16 %v251
        %v304 = vunpack.c.h.b16 %v251
        %v305 = vunpack.c.l.b16 %v252
        %v306 = vunpack.c.h.b16 %v252
        %v307 = vpack.c.b16 %v277, %v275
        %v308 = vpack.c.b16 %v278, %v276
        %v309 = vpack.c.b16 %v281, %v279
        %v310 = vpack.c.b16 %v282, %v280
        %v311 = vpack.c.b16 %v285, %v283
        %v312 = vpack.c.b16 %v286, %v284
        %v313 = vpack.c.b16 %v289, %v287
        %v314 = vpack.c.b16 %v290, %v288
        %v315 = vpack.c.b16 %v293, %v291
        %v316 = vpack.c.b16 %v294, %v292
        %v317 = vpack.c.b16 %v297, %v295
        %v318 = vpack.c.b16 %v298, %v296
        %v319 = vpack.c.b16 %v301, %v299
        %v320 = vpack.c.b16 %v302, %v300
        %v321 = vpack.c.b16 %v305, %v303
        %v322 = vpack.c.b16 %v306, %v304
        %339 = vmatpush.bf16.msra.mxu0 %v321
        %340 = vmatpush.bf16.msra.mxu0 %v319
        %341 = vmatpush.bf16.msra.mxu0 %v317
        %342 = vmatpush.bf16.msra.mxu0 %v315
        %343 = vmatpush.bf16.msra.mxu0 %v313
        %344 = vmatpush.bf16.msra.mxu0 %v311
        %345 = vmatpush.bf16.msra.mxu0 %v309
        %346 = vmatpush.bf16.msra.mxu0 %v307
        %347 = vmatmul.bf16.gmra.mxu0 %v236
        %v348 = vpop.f32.mrf.mxu0
        %v349 = vadd.f32 %v255, %v348
        %v350 = vpop.f32.mrf.mxu0
        %351 = vdwg.mxu0
        %352 = vmatpush.bf16.msra.mxu0 %v322
        %353 = vmatpush.bf16.msra.mxu0 %v320
        %354 = vmatpush.bf16.msra.mxu0 %v318
        %355 = vmatpush.bf16.msra.mxu0 %v316
        %356 = vmatpush.bf16.msra.mxu0 %v314
        %357 = vmatpush.bf16.msra.mxu0 %v312
        %358 = vmatpush.bf16.msra.mxu0 %v310
        %359 = vmatpush.bf16.msra.mxu0 %v308
        %360 = vmatmul.bf16.gmra.mxu0 %v236
        %v361 = vpop.f32.mrf.mxu0
        %v362 = vadd.f32 %v256, %v361
        %v363 = vpop.f32.mrf.mxu0
        %364 = vdwg.mxu0
        %365 = vst [vmem:[%s234] sm:$0xff] %v349
        %366 = vst [vmem:[%s234 + $0x8] sm:$0xff] %v362
        %s367 = smul.u32 2, %s20
        %p368 = scmp.lt.s32.totalorder %s19, 1
        %s369 = scalar_select %p368, %s19, 1
        %p370 = scmp.lt.s32.totalorder %s367, 1
        %s371 = scalar_select %p370, %s367, 1
        %s372 = smul.addr %s369, 2
        %s373 = sadd.s32 %s371, %s372
        %s374 = smul.addr %s373, 8
        %s375 = scalar_lea.vmem %s3, %s374
        // Predicated region
        $region37: #{seq2seq_forward.5} parent=31 // pred_check
          %p376 = pneg %p125
        $region38: #{seq2seq_forward.5} parent=31 // pred_check_branch
          %378 = sbr.rel (%p376) target = $region40
        $region39: #{seq2seq_forward.5} parent=31 // pred_region
          %s379 = smul.u32 2, %s20
        $region40: #{seq2seq_forward.5} parent=31 // pred_fallthru
          _
      $region32: #{seq2seq_forward.5} parent=5 // pred_fallthru
        _
      %p380 = scmp.le.s32.totalorder 2, %s10
      // Predicated region
      $region41: #{seq2seq_forward.5} parent=5 // pred_check
        %p381 = pneg %p380
      $region42: #{seq2seq_forward.5} parent=5 // pred_check_branch
        %383 = sbr.rel (%p381) target = $region44
      $region43: #{seq2seq_forward.5} parent=5 // pred_region
        %s384 = ssub.s32 %s10, 2
        // Predicated region
        $region45: #{seq2seq_forward.5} parent=43 // pred_check
          %p385 = pneg %p131
        $region46: #{seq2seq_forward.5} parent=43 // pred_check_branch
          %387 = sbr.rel (%p385) target = $region48
        $region47: #{seq2seq_forward.5} parent=43 // pred_region
          %s388 = smul.u32 2, %s22
          %p389 = scmp.lt.s32.totalorder %s21, 1
          %s390 = scalar_select %p389, %s21, 1
          %p391 = scmp.lt.s32.totalorder %s388, 1
          %s392 = scalar_select %p391, %s388, 1
          %s393 = smul.addr %s390, 2
          %s394 = sadd.s32 %s392, %s393
          %s395 = smul.addr %s394, 8
          %s396 = scalar_lea.vmem %s3, %s395
        $region48: #{seq2seq_forward.5} parent=43 // pred_fallthru
          _
      $region44: #{seq2seq_forward.5} parent=5 // pred_fallthru
        _
    $region6: #{seq2seq_forward.5} parent=1 // loop_footer
      %s14 = sadd.s32 1, %s10
    $region7: #{seq2seq_forward.5} parent=1 // loop_footer_branch
      %9 = sbr.rel target = $region3
    $region8: #{seq2seq_forward.5} parent=1 // loop_exit
      _
    %397 = vsyncpa [#allocation3], 1
    %s398 = scalar_lea.sflag [#allocation3], 1
    %399 = vsyncpa %s398, 1

// kernel: seq2seq_forward.3
$region0: #{seq2seq_forward.3}
  #allocation0 [shape = 'u32[]', space=smem, size = 0x4, offset = 0x4, fixed_abs, tag = 'smem constant byte address 0x4 - core index']
  #allocation1 [shape = 'u32[72,128]{1,0:T(1,128)}', space=vmem, size = 0x9000, scoped, tag = 'internal scratch']
  #allocation2 [shape = 'f32[8,128]{1,0:T(8,128)}', space=vmem, size = 0x1000, scoped, tag = 'scratch operand']
  %s0 = inlined_call_operand.vmem [shape: bf16[2,8,128], index: 0, kind: input, shape index: {}]
  %s1 = inlined_call_operand.vmem [shape: bf16[2,128,384], index: 1, kind: input, shape index: {}]
  %s2 = inlined_call_operand.vmem [shape: f32[2,1,384], index: 2, kind: input, shape index: {}]
  %s3 = inlined_call_operand.hbm [shape: bf16[2,128,128], index: 3, kind: input, shape index: {}]
  %s4 = inlined_call_operand.vmem [shape: f32[2,1,128], index: 4, kind: input, shape index: {}]
  %s5 = inlined_call_operand.vmem [shape: f32[2,1,128], index: 5, kind: input, shape index: {}]
  %s6 = inlined_call_operand.vmem [shape: f32[2,1,128], index: 6, kind: input, shape index: {}]
  %s7 = inlined_call_operand.hbm [shape: bf16[2,128,512], index: 7, kind: input, shape index: {}]
  %s8 = inlined_call_operand.vmem [shape: f32[2,1,512], index: 8, kind: input, shape index: {}]
  %s9 = inlined_call_operand.hbm [shape: bf16[2,512,128], index: 9, kind: input, shape index: {}]
  %s10 = inlined_call_operand.vmem [shape: f32[2,1,128], index: 10, kind: input, shape index: {}]
  %s11 = inlined_call_operand.vmem [shape: f32[2,1,128], index: 11, kind: input, shape index: {}]
  %s12 = inlined_call_operand.vmem [shape: f32[2,1,128], index: 12, kind: input, shape index: {}]
  %s13 = inlined_call_operand.vmem [shape: f32[1,128], index: 13, kind: input, shape index: {}]
  %s14 = inlined_call_operand.vmem [shape: f32[1,128], index: 14, kind: input, shape index: {}]
  %s15 = inlined_call_operand.vmem [shape: bf16[2,8,128], index: 15, kind: output, shape index: {}]
  %s16 = sld [smem:[#allocation0]]
  $region113: #{seq2seq_forward.3} parent=0
    _
  %s18 = ssub.s32 1, %s16
  %s19 = scalar_select 0, %s18, %s16
  $region1: #{seq2seq_forward.3} parent=0
    #allocation3 [shape = 'u8[65536]{0}', space=vmem, size = 0x10000, scoped, tag = 'input window, operand 3']
    #allocation4 [shape = 's32[2]{0}', space=sflag, size = 0x8, scoped, tag = 'scoped memory for seq2seq_forward.3']
    #allocation5 [shape = 'u8[262144]{0}', space=vmem, size = 0x40000, scoped, tag = 'input window, operand 7']
    #allocation6 [shape = 's32[2]{0}', space=sflag, size = 0x8, scoped, tag = 'scoped memory for seq2seq_forward.3']
    #allocation7 [shape = 'u8[262144]{0}', space=vmem, size = 0x40000, scoped, tag = 'input window, operand 9']
    %20 = vsyncpa [#allocation4], 0
    %s21 = scalar_lea.sflag [#allocation4], 1
    %22 = vsyncpa %s21, 0
    %23 = vsyncpa [#allocation6], 0
    %s24 = scalar_lea.sflag [#allocation6], 1
    %25 = vsyncpa %s24, 0
    loop: start=0, step=1, limit=6
    $region2: #{seq2seq_forward.3} parent=1 // loop_pre_header
      _
    $region3: #{seq2seq_forward.3} parent=1 // loop_header
      %s27 = sphi 0, %s31
      %p28 = scmp.ge.s32.totalorder %s27, 6
      %s34 = sphi 0, %s46
      %s35 = sphi 0, %s42
      %s36 = sphi 0, %s34
      %s37 = sphi 0, %s35
      %s38 = sphi 0, %s36
      %s39 = sphi 0, %s37
      %s49 = sphi 0, %s51
      %s52 = sphi 0, %s49
      %s53 = sphi 0, %s52
      %s69 = sphi 0, %s53
      %s75 = sphi 0, %s77
      %s78 = sphi 0, %s75
      %s79 = sphi 0, %s78
      %s95 = sphi 0, %s79
      %s101 = sphi 0, %s103
      %s104 = sphi 0, %s101
      %s105 = sphi 0, %s104
      %s121 = sphi 0, %s105
      %s127 = sphi 0, %s129
      %s130 = sphi 0, %s127
      %s131 = sphi 0, %s130
      %s147 = sphi 0, %s131
      %s153 = sphi 0, %s155
      %s156 = sphi 0, %s153
      %s157 = sphi 0, %s156
      %s173 = sphi 0, %s157
      %s179 = sphi 0, %s181
      %s182 = sphi 0, %s179
      %s183 = sphi 0, %s182
      %s199 = sphi 0, %s183
      %s205 = sphi 0, %s207
      %s208 = sphi 0, %s205
      %s209 = sphi 0, %s208
      %s225 = sphi 0, %s209
      %s231 = sphi 0, %s233
      %s234 = sphi 0, %s231
      %s235 = sphi 0, %s234
      %s251 = sphi 0, %s235
      %s257 = sphi 0, %s259
      %s260 = sphi 0, %s257
      %s261 = sphi 0, %s260
      %s277 = sphi 0, %s261
      %s283 = sphi 0, %s285
      %s286 = sphi 0, %s283
      %s287 = sphi 0, %s286
      %s303 = sphi 0, %s287
      %s309 = sphi 0, %s311
      %s312 = sphi 0, %s309
      %s313 = sphi 0, %s312
      %s329 = sphi 0, %s313
      %s335 = sphi 0, %s337
      %s338 = sphi 0, %s335
      %s339 = sphi 0, %s338
      %s355 = sphi 0, %s339
      %s361 = sphi 0, %s363
      %s364 = sphi 0, %s361
      %s365 = sphi 0, %s364
      %s381 = sphi 0, %s365
      %s385 = sphi 0, %s385
      %s387 = sphi 0, %s385
      %s388 = sphi 0, %s387
      %s402 = sphi 0, %s388
      %s406 = sphi 0, %s406
      %s408 = sphi 0, %s406
      %s409 = sphi 0, %s408
      %s423 = sphi 0, %s409
      %s429 = sphi 0, %s431
      %s432 = sphi 0, %s429
      %s433 = sphi 0, %s432
      %s449 = sphi 0, %s433
    $region4: #{seq2seq_forward.3} parent=1 // loop_header_branch
      %30 = sbr.rel (%p28) target = $region8
    $region5: #{seq2seq_forward.3} parent=1 // loop_body
      %s32 = ssub.s32 %s27, 1
      %s33 = ssub.s32 %s27, 2
      %s40 = sadd.s32 1, %s35
      %p41 = scmp.ge.s32.totalorder %s40, 2
      %s42 = scalar_select %p41, 0, %s40
      %s43 = sadd.s32 1, %s34
      %s44 = scalar_select %p41, %s43, %s34
      %p45 = scmp.ge.s32.totalorder %s44, 2
      %s46 = scalar_select %p45, 0, %s44
      %s47 = ssub.s32 %s34, %s46
      %p48 = scmp.eq.s32.totalorder %s47, 0
      %s50 = sadd.s32 %s49, 1
      %s51 = scalar_select %p48, %s49, %s50
      %p54 = pneg %p48
      %p55 = scmp.eq.s32.totalorder %s27, 3
      %p56 = por %p54, %p55
      %p57 = scmp.ne.s32.totalorder %s49, %s52
      %p58 = scmp.eq.s32.totalorder %s27, 0
      %p59 = por %p57, %p58
      %p60 = scmp.ne.s32.totalorder %s49, %s52
      %p61 = scmp.eq.s32.totalorder %s32, 3
      %p62 = por %p60, %p61
      %p63 = scmp.ne.s32.totalorder %s52, %s53
      %p64 = scmp.eq.s32.totalorder %s32, 0
      %p65 = por %p63, %p64
      %p66 = scmp.ne.s32.totalorder %s52, %s53
      %p67 = scmp.eq.s32.totalorder %s33, 3
      %p68 = por %p66, %p67
      %p70 = scmp.ne.s32.totalorder %s53, %s69
      %p71 = scmp.eq.s32.totalorder %s33, 0
      %p72 = por %p70, %p71
      %s73 = ssub.s32 %s35, %s42
      %p74 = scmp.eq.s32.totalorder %s73, 0
      %s76 = sadd.s32 %s75, 1
      %s77 = scalar_select %p74, %s75, %s76
      %p80 = pneg %p74
      %p81 = scmp.eq.s32.totalorder %s27, 3
      %p82 = por %p80, %p81
      %p83 = scmp.ne.s32.totalorder %s75, %s78
      %p84 = scmp.eq.s32.totalorder %s27, 0
      %p85 = por %p83, %p84
      %p86 = scmp.ne.s32.totalorder %s75, %s78
      %p87 = scmp.eq.s32.totalorder %s32, 3
      %p88 = por %p86, %p87
      %p89 = scmp.ne.s32.totalorder %s78, %s79
      %p90 = scmp.eq.s32.totalorder %s32, 0
      %p91 = por %p89, %p90
      %p92 = scmp.ne.s32.totalorder %s78, %s79
      %p93 = scmp.eq.s32.totalorder %s33, 3
      %p94 = por %p92, %p93
      %p96 = scmp.ne.s32.totalorder %s79, %s95
      %p97 = scmp.eq.s32.totalorder %s33, 0
      %p98 = por %p96, %p97
      %s99 = ssub.s32 %s35, %s42
      %p100 = scmp.eq.s32.totalorder %s99, 0
      %s102 = sadd.s32 %s101, 1
      %s103 = scalar_select %p100, %s101, %s102
      %p106 = pneg %p100
      %p107 = scmp.eq.s32.totalorder %s27, 3
      %p108 = por %p106, %p107
      %p109 = scmp.ne.s32.totalorder %s101, %s104
      %p110 = scmp.eq.s32.totalorder %s27, 0
      %p111 = por %p109, %p110
      %p112 = scmp.ne.s32.totalorder %s101, %s104
      %p113 = scmp.eq.s32.totalorder %s32, 3
      %p114 = por %p112, %p113
      %p115 = scmp.ne.s32.totalorder %s104, %s105
      %p116 = scmp.eq.s32.totalorder %s32, 0
      %p117 = por %p115, %p116
      %p118 = scmp.ne.s32.totalorder %s104, %s105
      %p119 = scmp.eq.s32.totalorder %s33, 3
      %p120 = por %p118, %p119
      %p122 = scmp.ne.s32.totalorder %s105, %s121
      %p123 = scmp.eq.s32.totalorder %s33, 0
      %p124 = por %p122, %p123
      %s125 = ssub.s32 %s35, %s42
      %p126 = scmp.eq.s32.totalorder %s125, 0
      %s128 = sadd.s32 %s127, 1
      %s129 = scalar_select %p126, %s127, %s128
      %p132 = pneg %p126
      %p133 = scmp.eq.s32.totalorder %s27, 3
      %p134 = por %p132, %p133
      %p135 = scmp.ne.s32.totalorder %s127, %s130
      %p136 = scmp.eq.s32.totalorder %s27, 0
      %p137 = por %p135, %p136
      %p138 = scmp.ne.s32.totalorder %s127, %s130
      %p139 = scmp.eq.s32.totalorder %s32, 3
      %p140 = por %p138, %p139
      %p141 = scmp.ne.s32.totalorder %s130, %s131
      %p142 = scmp.eq.s32.totalorder %s32, 0
      %p143 = por %p141, %p142
      %p144 = scmp.ne.s32.totalorder %s130, %s131
      %p145 = scmp.eq.s32.totalorder %s33, 3
      %p146 = por %p144, %p145
      %p148 = scmp.ne.s32.totalorder %s131, %s147
      %p149 = scmp.eq.s32.totalorder %s33, 0
      %p150 = por %p148, %p149
      %s151 = ssub.s32 %s35, %s42
      %p152 = scmp.eq.s32.totalorder %s151, 0
      %s154 = sadd.s32 %s153, 1
      %s155 = scalar_select %p152, %s153, %s154
      %p158 = pneg %p152
      %p159 = scmp.eq.s32.totalorder %s27, 3
      %p160 = por %p158, %p159
      %p161 = scmp.ne.s32.totalorder %s153, %s156
      %p162 = scmp.eq.s32.totalorder %s27, 0
      %p163 = por %p161, %p162
      %p164 = scmp.ne.s32.totalorder %s153, %s156
      %p165 = scmp.eq.s32.totalorder %s32, 3
      %p166 = por %p164, %p165
      %p167 = scmp.ne.s32.totalorder %s156, %s157
      %p168 = scmp.eq.s32.totalorder %s32, 0
      %p169 = por %p167, %p168
      %p170 = scmp.ne.s32.totalorder %s156, %s157
      %p171 = scmp.eq.s32.totalorder %s33, 3
      %p172 = por %p170, %p171
      %p174 = scmp.ne.s32.totalorder %s157, %s173
      %p175 = scmp.eq.s32.totalorder %s33, 0
      %p176 = por %p174, %p175
      %s177 = ssub.s32 %s35, %s42
      %p178 = scmp.eq.s32.totalorder %s177, 0
      %s180 = sadd.s32 %s179, 1
      %s181 = scalar_select %p178, %s179, %s180
      %p184 = pneg %p178
      %p185 = scmp.eq.s32.totalorder %s27, 3
      %p186 = por %p184, %p185
      %p187 = scmp.ne.s32.totalorder %s179, %s182
      %p188 = scmp.eq.s32.totalorder %s27, 0
      %p189 = por %p187, %p188
      %p190 = scmp.ne.s32.totalorder %s179, %s182
      %p191 = scmp.eq.s32.totalorder %s32, 3
      %p192 = por %p190, %p191
      %p193 = scmp.ne.s32.totalorder %s182, %s183
      %p194 = scmp.eq.s32.totalorder %s32, 0
      %p195 = por %p193, %p194
      %p196 = scmp.ne.s32.totalorder %s182, %s183
      %p197 = scmp.eq.s32.totalorder %s33, 3
      %p198 = por %p196, %p197
      %p200 = scmp.ne.s32.totalorder %s183, %s199
      %p201 = scmp.eq.s32.totalorder %s33, 0
      %p202 = por %p200, %p201
      %s203 = ssub.s32 %s35, %s42
      %p204 = scmp.eq.s32.totalorder %s203, 0
      %s206 = sadd.s32 %s205, 1
      %s207 = scalar_select %p204, %s205, %s206
      %p210 = pneg %p204
      %p211 = scmp.eq.s32.totalorder %s27, 3
      %p212 = por %p210, %p211
      %p213 = scmp.ne.s32.totalorder %s205, %s208
      %p214 = scmp.eq.s32.totalorder %s27, 0
      %p215 = por %p213, %p214
      %p216 = scmp.ne.s32.totalorder %s205, %s208
      %p217 = scmp.eq.s32.totalorder %s32, 3
      %p218 = por %p216, %p217
      %p219 = scmp.ne.s32.totalorder %s208, %s209
      %p220 = scmp.eq.s32.totalorder %s32, 0
      %p221 = por %p219, %p220
      %p222 = scmp.ne.s32.totalorder %s208, %s209
      %p223 = scmp.eq.s32.totalorder %s33, 3
      %p224 = por %p222, %p223
      %p226 = scmp.ne.s32.totalorder %s209, %s225
      %p227 = scmp.eq.s32.totalorder %s33, 0
      %p228 = por %p226, %p227
      %s229 = ssub.s32 %s35, %s42
      %p230 = scmp.eq.s32.totalorder %s229, 0
      %s232 = sadd.s32 %s231, 1
      %s233 = scalar_select %p230, %s231, %s232
      %p236 = pneg %p230
      %p237 = scmp.eq.s32.totalorder %s27, 3
      %p238 = por %p236, %p237
      %p239 = scmp.ne.s32.totalorder %s231, %s234
      %p240 = scmp.eq.s32.totalorder %s27, 0
      %p241 = por %p239, %p240
      %p242 = scmp.ne.s32.totalorder %s231, %s234
      %p243 = scmp.eq.s32.totalorder %s32, 3
      %p244 = por %p242, %p243
      %p245 = scmp.ne.s32.totalorder %s234, %s235
      %p246 = scmp.eq.s32.totalorder %s32, 0
      %p247 = por %p245, %p246
      %p248 = scmp.ne.s32.totalorder %s234, %s235
      %p249 = scmp.eq.s32.totalorder %s33, 3
      %p250 = por %p248, %p249
      %p252 = scmp.ne.s32.totalorder %s235, %s251
      %p253 = scmp.eq.s32.totalorder %s33, 0
      %p254 = por %p252, %p253
      %s255 = ssub.s32 %s35, %s42
      %p256 = scmp.eq.s32.totalorder %s255, 0
      %s258 = sadd.s32 %s257, 1
      %s259 = scalar_select %p256, %s257, %s258
      %p262 = pneg %p256
      %p263 = scmp.eq.s32.totalorder %s27, 3
      %p264 = por %p262, %p263
      %p265 = scmp.ne.s32.totalorder %s257, %s260
      %p266 = scmp.eq.s32.totalorder %s27, 0
      %p267 = por %p265, %p266
      %p268 = scmp.ne.s32.totalorder %s257, %s260
      %p269 = scmp.eq.s32.totalorder %s32, 3
      %p270 = por %p268, %p269
      %p271 = scmp.ne.s32.totalorder %s260, %s261
      %p272 = scmp.eq.s32.totalorder %s32, 0
      %p273 = por %p271, %p272
      %p274 = scmp.ne.s32.totalorder %s260, %s261
      %p275 = scmp.eq.s32.totalorder %s33, 3
      %p276 = por %p274, %p275
      %p278 = scmp.ne.s32.totalorder %s261, %s277
      %p279 = scmp.eq.s32.totalorder %s33, 0
      %p280 = por %p278, %p279
      %s281 = ssub.s32 %s35, %s42
      %p282 = scmp.eq.s32.totalorder %s281, 0
      %s284 = sadd.s32 %s283, 1
      %s285 = scalar_select %p282, %s283, %s284
      %p288 = pneg %p282
      %p289 = scmp.eq.s32.totalorder %s27, 3
      %p290 = por %p288, %p289
      %p291 = scmp.ne.s32.totalorder %s283, %s286
      %p292 = scmp.eq.s32.totalorder %s27, 0
      %p293 = por %p291, %p292
      %p294 = scmp.ne.s32.totalorder %s283, %s286
      %p295 = scmp.eq.s32.totalorder %s32, 3
      %p296 = por %p294, %p295
      %p297 = scmp.ne.s32.totalorder %s286, %s287
      %p298 = scmp.eq.s32.totalorder %s32, 0
      %p299 = por %p297, %p298
      %p300 = scmp.ne.s32.totalorder %s286, %s287
      %p301 = scmp.eq.s32.totalorder %s33, 3
      %p302 = por %p300, %p301
      %p304 = scmp.ne.s32.totalorder %s287, %s303
      %p305 = scmp.eq.s32.totalorder %s33, 0
      %p306 = por %p304, %p305
      %s307 = ssub.s32 %s35, %s42
      %p308 = scmp.eq.s32.totalorder %s307, 0
      %s310 = sadd.s32 %s309, 1
      %s311 = scalar_select %p308, %s309, %s310
      %p314 = pneg %p308
      %p315 = scmp.eq.s32.totalorder %s27, 3
      %p316 = por %p314, %p315
      %p317 = scmp.ne.s32.totalorder %s309, %s312
      %p318 = scmp.eq.s32.totalorder %s27, 0
      %p319 = por %p317, %p318
      %p320 = scmp.ne.s32.totalorder %s309, %s312
      %p321 = scmp.eq.s32.totalorder %s32, 3
      %p322 = por %p320, %p321
      %p323 = scmp.ne.s32.totalorder %s312, %s313
      %p324 = scmp.eq.s32.totalorder %s32, 0
      %p325 = por %p323, %p324
      %p326 = scmp.ne.s32.totalorder %s312, %s313
      %p327 = scmp.eq.s32.totalorder %s33, 3
      %p328 = por %p326, %p327
      %p330 = scmp.ne.s32.totalorder %s313, %s329
      %p331 = scmp.eq.s32.totalorder %s33, 0
      %p332 = por %p330, %p331
      %s333 = ssub.s32 %s35, %s42
      %p334 = scmp.eq.s32.totalorder %s333, 0
      %s336 = sadd.s32 %s335, 1
      %s337 = scalar_select %p334, %s335, %s336
      %p340 = pneg %p334
      %p341 = scmp.eq.s32.totalorder %s27, 3
      %p342 = por %p340, %p341
      %p343 = scmp.ne.s32.totalorder %s335, %s338
      %p344 = scmp.eq.s32.totalorder %s27, 0
      %p345 = por %p343, %p344
      %p346 = scmp.ne.s32.totalorder %s335, %s338
      %p347 = scmp.eq.s32.totalorder %s32, 3
      %p348 = por %p346, %p347
      %p349 = scmp.ne.s32.totalorder %s338, %s339
      %p350 = scmp.eq.s32.totalorder %s32, 0
      %p351 = por %p349, %p350
      %p352 = scmp.ne.s32.totalorder %s338, %s339
      %p353 = scmp.eq.s32.totalorder %s33, 3
      %p354 = por %p352, %p353
      %p356 = scmp.ne.s32.totalorder %s339, %s355
      %p357 = scmp.eq.s32.totalorder %s33, 0
      %p358 = por %p356, %p357
      %s359 = ssub.s32 %s35, %s42
      %p360 = scmp.eq.s32.totalorder %s359, 0
      %s362 = sadd.s32 %s361, 1
      %s363 = scalar_select %p360, %s361, %s362
      %p366 = pneg %p360
      %p367 = scmp.eq.s32.totalorder %s27, 3
      %p368 = por %p366, %p367
      %p369 = scmp.ne.s32.totalorder %s361, %s364
      %p370 = scmp.eq.s32.totalorder %s27, 0
      %p371 = por %p369, %p370
      %p372 = scmp.ne.s32.totalorder %s361, %s364
      %p373 = scmp.eq.s32.totalorder %s32, 3
      %p374 = por %p372, %p373
      %p375 = scmp.ne.s32.totalorder %s364, %s365
      %p376 = scmp.eq.s32.totalorder %s32, 0
      %p377 = por %p375, %p376
      %p378 = scmp.ne.s32.totalorder %s364, %s365
      %p379 = scmp.eq.s32.totalorder %s33, 3
      %p380 = por %p378, %p379
      %p382 = scmp.ne.s32.totalorder %s365, %s381
      %p383 = scmp.eq.s32.totalorder %s33, 0
      %p384 = por %p382, %p383
      %s386 = sadd.s32 %s385, 1
      %p389 = scmp.eq.s32.totalorder %s27, 3
      %p390 = scmp.ne.s32.totalorder %s385, %s387
      %p391 = scmp.eq.s32.totalorder %s27, 0
      %p392 = por %p390, %p391
      %p393 = scmp.ne.s32.totalorder %s385, %s387
      %p394 = scmp.eq.s32.totalorder %s32, 3
      %p395 = por %p393, %p394
      %p396 = scmp.ne.s32.totalorder %s387, %s388
      %p397 = scmp.eq.s32.totalorder %s32, 0
      %p398 = por %p396, %p397
      %p399 = scmp.ne.s32.totalorder %s387, %s388
      %p400 = scmp.eq.s32.totalorder %s33, 3
      %p401 = por %p399, %p400
      %p403 = scmp.ne.s32.totalorder %s388, %s402
      %p404 = scmp.eq.s32.totalorder %s33, 0
      %p405 = por %p403, %p404
      %s407 = sadd.s32 %s406, 1
      %p410 = scmp.eq.s32.totalorder %s27, 3
      %p411 = scmp.ne.s32.totalorder %s406, %s408
      %p412 = scmp.eq.s32.totalorder %s27, 0
      %p413 = por %p411, %p412
      %p414 = scmp.ne.s32.totalorder %s406, %s408
      %p415 = scmp.eq.s32.totalorder %s32, 3
      %p416 = por %p414, %p415
      %p417 = scmp.ne.s32.totalorder %s408, %s409
      %p418 = scmp.eq.s32.totalorder %s32, 0
      %p419 = por %p417, %p418
      %p420 = scmp.ne.s32.totalorder %s408, %s409
      %p421 = scmp.eq.s32.totalorder %s33, 3
      %p422 = por %p420, %p421
      %p424 = scmp.ne.s32.totalorder %s409, %s423
      %p425 = scmp.eq.s32.totalorder %s33, 0
      %p426 = por %p424, %p425
      %s427 = ssub.s32 %s34, %s46
      %p428 = scmp.eq.s32.totalorder %s427, 0
      %s430 = sadd.s32 %s429, 1
      %s431 = scalar_select %p428, %s429, %s430
      %p434 = pneg %p428
      %p435 = scmp.eq.s32.totalorder %s27, 3
      %p436 = por %p434, %p435
      %p437 = scmp.ne.s32.totalorder %s429, %s432
      %p438 = scmp.eq.s32.totalorder %s27, 0
      %p439 = por %p437, %p438
      %p440 = scmp.ne.s32.totalorder %s429, %s432
      %p441 = scmp.eq.s32.totalorder %s32, 3
      %p442 = por %p440, %p441
      %p443 = scmp.ne.s32.totalorder %s432, %s433
      %p444 = scmp.eq.s32.totalorder %s32, 0
      %p445 = por %p443, %p444
      %p446 = scmp.ne.s32.totalorder %s432, %s433
      %p447 = scmp.eq.s32.totalorder %s33, 3
      %p448 = por %p446, %p447
      %p450 = scmp.ne.s32.totalorder %s433, %s449
      %p451 = scmp.eq.s32.totalorder %s33, 0
      %p452 = por %p450, %p451
      %p453 = scmp.le.s32.totalorder 1, %s27
      %p454 = scmp.lt.s32.totalorder %s27, 5
      %p455 = pnand %p453, %p454
      %p456 = pneg %p455
      // Predicated region
      $region9: #{seq2seq_forward.3} parent=5 // pred_check
        _
      $region10: #{seq2seq_forward.3} parent=5 // pred_check_branch
        %458 = sbr.rel (%p455) target = $region12
      $region11: #{seq2seq_forward.3} parent=5 // pred_region
        %s459 = ssub.s32 %s27, 1
        // Predicated region
        $region13: #{seq2seq_forward.3} parent=11 // pred_check
          %p460 = pneg %p398
        $region14: #{seq2seq_forward.3} parent=11 // pred_check_branch
          %462 = sbr.rel (%p460) target = $region16
        $region15: #{seq2seq_forward.3} parent=11 // pred_region
          _
        $region16: #{seq2seq_forward.3} parent=11 // pred_fallthru
          _
        // Predicated region
        $region17: #{seq2seq_forward.3} parent=11 // pred_check
          %p463 = pneg %p419
        $region18: #{seq2seq_forward.3} parent=11 // pred_check_branch
          %465 = sbr.rel (%p463) target = $region20
        $region19: #{seq2seq_forward.3} parent=11 // pred_region
          _
        $region20: #{seq2seq_forward.3} parent=11 // pred_fallthru
          _
      $region12: #{seq2seq_forward.3} parent=5 // pred_fallthru
        _
      %p466 = scmp.lt.s32.totalorder %s27, 4
      // Predicated region
      $region21: #{seq2seq_forward.3} parent=5 // pred_check
        %p467 = pneg %p466
      $region22: #{seq2seq_forward.3} parent=5 // pred_check_branch
        %469 = sbr.rel (%p467) target = $region24
      $region23: #{seq2seq_forward.3} parent=5 // pred_region
        // Predicated region
        $region25: #{seq2seq_forward.3} parent=23 // pred_check
          %p470 = pneg %p59
        $region26: #{seq2seq_forward.3} parent=23 // pred_check_branch
          %472 = sbr.rel (%p470) target = $region28
        $region27: #{seq2seq_forward.3} parent=23 // pred_region
          %p473 = scmp.lt.s32.totalorder %s34, 1
          %s474 = scalar_select %p473, %s34, 1
          %s475 = smul.addr %s474, 4
          %s476 = scalar_lea.vmem %s0, %s475
        $region28: #{seq2seq_forward.3} parent=23 // pred_fallthru
          _
        // Predicated region
        $region29: #{seq2seq_forward.3} parent=23 // pred_check
          %p477 = pneg %p85
        $region30: #{seq2seq_forward.3} parent=23 // pred_check_branch
          %479 = sbr.rel (%p477) target = $region32
        $region31: #{seq2seq_forward.3} parent=23 // pred_region
          %p480 = scmp.lt.s32.totalorder %s35, 1
          %s481 = scalar_select %p480, %s35, 1
          %s482 = smul.addr %s481, 48
          %s483 = smul.addr %s482, 4
          %s484 = scalar_lea.vmem %s1, %s483
        $region32: #{seq2seq_forward.3} parent=23 // pred_fallthru
          _
        // Predicated region
        $region33: #{seq2seq_forward.3} parent=23 // pred_check
          %p485 = pneg %p111
        $region34: #{seq2seq_forward.3} parent=23 // pred_check_branch
          %487 = sbr.rel (%p485) target = $region36
        $region35: #{seq2seq_forward.3} parent=23 // pred_region
          %p488 = scmp.lt.s32.totalorder %s35, 1
          %s489 = scalar_select %p488, %s35, 1
          %s490 = smul.addr %s489, 3
          %s491 = scalar_lea.vmem %s2, %s490
        $region36: #{seq2seq_forward.3} parent=23 // pred_fallthru
          _
        // Predicated region
        $region37: #{seq2seq_forward.3} parent=23 // pred_check
          %p492 = pneg %p137
        $region38: #{seq2seq_forward.3} parent=23 // pred_check_branch
          %494 = sbr.rel (%p492) target = $region40
        $region39: #{seq2seq_forward.3} parent=23 // pred_region
          %s495 = sand.u32 %s127, 1
          %s496 = scalar_lea.sflag [#allocation4], %s495
          %s497 = sand.u32 %s127, 1
          %s498 = smul.addr %s497, 64
          %s499 = scalar_lea.vmem [#allocation3], %s498
          %501 = vsyncadd %s496, 0
          %s502 = smul.addr %s35, 16
          %s503 = smul.addr %s502, 4
          %s504 = scalar_lea.hbm %s3, %s503
          %s505 = sshll.u32 %s504, 4
          %s506 = int_to_ptr.hbm [resolvable:$true] %s505
          %s507 = sshll.u32 %s499, 4
          %s508 = int_to_ptr.vmem [resolvable:$true] %s507
          %513 = dma.hbm_to_vmem [thread:$0]  %s506, 1024, %s508, %s496, 64, 64, 4
        $region40: #{seq2seq_forward.3} parent=23 // pred_fallthru
          _
        // Predicated region
        $region41: #{seq2seq_forward.3} parent=23 // pred_check
          %p514 = pneg %p163
        $region42: #{seq2seq_forward.3} parent=23 // pred_check_branch
          %516 = sbr.rel (%p514) target = $region44
        $region43: #{seq2seq_forward.3} parent=23 // pred_region
          %p517 = scmp.lt.s32.totalorder %s35, 1
          %s518 = scalar_select %p517, %s35, 1
          %s519 = scalar_lea.vmem %s4, %s518
        $region44: #{seq2seq_forward.3} parent=23 // pred_fallthru
          _
        // Predicated region
        $region45: #{seq2seq_forward.3} parent=23 // pred_check
          %p520 = pneg %p189
        $region46: #{seq2seq_forward.3} parent=23 // pred_check_branch
          %522 = sbr.rel (%p520) target = $region48
        $region47: #{seq2seq_forward.3} parent=23 // pred_region
          %p523 = scmp.lt.s32.totalorder %s35, 1
          %s524 = scalar_select %p523, %s35, 1
          %s525 = scalar_lea.vmem %s5, %s524
        $region48: #{seq2seq_forward.3} parent=23 // pred_fallthru
          _
        // Predicated region
        $region49: #{seq2seq_forward.3} parent=23 // pred_check
          %p526 = pneg %p215
        $region50: #{seq2seq_forward.3} parent=23 // pred_check_branch
          %528 = sbr.rel (%p526) target = $region52
        $region51: #{seq2seq_forward.3} parent=23 // pred_region
          %p529 = scmp.lt.s32.totalorder %s35, 1
          %s530 = scalar_select %p529, %s35, 1
          %s531 = scalar_lea.vmem %s6, %s530
        $region52: #{seq2seq_forward.3} parent=23 // pred_fallthru
          _
        // Predicated region
        $region53: #{seq2seq_forward.3} parent=23 // pred_check
          %p532 = pneg %p241
        $region54: #{seq2seq_forward.3} parent=23 // pred_check_branch
          %534 = sbr.rel (%p532) target = $region56
        $region55: #{seq2seq_forward.3} parent=23 // pred_region
          %s535 = sand.u32 %s27, 1
          %s536 = scalar_lea.sflag [#allocation6], %s535
          %s537 = sand.u32 %s231, 1
          %s538 = smul.addr %s537, 256
          %s539 = scalar_lea.vmem [#allocation5], %s538
          %541 = vsyncadd %s536, 0
          %s542 = smul.addr %s35, 64
          %s543 = smul.addr %s542, 4
          %s544 = scalar_lea.hbm %s7, %s543
          %s545 = sshll.u32 %s544, 4
          %s546 = int_to_ptr.hbm [resolvable:$true] %s545
          %s547 = sshll.u32 %s539, 4
          %s548 = int_to_ptr.vmem [resolvable:$true] %s547
          %553 = dma.hbm_to_vmem [thread:$0]  %s546, 4096, %s548, %s536, 256, 256, 16
        $region56: #{seq2seq_forward.3} parent=23 // pred_fallthru
          _
        // Predicated region
        $region57: #{seq2seq_forward.3} parent=23 // pred_check
          %p554 = pneg %p267
        $region58: #{seq2seq_forward.3} parent=23 // pred_check_branch
          %556 = sbr.rel (%p554) target = $region60
        $region59: #{seq2seq_forward.3} parent=23 // pred_region
          %p557 = scmp.lt.s32.totalorder %s35, 1
          %s558 = scalar_select %p557, %s35, 1
          %s559 = smul.addr %s558, 4
          %s560 = scalar_lea.vmem %s8, %s559
        $region60: #{seq2seq_forward.3} parent=23 // pred_fallthru
          _
        // Predicated region
        $region61: #{seq2seq_forward.3} parent=23 // pred_check
          %p561 = pneg %p293
        $region62: #{seq2seq_forward.3} parent=23 // pred_check_branch
          %563 = sbr.rel (%p561) target = $region64
        $region63: #{seq2seq_forward.3} parent=23 // pred_region
          %s564 = sand.u32 %s27, 1
          %s565 = scalar_lea.sflag [#allocation6], %s564
          %s566 = sand.u32 %s283, 1
          %s567 = smul.addr %s566, 256
          %s568 = scalar_lea.vmem [#allocation7], %s567
          %570 = vsyncadd %s565, 0
          %s571 = smul.addr %s35, 64
          %s572 = smul.addr %s571, 4
          %s573 = scalar_lea.hbm %s9, %s572
          %s574 = sshll.u32 %s573, 4
          %s575 = int_to_ptr.hbm [resolvable:$true] %s574
          %s576 = sshll.u32 %s568, 4
          %s577 = int_to_ptr.vmem [resolvable:$true] %s576
          %582 = dma.hbm_to_vmem [thread:$0]  %s575, 4096, %s577, %s565, 64, 64, 4
        $region64: #{seq2seq_forward.3} parent=23 // pred_fallthru
          _
        // Predicated region
        $region65: #{seq2seq_forward.3} parent=23 // pred_check
          %p583 = pneg %p319
        $region66: #{seq2seq_forward.3} parent=23 // pred_check_branch
          %585 = sbr.rel (%p583) target = $region68
        $region67: #{seq2seq_forward.3} parent=23 // pred_region
          %p586 = scmp.lt.s32.totalorder %s35, 1
          %s587 = scalar_select %p586, %s35, 1
          %s588 = scalar_lea.vmem %s10, %s587
        $region68: #{seq2seq_forward.3} parent=23 // pred_fallthru
          _
        // Predicated region
        $region69: #{seq2seq_forward.3} parent=23 // pred_check
          %p589 = pneg %p345
        $region70: #{seq2seq_forward.3} parent=23 // pred_check_branch
          %591 = sbr.rel (%p589) target = $region72
        $region71: #{seq2seq_forward.3} parent=23 // pred_region
          %p592 = scmp.lt.s32.totalorder %s35, 1
          %s593 = scalar_select %p592, %s35, 1
          %s594 = scalar_lea.vmem %s11, %s593
        $region72: #{seq2seq_forward.3} parent=23 // pred_fallthru
          _
        // Predicated region
        $region73: #{seq2seq_forward.3} parent=23 // pred_check
          %p595 = pneg %p371
        $region74: #{seq2seq_forward.3} parent=23 // pred_check_branch
          %597 = sbr.rel (%p595) target = $region76
        $region75: #{seq2seq_forward.3} parent=23 // pred_region
          %p598 = scmp.lt.s32.totalorder %s35, 1
          %s599 = scalar_select %p598, %s35, 1
          %s600 = scalar_lea.vmem %s12, %s599
        $region76: #{seq2seq_forward.3} parent=23 // pred_fallthru
          _
      $region24: #{seq2seq_forward.3} parent=5 // pred_fallthru
        _
      %p601 = scmp.le.s32.totalorder 1, %s27
      %p602 = scmp.lt.s32.totalorder %s27, 5
      %p603 = pnand %p601, %p602
      %p604 = pneg %p603
      // Predicated region
      $region77: #{seq2seq_forward.3} parent=5 // pred_check
        _
      $region78: #{seq2seq_forward.3} parent=5 // pred_check_branch
        %606 = sbr.rel (%p603) target = $region80
      $region79: #{seq2seq_forward.3} parent=5 // pred_region
        %s607 = ssub.s32 %s27, 1
        %s608 = sand.u32 %s130, 1
        %s609 = scalar_lea.sflag [#allocation4], %s608
        %s610 = sand.u32 %s130, 1
        %s611 = smul.addr %s610, 64
        %s612 = scalar_lea.vmem [#allocation3], %s611
        // Predicated region
        $region81: #{seq2seq_forward.3} parent=79 // pred_check
          %p613 = pneg %p143
        $region82: #{seq2seq_forward.3} parent=79 // pred_check_branch
          %615 = sbr.rel (%p613) target = $region84
        $region83: #{seq2seq_forward.3} parent=79 // pred_region
          %617 = dma.done %s609, 1024
        $region84: #{seq2seq_forward.3} parent=79 // pred_fallthru
          _
        %s618 = sand.u32 %s32, 1
        %s619 = scalar_lea.sflag [#allocation6], %s618
        %s620 = sand.u32 %s234, 1
        %s621 = smul.addr %s620, 256
        %s622 = scalar_lea.vmem [#allocation5], %s621
        // Predicated region
        $region85: #{seq2seq_forward.3} parent=79 // pred_check
          %p623 = pneg %p247
        $region86: #{seq2seq_forward.3} parent=79 // pred_check_branch
          %625 = sbr.rel (%p623) target = $region88
        $region87: #{seq2seq_forward.3} parent=79 // pred_region
          %627 = dma.done %s619, 4096
        $region88: #{seq2seq_forward.3} parent=79 // pred_fallthru
          _
        %s628 = sand.u32 %s32, 1
        %s629 = scalar_lea.sflag [#allocation6], %s628
        %s630 = sand.u32 %s286, 1
        %s631 = smul.addr %s630, 256
        %s632 = scalar_lea.vmem [#allocation7], %s631
        // Predicated region
        $region89: #{seq2seq_forward.3} parent=79 // pred_check
          %p633 = pneg %p299
        $region90: #{seq2seq_forward.3} parent=79 // pred_check_branch
          %635 = sbr.rel (%p633) target = $region92
        $region91: #{seq2seq_forward.3} parent=79 // pred_region
          %637 = dma.done %s629, 4096
        $region92: #{seq2seq_forward.3} parent=79 // pred_fallthru
          _
        %p638 = scmp.lt.s32.totalorder %s36, 1
        %s639 = scalar_select %p638, %s36, 1
        %s640 = smul.addr %s639, 4
        %s641 = scalar_lea.vmem %s0, %s640
        %p642 = pneg %p65
        %p643 = pneg %p62
        %p644 = scmp.lt.s32.totalorder %s37, 1
        %s645 = scalar_select %p644, %s37, 1
        %s646 = smul.addr %s645, 48
        %s647 = smul.addr %s646, 4
        %s648 = scalar_lea.vmem %s1, %s647
        %p649 = pneg %p91
        %p650 = pneg %p88
        %p651 = scmp.lt.s32.totalorder %s37, 1
        %s652 = scalar_select %p651, %s37, 1
        %s653 = smul.addr %s652, 3
        %s654 = scalar_lea.vmem %s2, %s653
        %p655 = pneg %p117
        %p656 = pneg %p114
        %s657 = sand.u32 %s130, 1
        %s658 = scalar_lea.sflag [#allocation4], %s657
        %s659 = sand.u32 %s130, 1
        %s660 = smul.addr %s659, 64
        %s661 = scalar_lea.vmem [#allocation3], %s660
        %p662 = pneg %p143
        %p663 = pneg %p140
        %p664 = scmp.lt.s32.totalorder %s37, 1
        %s665 = scalar_select %p664, %s37, 1
        %s666 = scalar_lea.vmem %s4, %s665
        %p667 = pneg %p169
        %p668 = pneg %p166
        %p669 = scmp.lt.s32.totalorder %s37, 1
        %s670 = scalar_select %p669, %s37, 1
        %s671 = scalar_lea.vmem %s5, %s670
        %p672 = pneg %p195
        %p673 = pneg %p192
        %p674 = scmp.lt.s32.totalorder %s37, 1
        %s675 = scalar_select %p674, %s37, 1
        %s676 = scalar_lea.vmem %s6, %s675
        %p677 = pneg %p221
        %p678 = pneg %p218
        %s679 = sand.u32 %s32, 1
        %s680 = scalar_lea.sflag [#allocation6], %s679
        %s681 = sand.u32 %s234, 1
        %s682 = smul.addr %s681, 256
        %s683 = scalar_lea.vmem [#allocation5], %s682
        %p684 = pneg %p247
        %p685 = pneg %p244
        %p686 = scmp.lt.s32.totalorder %s37, 1
        %s687 = scalar_select %p686, %s37, 1
        %s688 = smul.addr %s687, 4
        %s689 = scalar_lea.vmem %s8, %s688
        %p690 = pneg %p273
        %p691 = pneg %p270
        %s692 = sand.u32 %s32, 1
        %s693 = scalar_lea.sflag [#allocation6], %s692
        %s694 = sand.u32 %s286, 1
        %s695 = smul.addr %s694, 256
        %s696 = scalar_lea.vmem [#allocation7], %s695
        %p697 = pneg %p299
        %p698 = pneg %p296
        %p699 = scmp.lt.s32.totalorder %s37, 1
        %s700 = scalar_select %p699, %s37, 1
        %s701 = scalar_lea.vmem %s10, %s700
        %p702 = pneg %p325
        %p703 = pneg %p322
        %p704 = scmp.lt.s32.totalorder %s37, 1
        %s705 = scalar_select %p704, %s37, 1
        %s706 = scalar_lea.vmem %s11, %s705
        %p707 = pneg %p351
        %p708 = pneg %p348
        %p709 = scmp.lt.s32.totalorder %s37, 1
        %s710 = scalar_select %p709, %s37, 1
        %s711 = scalar_lea.vmem %s12, %s710
        %p712 = pneg %p377
        %p713 = pneg %p374
        %p714 = pneg %p398
        %p715 = pneg %p395
        %p716 = pneg %p419
        %p717 = pneg %p416
        %p718 = pneg %p445
        %p719 = pneg %p442
        %p720 = scmp.lt.s32.totalorder %s36, 1
        %s721 = scalar_select %p720, %s36, 1
        %s722 = smul.addr %s721, 4
        %s723 = scalar_lea.vmem %s15, %s722
        %p724 = scmp.lt.s32.totalorder %s36, 1
        %s725 = scalar_select %p724, %s36, 1
        %s726 = smul.addr %s725, 4
        %s727 = scalar_lea.vmem %s0, %s726
        %p728 = scmp.lt.s32.totalorder %s37, 1
        %s729 = scalar_select %p728, %s37, 1
        %s730 = smul.addr %s729, 48
        %s731 = smul.addr %s730, 4
        %s732 = scalar_lea.vmem %s1, %s731
        %p733 = scmp.lt.s32.totalorder %s37, 1
        %s734 = scalar_select %p733, %s37, 1
        %s735 = smul.addr %s734, 3
        %s736 = scalar_lea.vmem %s2, %s735
        %p737 = scmp.lt.s32.totalorder %s37, 1
        %s738 = scalar_select %p737, %s37, 1
        %s739 = scalar_lea.vmem %s4, %s738
        %p740 = scmp.lt.s32.totalorder %s37, 1
        %s741 = scalar_select %p740, %s37, 1
        %s742 = scalar_lea.vmem %s5, %s741
        %p743 = scmp.lt.s32.totalorder %s37, 1
        %s744 = scalar_select %p743, %s37, 1
        %s745 = scalar_lea.vmem %s6, %s744
        %p746 = scmp.lt.s32.totalorder %s37, 1
        %s747 = scalar_select %p746, %s37, 1
        %s748 = smul.addr %s747, 4
        %s749 = scalar_lea.vmem %s8, %s748
        %p750 = scmp.lt.s32.totalorder %s37, 1
        %s751 = scalar_select %p750, %s37, 1
        %s752 = scalar_lea.vmem %s10, %s751
        %p753 = scmp.lt.s32.totalorder %s37, 1
        %s754 = scalar_select %p753, %s37, 1
        %s755 = scalar_lea.vmem %s11, %s754
        %p756 = scmp.lt.s32.totalorder %s37, 1
        %s757 = scalar_select %p756, %s37, 1
        %s758 = scalar_lea.vmem %s12, %s757
        %p759 = scmp.lt.s32.totalorder %s36, 1
        %s760 = scalar_select %p759, %s36, 1
        %s761 = smul.addr %s760, 4
        %s762 = scalar_lea.vmem %s15, %s761
        %p764 = scmp.eq.s32.totalorder %s37, 0
        // Predicated region
        $region93: #{seq2seq_forward.3} parent=79 // pred_check
          %p765 = pneg %p764
        $region94: #{seq2seq_forward.3} parent=79 // pred_check_branch
          %767 = sbr.rel (%p765) target = $region96
        $region95: #{seq2seq_forward.3} parent=79 // pred_region
          %v768 = vld [vmem:[%s727] sm:$0xf]
          %v769 = vunpack.c.l.bf16 %v768
          %770 = vst [vmem:[#allocation2] sm:$0xff] %v769
        $region96: #{seq2seq_forward.3} parent=79 // pred_fallthru
          _
        %v771 = vld [vmem:[#allocation2] sm:$0xff]
        %v772 = vld [vmem:[%s732] sm:$0xff]
        %v773 = vld [vmem:[%s732 + $0x8] sm:$0xf]
        %v774 = vld [vmem:[%s732 + $0xc] sm:$0xff]
        %v775 = vld [vmem:[%s732 + $0x14] sm:$0xf]
        %v776 = vld [vmem:[%s732 + $0x18] sm:$0xff]
        %v777 = vld [vmem:[%s732 + $0x20] sm:$0xf]
        %v778 = vld [vmem:[%s732 + $0x24] sm:$0xff]
        %v779 = vld [vmem:[%s732 + $0x2c] sm:$0xf]
        %v780 = vld [vmem:[%s732 + $0x30] sm:$0xff]
        %v781 = vld [vmem:[%s732 + $0x38] sm:$0xf]
        %v782 = vld [vmem:[%s732 + $0x3c] sm:$0xff]
        %v783 = vld [vmem:[%s732 + $0x44] sm:$0xf]
        %v784 = vld [vmem:[%s732 + $0x48] sm:$0xff]
        %v785 = vld [vmem:[%s732 + $0x50] sm:$0xf]
        %v786 = vld [vmem:[%s732 + $0x54] sm:$0xff]
        %v787 = vld [vmem:[%s732 + $0x5c] sm:$0xf]
        %v788 = vld [vmem:[%s732 + $0x60] sm:$0xff]
        %v789 = vld [vmem:[%s732 + $0x68] sm:$0xf]
        %v790 = vld [vmem:[%s732 + $0x6c] sm:$0xff]
        %v791 = vld [vmem:[%s732 + $0x74] sm:$0xf]
        %v792 = vld [vmem:[%s732 + $0x78] sm:$0xff]
        %v793 = vld [vmem:[%s732 + $0x80] sm:$0xf]
        %v794 = vld [vmem:[%s732 + $0x84] sm:$0xff]
        %v795 = vld [vmem:[%s732 + $0x8c] sm:$0xf]
        %v796 = vld [vmem:[%s732 + $0x90] sm:$0xff]
        %v797 = vld [vmem:[%s732 + $0x98] sm:$0xf]
        %v798 = vld [vmem:[%s732 + $0x9c] sm:$0xff]
        %v799 = vld [vmem:[%s732 + $0xa4] sm:$0xf]
        %v800 = vld [vmem:[%s732 + $0xa8] sm:$0xff]
        %v801 = vld [vmem:[%s732 + $0xb0] sm:$0xf]
        %v802 = vld [vmem:[%s732 + $0xb4] sm:$0xff]
        %v803 = vld [vmem:[%s732 + $0xbc] sm:$0xf]
        %v804 = vld [vmem:[%s736] sm:$0x7]
        %v805 = vld [vmem:[%s612] sm:$0xf]
        %v806 = vld [vmem:[%s612 + $0x4] sm:$0xf]
        %v807 = vld [vmem:[%s612 + $0x8] sm:$0xf]
        %v808 = vld [vmem:[%s612 + $0xc] sm:$0xf]
        %v809 = vld [vmem:[%s612 + $0x10] sm:$0xf]
        %v810 = vld [vmem:[%s612 + $0x14] sm:$0xf]
        %v811 = vld [vmem:[%s612 + $0x18] sm:$0xf]
        %v812 = vld [vmem:[%s612 + $0x1c] sm:$0xf]
        %v813 = vld [vmem:[%s612 + $0x20] sm:$0xf]
        %v814 = vld [vmem:[%s612 + $0x24] sm:$0xf]
        %v815 = vld [vmem:[%s612 + $0x28] sm:$0xf]
        %v816 = vld [vmem:[%s612 + $0x2c] sm:$0xf]
        %v817 = vld [vmem:[%s612 + $0x30] sm:$0xf]
        %v818 = vld [vmem:[%s612 + $0x34] sm:$0xf]
        %v819 = vld [vmem:[%s612 + $0x38] sm:$0xf]
        %v820 = vld [vmem:[%s612 + $0x3c] sm:$0xf]
        %v821 = vld [vmem:[%s739] sm:$0x1]
        %v822 = vld [vmem:[%s742] sm:$0x1]
        %v823 = vld [vmem:[%s745] sm:$0x1]
        %v824 = vpack.c.bf16 %v771, %v771
        %v826 = vperm.slane %v804, 0
        %v827 = vperm.slane %v804, 1
        %v828 = vperm.slane %v804, 2
        %v864 = vunpack.c.l.b16 %v772
        %v865 = vunpack.c.h.b16 %v772
        %v866 = vunpack.c.l.b16 %v773
        %v867 = vunpack.c.l.b16 %v774
        %v868 = vunpack.c.h.b16 %v774
        %v869 = vunpack.c.l.b16 %v775
        %v870 = vunpack.c.l.b16 %v776
        %v871 = vunpack.c.h.b16 %v776
        %v872 = vunpack.c.l.b16 %v777
        %v873 = vunpack.c.l.b16 %v778
        %v874 = vunpack.c.h.b16 %v778
        %v875 = vunpack.c.l.b16 %v779
        %v876 = vunpack.c.l.b16 %v780
        %v877 = vunpack.c.h.b16 %v780
        %v878 = vunpack.c.l.b16 %v781
        %v879 = vunpack.c.l.b16 %v782
        %v880 = vunpack.c.h.b16 %v782
        %v881 = vunpack.c.l.b16 %v783
        %v882 = vunpack.c.l.b16 %v784
        %v883 = vunpack.c.h.b16 %v784
        %v884 = vunpack.c.l.b16 %v785
        %v885 = vunpack.c.l.b16 %v786
        %v886 = vunpack.c.h.b16 %v786
        %v887 = vunpack.c.l.b16 %v787
        %v888 = vunpack.c.l.b16 %v788
        %v889 = vunpack.c.h.b16 %v788
        %v890 = vunpack.c.l.b16 %v789
        %v891 = vunpack.c.l.b16 %v790
        %v892 = vunpack.c.h.b16 %v790
        %v893 = vunpack.c.l.b16 %v791
        %v894 = vunpack.c.l.b16 %v792
        %v895 = vunpack.c.h.b16 %v792
        %v896 = vunpack.c.l.b16 %v793
        %v897 = vunpack.c.l.b16 %v794
        %v898 = vunpack.c.h.b16 %v794
        %v899 = vunpack.c.l.b16 %v795
        %v900 = vunpack.c.l.b16 %v796
        %v901 = vunpack.c.h.b16 %v796
        %v902 = vunpack.c.l.b16 %v797
        %v903 = vunpack.c.l.b16 %v798
        %v904 = vunpack.c.h.b16 %v798
        %v905 = vunpack.c.l.b16 %v799
        %v906 = vunpack.c.l.b16 %v800
        %v907 = vunpack.c.h.b16 %v800
        %v908 = vunpack.c.l.b16 %v801
        %v909 = vunpack.c.l.b16 %v802
        %v910 = vunpack.c.h.b16 %v802
        %v911 = vunpack.c.l.b16 %v803
        %v912 = vpack.c.b16 %v867, %v864
        %v913 = vpack.c.b16 %v868, %v865
        %v914 = vpack.c.b16 %v869, %v866
        %v915 = vpack.c.b16 %v873, %v870
        %v916 = vpack.c.b16 %v874, %v871
        %v917 = vpack.c.b16 %v875, %v872
        %v918 = vpack.c.b16 %v879, %v876
        %v919 = vpack.c.b16 %v880, %v877
        %v920 = vpack.c.b16 %v881, %v878
        %v921 = vpack.c.b16 %v885, %v882
        %v922 = vpack.c.b16 %v886, %v883
        %v923 = vpack.c.b16 %v887, %v884
        %v924 = vpack.c.b16 %v891, %v888
        %v925 = vpack.c.b16 %v892, %v889
        %v926 = vpack.c.b16 %v893, %v890
        %v927 = vpack.c.b16 %v897, %v894
        %v928 = vpack.c.b16 %v898, %v895
        %v929 = vpack.c.b16 %v899, %v896
        %v930 = vpack.c.b16 %v903, %v900
        %v931 = vpack.c.b16 %v904, %v901
        %v932 = vpack.c.b16 %v905, %v902
        %v933 = vpack.c.b16 %v909, %v906
        %v934 = vpack.c.b16 %v910, %v907
        %v935 = vpack.c.b16 %v911, %v908
        %960 = vmatpush.bf16.msra.mxu0 %v933
        %961 = vmatpush.bf16.msra.mxu0 %v930
        %962 = vmatpush.bf16.msra.mxu0 %v927
        %963 = vmatpush.bf16.msra.mxu0 %v924
        %964 = vmatpush.bf16.msra.mxu0 %v921
        %965 = vmatpush.bf16.msra.mxu0 %v918
        %966 = vmatpush.bf16.msra.mxu0 %v915
        %967 = vmatpush.bf16.msra.mxu0 %v912
        %968 = vmatmul.bf16.gmra.mxu0 %v824
        %v969 = vpop.f32.mrf.mxu0
        %v970 = vadd.f32 %v826, %v969
        %v971 = vpop.f32.mrf.mxu0
        %972 = vdwg.mxu0
        %973 = vmatpush.bf16.msra.mxu0 %v934
        %974 = vmatpush.bf16.msra.mxu0 %v931
        %975 = vmatpush.bf16.msra.mxu0 %v928
        %976 = vmatpush.bf16.msra.mxu0 %v925
        %977 = vmatpush.bf16.msra.mxu0 %v922
        %978 = vmatpush.bf16.msra.mxu0 %v919
        %979 = vmatpush.bf16.msra.mxu0 %v916
        %980 = vmatpush.bf16.msra.mxu0 %v913
        %981 = vmatmul.bf16.gmra.mxu0 %v824
        %v982 = vpop.f32.mrf.mxu0
        %v983 = vadd.f32 %v827, %v982
        %v984 = vpop.f32.mrf.mxu0
        %985 = vdwg.mxu0
        %986 = vmatpush.bf16.msra.mxu0 %v935
        %987 = vmatpush.bf16.msra.mxu0 %v932
        %988 = vmatpush.bf16.msra.mxu0 %v929
        %989 = vmatpush.bf16.msra.mxu0 %v926
        %990 = vmatpush.bf16.msra.mxu0 %v923
        %991 = vmatpush.bf16.msra.mxu0 %v920
        %992 = vmatpush.bf16.msra.mxu0 %v917
        %993 = vmatpush.bf16.msra.mxu0 %v914
        %994 = vmatmul.bf16.gmra.mxu0 %v824
        %v995 = vpop.f32.mrf.mxu0
        %v996 = vadd.f32 %v828, %v995
        %v997 = vpop.f32.mrf.mxu0
        %998 = vdwg.mxu0
        %v1000 = vperm.slane %v821, 0
        %v1002 = vadd.f32 %v771, %v1000
        %v1003 = vpack.c.bf16 %v970, %v970
        %v1004 = vpack.c.bf16 %v983, %v983
        %v1005 = vpack.c.bf16 %v996, %v996
        %vm1006 = vcmask 261120
        %v1008 = vsel %vm1006, %v1003, 0
        %v1011 = vsel %vm1006, %v1004, 0
        %1013 = vmatpush.bf16.xpose.msra.mxu0 0
        %1014 = vmatpush.bf16.xpose.msra.mxu0 0
        %1015 = vmatpush.bf16.xpose.msra.mxu0 0
        %1016 = vmatpush.bf16.xpose.msra.mxu0 0
        %1017 = vmatpush.bf16.xpose.msra.mxu0 0
        %1018 = vmatpush.bf16.xpose.msra.mxu0 0
        %1019 = vmatpush.bf16.xpose.msra.mxu0 0
        %1020 = vmatpush.bf16.xpose.msra.mxu0 %v1011
        %1021 = vmatmul.bf16.gmra.mxu0 %v1008
        %v1022 = vpop.f32.mrf.mxu0
        %v1023 = vadd.f32 0.0, %v1022
        %v1024 = vpop.f32.mrf.mxu0
        %1025 = vdwg.mxu0
        %vm1026 = vcmask 64512
        %v1027 = vsel %vm1026, %v1023, -inf
        %1028 = vmax.xlane.f32.xlu0 %v1027
        %v1029 = vpop.xlane.xlu0 %1028
        %v1030 = vsub.f32 %v1023, %v1029
        %v1031 = vmul.f32 %v1030, 1.442695
        %v1032 = vpow.pop %v1031
        %v1033 = vsel %vm1026, %v1032, 0.0
        %1034 = vadd.xlane.f32.xlu0 %v1033
        %v1035 = vpop.xlane.xlu0 %1034
        %v1036 = vrcp.pop %v1035
        %v1037 = vmul.f32 %v1032, %v1036
        %v1038 = vpack.c.bf16 %v1037, %v1037
        %v1040 = vsel %vm1026, %v1038, 0
        %vm1042 = vcmask 1043456
        %v1044 = vsel %vm1042, %v1005, 0
        %1046 = vmatpush.bf16.msra.mxu0 0
        %1047 = vmatpush.bf16.msra.mxu0 0
        %1048 = vmatpush.bf16.msra.mxu0 0
        %1049 = vmatpush.bf16.msra.mxu0 0
        %1050 = vmatpush.bf16.msra.mxu0 0
        %1051 = vmatpush.bf16.msra.mxu0 0
        %1052 = vmatpush.bf16.msra.mxu0 0
        %1053 = vmatpush.bf16.msra.mxu0 %v1044
        %1054 = vmatmul.bf16.gmra.mxu0 %v1040
        %v1055 = vpop.f32.mrf.mxu0
        %v1056 = vadd.f32 0.0, %v1055
        %v1057 = vpop.f32.mrf.mxu0
        %1058 = vdwg.mxu0
        %v1059 = vpack.c.bf16 %v1056, %v1056
        %v1064 = vunpack.c.l.b16 %v805
        %v1065 = vunpack.c.l.b16 %v806
        %v1066 = vunpack.c.l.b16 %v807
        %v1067 = vunpack.c.l.b16 %v808
        %v1068 = vpack.c.b16 %v1065, %v1064
        %v1069 = vpack.c.b16 %v1067, %v1066
        %v1073 = vsel %vm1006, %v1059, 0
        %1075 = vmatpush.bf16.msra.mxu0 0
        %1076 = vmatpush.bf16.msra.mxu0 0
        %1077 = vmatpush.bf16.msra.mxu0 0
        %1078 = vmatpush.bf16.msra.mxu0 0
        %1079 = vmatpush.bf16.msra.mxu0 0
        %1080 = vmatpush.bf16.msra.mxu0 0
        %1081 = vmatpush.bf16.msra.mxu0 %v1069
        %1082 = vmatpush.bf16.msra.mxu0 %v1068
        %1083 = vmatmul.bf16.gmra.mxu0 %v1073
        %v1084 = vpop.f32.mrf.mxu0
        %v1085 = vadd.f32 0.0, %v1084
        %v1086 = vpop.f32.mrf.mxu0
        %1087 = vdwg.mxu0
        %v1088 = vadd.f32 %v1002, %v1085
        %1090 = vrot.lane.b32.xlu0 %v1003, 96
        %v1091 = vpop.permute.xlu0 %1090
        %1093 = vrot.lane.b32.xlu0 %v1004, 96
        %v1094 = vpop.permute.xlu0 %1093
        %v1096 = vsel %vm1006, %v1091, 0
        %v1099 = vsel %vm1006, %v1094, 0
        %1101 = vmatpush.bf16.xpose.msra.mxu0 0
        %1102 = vmatpush.bf16.xpose.msra.mxu0 0
        %1103 = vmatpush.bf16.xpose.msra.mxu0 0
        %1104 = vmatpush.bf16.xpose.msra.mxu0 0
        %1105 = vmatpush.bf16.xpose.msra.mxu0 0
        %1106 = vmatpush.bf16.xpose.msra.mxu0 0
        %1107 = vmatpush.bf16.xpose.msra.mxu0 0
        %1108 = vmatpush.bf16.xpose.msra.mxu0 %v1099
        %1109 = vmatmul.bf16.gmra.mxu0 %v1096
        %v1110 = vpop.f32.mrf.mxu0
        %v1111 = vadd.f32 0.0, %v1110
        %v1112 = vpop.f32.mrf.mxu0
        %1113 = vdwg.mxu0
        %v1114 = vsel %vm1026, %v1111, -inf
        %1115 = vmax.xlane.f32.xlu0 %v1114
        %v1116 = vpop.xlane.xlu0 %1115
        %v1117 = vsub.f32 %v1111, %v1116
        %v1118 = vmul.f32 %v1117, 1.442695
        %v1119 = vpow.pop %v1118
        %v1120 = vsel %vm1026, %v1119, 0.0
        %1121 = vadd.xlane.f32.xlu0 %v1120
        %v1122 = vpop.xlane.xlu0 %1121
        %v1123 = vrcp.pop %v1122
        %v1124 = vmul.f32 %v1119, %v1123
        %v1125 = vpack.c.bf16 %v1124, %v1124
        %1127 = vrot.lane.b32.xlu0 %v1005, 96
        %v1128 = vpop.permute.xlu0 %1127
        %v1130 = vsel %vm1026, %v1125, 0
        %v1133 = vsel %vm1042, %v1128, 0
        %1135 = vmatpush.bf16.msra.mxu0 0
        %1136 = vmatpush.bf16.msra.mxu0 0
        %1137 = vmatpush.bf16.msra.mxu0 0
        %1138 = vmatpush.bf16.msra.mxu0 0
        %1139 = vmatpush.bf16.msra.mxu0 0
        %1140 = vmatpush.bf16.msra.mxu0 0
        %1141 = vmatpush.bf16.msra.mxu0 0
        %1142 = vmatpush.bf16.msra.mxu0 %v1133
        %1143 = vmatmul.bf16.gmra.mxu0 %v1130
        %v1144 = vpop.f32.mrf.mxu0
        %v1145 = vadd.f32 0.0, %v1144
        %v1146 = vpop.f32.mrf.mxu0
        %1147 = vdwg.mxu0
        %v1148 = vpack.c.bf16 %v1145, %v1145
        %v1153 = vunpack.c.l.b16 %v809
        %v1154 = vunpack.c.l.b16 %v810
        %v1155 = vunpack.c.l.b16 %v811
        %v1156 = vunpack.c.l.b16 %v812
        %v1157 = vpack.c.b16 %v1154, %v1153
        %v1158 = vpack.c.b16 %v1156, %v1155
        %v1162 = vsel %vm1006, %v1148, 0
        %1164 = vmatpush.bf16.msra.mxu0 0
        %1165 = vmatpush.bf16.msra.mxu0 0
        %1166 = vmatpush.bf16.msra.mxu0 0
        %1167 = vmatpush.bf16.msra.mxu0 0
        %1168 = vmatpush.bf16.msra.mxu0 0
        %1169 = vmatpush.bf16.msra.mxu0 0
        %1170 = vmatpush.bf16.msra.mxu0 %v1158
        %1171 = vmatpush.bf16.msra.mxu0 %v1157
        %1172 = vmatmul.bf16.gmra.mxu0 %v1162
        %v1173 = vpop.f32.mrf.mxu0
        %v1174 = vadd.f32 0.0, %v1173
        %v1175 = vpop.f32.mrf.mxu0
        %1176 = vdwg.mxu0
        %v1177 = vadd.f32 %v1088, %v1174
        %1178 = vrot.lane.b32.xlu0 %v1003, 64
        %v1179 = vpop.permute.xlu0 %1178
        %1180 = vrot.lane.b32.xlu0 %v1004, 64
        %v1181 = vpop.permute.xlu0 %1180
        %v1183 = vsel %vm1006, %v1179, 0
        %v1186 = vsel %vm1006, %v1181, 0
        %1188 = vmatpush.bf16.xpose.msra.mxu0 0
        %1189 = vmatpush.bf16.xpose.msra.mxu0 0
        %1190 = vmatpush.bf16.xpose.msra.mxu0 0
        %1191 = vmatpush.bf16.xpose.msra.mxu0 0
        %1192 = vmatpush.bf16.xpose.msra.mxu0 0
        %1193 = vmatpush.bf16.xpose.msra.mxu0 0
        %1194 = vmatpush.bf16.xpose.msra.mxu0 0
        %1195 = vmatpush.bf16.xpose.msra.mxu0 %v1186
        %1196 = vmatmul.bf16.gmra.mxu0 %v1183
        %v1197 = vpop.f32.mrf.mxu0
        %v1198 = vadd.f32 0.0, %v1197
        %v1199 = vpop.f32.mrf.mxu0
        %1200 = vdwg.mxu0
        %v1201 = vsel %vm1026, %v1198, -inf
        %1202 = vmax.xlane.f32.xlu0 %v1201
        %v1203 = vpop.xlane.xlu0 %1202
        %v1204 = vsub.f32 %v1198, %v1203
        %v1205 = vmul.f32 %v1204, 1.442695
        %v1206 = vpow.pop %v1205
        %v1207 = vsel %vm1026, %v1206, 0.0
        %1208 = vadd.xlane.f32.xlu0 %v1207
        %v1209 = vpop.xlane.xlu0 %1208
        %v1210 = vrcp.pop %v1209
        %v1211 = vmul.f32 %v1206, %v1210
        %v1212 = vpack.c.bf16 %v1211, %v1211
        %1213 = vrot.lane.b32.xlu0 %v1005, 64
        %v1214 = vpop.permute.xlu0 %1213
        %v1216 = vsel %vm1026, %v1212, 0
        %v1219 = vsel %vm1042, %v1214, 0
        %1221 = vmatpush.bf16.msra.mxu0 0
        %1222 = vmatpush.bf16.msra.mxu0 0
        %1223 = vmatpush.bf16.msra.mxu0 0
        %1224 = vmatpush.bf16.msra.mxu0 0
        %1225 = vmatpush.bf16.msra.mxu0 0
        %1226 = vmatpush.bf16.msra.mxu0 0
        %1227 = vmatpush.bf16.msra.mxu0 0
        %1228 = vmatpush.bf16.msra.mxu0 %v1219
        %1229 = vmatmul.bf16.gmra.mxu0 %v1216
        %v1230 = vpop.f32.mrf.mxu0
        %v1231 = vadd.f32 0.0, %v1230
        %v1232 = vpop.f32.mrf.mxu0
        %1233 = vdwg.mxu0
        %v1234 = vpack.c.bf16 %v1231, %v1231
        %v1239 = vunpack.c.l.b16 %v813
        %v1240 = vunpack.c.l.b16 %v814
        %v1241 = vunpack.c.l.b16 %v815
        %v1242 = vunpack.c.l.b16 %v816
        %v1243 = vpack.c.b16 %v1240, %v1239
        %v1244 = vpack.c.b16 %v1242, %v1241
        %v1248 = vsel %vm1006, %v1234, 0
        %1250 = vmatpush.bf16.msra.mxu0 0
        %1251 = vmatpush.bf16.msra.mxu0 0
        %1252 = vmatpush.bf16.msra.mxu0 0
        %1253 = vmatpush.bf16.msra.mxu0 0
        %1254 = vmatpush.bf16.msra.mxu0 0
        %1255 = vmatpush.bf16.msra.mxu0 0
        %1256 = vmatpush.bf16.msra.mxu0 %v1244
        %1257 = vmatpush.bf16.msra.mxu0 %v1243
        %1258 = vmatmul.bf16.gmra.mxu0 %v1248
        %v1259 = vpop.f32.mrf.mxu0
        %v1260 = vadd.f32 0.0, %v1259
        %v1261 = vpop.f32.mrf.mxu0
        %1262 = vdwg.mxu0
        %v1263 = vadd.f32 %v1177, %v1260
        %1264 = vrot.lane.b32.xlu0 %v1003, 32
        %v1265 = vpop.permute.xlu0 %1264
        %1266 = vrot.lane.b32.xlu0 %v1004, 32
        %v1267 = vpop.permute.xlu0 %1266
        %v1269 = vsel %vm1006, %v1265, 0
        %v1272 = vsel %vm1006, %v1267, 0
        %1274 = vmatpush.bf16.xpose.msra.mxu0 0
        %1275 = vmatpush.bf16.xpose.msra.mxu0 0
        %1276 = vmatpush.bf16.xpose.msra.mxu0 0
        %1277 = vmatpush.bf16.xpose.msra.mxu0 0
        %1278 = vmatpush.bf16.xpose.msra.mxu0 0
        %1279 = vmatpush.bf16.xpose.msra.mxu0 0
        %1280 = vmatpush.bf16.xpose.msra.mxu0 0
        %1281 = vmatpush.bf16.xpose.msra.mxu0 %v1272
        %1282 = vmatmul.bf16.gmra.mxu0 %v1269
        %v1283 = vpop.f32.mrf.mxu0
        %v1284 = vadd.f32 0.0, %v1283
        %v1285 = vpop.f32.mrf.mxu0
        %1286 = vdwg.mxu0
        %v1287 = vsel %vm1026, %v1284, -inf
        %1288 = vmax.xlane.f32.xlu0 %v1287
        %v1289 = vpop.xlane.xlu0 %1288
        %v1290 = vsub.f32 %v1284, %v1289
        %v1291 = vmul.f32 %v1290, 1.442695
        %v1292 = vpow.pop %v1291
        %v1293 = vsel %vm1026, %v1292, 0.0
        %1294 = vadd.xlane.f32.xlu0 %v1293
        %v1295 = vpop.xlane.xlu0 %1294
        %v1296 = vrcp.pop %v1295
        %v1297 = vmul.f32 %v1292, %v1296
        %v1298 = vpack.c.bf16 %v1297, %v1297
        %1299 = vrot.lane.b32.xlu0 %v1005, 32
        %v1300 = vpop.permute.xlu0 %1299
        %v1302 = vsel %vm1026, %v1298, 0
        %v1305 = vsel %vm1042, %v1300, 0
        %1307 = vmatpush.bf16.msra.mxu0 0
        %1308 = vmatpush.bf16.msra.mxu0 0
        %1309 = vmatpush.bf16.msra.mxu0 0
        %1310 = vmatpush.bf16.msra.mxu0 0
        %1311 = vmatpush.bf16.msra.mxu0 0
        %1312 = vmatpush.bf16.msra.mxu0 0
        %1313 = vmatpush.bf16.msra.mxu0 0
        %1314 = vmatpush.bf16.msra.mxu0 %v1305
        %1315 = vmatmul.bf16.gmra.mxu0 %v1302
        %v1316 = vpop.f32.mrf.mxu0
        %v1317 = vadd.f32 0.0, %v1316
        %v1318 = vpop.f32.mrf.mxu0
        %1319 = vdwg.mxu0
        %v1320 = vpack.c.bf16 %v1317, %v1317
        %v1325 = vunpack.c.l.b16 %v817
        %v1326 = vunpack.c.l.b16 %v818
        %v1327 = vunpack.c.l.b16 %v819
        %v1328 = vunpack.c.l.b16 %v820
        %v1329 = vpack.c.b16 %v1326, %v1325
        %v1330 = vpack.c.b16 %v1328, %v1327
        %v1334 = vsel %vm1006, %v1320, 0
        %1336 = vmatpush.bf16.msra.mxu0 0
        %1337 = vmatpush.bf16.msra.mxu0 0
        %1338 = vmatpush.bf16.msra.mxu0 0
        %1339 = vmatpush.bf16.msra.mxu0 0
        %1340 = vmatpush.bf16.msra.mxu0 0
        %1341 = vmatpush.bf16.msra.mxu0 0
        %1342 = vmatpush.bf16.msra.mxu0 %v1330
        %1343 = vmatpush.bf16.msra.mxu0 %v1329
        %1344 = vmatmul.bf16.gmra.mxu0 %v1334
        %v1345 = vpop.f32.mrf.mxu0
        %v1346 = vadd.f32 0.0, %v1345
        %v1347 = vpop.f32.mrf.mxu0
        %1348 = vdwg.mxu0
        %v1349 = vadd.f32 %v1263, %v1346
        %1350 = vadd.xlane.f32.xlu0 %v1349
        %v1351 = vpop.xlane.xlu0 %1350
        %v1352 = vrcp.pop 128.0
        %v1353 = vmul.f32 128.0, %v1352
        %v1354 = vsub.f32 1.0, %v1353
        %v1355 = vmul.f32 %v1352, %v1354
        %v1356 = vadd.f32 %v1352, %v1355
        %vm1357 = vweird.f32 %v1352
        %v1358 = vsel %vm1357, %v1352, %v1356
        %v1359 = vmul.f32 %v1351, %v1358
        %v1360 = vsub.f32 %v1349, %v1359
        %v1361 = vmul.f32 %v1360, %v1360
        %1362 = vadd.xlane.f32.xlu0 %v1361
        %v1363 = vpop.xlane.xlu0 %1362
        %v1364 = vmul.f32 %v1363, %v1358
        %v1365 = vadd.f32 %v1364, 1e-05
        %v1366 = vrsqrt.pop %v1365
        %v1367 = vmul.f32 %v1366, %v1365
        %v1368 = vmul.f32 %v1367, %v1366
        %v1369 = vmul.f32 0.5, %v1368
        %v1370 = vsub.f32 1.5, %v1369
        %v1371 = vmul.f32 %v1366, %v1370
        %vm1372 = vweird.f32 %v1365
        %vm1373 = vweird.f32 %v1366
        %vm1374 = vmor %vm1372, %vm1373
        %v1375 = vsel %vm1374, %v1366, %v1371
        %v1376 = vmul.f32 %v1360, %v1375
        %v1378 = vperm.slane %v822, 0
        %v1380 = vmul.f32 %v1376, %v1378
        %v1382 = vperm.slane %v823, 0
        %v1384 = vadd.f32 %v1380, %v1382
        %v1385 = vld [vmem:[%s622] sm:$0xff]
        %v1386 = vld [vmem:[%s622 + $0x8] sm:$0xff]
        %v1387 = vld [vmem:[%s622 + $0x10] sm:$0xff]
        %v1388 = vld [vmem:[%s622 + $0x18] sm:$0xff]
        %v1389 = vld [vmem:[%s622 + $0x20] sm:$0xff]
        %v1390 = vld [vmem:[%s622 + $0x28] sm:$0xff]
        %v1391 = vld [vmem:[%s622 + $0x30] sm:$0xff]
        %v1392 = vld [vmem:[%s622 + $0x38] sm:$0xff]
        %v1393 = vld [vmem:[%s622 + $0x40] sm:$0xff]
        %v1394 = vld [vmem:[%s622 + $0x48] sm:$0xff]
        %v1395 = vld [vmem:[%s622 + $0x50] sm:$0xff]
        %v1396 = vld [vmem:[%s622 + $0x58] sm:$0xff]
        %v1397 = vld [vmem:[%s622 + $0x60] sm:$0xff]
        %v1398 = vld [vmem:[%s622 + $0x68] sm:$0xff]
        %v1399 = vld [vmem:[%s622 + $0x70] sm:$0xff]
        %v1400 = vld [vmem:[%s622 + $0x78] sm:$0xff]
        %v1401 = vld [vmem:[%s622 + $0x80] sm:$0xff]
        %v1402 = vld [vmem:[%s622 + $0x88] sm:$0xff]
        %v1403 = vld [vmem:[%s622 + $0x90] sm:$0xff]
        %v1404 = vld [vmem:[%s622 + $0x98] sm:$0xff]
        %v1405 = vld [vmem:[%s622 + $0xa0] sm:$0xff]
        %v1406 = vld [vmem:[%s622 + $0xa8] sm:$0xff]
        %v1407 = vld [vmem:[%s622 + $0xb0] sm:$0xff]
        %v1408 = vld [vmem:[%s622 + $0xb8] sm:$0xff]
        %v1409 = vld [vmem:[%s622 + $0xc0] sm:$0xff]
        %v1410 = vld [vmem:[%s622 + $0xc8] sm:$0xff]
        %v1411 = vld [vmem:[%s622 + $0xd0] sm:$0xff]
        %v1412 = vld [vmem:[%s622 + $0xd8] sm:$0xff]
        %v1413 = vld [vmem:[%s622 + $0xe0] sm:$0xff]
        %v1414 = vld [vmem:[%s622 + $0xe8] sm:$0xff]
        %v1415 = vld [vmem:[%s622 + $0xf0] sm:$0xff]
        %v1416 = vld [vmem:[%s622 + $0xf8] sm:$0xff]
        %v1417 = vld [vmem:[%s749] sm:$0xf]
        %v1418 = vld [vmem:[%s632] sm:$0xf]
        %v1419 = vld [vmem:[%s632 + $0x4] sm:$0xf]
        %v1420 = vld [vmem:[%s632 + $0x8] sm:$0xf]
        %v1421 = vld [vmem:[%s632 + $0xc] sm:$0xf]
        %v1422 = vld [vmem:[%s632 + $0x10] sm:$0xf]
        %v1423 = vld [vmem:[%s632 + $0x14] sm:$0xf]
        %v1424 = vld [vmem:[%s632 + $0x18] sm:$0xf]
        %v1425 = vld [vmem:[%s632 + $0x1c] sm:$0xf]
        %v1426 = vld [vmem:[%s632 + $0x20] sm:$0xf]
        %v1427 = vld [vmem:[%s632 + $0x24] sm:$0xf]
        %v1428 = vld [vmem:[%s632 + $0x28] sm:$0xf]
        %v1429 = vld [vmem:[%s632 + $0x2c] sm:$0xf]
        %v1430 = vld [vmem:[%s632 + $0x30] sm:$0xf]
        %v1431 = vld [vmem:[%s632 + $0x34] sm:$0xf]
        %v1432 = vld [vmem:[%s632 + $0x38] sm:$0xf]
        %v1433 = vld [vmem:[%s632 + $0x3c] sm:$0xf]
        %v1434 = vld [vmem:[%s632 + $0x40] sm:$0xf]
        %v1435 = vld [vmem:[%s632 + $0x44] sm:$0xf]
        %v1436 = vld [vmem:[%s632 + $0x48] sm:$0xf]
        %v1437 = vld [vmem:[%s632 + $0x4c] sm:$0xf]
        %v1438 = vld [vmem:[%s632 + $0x50] sm:$0xf]
        %v1439 = vld [vmem:[%s632 + $0x54] sm:$0xf]
        %v1440 = vld [vmem:[%s632 + $0x58] sm:$0xf]
        %v1441 = vld [vmem:[%s632 + $0x5c] sm:$0xf]
        %v1442 = vld [vmem:[%s632 + $0x60] sm:$0xf]
        %v1443 = vld [vmem:[%s632 + $0x64] sm:$0xf]
        %v1444 = vld [vmem:[%s632 + $0x68] sm:$0xf]
        %v1445 = vld [vmem:[%s632 + $0x6c] sm:$0xf]
        %v1446 = vld [vmem:[%s632 + $0x70] sm:$0xf]
        %v1447 = vld [vmem:[%s632 + $0x74] sm:$0xf]
        %v1448 = vld [vmem:[%s632 + $0x78] sm:$0xf]
        %v1449 = vld [vmem:[%s632 + $0x7c] sm:$0xf]
        %v1450 = vld [vmem:[%s632 + $0x80] sm:$0xf]
        %v1451 = vld [vmem:[%s632 + $0x84] sm:$0xf]
        %v1452 = vld [vmem:[%s632 + $0x88] sm:$0xf]
        %v1453 = vld [vmem:[%s632 + $0x8c] sm:$0xf]
        %v1454 = vld [vmem:[%s632 + $0x90] sm:$0xf]
        %v1455 = vld [vmem:[%s632 + $0x94] sm:$0xf]
        %v1456 = vld [vmem:[%s632 + $0x98] sm:$0xf]
        %v1457 = vld [vmem:[%s632 + $0x9c] sm:$0xf]
        %v1458 = vld [vmem:[%s632 + $0xa0] sm:$0xf]
        %v1459 = vld [vmem:[%s632 + $0xa4] sm:$0xf]
        %v1460 = vld [vmem:[%s632 + $0xa8] sm:$0xf]
        %v1461 = vld [vmem:[%s632 + $0xac] sm:$0xf]
        %v1462 = vld [vmem:[%s632 + $0xb0] sm:$0xf]
        %v1463 = vld [vmem:[%s632 + $0xb4] sm:$0xf]
        %v1464 = vld [vmem:[%s632 + $0xb8] sm:$0xf]
        %v1465 = vld [vmem:[%s632 + $0xbc] sm:$0xf]
        %v1466 = vld [vmem:[%s632 + $0xc0] sm:$0xf]
        %v1467 = vld [vmem:[%s632 + $0xc4] sm:$0xf]
        %v1468 = vld [vmem:[%s632 + $0xc8] sm:$0xf]
        %v1469 = vld [vmem:[%s632 + $0xcc] sm:$0xf]
        %v1470 = vld [vmem:[%s632 + $0xd0] sm:$0xf]
        %v1471 = vld [vmem:[%s632 + $0xd4] sm:$0xf]
        %v1472 = vld [vmem:[%s632 + $0xd8] sm:$0xf]
        %v1473 = vld [vmem:[%s632 + $0xdc] sm:$0xf]
        %v1474 = vld [vmem:[%s632 + $0xe0] sm:$0xf]
        %v1475 = vld [vmem:[%s632 + $0xe4] sm:$0xf]
        %v1476 = vld [vmem:[%s632 + $0xe8] sm:$0xf]
        %v1477 = vld [vmem:[%s632 + $0xec] sm:$0xf]
        %v1478 = vld [vmem:[%s632 + $0xf0] sm:$0xf]
        %v1479 = vld [vmem:[%s632 + $0xf4] sm:$0xf]
        %v1480 = vld [vmem:[%s632 + $0xf8] sm:$0xf]
        %v1481 = vld [vmem:[%s632 + $0xfc] sm:$0xf]
        %v1482 = vld [vmem:[%s752] sm:$0x1]
        %v1483 = vld [vmem:[%s755] sm:$0x1]
        %v1484 = vld [vmem:[%s758] sm:$0x1]
        %v1485 = vpack.c.bf16 %v1384, %v1384
        %v1487 = vperm.slane %v1417, 0
        %v1488 = vperm.slane %v1417, 1
        %v1489 = vperm.slane %v1417, 2
        %v1490 = vperm.slane %v1417, 3
        %v1527 = vunpack.c.l.b16 %v1385
        %v1528 = vunpack.c.h.b16 %v1385
        %v1529 = vunpack.c.l.b16 %v1386
        %v1530 = vunpack.c.h.b16 %v1386
        %v1531 = vunpack.c.l.b16 %v1387
        %v1532 = vunpack.c.h.b16 %v1387
        %v1533 = vunpack.c.l.b16 %v1388
        %v1534 = vunpack.c.h.b16 %v1388
        %v1535 = vunpack.c.l.b16 %v1389
        %v1536 = vunpack.c.h.b16 %v1389
        %v1537 = vunpack.c.l.b16 %v1390
        %v1538 = vunpack.c.h.b16 %v1390
        %v1539 = vunpack.c.l.b16 %v1391
        %v1540 = vunpack.c.h.b16 %v1391
        %v1541 = vunpack.c.l.b16 %v1392
        %v1542 = vunpack.c.h.b16 %v1392
        %v1543 = vunpack.c.l.b16 %v1393
        %v1544 = vunpack.c.h.b16 %v1393
        %v1545 = vunpack.c.l.b16 %v1394
        %v1546 = vunpack.c.h.b16 %v1394
        %v1547 = vunpack.c.l.b16 %v1395
        %v1548 = vunpack.c.h.b16 %v1395
        %v1549 = vunpack.c.l.b16 %v1396
        %v1550 = vunpack.c.h.b16 %v1396
        %v1551 = vunpack.c.l.b16 %v1397
        %v1552 = vunpack.c.h.b16 %v1397
        %v1553 = vunpack.c.l.b16 %v1398
        %v1554 = vunpack.c.h.b16 %v1398
        %v1555 = vunpack.c.l.b16 %v1399
        %v1556 = vunpack.c.h.b16 %v1399
        %v1557 = vunpack.c.l.b16 %v1400
        %v1558 = vunpack.c.h.b16 %v1400
        %v1559 = vunpack.c.l.b16 %v1401
        %v1560 = vunpack.c.h.b16 %v1401
        %v1561 = vunpack.c.l.b16 %v1402
        %v1562 = vunpack.c.h.b16 %v1402
        %v1563 = vunpack.c.l.b16 %v1403
        %v1564 = vunpack.c.h.b16 %v1403
        %v1565 = vunpack.c.l.b16 %v1404
        %v1566 = vunpack.c.h.b16 %v1404
        %v1567 = vunpack.c.l.b16 %v1405
        %v1568 = vunpack.c.h.b16 %v1405
        %v1569 = vunpack.c.l.b16 %v1406
        %v1570 = vunpack.c.h.b16 %v1406
        %v1571 = vunpack.c.l.b16 %v1407
        %v1572 = vunpack.c.h.b16 %v1407
        %v1573 = vunpack.c.l.b16 %v1408
        %v1574 = vunpack.c.h.b16 %v1408
        %v1575 = vunpack.c.l.b16 %v1409
        %v1576 = vunpack.c.h.b16 %v1409
        %v1577 = vunpack.c.l.b16 %v1410
        %v1578 = vunpack.c.h.b16 %v1410
        %v1579 = vunpack.c.l.b16 %v1411
        %v1580 = vunpack.c.h.b16 %v1411
        %v1581 = vunpack.c.l.b16 %v1412
        %v1582 = vunpack.c.h.b16 %v1412
        %v1583 = vunpack.c.l.b16 %v1413
        %v1584 = vunpack.c.h.b16 %v1413
        %v1585 = vunpack.c.l.b16 %v1414
        %v1586 = vunpack.c.h.b16 %v1414
        %v1587 = vunpack.c.l.b16 %v1415
        %v1588 = vunpack.c.h.b16 %v1415
        %v1589 = vunpack.c.l.b16 %v1416
        %v1590 = vunpack.c.h.b16 %v1416
        %v1591 = vpack.c.b16 %v1531, %v1527
        %v1592 = vpack.c.b16 %v1532, %v1528
        %v1593 = vpack.c.b16 %v1533, %v1529
        %v1594 = vpack.c.b16 %v1534, %v1530
        %v1595 = vpack.c.b16 %v1539, %v1535
        %v1596 = vpack.c.b16 %v1540, %v1536
        %v1597 = vpack.c.b16 %v1541, %v1537
        %v1598 = vpack.c.b16 %v1542, %v1538
        %v1599 = vpack.c.b16 %v1547, %v1543
        %v1600 = vpack.c.b16 %v1548, %v1544
        %v1601 = vpack.c.b16 %v1549, %v1545
        %v1602 = vpack.c.b16 %v1550, %v1546
        %v1603 = vpack.c.b16 %v1555, %v1551
        %v1604 = vpack.c.b16 %v1556, %v1552
        %v1605 = vpack.c.b16 %v1557, %v1553
        %v1606 = vpack.c.b16 %v1558, %v1554
        %v1607 = vpack.c.b16 %v1563, %v1559
        %v1608 = vpack.c.b16 %v1564, %v1560
        %v1609 = vpack.c.b16 %v1565, %v1561
        %v1610 = vpack.c.b16 %v1566, %v1562
        %v1611 = vpack.c.b16 %v1571, %v1567
        %v1612 = vpack.c.b16 %v1572, %v1568
        %v1613 = vpack.c.b16 %v1573, %v1569
        %v1614 = vpack.c.b16 %v1574, %v1570
        %v1615 = vpack.c.b16 %v1579, %v1575
        %v1616 = vpack.c.b16 %v1580, %v1576
        %v1617 = vpack.c.b16 %v1581, %v1577
        %v1618 = vpack.c.b16 %v1582, %v1578
        %v1619 = vpack.c.b16 %v1587, %v1583
        %v1620 = vpack.c.b16 %v1588, %v1584
        %v1621 = vpack.c.b16 %v1589, %v1585
        %v1622 = vpack.c.b16 %v1590, %v1586
        %1655 = vmatpush.bf16.msra.mxu0 %v1619
        %1656 = vmatpush.bf16.msra.mxu0 %v1615
        %1657 = vmatpush.bf16.msra.mxu0 %v1611
        %1658 = vmatpush.bf16.msra.mxu0 %v1607
        %1659 = vmatpush.bf16.msra.mxu0 %v1603
        %1660 = vmatpush.bf16.msra.mxu0 %v1599
        %1661 = vmatpush.bf16.msra.mxu0 %v1595
        %1662 = vmatpush.bf16.msra.mxu0 %v1591
        %1663 = vmatmul.bf16.gmra.mxu0 %v1485
        %v1664 = vpop.f32.mrf.mxu0
        %v1665 = vadd.f32 %v1487, %v1664
        %v1666 = vpop.f32.mrf.mxu0
        %1667 = vdwg.mxu0
        %1668 = vmatpush.bf16.msra.mxu0 %v1620
        %1669 = vmatpush.bf16.msra.mxu0 %v1616
        %1670 = vmatpush.bf16.msra.mxu0 %v1612
        %1671 = vmatpush.bf16.msra.mxu0 %v1608
        %1672 = vmatpush.bf16.msra.mxu0 %v1604
        %1673 = vmatpush.bf16.msra.mxu0 %v1600
        %1674 = vmatpush.bf16.msra.mxu0 %v1596
        %1675 = vmatpush.bf16.msra.mxu0 %v1592
        %1676 = vmatmul.bf16.gmra.mxu0 %v1485
        %v1677 = vpop.f32.mrf.mxu0
        %v1678 = vadd.f32 %v1488, %v1677
        %v1679 = vpop.f32.mrf.mxu0
        %1680 = vdwg.mxu0
        %1681 = vmatpush.bf16.msra.mxu0 %v1621
        %1682 = vmatpush.bf16.msra.mxu0 %v1617
        %1683 = vmatpush.bf16.msra.mxu0 %v1613
        %1684 = vmatpush.bf16.msra.mxu0 %v1609
        %1685 = vmatpush.bf16.msra.mxu0 %v1605
        %1686 = vmatpush.bf16.msra.mxu0 %v1601
        %1687 = vmatpush.bf16.msra.mxu0 %v1597
        %1688 = vmatpush.bf16.msra.mxu0 %v1593
        %1689 = vmatmul.bf16.gmra.mxu0 %v1485
        %v1690 = vpop.f32.mrf.mxu0
        %v1691 = vadd.f32 %v1489, %v1690
        %v1692 = vpop.f32.mrf.mxu0
        %1693 = vdwg.mxu0
        %1694 = vmatpush.bf16.msra.mxu0 %v1622
        %1695 = vmatpush.bf16.msra.mxu0 %v1618
        %1696 = vmatpush.bf16.msra.mxu0 %v1614
        %1697 = vmatpush.bf16.msra.mxu0 %v1610
        %1698 = vmatpush.bf16.msra.mxu0 %v1606
        %1699 = vmatpush.bf16.msra.mxu0 %v1602
        %1700 = vmatpush.bf16.msra.mxu0 %v1598
        %1701 = vmatpush.bf16.msra.mxu0 %v1594
        %1702 = vmatmul.bf16.gmra.mxu0 %v1485
        %v1703 = vpop.f32.mrf.mxu0
        %v1704 = vadd.f32 %v1490, %v1703
        %v1705 = vpop.f32.mrf.mxu0
        %1706 = vdwg.mxu0
        %v1707 = vmax.f32 %v1665, 0.0
        %v1708 = vmax.f32 %v1678, 0.0
        %v1709 = vmax.f32 %v1691, 0.0
        %v1710 = vmax.f32 %v1704, 0.0
        %v1711 = vpack.c.bf16 %v1707, %v1707
        %v1712 = vpack.c.bf16 %v1708, %v1708
        %v1713 = vpack.c.bf16 %v1709, %v1709
        %v1714 = vpack.c.bf16 %v1710, %v1710
        %v1716 = vperm.slane %v1482, 0
        %v1782 = vunpack.c.l.b16 %v1418
        %v1783 = vunpack.c.l.b16 %v1419
        %v1784 = vunpack.c.l.b16 %v1420
        %v1785 = vunpack.c.l.b16 %v1421
        %v1786 = vunpack.c.l.b16 %v1422
        %v1787 = vunpack.c.l.b16 %v1423
        %v1788 = vunpack.c.l.b16 %v1424
        %v1789 = vunpack.c.l.b16 %v1425
        %v1790 = vunpack.c.l.b16 %v1426
        %v1791 = vunpack.c.l.b16 %v1427
        %v1792 = vunpack.c.l.b16 %v1428
        %v1793 = vunpack.c.l.b16 %v1429
        %v1794 = vunpack.c.l.b16 %v1430
        %v1795 = vunpack.c.l.b16 %v1431
        %v1796 = vunpack.c.l.b16 %v1432
        %v1797 = vunpack.c.l.b16 %v1433
        %v1798 = vunpack.c.l.b16 %v1434
        %v1799 = vunpack.c.l.b16 %v1435
        %v1800 = vunpack.c.l.b16 %v1436
        %v1801 = vunpack.c.l.b16 %v1437
        %v1802 = vunpack.c.l.b16 %v1438
        %v1803 = vunpack.c.l.b16 %v1439
        %v1804 = vunpack.c.l.b16 %v1440
        %v1805 = vunpack.c.l.b16 %v1441
        %v1806 = vunpack.c.l.b16 %v1442
        %v1807 = vunpack.c.l.b16 %v1443
        %v1808 = vunpack.c.l.b16 %v1444
        %v1809 = vunpack.c.l.b16 %v1445
        %v1810 = vunpack.c.l.b16 %v1446
        %v1811 = vunpack.c.l.b16 %v1447
        %v1812 = vunpack.c.l.b16 %v1448
        %v1813 = vunpack.c.l.b16 %v1449
        %v1814 = vunpack.c.l.b16 %v1450
        %v1815 = vunpack.c.l.b16 %v1451
        %v1816 = vunpack.c.l.b16 %v1452
        %v1817 = vunpack.c.l.b16 %v1453
        %v1818 = vunpack.c.l.b16 %v1454
        %v1819 = vunpack.c.l.b16 %v1455
        %v1820 = vunpack.c.l.b16 %v1456
        %v1821 = vunpack.c.l.b16 %v1457
        %v1822 = vunpack.c.l.b16 %v1458
        %v1823 = vunpack.c.l.b16 %v1459
        %v1824 = vunpack.c.l.b16 %v1460
        %v1825 = vunpack.c.l.b16 %v1461
        %v1826 = vunpack.c.l.b16 %v1462
        %v1827 = vunpack.c.l.b16 %v1463
        %v1828 = vunpack.c.l.b16 %v1464
        %v1829 = vunpack.c.l.b16 %v1465
        %v1830 = vunpack.c.l.b16 %v1466
        %v1831 = vunpack.c.l.b16 %v1467
        %v1832 = vunpack.c.l.b16 %v1468
        %v1833 = vunpack.c.l.b16 %v1469
        %v1834 = vunpack.c.l.b16 %v1470
        %v1835 = vunpack.c.l.b16 %v1471
        %v1836 = vunpack.c.l.b16 %v1472
        %v1837 = vunpack.c.l.b16 %v1473
        %v1838 = vunpack.c.l.b16 %v1474
        %v1839 = vunpack.c.l.b16 %v1475
        %v1840 = vunpack.c.l.b16 %v1476
        %v1841 = vunpack.c.l.b16 %v1477
        %v1842 = vunpack.c.l.b16 %v1478
        %v1843 = vunpack.c.l.b16 %v1479
        %v1844 = vunpack.c.l.b16 %v1480
        %v1845 = vunpack.c.l.b16 %v1481
        %v1846 = vpack.c.b16 %v1783, %v1782
        %v1847 = vpack.c.b16 %v1785, %v1784
        %v1848 = vpack.c.b16 %v1787, %v1786
        %v1849 = vpack.c.b16 %v1789, %v1788
        %v1850 = vpack.c.b16 %v1791, %v1790
        %v1851 = vpack.c.b16 %v1793, %v1792
        %v1852 = vpack.c.b16 %v1795, %v1794
        %v1853 = vpack.c.b16 %v1797, %v1796
        %v1854 = vpack.c.b16 %v1799, %v1798
        %v1855 = vpack.c.b16 %v1801, %v1800
        %v1856 = vpack.c.b16 %v1803, %v1802
        %v1857 = vpack.c.b16 %v1805, %v1804
        %v1858 = vpack.c.b16 %v1807, %v1806
        %v1859 = vpack.c.b16 %v1809, %v1808
        %v1860 = vpack.c.b16 %v1811, %v1810
        %v1861 = vpack.c.b16 %v1813, %v1812
        %v1862 = vpack.c.b16 %v1815, %v1814
        %v1863 = vpack.c.b16 %v1817, %v1816
        %v1864 = vpack.c.b16 %v1819, %v1818
        %v1865 = vpack.c.b16 %v1821, %v1820
        %v1866 = vpack.c.b16 %v1823, %v1822
        %v1867 = vpack.c.b16 %v1825, %v1824
        %v1868 = vpack.c.b16 %v1827, %v1826
        %v1869 = vpack.c.b16 %v1829, %v1828
        %v1870 = vpack.c.b16 %v1831, %v1830
        %v1871 = vpack.c.b16 %v1833, %v1832
        %v1872 = vpack.c.b16 %v1835, %v1834
        %v1873 = vpack.c.b16 %v1837, %v1836
        %v1874 = vpack.c.b16 %v1839, %v1838
        %v1875 = vpack.c.b16 %v1841, %v1840
        %v1876 = vpack.c.b16 %v1843, %v1842
        %v1877 = vpack.c.b16 %v1845, %v1844
        %1910 = vmatpush.bf16.msra.mxu0 %v1853
        %1911 = vmatpush.bf16.msra.mxu0 %v1852
        %1912 = vmatpush.bf16.msra.mxu0 %v1851
        %1913 = vmatpush.bf16.msra.mxu0 %v1850
        %1914 = vmatpush.bf16.msra.mxu0 %v1849
        %1915 = vmatpush.bf16.msra.mxu0 %v1848
        %1916 = vmatpush.bf16.msra.mxu0 %v1847
        %1917 = vmatpush.bf16.msra.mxu0 %v1846
        %1918 = vmatmul.bf16.gmra.mxu0 %v1711
        %v1919 = vpop.f32.mrf.mxu0
        %v1920 = vadd.f32 %v1716, %v1919
        %v1921 = vpop.f32.mrf.mxu0
        %1922 = vdwg.mxu0
        %1923 = vmatpush.bf16.msra.mxu0 %v1861
        %1924 = vmatpush.bf16.msra.mxu0 %v1860
        %1925 = vmatpush.bf16.msra.mxu0 %v1859
        %1926 = vmatpush.bf16.msra.mxu0 %v1858
        %1927 = vmatpush.bf16.msra.mxu0 %v1857
        %1928 = vmatpush.bf16.msra.mxu0 %v1856
        %1929 = vmatpush.bf16.msra.mxu0 %v1855
        %1930 = vmatpush.bf16.msra.mxu0 %v1854
        %1931 = vmatmul.bf16.gmra.mxu0 %v1712
        %v1932 = vpop.f32.mrf.mxu0
        %v1933 = vadd.f32 %v1920, %v1932
        %v1934 = vpop.f32.mrf.mxu0
        %1935 = vdwg.mxu0
        %1936 = vmatpush.bf16.msra.mxu0 %v1869
        %1937 = vmatpush.bf16.msra.mxu0 %v1868
        %1938 = vmatpush.bf16.msra.mxu0 %v1867
        %1939 = vmatpush.bf16.msra.mxu0 %v1866
        %1940 = vmatpush.bf16.msra.mxu0 %v1865
        %1941 = vmatpush.bf16.msra.mxu0 %v1864
        %1942 = vmatpush.bf16.msra.mxu0 %v1863
        %1943 = vmatpush.bf16.msra.mxu0 %v1862
        %1944 = vmatmul.bf16.gmra.mxu0 %v1713
        %v1945 = vpop.f32.mrf.mxu0
        %v1946 = vadd.f32 %v1933, %v1945
        %v1947 = vpop.f32.mrf.mxu0
        %1948 = vdwg.mxu0
        %1949 = vmatpush.bf16.msra.mxu0 %v1877
        %1950 = vmatpush.bf16.msra.mxu0 %v1876
        %1951 = vmatpush.bf16.msra.mxu0 %v1875
        %1952 = vmatpush.bf16.msra.mxu0 %v1874
        %1953 = vmatpush.bf16.msra.mxu0 %v1873
        %1954 = vmatpush.bf16.msra.mxu0 %v1872
        %1955 = vmatpush.bf16.msra.mxu0 %v1871
        %1956 = vmatpush.bf16.msra.mxu0 %v1870
        %1957 = vmatmul.bf16.gmra.mxu0 %v1714
        %v1958 = vpop.f32.mrf.mxu0
        %v1959 = vadd.f32 %v1946, %v1958
        %v1960 = vpop.f32.mrf.mxu0
        %1961 = vdwg.mxu0
        %v1962 = vadd.f32 %v1959, %v1384
        %1963 = vadd.xlane.f32.xlu0 %v1962
        %v1964 = vpop.xlane.xlu0 %1963
        %v1965 = vmul.f32 %v1964, %v1358
        %v1966 = vsub.f32 %v1962, %v1965
        %v1967 = vmul.f32 %v1966, %v1966
        %1968 = vadd.xlane.f32.xlu0 %v1967
        %v1969 = vpop.xlane.xlu0 %1968
        %v1970 = vmul.f32 %v1969, %v1358
        %v1971 = vadd.f32 %v1970, 1e-05
        %v1972 = vrsqrt.pop %v1971
        %v1973 = vmul.f32 %v1972, %v1971
        %v1974 = vmul.f32 %v1973, %v1972
        %v1975 = vmul.f32 0.5, %v1974
        %v1976 = vsub.f32 1.5, %v1975
        %v1977 = vmul.f32 %v1972, %v1976
        %vm1978 = vweird.f32 %v1971
        %vm1979 = vweird.f32 %v1972
        %vm1980 = vmor %vm1978, %vm1979
        %v1981 = vsel %vm1980, %v1972, %v1977
        %v1982 = vmul.f32 %v1966, %v1981
        %v1984 = vperm.slane %v1483, 0
        %v1986 = vmul.f32 %v1982, %v1984
        %v1988 = vperm.slane %v1484, 0
        %v1990 = vadd.f32 %v1986, %v1988
        %1991 = vst [vmem:[#allocation2] sm:$0xff] %v1990
        %p1992 = scmp.eq.s32.totalorder %s37, 1
        // Predicated region
        $region97: #{seq2seq_forward.3} parent=79 // pred_check
          %p1993 = pneg %p1992
        $region98: #{seq2seq_forward.3} parent=79 // pred_check_branch
          %1995 = sbr.rel (%p1993) target = $region100
        $region99: #{seq2seq_forward.3} parent=79 // pred_region
          %v1996 = vld [vmem:[%s13] sm:$0x1]
          %v1997 = vld [vmem:[%s14] sm:$0x1]
          %1998 = vadd.xlane.f32.xlu0 %v1990
          %v1999 = vpop.xlane.xlu0 %1998
          %v2000 = vmul.f32 %v1999, %v1358
          %v2001 = vsub.f32 %v1990, %v2000
          %v2002 = vmul.f32 %v2001, %v2001
          %2003 = vadd.xlane.f32.xlu0 %v2002
          %v2004 = vpop.xlane.xlu0 %2003
          %v2005 = vmul.f32 %v2004, %v1358
          %v2006 = vadd.f32 %v2005, 1e-05
          %v2007 = vrsqrt.pop %v2006
          %v2008 = vmul.f32 %v2007, %v2006
          %v2009 = vmul.f32 %v2008, %v2007
          %v2010 = vmul.f32 0.5, %v2009
          %v2011 = vsub.f32 1.5, %v2010
          %v2012 = vmul.f32 %v2007, %v2011
          %vm2013 = vweird.f32 %v2006
          %vm2014 = vweird.f32 %v2007
          %vm2015 = vmor %vm2013, %vm2014
          %v2016 = vsel %vm2015, %v2007, %v2012
          %v2017 = vmul.f32 %v2001, %v2016
          %v2019 = vperm.slane %v1996, 0
          %v2021 = vmul.f32 %v2017, %v2019
          %v2023 = vperm.slane %v1997, 0
          %v2025 = vadd.f32 %v2021, %v2023
          %v2026 = vpack.c.bf16 %v2025, %v2025
          %2027 = vst [vmem:[%s762] sm:$0xf] %v2026
        $region100: #{seq2seq_forward.3} parent=79 // pred_fallthru
          _
        %p2028 = scmp.lt.s32.totalorder %s36, 1
        %s2029 = scalar_select %p2028, %s36, 1
        %s2030 = smul.addr %s2029, 4
        %s2031 = scalar_lea.vmem %s15, %s2030
        // Predicated region
        $region101: #{seq2seq_forward.3} parent=79 // pred_check
          %p2032 = pneg %p442
        $region102: #{seq2seq_forward.3} parent=79 // pred_check_branch
          %2034 = sbr.rel (%p2032) target = $region104
        $region103: #{seq2seq_forward.3} parent=79 // pred_region
          _
        $region104: #{seq2seq_forward.3} parent=79 // pred_fallthru
          _
      $region80: #{seq2seq_forward.3} parent=5 // pred_fallthru
        _
      %p2035 = scmp.le.s32.totalorder 2, %s27
      // Predicated region
      $region105: #{seq2seq_forward.3} parent=5 // pred_check
        %p2036 = pneg %p2035
      $region106: #{seq2seq_forward.3} parent=5 // pred_check_branch
        %2038 = sbr.rel (%p2036) target = $region108
      $region107: #{seq2seq_forward.3} parent=5 // pred_region
        %s2039 = ssub.s32 %s27, 2
        // Predicated region
        $region109: #{seq2seq_forward.3} parent=107 // pred_check
          %p2040 = pneg %p448
        $region110: #{seq2seq_forward.3} parent=107 // pred_check_branch
          %2042 = sbr.rel (%p2040) target = $region112
        $region111: #{seq2seq_forward.3} parent=107 // pred_region
          %p2043 = scmp.lt.s32.totalorder %s38, 1
          %s2044 = scalar_select %p2043, %s38, 1
          %s2045 = smul.addr %s2044, 4
          %s2046 = scalar_lea.vmem %s15, %s2045
        $region112: #{seq2seq_forward.3} parent=107 // pred_fallthru
          _
      $region108: #{seq2seq_forward.3} parent=5 // pred_fallthru
        _
    $region6: #{seq2seq_forward.3} parent=1 // loop_footer
      %s31 = sadd.s32 1, %s27
    $region7: #{seq2seq_forward.3} parent=1 // loop_footer_branch
      %26 = sbr.rel target = $region3
    $region8: #{seq2seq_forward.3} parent=1 // loop_exit
      _
    %2047 = vsyncpa [#allocation4], 1
    %s2048 = scalar_lea.sflag [#allocation4], 1
    %2049 = vsyncpa %s2048, 1
    %2050 = vsyncpa [#allocation6], 1
    %s2051 = scalar_lea.sflag [#allocation6], 1
    %2052 = vsyncpa %s2051, 1

// kernel: seq2seq_forward.4
$region0: #{seq2seq_forward.4}
  #allocation0 [shape = 'u32[]', space=smem, size = 0x4, offset = 0x4, fixed_abs, tag = 'smem constant byte address 0x4 - core index']
  #allocation1 [shape = 'u32[72,128]{1,0:T(1,128)}', space=vmem, size = 0x9000, scoped, tag = 'internal scratch']
  #allocation2 [shape = 'f32[8,128]{1,0:T(8,128)}', space=vmem, size = 0x1000, scoped, tag = 'scratch operand']
  %s0 = inlined_call_operand.vmem [shape: bf16[2,8,128], index: 0, kind: input, shape index: {}]
  %s1 = inlined_call_operand.vmem [shape: bf16[2,8,128], index: 1, kind: input, shape index: {}]
  %s2 = inlined_call_operand.hbm [shape: bf16[2,128,384], index: 2, kind: input, shape index: {}]
  %s3 = inlined_call_operand.vmem [shape: f32[2,1,384], index: 3, kind: input, shape index: {}]
  %s4 = inlined_call_operand.hbm [shape: bf16[2,128,128], index: 4, kind: input, shape index: {}]
  %s5 = inlined_call_operand.vmem [shape: f32[2,1,128], index: 5, kind: input, shape index: {}]
  %s6 = inlined_call_operand.vmem [shape: f32[2,1,128], index: 6, kind: input, shape index: {}]
  %s7 = inlined_call_operand.vmem [shape: f32[2,1,128], index: 7, kind: input, shape index: {}]
  %s8 = inlined_call_operand.hbm [shape: bf16[2,128,128], index: 8, kind: input, shape index: {}]
  %s9 = inlined_call_operand.vmem [shape: f32[2,1,128], index: 9, kind: input, shape index: {}]
  %s10 = inlined_call_operand.vmem [shape: bf16[2,128,256], index: 10, kind: input, shape index: {}]
  %s11 = inlined_call_operand.vmem [shape: f32[2,1,256], index: 11, kind: input, shape index: {}]
  %s12 = inlined_call_operand.hbm [shape: bf16[2,128,128], index: 12, kind: input, shape index: {}]
  %s13 = inlined_call_operand.vmem [shape: f32[2,1,128], index: 13, kind: input, shape index: {}]
  %s14 = inlined_call_operand.vmem [shape: f32[2,1,128], index: 14, kind: input, shape index: {}]
  %s15 = inlined_call_operand.vmem [shape: f32[2,1,128], index: 15, kind: input, shape index: {}]
  %s16 = inlined_call_operand.hbm [shape: bf16[2,128,512], index: 16, kind: input, shape index: {}]
  %s17 = inlined_call_operand.vmem [shape: f32[2,1,512], index: 17, kind: input, shape index: {}]
  %s18 = inlined_call_operand.hbm [shape: bf16[2,512,128], index: 18, kind: input, shape index: {}]
  %s19 = inlined_call_operand.vmem [shape: f32[2,1,128], index: 19, kind: input, shape index: {}]
  %s20 = inlined_call_operand.vmem [shape: f32[2,1,128], index: 20, kind: input, shape index: {}]
  %s21 = inlined_call_operand.vmem [shape: f32[2,1,128], index: 21, kind: input, shape index: {}]
  %s22 = inlined_call_operand.vmem [shape: f32[1,128], index: 22, kind: input, shape index: {}]
  %s23 = inlined_call_operand.vmem [shape: f32[1,128], index: 23, kind: input, shape index: {}]
  %s24 = inlined_call_operand.vmem [shape: bf16[2,8,128], index: 24, kind: output, shape index: {}]
  %s25 = sld [smem:[#allocation0]]
  $region161: #{seq2seq_forward.4} parent=0
    _
  %s27 = ssub.s32 1, %s25
  %s28 = scalar_select 0, %s27, %s25
  $region1: #{seq2seq_forward.4} parent=0
    #allocation3 [shape = 'u8[196608]{0}', space=vmem, size = 0x30000, scoped, tag = 'input window, operand 2']
    #allocation4 [shape = 's32[2]{0}', space=sflag, size = 0x8, scoped, tag = 'scoped memory for seq2seq_forward.4']
    #allocation5 [shape = 'u8[65536]{0}', space=vmem, size = 0x10000, scoped, tag = 'input window, operand 4']
    #allocation6 [shape = 's32[2]{0}', space=sflag, size = 0x8, scoped, tag = 'scoped memory for seq2seq_forward.4']
    #allocation7 [shape = 'u8[65536]{0}', space=vmem, size = 0x10000, scoped, tag = 'input window, operand 8']
    #allocation8 [shape = 'u8[65536]{0}', space=vmem, size = 0x10000, scoped, tag = 'input window, operand 12']
    #allocation9 [shape = 's32[2]{0}', space=sflag, size = 0x8, scoped, tag = 'scoped memory for seq2seq_forward.4']
    #allocation10 [shape = 'u8[262144]{0}', space=vmem, size = 0x40000, scoped, tag = 'input window, operand 16']
    #allocation11 [shape = 'u8[262144]{0}', space=vmem, size = 0x40000, scoped, tag = 'input window, operand 18']
    #allocation12 [shape = 's32[2]{0}', space=sflag, size = 0x8, scoped, tag = 'scoped memory for seq2seq_forward.4']
    %29 = vsyncpa [#allocation4], 0
    %s30 = scalar_lea.sflag [#allocation4], 1
    %31 = vsyncpa %s30, 0
    %32 = vsyncpa [#allocation6], 0
    %s33 = scalar_lea.sflag [#allocation6], 1
    %34 = vsyncpa %s33, 0
    %35 = vsyncpa [#allocation9], 0
    %s36 = scalar_lea.sflag [#allocation9], 1
    %37 = vsyncpa %s36, 0
    %38 = vsyncpa [#allocation12], 0
    %s39 = scalar_lea.sflag [#allocation12], 1
    %40 = vsyncpa %s39, 0
    loop: start=0, step=1, limit=6
    $region2: #{seq2seq_forward.4} parent=1 // loop_pre_header
      _
    $region3: #{seq2seq_forward.4} parent=1 // loop_header
      %s42 = sphi 0, %s46
      %p43 = scmp.ge.s32.totalorder %s42, 6
      %s49 = sphi 0, %s61
      %s50 = sphi 0, %s57
      %s51 = sphi 0, %s49
      %s52 = sphi 0, %s50
      %s53 = sphi 0, %s51
      %s54 = sphi 0, %s52
      %s64 = sphi 0, %s66
      %s67 = sphi 0, %s64
      %s68 = sphi 0, %s67
      %s84 = sphi 0, %s68
      %s90 = sphi 0, %s92
      %s93 = sphi 0, %s90
      %s94 = sphi 0, %s93
      %s110 = sphi 0, %s94
      %s116 = sphi 0, %s118
      %s119 = sphi 0, %s116
      %s120 = sphi 0, %s119
      %s136 = sphi 0, %s120
      %s142 = sphi 0, %s144
      %s145 = sphi 0, %s142
      %s146 = sphi 0, %s145
      %s162 = sphi 0, %s146
      %s168 = sphi 0, %s170
      %s171 = sphi 0, %s168
      %s172 = sphi 0, %s171
      %s188 = sphi 0, %s172
      %s194 = sphi 0, %s196
      %s197 = sphi 0, %s194
      %s198 = sphi 0, %s197
      %s214 = sphi 0, %s198
      %s220 = sphi 0, %s222
      %s223 = sphi 0, %s220
      %s224 = sphi 0, %s223
      %s240 = sphi 0, %s224
      %s246 = sphi 0, %s248
      %s249 = sphi 0, %s246
      %s250 = sphi 0, %s249
      %s266 = sphi 0, %s250
      %s272 = sphi 0, %s274
      %s275 = sphi 0, %s272
      %s276 = sphi 0, %s275
      %s292 = sphi 0, %s276
      %s298 = sphi 0, %s300
      %s301 = sphi 0, %s298
      %s302 = sphi 0, %s301
      %s318 = sphi 0, %s302
      %s324 = sphi 0, %s326
      %s327 = sphi 0, %s324
      %s328 = sphi 0, %s327
      %s344 = sphi 0, %s328
      %s350 = sphi 0, %s352
      %s353 = sphi 0, %s350
      %s354 = sphi 0, %s353
      %s370 = sphi 0, %s354
      %s376 = sphi 0, %s378
      %s379 = sphi 0, %s376
      %s380 = sphi 0, %s379
      %s396 = sphi 0, %s380
      %s402 = sphi 0, %s404
      %s405 = sphi 0, %s402
      %s406 = sphi 0, %s405
      %s422 = sphi 0, %s406
      %s428 = sphi 0, %s430
      %s431 = sphi 0, %s428
      %s432 = sphi 0, %s431
      %s448 = sphi 0, %s432
      %s454 = sphi 0, %s456
      %s457 = sphi 0, %s454
      %s458 = sphi 0, %s457
      %s474 = sphi 0, %s458
      %s480 = sphi 0, %s482
      %s483 = sphi 0, %s480
      %s484 = sphi 0, %s483
      %s500 = sphi 0, %s484
      %s506 = sphi 0, %s508
      %s509 = sphi 0, %s506
      %s510 = sphi 0, %s509
      %s526 = sphi 0, %s510
      %s532 = sphi 0, %s534
      %s535 = sphi 0, %s532
      %s536 = sphi 0, %s535
      %s552 = sphi 0, %s536
      %s558 = sphi 0, %s560
      %s561 = sphi 0, %s558
      %s562 = sphi 0, %s561
      %s578 = sphi 0, %s562
      %s584 = sphi 0, %s586
      %s587 = sphi 0, %s584
      %s588 = sphi 0, %s587
      %s604 = sphi 0, %s588
      %s610 = sphi 0, %s612
      %s613 = sphi 0, %s610
      %s614 = sphi 0, %s613
      %s630 = sphi 0, %s614
      %s634 = sphi 0, %s634
      %s636 = sphi 0, %s634
      %s637 = sphi 0, %s636
      %s651 = sphi 0, %s637
      %s655 = sphi 0, %s655
      %s657 = sphi 0, %s655
      %s658 = sphi 0, %s657
      %s672 = sphi 0, %s658
      %s678 = sphi 0, %s680
      %s681 = sphi 0, %s678
      %s682 = sphi 0, %s681
      %s698 = sphi 0, %s682
    $region4: #{seq2seq_forward.4} parent=1 // loop_header_branch
      %45 = sbr.rel (%p43) target = $region8
    $region5: #{seq2seq_forward.4} parent=1 // loop_body
      %s47 = ssub.s32 %s42, 1
      %s48 = ssub.s32 %s42, 2
      %s55 = sadd.s32 1, %s50
      %p56 = scmp.ge.s32.totalorder %s55, 2
      %s57 = scalar_select %p56, 0, %s55
      %s58 = sadd.s32 1, %s49
      %s59 = scalar_select %p56, %s58, %s49
      %p60 = scmp.ge.s32.totalorder %s59, 2
      %s61 = scalar_select %p60, 0, %s59
      %s62 = ssub.s32 %s49, %s61
      %p63 = scmp.eq.s32.totalorder %s62, 0
      %s65 = sadd.s32 %s64, 1
      %s66 = scalar_select %p63, %s64, %s65
      %p69 = pneg %p63
      %p70 = scmp.eq.s32.totalorder %s42, 3
      %p71 = por %p69, %p70
      %p72 = scmp.ne.s32.totalorder %s64, %s67
      %p73 = scmp.eq.s32.totalorder %s42, 0
      %p74 = por %p72, %p73
      %p75 = scmp.ne.s32.totalorder %s64, %s67
      %p76 = scmp.eq.s32.totalorder %s47, 3
      %p77 = por %p75, %p76
      %p78 = scmp.ne.s32.totalorder %s67, %s68
      %p79 = scmp.eq.s32.totalorder %s47, 0
      %p80 = por %p78, %p79
      %p81 = scmp.ne.s32.totalorder %s67, %s68
      %p82 = scmp.eq.s32.totalorder %s48, 3
      %p83 = por %p81, %p82
      %p85 = scmp.ne.s32.totalorder %s68, %s84
      %p86 = scmp.eq.s32.totalorder %s48, 0
      %p87 = por %p85, %p86
      %s88 = ssub.s32 %s49, %s61
      %p89 = scmp.eq.s32.totalorder %s88, 0
      %s91 = sadd.s32 %s90, 1
      %s92 = scalar_select %p89, %s90, %s91
      %p95 = pneg %p89
      %p96 = scmp.eq.s32.totalorder %s42, 3
      %p97 = por %p95, %p96
      %p98 = scmp.ne.s32.totalorder %s90, %s93
      %p99 = scmp.eq.s32.totalorder %s42, 0
      %p100 = por %p98, %p99
      %p101 = scmp.ne.s32.totalorder %s90, %s93
      %p102 = scmp.eq.s32.totalorder %s47, 3
      %p103 = por %p101, %p102
      %p104 = scmp.ne.s32.totalorder %s93, %s94
      %p105 = scmp.eq.s32.totalorder %s47, 0
      %p106 = por %p104, %p105
      %p107 = scmp.ne.s32.totalorder %s93, %s94
      %p108 = scmp.eq.s32.totalorder %s48, 3
      %p109 = por %p107, %p108
      %p111 = scmp.ne.s32.totalorder %s94, %s110
      %p112 = scmp.eq.s32.totalorder %s48, 0
      %p113 = por %p111, %p112
      %s114 = ssub.s32 %s50, %s57
      %p115 = scmp.eq.s32.totalorder %s114, 0
      %s117 = sadd.s32 %s116, 1
      %s118 = scalar_select %p115, %s116, %s117
      %p121 = pneg %p115
      %p122 = scmp.eq.s32.totalorder %s42, 3
      %p123 = por %p121, %p122
      %p124 = scmp.ne.s32.totalorder %s116, %s119
      %p125 = scmp.eq.s32.totalorder %s42, 0
      %p126 = por %p124, %p125
      %p127 = scmp.ne.s32.totalorder %s116, %s119
      %p128 = scmp.eq.s32.totalorder %s47, 3
      %p129 = por %p127, %p128
      %p130 = scmp.ne.s32.totalorder %s119, %s120
      %p131 = scmp.eq.s32.totalorder %s47, 0
      %p132 = por %p130, %p131
      %p133 = scmp.ne.s32.totalorder %s119, %s120
      %p134 = scmp.eq.s32.totalorder %s48, 3
      %p135 = por %p133, %p134
      %p137 = scmp.ne.s32.totalorder %s120, %s136
      %p138 = scmp.eq.s32.totalorder %s48, 0
      %p139 = por %p137, %p138
      %s140 = ssub.s32 %s50, %s57
      %p141 = scmp.eq.s32.totalorder %s140, 0
      %s143 = sadd.s32 %s142, 1
      %s144 = scalar_select %p141, %s142, %s143
      %p147 = pneg %p141
      %p148 = scmp.eq.s32.totalorder %s42, 3
      %p149 = por %p147, %p148
      %p150 = scmp.ne.s32.totalorder %s142, %s145
      %p151 = scmp.eq.s32.totalorder %s42, 0
      %p152 = por %p150, %p151
      %p153 = scmp.ne.s32.totalorder %s142, %s145
      %p154 = scmp.eq.s32.totalorder %s47, 3
      %p155 = por %p153, %p154
      %p156 = scmp.ne.s32.totalorder %s145, %s146
      %p157 = scmp.eq.s32.totalorder %s47, 0
      %p158 = por %p156, %p157
      %p159 = scmp.ne.s32.totalorder %s145, %s146
      %p160 = scmp.eq.s32.totalorder %s48, 3
      %p161 = por %p159, %p160
      %p163 = scmp.ne.s32.totalorder %s146, %s162
      %p164 = scmp.eq.s32.totalorder %s48, 0
      %p165 = por %p163, %p164
      %s166 = ssub.s32 %s50, %s57
      %p167 = scmp.eq.s32.totalorder %s166, 0
      %s169 = sadd.s32 %s168, 1
      %s170 = scalar_select %p167, %s168, %s169
      %p173 = pneg %p167
      %p174 = scmp.eq.s32.totalorder %s42, 3
      %p175 = por %p173, %p174
      %p176 = scmp.ne.s32.totalorder %s168, %s171
      %p177 = scmp.eq.s32.totalorder %s42, 0
      %p178 = por %p176, %p177
      %p179 = scmp.ne.s32.totalorder %s168, %s171
      %p180 = scmp.eq.s32.totalorder %s47, 3
      %p181 = por %p179, %p180
      %p182 = scmp.ne.s32.totalorder %s171, %s172
      %p183 = scmp.eq.s32.totalorder %s47, 0
      %p184 = por %p182, %p183
      %p185 = scmp.ne.s32.totalorder %s171, %s172
      %p186 = scmp.eq.s32.totalorder %s48, 3
      %p187 = por %p185, %p186
      %p189 = scmp.ne.s32.totalorder %s172, %s188
      %p190 = scmp.eq.s32.totalorder %s48, 0
      %p191 = por %p189, %p190
      %s192 = ssub.s32 %s50, %s57
      %p193 = scmp.eq.s32.totalorder %s192, 0
      %s195 = sadd.s32 %s194, 1
      %s196 = scalar_select %p193, %s194, %s195
      %p199 = pneg %p193
      %p200 = scmp.eq.s32.totalorder %s42, 3
      %p201 = por %p199, %p200
      %p202 = scmp.ne.s32.totalorder %s194, %s197
      %p203 = scmp.eq.s32.totalorder %s42, 0
      %p204 = por %p202, %p203
      %p205 = scmp.ne.s32.totalorder %s194, %s197
      %p206 = scmp.eq.s32.totalorder %s47, 3
      %p207 = por %p205, %p206
      %p208 = scmp.ne.s32.totalorder %s197, %s198
      %p209 = scmp.eq.s32.totalorder %s47, 0
      %p210 = por %p208, %p209
      %p211 = scmp.ne.s32.totalorder %s197, %s198
      %p212 = scmp.eq.s32.totalorder %s48, 3
      %p213 = por %p211, %p212
      %p215 = scmp.ne.s32.totalorder %s198, %s214
      %p216 = scmp.eq.s32.totalorder %s48, 0
      %p217 = por %p215, %p216
      %s218 = ssub.s32 %s50, %s57
      %p219 = scmp.eq.s32.totalorder %s218, 0
      %s221 = sadd.s32 %s220, 1
      %s222 = scalar_select %p219, %s220, %s221
      %p225 = pneg %p219
      %p226 = scmp.eq.s32.totalorder %s42, 3
      %p227 = por %p225, %p226
      %p228 = scmp.ne.s32.totalorder %s220, %s223
      %p229 = scmp.eq.s32.totalorder %s42, 0
      %p230 = por %p228, %p229
      %p231 = scmp.ne.s32.totalorder %s220, %s223
      %p232 = scmp.eq.s32.totalorder %s47, 3
      %p233 = por %p231, %p232
      %p234 = scmp.ne.s32.totalorder %s223, %s224
      %p235 = scmp.eq.s32.totalorder %s47, 0
      %p236 = por %p234, %p235
      %p237 = scmp.ne.s32.totalorder %s223, %s224
      %p238 = scmp.eq.s32.totalorder %s48, 3
      %p239 = por %p237, %p238
      %p241 = scmp.ne.s32.totalorder %s224, %s240
      %p242 = scmp.eq.s32.totalorder %s48, 0
      %p243 = por %p241, %p242
      %s244 = ssub.s32 %s50, %s57
      %p245 = scmp.eq.s32.totalorder %s244, 0
      %s247 = sadd.s32 %s246, 1
      %s248 = scalar_select %p245, %s246, %s247
      %p251 = pneg %p245
      %p252 = scmp.eq.s32.totalorder %s42, 3
      %p253 = por %p251, %p252
      %p254 = scmp.ne.s32.totalorder %s246, %s249
      %p255 = scmp.eq.s32.totalorder %s42, 0
      %p256 = por %p254, %p255
      %p257 = scmp.ne.s32.totalorder %s246, %s249
      %p258 = scmp.eq.s32.totalorder %s47, 3
      %p259 = por %p257, %p258
      %p260 = scmp.ne.s32.totalorder %s249, %s250
      %p261 = scmp.eq.s32.totalorder %s47, 0
      %p262 = por %p260, %p261
      %p263 = scmp.ne.s32.totalorder %s249, %s250
      %p264 = scmp.eq.s32.totalorder %s48, 3
      %p265 = por %p263, %p264
      %p267 = scmp.ne.s32.totalorder %s250, %s266
      %p268 = scmp.eq.s32.totalorder %s48, 0
      %p269 = por %p267, %p268
      %s270 = ssub.s32 %s50, %s57
      %p271 = scmp.eq.s32.totalorder %s270, 0
      %s273 = sadd.s32 %s272, 1
      %s274 = scalar_select %p271, %s272, %s273
      %p277 = pneg %p271
      %p278 = scmp.eq.s32.totalorder %s42, 3
      %p279 = por %p277, %p278
      %p280 = scmp.ne.s32.totalorder %s272, %s275
      %p281 = scmp.eq.s32.totalorder %s42, 0
      %p282 = por %p280, %p281
      %p283 = scmp.ne.s32.totalorder %s272, %s275
      %p284 = scmp.eq.s32.totalorder %s47, 3
      %p285 = por %p283, %p284
      %p286 = scmp.ne.s32.totalorder %s275, %s276
      %p287 = scmp.eq.s32.totalorder %s47, 0
      %p288 = por %p286, %p287
      %p289 = scmp.ne.s32.totalorder %s275, %s276
      %p290 = scmp.eq.s32.totalorder %s48, 3
      %p291 = por %p289, %p290
      %p293 = scmp.ne.s32.totalorder %s276, %s292
      %p294 = scmp.eq.s32.totalorder %s48, 0
      %p295 = por %p293, %p294
      %s296 = ssub.s32 %s50, %s57
      %p297 = scmp.eq.s32.totalorder %s296, 0
      %s299 = sadd.s32 %s298, 1
      %s300 = scalar_select %p297, %s298, %s299
      %p303 = pneg %p297
      %p304 = scmp.eq.s32.totalorder %s42, 3
      %p305 = por %p303, %p304
      %p306 = scmp.ne.s32.totalorder %s298, %s301
      %p307 = scmp.eq.s32.totalorder %s42, 0
      %p308 = por %p306, %p307
      %p309 = scmp.ne.s32.totalorder %s298, %s301
      %p310 = scmp.eq.s32.totalorder %s47, 3
      %p311 = por %p309, %p310
      %p312 = scmp.ne.s32.totalorder %s301, %s302
      %p313 = scmp.eq.s32.totalorder %s47, 0
      %p314 = por %p312, %p313
      %p315 = scmp.ne.s32.totalorder %s301, %s302
      %p316 = scmp.eq.s32.totalorder %s48, 3
      %p317 = por %p315, %p316
      %p319 = scmp.ne.s32.totalorder %s302, %s318
      %p320 = scmp.eq.s32.totalorder %s48, 0
      %p321 = por %p319, %p320
      %s322 = ssub.s32 %s50, %s57
      %p323 = scmp.eq.s32.totalorder %s322, 0
      %s325 = sadd.s32 %s324, 1
      %s326 = scalar_select %p323, %s324, %s325
      %p329 = pneg %p323
      %p330 = scmp.eq.s32.totalorder %s42, 3
      %p331 = por %p329, %p330
      %p332 = scmp.ne.s32.totalorder %s324, %s327
      %p333 = scmp.eq.s32.totalorder %s42, 0
      %p334 = por %p332, %p333
      %p335 = scmp.ne.s32.totalorder %s324, %s327
      %p336 = scmp.eq.s32.totalorder %s47, 3
      %p337 = por %p335, %p336
      %p338 = scmp.ne.s32.totalorder %s327, %s328
      %p339 = scmp.eq.s32.totalorder %s47, 0
      %p340 = por %p338, %p339
      %p341 = scmp.ne.s32.totalorder %s327, %s328
      %p342 = scmp.eq.s32.totalorder %s48, 3
      %p343 = por %p341, %p342
      %p345 = scmp.ne.s32.totalorder %s328, %s344
      %p346 = scmp.eq.s32.totalorder %s48, 0
      %p347 = por %p345, %p346
      %s348 = ssub.s32 %s50, %s57
      %p349 = scmp.eq.s32.totalorder %s348, 0
      %s351 = sadd.s32 %s350, 1
      %s352 = scalar_select %p349, %s350, %s351
      %p355 = pneg %p349
      %p356 = scmp.eq.s32.totalorder %s42, 3
      %p357 = por %p355, %p356
      %p358 = scmp.ne.s32.totalorder %s350, %s353
      %p359 = scmp.eq.s32.totalorder %s42, 0
      %p360 = por %p358, %p359
      %p361 = scmp.ne.s32.totalorder %s350, %s353
      %p362 = scmp.eq.s32.totalorder %s47, 3
      %p363 = por %p361, %p362
      %p364 = scmp.ne.s32.totalorder %s353, %s354
      %p365 = scmp.eq.s32.totalorder %s47, 0
      %p366 = por %p364, %p365
      %p367 = scmp.ne.s32.totalorder %s353, %s354
      %p368 = scmp.eq.s32.totalorder %s48, 3
      %p369 = por %p367, %p368
      %p371 = scmp.ne.s32.totalorder %s354, %s370
      %p372 = scmp.eq.s32.totalorder %s48, 0
      %p373 = por %p371, %p372
      %s374 = ssub.s32 %s50, %s57
      %p375 = scmp.eq.s32.totalorder %s374, 0
      %s377 = sadd.s32 %s376, 1
      %s378 = scalar_select %p375, %s376, %s377
      %p381 = pneg %p375
      %p382 = scmp.eq.s32.totalorder %s42, 3
      %p383 = por %p381, %p382
      %p384 = scmp.ne.s32.totalorder %s376, %s379
      %p385 = scmp.eq.s32.totalorder %s42, 0
      %p386 = por %p384, %p385
      %p387 = scmp.ne.s32.totalorder %s376, %s379
      %p388 = scmp.eq.s32.totalorder %s47, 3
      %p389 = por %p387, %p388
      %p390 = scmp.ne.s32.totalorder %s379, %s380
      %p391 = scmp.eq.s32.totalorder %s47, 0
      %p392 = por %p390, %p391
      %p393 = scmp.ne.s32.totalorder %s379, %s380
      %p394 = scmp.eq.s32.totalorder %s48, 3
      %p395 = por %p393, %p394
      %p397 = scmp.ne.s32.totalorder %s380, %s396
      %p398 = scmp.eq.s32.totalorder %s48, 0
      %p399 = por %p397, %p398
      %s400 = ssub.s32 %s50, %s57
      %p401 = scmp.eq.s32.totalorder %s400, 0
      %s403 = sadd.s32 %s402, 1
      %s404 = scalar_select %p401, %s402, %s403
      %p407 = pneg %p401
      %p408 = scmp.eq.s32.totalorder %s42, 3
      %p409 = por %p407, %p408
      %p410 = scmp.ne.s32.totalorder %s402, %s405
      %p411 = scmp.eq.s32.totalorder %s42, 0
      %p412 = por %p410, %p411
      %p413 = scmp.ne.s32.totalorder %s402, %s405
      %p414 = scmp.eq.s32.totalorder %s47, 3
      %p415 = por %p413, %p414
      %p416 = scmp.ne.s32.totalorder %s405, %s406
      %p417 = scmp.eq.s32.totalorder %s47, 0
      %p418 = por %p416, %p417
      %p419 = scmp.ne.s32.totalorder %s405, %s406
      %p420 = scmp.eq.s32.totalorder %s48, 3
      %p421 = por %p419, %p420
      %p423 = scmp.ne.s32.totalorder %s406, %s422
      %p424 = scmp.eq.s32.totalorder %s48, 0
      %p425 = por %p423, %p424
      %s426 = ssub.s32 %s50, %s57
      %p427 = scmp.eq.s32.totalorder %s426, 0
      %s429 = sadd.s32 %s428, 1
      %s430 = scalar_select %p427, %s428, %s429
      %p433 = pneg %p427
      %p434 = scmp.eq.s32.totalorder %s42, 3
      %p435 = por %p433, %p434
      %p436 = scmp.ne.s32.totalorder %s428, %s431
      %p437 = scmp.eq.s32.totalorder %s42, 0
      %p438 = por %p436, %p437
      %p439 = scmp.ne.s32.totalorder %s428, %s431
      %p440 = scmp.eq.s32.totalorder %s47, 3
      %p441 = por %p439, %p440
      %p442 = scmp.ne.s32.totalorder %s431, %s432
      %p443 = scmp.eq.s32.totalorder %s47, 0
      %p444 = por %p442, %p443
      %p445 = scmp.ne.s32.totalorder %s431, %s432
      %p446 = scmp.eq.s32.totalorder %s48, 3
      %p447 = por %p445, %p446
      %p449 = scmp.ne.s32.totalorder %s432, %s448
      %p450 = scmp.eq.s32.totalorder %s48, 0
      %p451 = por %p449, %p450
      %s452 = ssub.s32 %s50, %s57
      %p453 = scmp.eq.s32.totalorder %s452, 0
      %s455 = sadd.s32 %s454, 1
      %s456 = scalar_select %p453, %s454, %s455
      %p459 = pneg %p453
      %p460 = scmp.eq.s32.totalorder %s42, 3
      %p461 = por %p459, %p460
      %p462 = scmp.ne.s32.totalorder %s454, %s457
      %p463 = scmp.eq.s32.totalorder %s42, 0
      %p464 = por %p462, %p463
      %p465 = scmp.ne.s32.totalorder %s454, %s457
      %p466 = scmp.eq.s32.totalorder %s47, 3
      %p467 = por %p465, %p466
      %p468 = scmp.ne.s32.totalorder %s457, %s458
      %p469 = scmp.eq.s32.totalorder %s47, 0
      %p470 = por %p468, %p469
      %p471 = scmp.ne.s32.totalorder %s457, %s458
      %p472 = scmp.eq.s32.totalorder %s48, 3
      %p473 = por %p471, %p472
      %p475 = scmp.ne.s32.totalorder %s458, %s474
      %p476 = scmp.eq.s32.totalorder %s48, 0
      %p477 = por %p475, %p476
      %s478 = ssub.s32 %s50, %s57
      %p479 = scmp.eq.s32.totalorder %s478, 0
      %s481 = sadd.s32 %s480, 1
      %s482 = scalar_select %p479, %s480, %s481
      %p485 = pneg %p479
      %p486 = scmp.eq.s32.totalorder %s42, 3
      %p487 = por %p485, %p486
      %p488 = scmp.ne.s32.totalorder %s480, %s483
      %p489 = scmp.eq.s32.totalorder %s42, 0
      %p490 = por %p488, %p489
      %p491 = scmp.ne.s32.totalorder %s480, %s483
      %p492 = scmp.eq.s32.totalorder %s47, 3
      %p493 = por %p491, %p492
      %p494 = scmp.ne.s32.totalorder %s483, %s484
      %p495 = scmp.eq.s32.totalorder %s47, 0
      %p496 = por %p494, %p495
      %p497 = scmp.ne.s32.totalorder %s483, %s484
      %p498 = scmp.eq.s32.totalorder %s48, 3
      %p499 = por %p497, %p498
      %p501 = scmp.ne.s32.totalorder %s484, %s500
      %p502 = scmp.eq.s32.totalorder %s48, 0
      %p503 = por %p501, %p502
      %s504 = ssub.s32 %s50, %s57
      %p505 = scmp.eq.s32.totalorder %s504, 0
      %s507 = sadd.s32 %s506, 1
      %s508 = scalar_select %p505, %s506, %s507
      %p511 = pneg %p505
      %p512 = scmp.eq.s32.totalorder %s42, 3
      %p513 = por %p511, %p512
      %p514 = scmp.ne.s32.totalorder %s506, %s509
      %p515 = scmp.eq.s32.totalorder %s42, 0
      %p516 = por %p514, %p515
      %p517 = scmp.ne.s32.totalorder %s506, %s509
      %p518 = scmp.eq.s32.totalorder %s47, 3
      %p519 = por %p517, %p518
      %p520 = scmp.ne.s32.totalorder %s509, %s510
      %p521 = scmp.eq.s32.totalorder %s47, 0
      %p522 = por %p520, %p521
      %p523 = scmp.ne.s32.totalorder %s509, %s510
      %p524 = scmp.eq.s32.totalorder %s48, 3
      %p525 = por %p523, %p524
      %p527 = scmp.ne.s32.totalorder %s510, %s526
      %p528 = scmp.eq.s32.totalorder %s48, 0
      %p529 = por %p527, %p528
      %s530 = ssub.s32 %s50, %s57
      %p531 = scmp.eq.s32.totalorder %s530, 0
      %s533 = sadd.s32 %s532, 1
      %s534 = scalar_select %p531, %s532, %s533
      %p537 = pneg %p531
      %p538 = scmp.eq.s32.totalorder %s42, 3
      %p539 = por %p537, %p538
      %p540 = scmp.ne.s32.totalorder %s532, %s535
      %p541 = scmp.eq.s32.totalorder %s42, 0
      %p542 = por %p540, %p541
      %p543 = scmp.ne.s32.totalorder %s532, %s535
      %p544 = scmp.eq.s32.totalorder %s47, 3
      %p545 = por %p543, %p544
      %p546 = scmp.ne.s32.totalorder %s535, %s536
      %p547 = scmp.eq.s32.totalorder %s47, 0
      %p548 = por %p546, %p547
      %p549 = scmp.ne.s32.totalorder %s535, %s536
      %p550 = scmp.eq.s32.totalorder %s48, 3
      %p551 = por %p549, %p550
      %p553 = scmp.ne.s32.totalorder %s536, %s552
      %p554 = scmp.eq.s32.totalorder %s48, 0
      %p555 = por %p553, %p554
      %s556 = ssub.s32 %s50, %s57
      %p557 = scmp.eq.s32.totalorder %s556, 0
      %s559 = sadd.s32 %s558, 1
      %s560 = scalar_select %p557, %s558, %s559
      %p563 = pneg %p557
      %p564 = scmp.eq.s32.totalorder %s42, 3
      %p565 = por %p563, %p564
      %p566 = scmp.ne.s32.totalorder %s558, %s561
      %p567 = scmp.eq.s32.totalorder %s42, 0
      %p568 = por %p566, %p567
      %p569 = scmp.ne.s32.totalorder %s558, %s561
      %p570 = scmp.eq.s32.totalorder %s47, 3
      %p571 = por %p569, %p570
      %p572 = scmp.ne.s32.totalorder %s561, %s562
      %p573 = scmp.eq.s32.totalorder %s47, 0
      %p574 = por %p572, %p573
      %p575 = scmp.ne.s32.totalorder %s561, %s562
      %p576 = scmp.eq.s32.totalorder %s48, 3
      %p577 = por %p575, %p576
      %p579 = scmp.ne.s32.totalorder %s562, %s578
      %p580 = scmp.eq.s32.totalorder %s48, 0
      %p581 = por %p579, %p580
      %s582 = ssub.s32 %s50, %s57
      %p583 = scmp.eq.s32.totalorder %s582, 0
      %s585 = sadd.s32 %s584, 1
      %s586 = scalar_select %p583, %s584, %s585
      %p589 = pneg %p583
      %p590 = scmp.eq.s32.totalorder %s42, 3
      %p591 = por %p589, %p590
      %p592 = scmp.ne.s32.totalorder %s584, %s587
      %p593 = scmp.eq.s32.totalorder %s42, 0
      %p594 = por %p592, %p593
      %p595 = scmp.ne.s32.totalorder %s584, %s587
      %p596 = scmp.eq.s32.totalorder %s47, 3
      %p597 = por %p595, %p596
      %p598 = scmp.ne.s32.totalorder %s587, %s588
      %p599 = scmp.eq.s32.totalorder %s47, 0
      %p600 = por %p598, %p599
      %p601 = scmp.ne.s32.totalorder %s587, %s588
      %p602 = scmp.eq.s32.totalorder %s48, 3
      %p603 = por %p601, %p602
      %p605 = scmp.ne.s32.totalorder %s588, %s604
      %p606 = scmp.eq.s32.totalorder %s48, 0
      %p607 = por %p605, %p606
      %s608 = ssub.s32 %s50, %s57
      %p609 = scmp.eq.s32.totalorder %s608, 0
      %s611 = sadd.s32 %s610, 1
      %s612 = scalar_select %p609, %s610, %s611
      %p615 = pneg %p609
      %p616 = scmp.eq.s32.totalorder %s42, 3
      %p617 = por %p615, %p616
      %p618 = scmp.ne.s32.totalorder %s610, %s613
      %p619 = scmp.eq.s32.totalorder %s42, 0
      %p620 = por %p618, %p619
      %p621 = scmp.ne.s32.totalorder %s610, %s613
      %p622 = scmp.eq.s32.totalorder %s47, 3
      %p623 = por %p621, %p622
      %p624 = scmp.ne.s32.totalorder %s613, %s614
      %p625 = scmp.eq.s32.totalorder %s47, 0
      %p626 = por %p624, %p625
      %p627 = scmp.ne.s32.totalorder %s613, %s614
      %p628 = scmp.eq.s32.totalorder %s48, 3
      %p629 = por %p627, %p628
      %p631 = scmp.ne.s32.totalorder %s614, %s630
      %p632 = scmp.eq.s32.totalorder %s48, 0
      %p633 = por %p631, %p632
      %s635 = sadd.s32 %s634, 1
      %p638 = scmp.eq.s32.totalorder %s42, 3
      %p639 = scmp.ne.s32.totalorder %s634, %s636
      %p640 = scmp.eq.s32.totalorder %s42, 0
      %p641 = por %p639, %p640
      %p642 = scmp.ne.s32.totalorder %s634, %s636
      %p643 = scmp.eq.s32.totalorder %s47, 3
      %p644 = por %p642, %p643
      %p645 = scmp.ne.s32.totalorder %s636, %s637
      %p646 = scmp.eq.s32.totalorder %s47, 0
      %p647 = por %p645, %p646
      %p648 = scmp.ne.s32.totalorder %s636, %s637
      %p649 = scmp.eq.s32.totalorder %s48, 3
      %p650 = por %p648, %p649
      %p652 = scmp.ne.s32.totalorder %s637, %s651
      %p653 = scmp.eq.s32.totalorder %s48, 0
      %p654 = por %p652, %p653
      %s656 = sadd.s32 %s655, 1
      %p659 = scmp.eq.s32.totalorder %s42, 3
      %p660 = scmp.ne.s32.totalorder %s655, %s657
      %p661 = scmp.eq.s32.totalorder %s42, 0
      %p662 = por %p660, %p661
      %p663 = scmp.ne.s32.totalorder %s655, %s657
      %p664 = scmp.eq.s32.totalorder %s47, 3
      %p665 = por %p663, %p664
      %p666 = scmp.ne.s32.totalorder %s657, %s658
      %p667 = scmp.eq.s32.totalorder %s47, 0
      %p668 = por %p666, %p667
      %p669 = scmp.ne.s32.totalorder %s657, %s658
      %p670 = scmp.eq.s32.totalorder %s48, 3
      %p671 = por %p669, %p670
      %p673 = scmp.ne.s32.totalorder %s658, %s672
      %p674 = scmp.eq.s32.totalorder %s48, 0
      %p675 = por %p673, %p674
      %s676 = ssub.s32 %s49, %s61
      %p677 = scmp.eq.s32.totalorder %s676, 0
      %s679 = sadd.s32 %s678, 1
      %s680 = scalar_select %p677, %s678, %s679
      %p683 = pneg %p677
      %p684 = scmp.eq.s32.totalorder %s42, 3
      %p685 = por %p683, %p684
      %p686 = scmp.ne.s32.totalorder %s678, %s681
      %p687 = scmp.eq.s32.totalorder %s42, 0
      %p688 = por %p686, %p687
      %p689 = scmp.ne.s32.totalorder %s678, %s681
      %p690 = scmp.eq.s32.totalorder %s47, 3
      %p691 = por %p689, %p690
      %p692 = scmp.ne.s32.totalorder %s681, %s682
      %p693 = scmp.eq.s32.totalorder %s47, 0
      %p694 = por %p692, %p693
      %p695 = scmp.ne.s32.totalorder %s681, %s682
      %p696 = scmp.eq.s32.totalorder %s48, 3
      %p697 = por %p695, %p696
      %p699 = scmp.ne.s32.totalorder %s682, %s698
      %p700 = scmp.eq.s32.totalorder %s48, 0
      %p701 = por %p699, %p700
      %p702 = scmp.le.s32.totalorder 1, %s42
      %p703 = scmp.lt.s32.totalorder %s42, 5
      %p704 = pnand %p702, %p703
      %p705 = pneg %p704
      // Predicated region
      $region9: #{seq2seq_forward.4} parent=5 // pred_check
        _
      $region10: #{seq2seq_forward.4} parent=5 // pred_check_branch
        %707 = sbr.rel (%p704) target = $region12
      $region11: #{seq2seq_forward.4} parent=5 // pred_region
        %s708 = ssub.s32 %s42, 1
        // Predicated region
        $region13: #{seq2seq_forward.4} parent=11 // pred_check
          %p709 = pneg %p647
        $region14: #{seq2seq_forward.4} parent=11 // pred_check_branch
          %711 = sbr.rel (%p709) target = $region16
        $region15: #{seq2seq_forward.4} parent=11 // pred_region
          _
        $region16: #{seq2seq_forward.4} parent=11 // pred_fallthru
          _
        // Predicated region
        $region17: #{seq2seq_forward.4} parent=11 // pred_check
          %p712 = pneg %p668
        $region18: #{seq2seq_forward.4} parent=11 // pred_check_branch
          %714 = sbr.rel (%p712) target = $region20
        $region19: #{seq2seq_forward.4} parent=11 // pred_region
          _
        $region20: #{seq2seq_forward.4} parent=11 // pred_fallthru
          _
      $region12: #{seq2seq_forward.4} parent=5 // pred_fallthru
        _
      %p715 = scmp.lt.s32.totalorder %s42, 4
      // Predicated region
      $region21: #{seq2seq_forward.4} parent=5 // pred_check
        %p716 = pneg %p715
      $region22: #{seq2seq_forward.4} parent=5 // pred_check_branch
        %718 = sbr.rel (%p716) target = $region24
      $region23: #{seq2seq_forward.4} parent=5 // pred_region
        // Predicated region
        $region25: #{seq2seq_forward.4} parent=23 // pred_check
          %p719 = pneg %p74
        $region26: #{seq2seq_forward.4} parent=23 // pred_check_branch
          %721 = sbr.rel (%p719) target = $region28
        $region27: #{seq2seq_forward.4} parent=23 // pred_region
          %p722 = scmp.lt.s32.totalorder %s49, 1
          %s723 = scalar_select %p722, %s49, 1
          %s724 = smul.addr %s723, 4
          %s725 = scalar_lea.vmem %s0, %s724
        $region28: #{seq2seq_forward.4} parent=23 // pred_fallthru
          _
        // Predicated region
        $region29: #{seq2seq_forward.4} parent=23 // pred_check
          %p726 = pneg %p100
        $region30: #{seq2seq_forward.4} parent=23 // pred_check_branch
          %728 = sbr.rel (%p726) target = $region32
        $region31: #{seq2seq_forward.4} parent=23 // pred_region
          %p729 = scmp.lt.s32.totalorder %s49, 1
          %s730 = scalar_select %p729, %s49, 1
          %s731 = smul.addr %s730, 4
          %s732 = scalar_lea.vmem %s1, %s731
        $region32: #{seq2seq_forward.4} parent=23 // pred_fallthru
          _
        // Predicated region
        $region33: #{seq2seq_forward.4} parent=23 // pred_check
          %p733 = pneg %p126
        $region34: #{seq2seq_forward.4} parent=23 // pred_check_branch
          %735 = sbr.rel (%p733) target = $region36
        $region35: #{seq2seq_forward.4} parent=23 // pred_region
          %s736 = sand.u32 %s116, 1
          %s737 = scalar_lea.sflag [#allocation4], %s736
          %s738 = sand.u32 %s116, 1
          %s739 = smul.addr %s738, 192
          %s740 = scalar_lea.vmem [#allocation3], %s739
          %742 = vsyncadd %s737, 0
          %s743 = smul.addr %s50, 48
          %s744 = smul.addr %s743, 4
          %s745 = scalar_lea.hbm %s2, %s744
          %s746 = sshll.u32 %s745, 4
          %s747 = int_to_ptr.hbm [resolvable:$true] %s746
          %s748 = sshll.u32 %s740, 4
          %s749 = int_to_ptr.vmem [resolvable:$true] %s748
          %754 = dma.hbm_to_vmem [thread:$0]  %s747, 3072, %s749, %s737, 192, 192, 12
        $region36: #{seq2seq_forward.4} parent=23 // pred_fallthru
          _
        // Predicated region
        $region37: #{seq2seq_forward.4} parent=23 // pred_check
          %p755 = pneg %p152
        $region38: #{seq2seq_forward.4} parent=23 // pred_check_branch
          %757 = sbr.rel (%p755) target = $region40
        $region39: #{seq2seq_forward.4} parent=23 // pred_region
          %p758 = scmp.lt.s32.totalorder %s50, 1
          %s759 = scalar_select %p758, %s50, 1
          %s760 = smul.addr %s759, 3
          %s761 = scalar_lea.vmem %s3, %s760
        $region40: #{seq2seq_forward.4} parent=23 // pred_fallthru
          _
        // Predicated region
        $region41: #{seq2seq_forward.4} parent=23 // pred_check
          %p762 = pneg %p178
        $region42: #{seq2seq_forward.4} parent=23 // pred_check_branch
          %764 = sbr.rel (%p762) target = $region44
        $region43: #{seq2seq_forward.4} parent=23 // pred_region
          %s765 = sand.u32 %s42, 1
          %s766 = scalar_lea.sflag [#allocation6], %s765
          %s767 = sand.u32 %s168, 1
          %s768 = smul.addr %s767, 64
          %s769 = scalar_lea.vmem [#allocation5], %s768
          %771 = vsyncadd %s766, 0
          %s772 = smul.addr %s50, 16
          %s773 = smul.addr %s772, 4
          %s774 = scalar_lea.hbm %s4, %s773
          %s775 = sshll.u32 %s774, 4
          %s776 = int_to_ptr.hbm [resolvable:$true] %s775
          %s777 = sshll.u32 %s769, 4
          %s778 = int_to_ptr.vmem [resolvable:$true] %s777
          %783 = dma.hbm_to_vmem [thread:$0]  %s776, 1024, %s778, %s766, 64, 64, 4
        $region44: #{seq2seq_forward.4} parent=23 // pred_fallthru
          _
        // Predicated region
        $region45: #{seq2seq_forward.4} parent=23 // pred_check
          %p784 = pneg %p204
        $region46: #{seq2seq_forward.4} parent=23 // pred_check_branch
          %786 = sbr.rel (%p784) target = $region48
        $region47: #{seq2seq_forward.4} parent=23 // pred_region
          %p787 = scmp.lt.s32.totalorder %s50, 1
          %s788 = scalar_select %p787, %s50, 1
          %s789 = scalar_lea.vmem %s5, %s788
        $region48: #{seq2seq_forward.4} parent=23 // pred_fallthru
          _
        // Predicated region
        $region49: #{seq2seq_forward.4} parent=23 // pred_check
          %p790 = pneg %p230
        $region50: #{seq2seq_forward.4} parent=23 // pred_check_branch
          %792 = sbr.rel (%p790) target = $region52
        $region51: #{seq2seq_forward.4} parent=23 // pred_region
          %p793 = scmp.lt.s32.totalorder %s50, 1
          %s794 = scalar_select %p793, %s50, 1
          %s795 = scalar_lea.vmem %s6, %s794
        $region52: #{seq2seq_forward.4} parent=23 // pred_fallthru
          _
        // Predicated region
        $region53: #{seq2seq_forward.4} parent=23 // pred_check
          %p796 = pneg %p256
        $region54: #{seq2seq_forward.4} parent=23 // pred_check_branch
          %798 = sbr.rel (%p796) target = $region56
        $region55: #{seq2seq_forward.4} parent=23 // pred_region
          %p799 = scmp.lt.s32.totalorder %s50, 1
          %s800 = scalar_select %p799, %s50, 1
          %s801 = scalar_lea.vmem %s7, %s800
        $region56: #{seq2seq_forward.4} parent=23 // pred_fallthru
          _
        // Predicated region
        $region57: #{seq2seq_forward.4} parent=23 // pred_check
          %p802 = pneg %p282
        $region58: #{seq2seq_forward.4} parent=23 // pred_check_branch
          %804 = sbr.rel (%p802) target = $region60
        $region59: #{seq2seq_forward.4} parent=23 // pred_region
          %s805 = sand.u32 %s42, 1
          %s806 = scalar_lea.sflag [#allocation6], %s805
          %s807 = sand.u32 %s272, 1
          %s808 = smul.addr %s807, 64
          %s809 = scalar_lea.vmem [#allocation7], %s808
          %811 = vsyncadd %s806, 0
          %s812 = smul.addr %s50, 16
          %s813 = smul.addr %s812, 4
          %s814 = scalar_lea.hbm %s8, %s813
          %s815 = sshll.u32 %s814, 4
          %s816 = int_to_ptr.hbm [resolvable:$true] %s815
          %s817 = sshll.u32 %s809, 4
          %s818 = int_to_ptr.vmem [resolvable:$true] %s817
          %823 = dma.hbm_to_vmem [thread:$0]  %s816, 1024, %s818, %s806, 64, 64, 4
        $region60: #{seq2seq_forward.4} parent=23 // pred_fallthru
          _
        // Predicated region
        $region61: #{seq2seq_forward.4} parent=23 // pred_check
          %p824 = pneg %p308
        $region62: #{seq2seq_forward.4} parent=23 // pred_check_branch
          %826 = sbr.rel (%p824) target = $region64
        $region63: #{seq2seq_forward.4} parent=23 // pred_region
          %p827 = scmp.lt.s32.totalorder %s50, 1
          %s828 = scalar_select %p827, %s50, 1
          %s829 = scalar_lea.vmem %s9, %s828
        $region64: #{seq2seq_forward.4} parent=23 // pred_fallthru
          _
        // Predicated region
        $region65: #{seq2seq_forward.4} parent=23 // pred_check
          %p830 = pneg %p334
        $region66: #{seq2seq_forward.4} parent=23 // pred_check_branch
          %832 = sbr.rel (%p830) target = $region68
        $region67: #{seq2seq_forward.4} parent=23 // pred_region
          %p833 = scmp.lt.s32.totalorder %s50, 1
          %s834 = scalar_select %p833, %s50, 1
          %s835 = smul.addr %s834, 32
          %s836 = smul.addr %s835, 4
          %s837 = scalar_lea.vmem %s10, %s836
        $region68: #{seq2seq_forward.4} parent=23 // pred_fallthru
          _
        // Predicated region
        $region69: #{seq2seq_forward.4} parent=23 // pred_check
          %p838 = pneg %p360
        $region70: #{seq2seq_forward.4} parent=23 // pred_check_branch
          %840 = sbr.rel (%p838) target = $region72
        $region71: #{seq2seq_forward.4} parent=23 // pred_region
          %p841 = scmp.lt.s32.totalorder %s50, 1
          %s842 = scalar_select %p841, %s50, 1
          %s843 = smul.addr %s842, 2
          %s844 = scalar_lea.vmem %s11, %s843
        $region72: #{seq2seq_forward.4} parent=23 // pred_fallthru
          _
        // Predicated region
        $region73: #{seq2seq_forward.4} parent=23 // pred_check
          %p845 = pneg %p386
        $region74: #{seq2seq_forward.4} parent=23 // pred_check_branch
          %847 = sbr.rel (%p845) target = $region76
        $region75: #{seq2seq_forward.4} parent=23 // pred_region
          %s848 = sand.u32 %s42, 1
          %s849 = scalar_lea.sflag [#allocation9], %s848
          %s850 = sand.u32 %s376, 1
          %s851 = smul.addr %s850, 64
          %s852 = scalar_lea.vmem [#allocation8], %s851
          %854 = vsyncadd %s849, 0
          %s855 = smul.addr %s50, 16
          %s856 = smul.addr %s855, 4
          %s857 = scalar_lea.hbm %s12, %s856
          %s858 = sshll.u32 %s857, 4
          %s859 = int_to_ptr.hbm [resolvable:$true] %s858
          %s860 = sshll.u32 %s852, 4
          %s861 = int_to_ptr.vmem [resolvable:$true] %s860
          %866 = dma.hbm_to_vmem [thread:$0]  %s859, 1024, %s861, %s849, 64, 64, 4
        $region76: #{seq2seq_forward.4} parent=23 // pred_fallthru
          _
        // Predicated region
        $region77: #{seq2seq_forward.4} parent=23 // pred_check
          %p867 = pneg %p412
        $region78: #{seq2seq_forward.4} parent=23 // pred_check_branch
          %869 = sbr.rel (%p867) target = $region80
        $region79: #{seq2seq_forward.4} parent=23 // pred_region
          %p870 = scmp.lt.s32.totalorder %s50, 1
          %s871 = scalar_select %p870, %s50, 1
          %s872 = scalar_lea.vmem %s13, %s871
        $region80: #{seq2seq_forward.4} parent=23 // pred_fallthru
          _
        // Predicated region
        $region81: #{seq2seq_forward.4} parent=23 // pred_check
          %p873 = pneg %p438
        $region82: #{seq2seq_forward.4} parent=23 // pred_check_branch
          %875 = sbr.rel (%p873) target = $region84
        $region83: #{seq2seq_forward.4} parent=23 // pred_region
          %p876 = scmp.lt.s32.totalorder %s50, 1
          %s877 = scalar_select %p876, %s50, 1
          %s878 = scalar_lea.vmem %s14, %s877
        $region84: #{seq2seq_forward.4} parent=23 // pred_fallthru
          _
        // Predicated region
        $region85: #{seq2seq_forward.4} parent=23 // pred_check
          %p879 = pneg %p464
        $region86: #{seq2seq_forward.4} parent=23 // pred_check_branch
          %881 = sbr.rel (%p879) target = $region88
        $region87: #{seq2seq_forward.4} parent=23 // pred_region
          %p882 = scmp.lt.s32.totalorder %s50, 1
          %s883 = scalar_select %p882, %s50, 1
          %s884 = scalar_lea.vmem %s15, %s883
        $region88: #{seq2seq_forward.4} parent=23 // pred_fallthru
          _
        // Predicated region
        $region89: #{seq2seq_forward.4} parent=23 // pred_check
          %p885 = pneg %p490
        $region90: #{seq2seq_forward.4} parent=23 // pred_check_branch
          %887 = sbr.rel (%p885) target = $region92
        $region91: #{seq2seq_forward.4} parent=23 // pred_region
          %s888 = sand.u32 %s42, 1
          %s889 = scalar_lea.sflag [#allocation9], %s888
          %s890 = sand.u32 %s480, 1
          %s891 = smul.addr %s890, 256
          %s892 = scalar_lea.vmem [#allocation10], %s891
          %894 = vsyncadd %s889, 0
          %s895 = smul.addr %s50, 64
          %s896 = smul.addr %s895, 4
          %s897 = scalar_lea.hbm %s16, %s896
          %s898 = sshll.u32 %s897, 4
          %s899 = int_to_ptr.hbm [resolvable:$true] %s898
          %s900 = sshll.u32 %s892, 4
          %s901 = int_to_ptr.vmem [resolvable:$true] %s900
          %906 = dma.hbm_to_vmem [thread:$0]  %s899, 4096, %s901, %s889, 256, 256, 16
        $region92: #{seq2seq_forward.4} parent=23 // pred_fallthru
          _
        // Predicated region
        $region93: #{seq2seq_forward.4} parent=23 // pred_check
          %p907 = pneg %p516
        $region94: #{seq2seq_forward.4} parent=23 // pred_check_branch
          %909 = sbr.rel (%p907) target = $region96
        $region95: #{seq2seq_forward.4} parent=23 // pred_region
          %p910 = scmp.lt.s32.totalorder %s50, 1
          %s911 = scalar_select %p910, %s50, 1
          %s912 = smul.addr %s911, 4
          %s913 = scalar_lea.vmem %s17, %s912
        $region96: #{seq2seq_forward.4} parent=23 // pred_fallthru
          _
        // Predicated region
        $region97: #{seq2seq_forward.4} parent=23 // pred_check
          %p914 = pneg %p542
        $region98: #{seq2seq_forward.4} parent=23 // pred_check_branch
          %916 = sbr.rel (%p914) target = $region100
        $region99: #{seq2seq_forward.4} parent=23 // pred_region
          %s917 = sand.u32 %s532, 1
          %s918 = scalar_lea.sflag [#allocation12], %s917
          %s919 = sand.u32 %s532, 1
          %s920 = smul.addr %s919, 256
          %s921 = scalar_lea.vmem [#allocation11], %s920
          %923 = vsyncadd %s918, 0
          %s924 = smul.addr %s50, 64
          %s925 = smul.addr %s924, 4
          %s926 = scalar_lea.hbm %s18, %s925
          %s927 = sshll.u32 %s926, 4
          %s928 = int_to_ptr.hbm [resolvable:$true] %s927
          %s929 = sshll.u32 %s921, 4
          %s930 = int_to_ptr.vmem [resolvable:$true] %s929
          %935 = dma.hbm_to_vmem [thread:$0]  %s928, 4096, %s930, %s918, 64, 64, 4
        $region100: #{seq2seq_forward.4} parent=23 // pred_fallthru
          _
        // Predicated region
        $region101: #{seq2seq_forward.4} parent=23 // pred_check
          %p936 = pneg %p568
        $region102: #{seq2seq_forward.4} parent=23 // pred_check_branch
          %938 = sbr.rel (%p936) target = $region104
        $region103: #{seq2seq_forward.4} parent=23 // pred_region
          %p939 = scmp.lt.s32.totalorder %s50, 1
          %s940 = scalar_select %p939, %s50, 1
          %s941 = scalar_lea.vmem %s19, %s940
        $region104: #{seq2seq_forward.4} parent=23 // pred_fallthru
          _
        // Predicated region
        $region105: #{seq2seq_forward.4} parent=23 // pred_check
          %p942 = pneg %p594
        $region106: #{seq2seq_forward.4} parent=23 // pred_check_branch
          %944 = sbr.rel (%p942) target = $region108
        $region107: #{seq2seq_forward.4} parent=23 // pred_region
          %p945 = scmp.lt.s32.totalorder %s50, 1
          %s946 = scalar_select %p945, %s50, 1
          %s947 = scalar_lea.vmem %s20, %s946
        $region108: #{seq2seq_forward.4} parent=23 // pred_fallthru
          _
        // Predicated region
        $region109: #{seq2seq_forward.4} parent=23 // pred_check
          %p948 = pneg %p620
        $region110: #{seq2seq_forward.4} parent=23 // pred_check_branch
          %950 = sbr.rel (%p948) target = $region112
        $region111: #{seq2seq_forward.4} parent=23 // pred_region
          %p951 = scmp.lt.s32.totalorder %s50, 1
          %s952 = scalar_select %p951, %s50, 1
          %s953 = scalar_lea.vmem %s21, %s952
        $region112: #{seq2seq_forward.4} parent=23 // pred_fallthru
          _
      $region24: #{seq2seq_forward.4} parent=5 // pred_fallthru
        _
      %p954 = scmp.le.s32.totalorder 1, %s42
      %p955 = scmp.lt.s32.totalorder %s42, 5
      %p956 = pnand %p954, %p955
      %p957 = pneg %p956
      // Predicated region
      $region113: #{seq2seq_forward.4} parent=5 // pred_check
        _
      $region114: #{seq2seq_forward.4} parent=5 // pred_check_branch
        %959 = sbr.rel (%p956) target = $region116
      $region115: #{seq2seq_forward.4} parent=5 // pred_region
        %s960 = ssub.s32 %s42, 1
        %s961 = sand.u32 %s119, 1
        %s962 = scalar_lea.sflag [#allocation4], %s961
        %s963 = sand.u32 %s119, 1
        %s964 = smul.addr %s963, 192
        %s965 = scalar_lea.vmem [#allocation3], %s964
        // Predicated region
        $region117: #{seq2seq_forward.4} parent=115 // pred_check
          %p966 = pneg %p132
        $region118: #{seq2seq_forward.4} parent=115 // pred_check_branch
          %968 = sbr.rel (%p966) target = $region120
        $region119: #{seq2seq_forward.4} parent=115 // pred_region
          %970 = dma.done %s962, 3072
        $region120: #{seq2seq_forward.4} parent=115 // pred_fallthru
          _
        %s971 = sand.u32 %s47, 1
        %s972 = scalar_lea.sflag [#allocation6], %s971
        %s973 = sand.u32 %s171, 1
        %s974 = smul.addr %s973, 64
        %s975 = scalar_lea.vmem [#allocation5], %s974
        // Predicated region
        $region121: #{seq2seq_forward.4} parent=115 // pred_check
          %p976 = pneg %p184
        $region122: #{seq2seq_forward.4} parent=115 // pred_check_branch
          %978 = sbr.rel (%p976) target = $region124
        $region123: #{seq2seq_forward.4} parent=115 // pred_region
          %980 = dma.done %s972, 1024
        $region124: #{seq2seq_forward.4} parent=115 // pred_fallthru
          _
        %s981 = sand.u32 %s47, 1
        %s982 = scalar_lea.sflag [#allocation6], %s981
        %s983 = sand.u32 %s275, 1
        %s984 = smul.addr %s983, 64
        %s985 = scalar_lea.vmem [#allocation7], %s984
        // Predicated region
        $region125: #{seq2seq_forward.4} parent=115 // pred_check
          %p986 = pneg %p288
        $region126: #{seq2seq_forward.4} parent=115 // pred_check_branch
          %988 = sbr.rel (%p986) target = $region128
        $region127: #{seq2seq_forward.4} parent=115 // pred_region
          %990 = dma.done %s982, 1024
        $region128: #{seq2seq_forward.4} parent=115 // pred_fallthru
          _
        %s991 = sand.u32 %s47, 1
        %s992 = scalar_lea.sflag [#allocation9], %s991
        %s993 = sand.u32 %s379, 1
        %s994 = smul.addr %s993, 64
        %s995 = scalar_lea.vmem [#allocation8], %s994
        // Predicated region
        $region129: #{seq2seq_forward.4} parent=115 // pred_check
          %p996 = pneg %p392
        $region130: #{seq2seq_forward.4} parent=115 // pred_check_branch
          %998 = sbr.rel (%p996) target = $region132
        $region131: #{seq2seq_forward.4} parent=115 // pred_region
          %1000 = dma.done %s992, 1024
        $region132: #{seq2seq_forward.4} parent=115 // pred_fallthru
          _
        %s1001 = sand.u32 %s47, 1
        %s1002 = scalar_lea.sflag [#allocation9], %s1001
        %s1003 = sand.u32 %s483, 1
        %s1004 = smul.addr %s1003, 256
        %s1005 = scalar_lea.vmem [#allocation10], %s1004
        // Predicated region
        $region133: #{seq2seq_forward.4} parent=115 // pred_check
          %p1006 = pneg %p496
        $region134: #{seq2seq_forward.4} parent=115 // pred_check_branch
          %1008 = sbr.rel (%p1006) target = $region136
        $region135: #{seq2seq_forward.4} parent=115 // pred_region
          %1010 = dma.done %s1002, 4096
        $region136: #{seq2seq_forward.4} parent=115 // pred_fallthru
          _
        %s1011 = sand.u32 %s535, 1
        %s1012 = scalar_lea.sflag [#allocation12], %s1011
        %s1013 = sand.u32 %s535, 1
        %s1014 = smul.addr %s1013, 256
        %s1015 = scalar_lea.vmem [#allocation11], %s1014
        // Predicated region
        $region137: #{seq2seq_forward.4} parent=115 // pred_check
          %p1016 = pneg %p548
        $region138: #{seq2seq_forward.4} parent=115 // pred_check_branch
          %1018 = sbr.rel (%p1016) target = $region140
        $region139: #{seq2seq_forward.4} parent=115 // pred_region
          %1020 = dma.done %s1012, 4096
        $region140: #{seq2seq_forward.4} parent=115 // pred_fallthru
          _
        %p1021 = scmp.lt.s32.totalorder %s51, 1
        %s1022 = scalar_select %p1021, %s51, 1
        %s1023 = smul.addr %s1022, 4
        %s1024 = scalar_lea.vmem %s0, %s1023
        %p1025 = pneg %p80
        %p1026 = pneg %p77
        %p1027 = scmp.lt.s32.totalorder %s51, 1
        %s1028 = scalar_select %p1027, %s51, 1
        %s1029 = smul.addr %s1028, 4
        %s1030 = scalar_lea.vmem %s1, %s1029
        %p1031 = pneg %p106
        %p1032 = pneg %p103
        %s1033 = sand.u32 %s119, 1
        %s1034 = scalar_lea.sflag [#allocation4], %s1033
        %s1035 = sand.u32 %s119, 1
        %s1036 = smul.addr %s1035, 192
        %s1037 = scalar_lea.vmem [#allocation3], %s1036
        %p1038 = pneg %p132
        %p1039 = pneg %p129
        %p1040 = scmp.lt.s32.totalorder %s52, 1
        %s1041 = scalar_select %p1040, %s52, 1
        %s1042 = smul.addr %s1041, 3
        %s1043 = scalar_lea.vmem %s3, %s1042
        %p1044 = pneg %p158
        %p1045 = pneg %p155
        %s1046 = sand.u32 %s47, 1
        %s1047 = scalar_lea.sflag [#allocation6], %s1046
        %s1048 = sand.u32 %s171, 1
        %s1049 = smul.addr %s1048, 64
        %s1050 = scalar_lea.vmem [#allocation5], %s1049
        %p1051 = pneg %p184
        %p1052 = pneg %p181
        %p1053 = scmp.lt.s32.totalorder %s52, 1
        %s1054 = scalar_select %p1053, %s52, 1
        %s1055 = scalar_lea.vmem %s5, %s1054
        %p1056 = pneg %p210
        %p1057 = pneg %p207
        %p1058 = scmp.lt.s32.totalorder %s52, 1
        %s1059 = scalar_select %p1058, %s52, 1
        %s1060 = scalar_lea.vmem %s6, %s1059
        %p1061 = pneg %p236
        %p1062 = pneg %p233
        %p1063 = scmp.lt.s32.totalorder %s52, 1
        %s1064 = scalar_select %p1063, %s52, 1
        %s1065 = scalar_lea.vmem %s7, %s1064
        %p1066 = pneg %p262
        %p1067 = pneg %p259
        %s1068 = sand.u32 %s47, 1
        %s1069 = scalar_lea.sflag [#allocation6], %s1068
        %s1070 = sand.u32 %s275, 1
        %s1071 = smul.addr %s1070, 64
        %s1072 = scalar_lea.vmem [#allocation7], %s1071
        %p1073 = pneg %p288
        %p1074 = pneg %p285
        %p1075 = scmp.lt.s32.totalorder %s52, 1
        %s1076 = scalar_select %p1075, %s52, 1
        %s1077 = scalar_lea.vmem %s9, %s1076
        %p1078 = pneg %p314
        %p1079 = pneg %p311
        %p1080 = scmp.lt.s32.totalorder %s52, 1
        %s1081 = scalar_select %p1080, %s52, 1
        %s1082 = smul.addr %s1081, 32
        %s1083 = smul.addr %s1082, 4
        %s1084 = scalar_lea.vmem %s10, %s1083
        %p1085 = pneg %p340
        %p1086 = pneg %p337
        %p1087 = scmp.lt.s32.totalorder %s52, 1
        %s1088 = scalar_select %p1087, %s52, 1
        %s1089 = smul.addr %s1088, 2
        %s1090 = scalar_lea.vmem %s11, %s1089
        %p1091 = pneg %p366
        %p1092 = pneg %p363
        %s1093 = sand.u32 %s47, 1
        %s1094 = scalar_lea.sflag [#allocation9], %s1093
        %s1095 = sand.u32 %s379, 1
        %s1096 = smul.addr %s1095, 64
        %s1097 = scalar_lea.vmem [#allocation8], %s1096
        %p1098 = pneg %p392
        %p1099 = pneg %p389
        %p1100 = scmp.lt.s32.totalorder %s52, 1
        %s1101 = scalar_select %p1100, %s52, 1
        %s1102 = scalar_lea.vmem %s13, %s1101
        %p1103 = pneg %p418
        %p1104 = pneg %p415
        %p1105 = scmp.lt.s32.totalorder %s52, 1
        %s1106 = scalar_select %p1105, %s52, 1
        %s1107 = scalar_lea.vmem %s14, %s1106
        %p1108 = pneg %p444
        %p1109 = pneg %p441
        %p1110 = scmp.lt.s32.totalorder %s52, 1
        %s1111 = scalar_select %p1110, %s52, 1
        %s1112 = scalar_lea.vmem %s15, %s1111
        %p1113 = pneg %p470
        %p1114 = pneg %p467
        %s1115 = sand.u32 %s47, 1
        %s1116 = scalar_lea.sflag [#allocation9], %s1115
        %s1117 = sand.u32 %s483, 1
        %s1118 = smul.addr %s1117, 256
        %s1119 = scalar_lea.vmem [#allocation10], %s1118
        %p1120 = pneg %p496
        %p1121 = pneg %p493
        %p1122 = scmp.lt.s32.totalorder %s52, 1
        %s1123 = scalar_select %p1122, %s52, 1
        %s1124 = smul.addr %s1123, 4
        %s1125 = scalar_lea.vmem %s17, %s1124
        %p1126 = pneg %p522
        %p1127 = pneg %p519
        %s1128 = sand.u32 %s535, 1
        %s1129 = scalar_lea.sflag [#allocation12], %s1128
        %s1130 = sand.u32 %s535, 1
        %s1131 = smul.addr %s1130, 256
        %s1132 = scalar_lea.vmem [#allocation11], %s1131
        %p1133 = pneg %p548
        %p1134 = pneg %p545
        %p1135 = scmp.lt.s32.totalorder %s52, 1
        %s1136 = scalar_select %p1135, %s52, 1
        %s1137 = scalar_lea.vmem %s19, %s1136
        %p1138 = pneg %p574
        %p1139 = pneg %p571
        %p1140 = scmp.lt.s32.totalorder %s52, 1
        %s1141 = scalar_select %p1140, %s52, 1
        %s1142 = scalar_lea.vmem %s20, %s1141
        %p1143 = pneg %p600
        %p1144 = pneg %p597
        %p1145 = scmp.lt.s32.totalorder %s52, 1
        %s1146 = scalar_select %p1145, %s52, 1
        %s1147 = scalar_lea.vmem %s21, %s1146
        %p1148 = pneg %p626
        %p1149 = pneg %p623
        %p1150 = pneg %p647
        %p1151 = pneg %p644
        %p1152 = pneg %p668
        %p1153 = pneg %p665
        %p1154 = pneg %p694
        %p1155 = pneg %p691
        %p1156 = scmp.lt.s32.totalorder %s51, 1
        %s1157 = scalar_select %p1156, %s51, 1
        %s1158 = smul.addr %s1157, 4
        %s1159 = scalar_lea.vmem %s24, %s1158
        %p1160 = scmp.lt.s32.totalorder %s51, 1
        %s1161 = scalar_select %p1160, %s51, 1
        %s1162 = smul.addr %s1161, 4
        %s1163 = scalar_lea.vmem %s0, %s1162
        %p1164 = scmp.lt.s32.totalorder %s51, 1
        %s1165 = scalar_select %p1164, %s51, 1
        %s1166 = smul.addr %s1165, 4
        %s1167 = scalar_lea.vmem %s1, %s1166
        %p1168 = scmp.lt.s32.totalorder %s52, 1
        %s1169 = scalar_select %p1168, %s52, 1
        %s1170 = smul.addr %s1169, 3
        %s1171 = scalar_lea.vmem %s3, %s1170
        %p1172 = scmp.lt.s32.totalorder %s52, 1
        %s1173 = scalar_select %p1172, %s52, 1
        %s1174 = scalar_lea.vmem %s5, %s1173
        %p1175 = scmp.lt.s32.totalorder %s52, 1
        %s1176 = scalar_select %p1175, %s52, 1
        %s1177 = scalar_lea.vmem %s6, %s1176
        %p1178 = scmp.lt.s32.totalorder %s52, 1
        %s1179 = scalar_select %p1178, %s52, 1
        %s1180 = scalar_lea.vmem %s7, %s1179
        %p1181 = scmp.lt.s32.totalorder %s52, 1
        %s1182 = scalar_select %p1181, %s52, 1
        %s1183 = scalar_lea.vmem %s9, %s1182
        %p1184 = scmp.lt.s32.totalorder %s52, 1
        %s1185 = scalar_select %p1184, %s52, 1
        %s1186 = smul.addr %s1185, 32
        %s1187 = smul.addr %s1186, 4
        %s1188 = scalar_lea.vmem %s10, %s1187
        %p1189 = scmp.lt.s32.totalorder %s52, 1
        %s1190 = scalar_select %p1189, %s52, 1
        %s1191 = smul.addr %s1190, 2
        %s1192 = scalar_lea.vmem %s11, %s1191
        %p1193 = scmp.lt.s32.totalorder %s52, 1
        %s1194 = scalar_select %p1193, %s52, 1
        %s1195 = scalar_lea.vmem %s13, %s1194
        %p1196 = scmp.lt.s32.totalorder %s52, 1
        %s1197 = scalar_select %p1196, %s52, 1
        %s1198 = scalar_lea.vmem %s14, %s1197
        %p1199 = scmp.lt.s32.totalorder %s52, 1
        %s1200 = scalar_select %p1199, %s52, 1
        %s1201 = scalar_lea.vmem %s15, %s1200
        %p1202 = scmp.lt.s32.totalorder %s52, 1
        %s1203 = scalar_select %p1202, %s52, 1
        %s1204 = smul.addr %s1203, 4
        %s1205 = scalar_lea.vmem %s17, %s1204
        %p1206 = scmp.lt.s32.totalorder %s52, 1
        %s1207 = scalar_select %p1206, %s52, 1
        %s1208 = scalar_lea.vmem %s19, %s1207
        %p1209 = scmp.lt.s32.totalorder %s52, 1
        %s1210 = scalar_select %p1209, %s52, 1
        %s1211 = scalar_lea.vmem %s20, %s1210
        %p1212 = scmp.lt.s32.totalorder %s52, 1
        %s1213 = scalar_select %p1212, %s52, 1
        %s1214 = scalar_lea.vmem %s21, %s1213
        %p1215 = scmp.lt.s32.totalorder %s51, 1
        %s1216 = scalar_select %p1215, %s51, 1
        %s1217 = smul.addr %s1216, 4
        %s1218 = scalar_lea.vmem %s24, %s1217
        %p1220 = scmp.eq.s32.totalorder %s52, 0
        // Predicated region
        $region141: #{seq2seq_forward.4} parent=115 // pred_check
          %p1221 = pneg %p1220
        $region142: #{seq2seq_forward.4} parent=115 // pred_check_branch
          %1223 = sbr.rel (%p1221) target = $region144
        $region143: #{seq2seq_forward.4} parent=115 // pred_region
          %v1224 = vld [vmem:[%s1163] sm:$0xf]
          %v1225 = vunpack.c.l.bf16 %v1224
          %1226 = vst [vmem:[#allocation2] sm:$0xff] %v1225
        $region144: #{seq2seq_forward.4} parent=115 // pred_fallthru
          _
        %v1227 = vld [vmem:[#allocation2] sm:$0xff]
        %v1228 = vld [vmem:[%s1167] sm:$0xf]
        %v1229 = vlaneseq
        %v1230 = vshrl.u32 %v1229, 7
        %v1231 = vlaneseq
        %v1232 = vand.u32 %v1231, 127
        %vm1233 = vcmp.lt.s32.totalorder %v1232, 0
        %v1234 = vsub.s32 0, %v1232
        %v1235 = vsel %vm1233, %v1234, %v1232
        %v1236 = vshrl.u32 %v1235, 3
        %v1237 = vand.u32 %v1235, 7
        %v1238 = vsub.s32 0, %v1237
        %v1239 = vsel %vm1233, %v1238, %v1237
        %vm1240 = vcmp.ne.s32.totalorder %v1239, 0
        %vm1241 = vcmp.lt.s32.totalorder %v1239, 0
        %vm1242 = vmand %vm1241, %vm1240
        %v1243 = vadd.s32 %v1239, 8
        %v1244 = vsel %vm1242, %v1243, %v1239
        %vm1245 = vcmp.lt.s32.totalorder %v1230, 0
        %v1246 = vsub.s32 0, %v1230
        %v1247 = vsel %vm1245, %v1246, %v1230
        %v1248 = vshrl.u32 %v1247, 3
        %v1249 = vand.u32 %v1247, 7
        %v1250 = vsub.s32 0, %v1249
        %v1251 = vsel %vm1245, %v1250, %v1249
        %vm1252 = vcmp.ne.s32.totalorder %v1251, 0
        %vm1253 = vcmp.lt.s32.totalorder %v1251, 0
        %vm1254 = vmand %vm1253, %vm1252
        %v1255 = vadd.s32 %v1251, 8
        %v1256 = vsel %vm1254, %v1255, %v1251
        %vm1257 = vcmp.le.s32.totalorder %v1244, %v1256
        %v1258 = vld [vmem:[%s965] sm:$0xff]
        %v1259 = vld [vmem:[%s965 + $0x8] sm:$0xf]
        %v1260 = vld [vmem:[%s965 + $0xc] sm:$0xff]
        %v1261 = vld [vmem:[%s965 + $0x14] sm:$0xf]
        %v1262 = vld [vmem:[%s965 + $0x18] sm:$0xff]
        %v1263 = vld [vmem:[%s965 + $0x20] sm:$0xf]
        %v1264 = vld [vmem:[%s965 + $0x24] sm:$0xff]
        %v1265 = vld [vmem:[%s965 + $0x2c] sm:$0xf]
        %v1266 = vld [vmem:[%s965 + $0x30] sm:$0xff]
        %v1267 = vld [vmem:[%s965 + $0x38] sm:$0xf]
        %v1268 = vld [vmem:[%s965 + $0x3c] sm:$0xff]
        %v1269 = vld [vmem:[%s965 + $0x44] sm:$0xf]
        %v1270 = vld [vmem:[%s965 + $0x48] sm:$0xff]
        %v1271 = vld [vmem:[%s965 + $0x50] sm:$0xf]
        %v1272 = vld [vmem:[%s965 + $0x54] sm:$0xff]
        %v1273 = vld [vmem:[%s965 + $0x5c] sm:$0xf]
        %v1274 = vld [vmem:[%s965 + $0x60] sm:$0xff]
        %v1275 = vld [vmem:[%s965 + $0x68] sm:$0xf]
        %v1276 = vld [vmem:[%s965 + $0x6c] sm:$0xff]
        %v1277 = vld [vmem:[%s965 + $0x74] sm:$0xf]
        %v1278 = vld [vmem:[%s965 + $0x78] sm:$0xff]
        %v1279 = vld [vmem:[%s965 + $0x80] sm:$0xf]
        %v1280 = vld [vmem:[%s965 + $0x84] sm:$0xff]
        %v1281 = vld [vmem:[%s965 + $0x8c] sm:$0xf]
        %v1282 = vld [vmem:[%s965 + $0x90] sm:$0xff]
        %v1283 = vld [vmem:[%s965 + $0x98] sm:$0xf]
        %v1284 = vld [vmem:[%s965 + $0x9c] sm:$0xff]
        %v1285 = vld [vmem:[%s965 + $0xa4] sm:$0xf]
        %v1286 = vld [vmem:[%s965 + $0xa8] sm:$0xff]
        %v1287 = vld [vmem:[%s965 + $0xb0] sm:$0xf]
        %v1288 = vld [vmem:[%s965 + $0xb4] sm:$0xff]
        %v1289 = vld [vmem:[%s965 + $0xbc] sm:$0xf]
        %v1290 = vld [vmem:[%s1171] sm:$0x7]
        %v1291 = vld [vmem:[%s975] sm:$0xf]
        %v1292 = vld [vmem:[%s975 + $0x4] sm:$0xf]
        %v1293 = vld [vmem:[%s975 + $0x8] sm:$0xf]
        %v1294 = vld [vmem:[%s975 + $0xc] sm:$0xf]
        %v1295 = vld [vmem:[%s975 + $0x10] sm:$0xf]
        %v1296 = vld [vmem:[%s975 + $0x14] sm:$0xf]
        %v1297 = vld [vmem:[%s975 + $0x18] sm:$0xf]
        %v1298 = vld [vmem:[%s975 + $0x1c] sm:$0xf]
        %v1299 = vld [vmem:[%s975 + $0x20] sm:$0xf]
        %v1300 = vld [vmem:[%s975 + $0x24] sm:$0xf]
        %v1301 = vld [vmem:[%s975 + $0x28] sm:$0xf]
        %v1302 = vld [vmem:[%s975 + $0x2c] sm:$0xf]
        %v1303 = vld [vmem:[%s975 + $0x30] sm:$0xf]
        %v1304 = vld [vmem:[%s975 + $0x34] sm:$0xf]
        %v1305 = vld [vmem:[%s975 + $0x38] sm:$0xf]
        %v1306 = vld [vmem:[%s975 + $0x3c] sm:$0xf]
        %v1307 = vld [vmem:[%s1174] sm:$0x1]
        %v1308 = vld [vmem:[%s1177] sm:$0x1]
        %v1309 = vld [vmem:[%s1180] sm:$0x1]
        %v1310 = vpack.c.bf16 %v1227, %v1227
        %v1312 = vperm.slane %v1290, 0
        %v1313 = vperm.slane %v1290, 1
        %v1314 = vperm.slane %v1290, 2
        %v1350 = vunpack.c.l.b16 %v1258
        %v1351 = vunpack.c.h.b16 %v1258
        %v1352 = vunpack.c.l.b16 %v1259
        %v1353 = vunpack.c.l.b16 %v1260
        %v1354 = vunpack.c.h.b16 %v1260
        %v1355 = vunpack.c.l.b16 %v1261
        %v1356 = vunpack.c.l.b16 %v1262
        %v1357 = vunpack.c.h.b16 %v1262
        %v1358 = vunpack.c.l.b16 %v1263
        %v1359 = vunpack.c.l.b16 %v1264
        %v1360 = vunpack.c.h.b16 %v1264
        %v1361 = vunpack.c.l.b16 %v1265
        %v1362 = vunpack.c.l.b16 %v1266
        %v1363 = vunpack.c.h.b16 %v1266
        %v1364 = vunpack.c.l.b16 %v1267
        %v1365 = vunpack.c.l.b16 %v1268
        %v1366 = vunpack.c.h.b16 %v1268
        %v1367 = vunpack.c.l.b16 %v1269
        %v1368 = vunpack.c.l.b16 %v1270
        %v1369 = vunpack.c.h.b16 %v1270
        %v1370 = vunpack.c.l.b16 %v1271
        %v1371 = vunpack.c.l.b16 %v1272
        %v1372 = vunpack.c.h.b16 %v1272
        %v1373 = vunpack.c.l.b16 %v1273
        %v1374 = vunpack.c.l.b16 %v1274
        %v1375 = vunpack.c.h.b16 %v1274
        %v1376 = vunpack.c.l.b16 %v1275
        %v1377 = vunpack.c.l.b16 %v1276
        %v1378 = vunpack.c.h.b16 %v1276
        %v1379 = vunpack.c.l.b16 %v1277
        %v1380 = vunpack.c.l.b16 %v1278
        %v1381 = vunpack.c.h.b16 %v1278
        %v1382 = vunpack.c.l.b16 %v1279
        %v1383 = vunpack.c.l.b16 %v1280
        %v1384 = vunpack.c.h.b16 %v1280
        %v1385 = vunpack.c.l.b16 %v1281
        %v1386 = vunpack.c.l.b16 %v1282
        %v1387 = vunpack.c.h.b16 %v1282
        %v1388 = vunpack.c.l.b16 %v1283
        %v1389 = vunpack.c.l.b16 %v1284
        %v1390 = vunpack.c.h.b16 %v1284
        %v1391 = vunpack.c.l.b16 %v1285
        %v1392 = vunpack.c.l.b16 %v1286
        %v1393 = vunpack.c.h.b16 %v1286
        %v1394 = vunpack.c.l.b16 %v1287
        %v1395 = vunpack.c.l.b16 %v1288
        %v1396 = vunpack.c.h.b16 %v1288
        %v1397 = vunpack.c.l.b16 %v1289
        %v1398 = vpack.c.b16 %v1353, %v1350
        %v1399 = vpack.c.b16 %v1354, %v1351
        %v1400 = vpack.c.b16 %v1355, %v1352
        %v1401 = vpack.c.b16 %v1359, %v1356
        %v1402 = vpack.c.b16 %v1360, %v1357
        %v1403 = vpack.c.b16 %v1361, %v1358
        %v1404 = vpack.c.b16 %v1365, %v1362
        %v1405 = vpack.c.b16 %v1366, %v1363
        %v1406 = vpack.c.b16 %v1367, %v1364
        %v1407 = vpack.c.b16 %v1371, %v1368
        %v1408 = vpack.c.b16 %v1372, %v1369
        %v1409 = vpack.c.b16 %v1373, %v1370
        %v1410 = vpack.c.b16 %v1377, %v1374
        %v1411 = vpack.c.b16 %v1378, %v1375
        %v1412 = vpack.c.b16 %v1379, %v1376
        %v1413 = vpack.c.b16 %v1383, %v1380
        %v1414 = vpack.c.b16 %v1384, %v1381
        %v1415 = vpack.c.b16 %v1385, %v1382
        %v1416 = vpack.c.b16 %v1389, %v1386
        %v1417 = vpack.c.b16 %v1390, %v1387
        %v1418 = vpack.c.b16 %v1391, %v1388
        %v1419 = vpack.c.b16 %v1395, %v1392
        %v1420 = vpack.c.b16 %v1396, %v1393
        %v1421 = vpack.c.b16 %v1397, %v1394
        %1446 = vmatpush.bf16.msra.mxu0 %v1419
        %1447 = vmatpush.bf16.msra.mxu0 %v1416
        %1448 = vmatpush.bf16.msra.mxu0 %v1413
        %1449 = vmatpush.bf16.msra.mxu0 %v1410
        %1450 = vmatpush.bf16.msra.mxu0 %v1407
        %1451 = vmatpush.bf16.msra.mxu0 %v1404
        %1452 = vmatpush.bf16.msra.mxu0 %v1401
        %1453 = vmatpush.bf16.msra.mxu0 %v1398
        %1454 = vmatmul.bf16.gmra.mxu0 %v1310
        %v1455 = vpop.f32.mrf.mxu0
        %v1456 = vadd.f32 %v1312, %v1455
        %v1457 = vpop.f32.mrf.mxu0
        %1458 = vdwg.mxu0
        %1459 = vmatpush.bf16.msra.mxu0 %v1420
        %1460 = vmatpush.bf16.msra.mxu0 %v1417
        %1461 = vmatpush.bf16.msra.mxu0 %v1414
        %1462 = vmatpush.bf16.msra.mxu0 %v1411
        %1463 = vmatpush.bf16.msra.mxu0 %v1408
        %1464 = vmatpush.bf16.msra.mxu0 %v1405
        %1465 = vmatpush.bf16.msra.mxu0 %v1402
        %1466 = vmatpush.bf16.msra.mxu0 %v1399
        %1467 = vmatmul.bf16.gmra.mxu0 %v1310
        %v1468 = vpop.f32.mrf.mxu0
        %v1469 = vadd.f32 %v1313, %v1468
        %v1470 = vpop.f32.mrf.mxu0
        %1471 = vdwg.mxu0
        %1472 = vmatpush.bf16.msra.mxu0 %v1421
        %1473 = vmatpush.bf16.msra.mxu0 %v1418
        %1474 = vmatpush.bf16.msra.mxu0 %v1415
        %1475 = vmatpush.bf16.msra.mxu0 %v1412
        %1476 = vmatpush.bf16.msra.mxu0 %v1409
        %1477 = vmatpush.bf16.msra.mxu0 %v1406
        %1478 = vmatpush.bf16.msra.mxu0 %v1403
        %1479 = vmatpush.bf16.msra.mxu0 %v1400
        %1480 = vmatmul.bf16.gmra.mxu0 %v1310
        %v1481 = vpop.f32.mrf.mxu0
        %v1482 = vadd.f32 %v1314, %v1481
        %v1483 = vpop.f32.mrf.mxu0
        %1484 = vdwg.mxu0
        %v1486 = vperm.slane %v1307, 0
        %v1488 = vadd.f32 %v1227, %v1486
        %v1489 = vpack.c.bf16 %v1456, %v1456
        %v1490 = vpack.c.bf16 %v1469, %v1469
        %v1491 = vpack.c.bf16 %v1482, %v1482
        %vm1492 = vcmask 261120
        %v1494 = vsel %vm1492, %v1489, 0
        %v1497 = vsel %vm1492, %v1490, 0
        %1499 = vmatpush.bf16.xpose.msra.mxu0 0
        %1500 = vmatpush.bf16.xpose.msra.mxu0 0
        %1501 = vmatpush.bf16.xpose.msra.mxu0 0
        %1502 = vmatpush.bf16.xpose.msra.mxu0 0
        %1503 = vmatpush.bf16.xpose.msra.mxu0 0
        %1504 = vmatpush.bf16.xpose.msra.mxu0 0
        %1505 = vmatpush.bf16.xpose.msra.mxu0 0
        %1506 = vmatpush.bf16.xpose.msra.mxu0 %v1497
        %1507 = vmatmul.bf16.gmra.mxu0 %v1494
        %v1508 = vpop.f32.mrf.mxu0
        %v1509 = vadd.f32 0.0, %v1508
        %v1510 = vpop.f32.mrf.mxu0
        %1511 = vdwg.mxu0
        %v1512 = vsel %vm1257, %v1509, -1e+09
        %vm1513 = vcmask 64512
        %v1514 = vsel %vm1513, %v1512, -inf
        %1515 = vmax.xlane.f32.xlu0 %v1514
        %v1516 = vpop.xlane.xlu0 %1515
        %v1517 = vsub.f32 %v1512, %v1516
        %v1518 = vmul.f32 %v1517, 1.442695
        %v1519 = vpow.pop %v1518
        %v1520 = vsel %vm1513, %v1519, 0.0
        %1521 = vadd.xlane.f32.xlu0 %v1520
        %v1522 = vpop.xlane.xlu0 %1521
        %v1523 = vrcp.pop %v1522
        %v1524 = vmul.f32 %v1519, %v1523
        %v1525 = vpack.c.bf16 %v1524, %v1524
        %v1527 = vsel %vm1513, %v1525, 0
        %vm1529 = vcmask 1043456
        %v1531 = vsel %vm1529, %v1491, 0
        %1533 = vmatpush.bf16.msra.mxu0 0
        %1534 = vmatpush.bf16.msra.mxu0 0
        %1535 = vmatpush.bf16.msra.mxu0 0
        %1536 = vmatpush.bf16.msra.mxu0 0
        %1537 = vmatpush.bf16.msra.mxu0 0
        %1538 = vmatpush.bf16.msra.mxu0 0
        %1539 = vmatpush.bf16.msra.mxu0 0
        %1540 = vmatpush.bf16.msra.mxu0 %v1531
        %1541 = vmatmul.bf16.gmra.mxu0 %v1527
        %v1542 = vpop.f32.mrf.mxu0
        %v1543 = vadd.f32 0.0, %v1542
        %v1544 = vpop.f32.mrf.mxu0
        %1545 = vdwg.mxu0
        %v1546 = vpack.c.bf16 %v1543, %v1543
        %v1551 = vunpack.c.l.b16 %v1291
        %v1552 = vunpack.c.l.b16 %v1292
        %v1553 = vunpack.c.l.b16 %v1293
        %v1554 = vunpack.c.l.b16 %v1294
        %v1555 = vpack.c.b16 %v1552, %v1551
        %v1556 = vpack.c.b16 %v1554, %v1553
        %v1560 = vsel %vm1492, %v1546, 0
        %1562 = vmatpush.bf16.msra.mxu0 0
        %1563 = vmatpush.bf16.msra.mxu0 0
        %1564 = vmatpush.bf16.msra.mxu0 0
        %1565 = vmatpush.bf16.msra.mxu0 0
        %1566 = vmatpush.bf16.msra.mxu0 0
        %1567 = vmatpush.bf16.msra.mxu0 0
        %1568 = vmatpush.bf16.msra.mxu0 %v1556
        %1569 = vmatpush.bf16.msra.mxu0 %v1555
        %1570 = vmatmul.bf16.gmra.mxu0 %v1560
        %v1571 = vpop.f32.mrf.mxu0
        %v1572 = vadd.f32 0.0, %v1571
        %v1573 = vpop.f32.mrf.mxu0
        %1574 = vdwg.mxu0
        %v1575 = vadd.f32 %v1488, %v1572
        %1577 = vrot.lane.b32.xlu0 %v1489, 96
        %v1578 = vpop.permute.xlu0 %1577
        %1580 = vrot.lane.b32.xlu0 %v1490, 96
        %v1581 = vpop.permute.xlu0 %1580
        %v1583 = vsel %vm1492, %v1578, 0
        %v1586 = vsel %vm1492, %v1581, 0
        %1588 = vmatpush.bf16.xpose.msra.mxu0 0
        %1589 = vmatpush.bf16.xpose.msra.mxu0 0
        %1590 = vmatpush.bf16.xpose.msra.mxu0 0
        %1591 = vmatpush.bf16.xpose.msra.mxu0 0
        %1592 = vmatpush.bf16.xpose.msra.mxu0 0
        %1593 = vmatpush.bf16.xpose.msra.mxu0 0
        %1594 = vmatpush.bf16.xpose.msra.mxu0 0
        %1595 = vmatpush.bf16.xpose.msra.mxu0 %v1586
        %1596 = vmatmul.bf16.gmra.mxu0 %v1583
        %v1597 = vpop.f32.mrf.mxu0
        %v1598 = vadd.f32 0.0, %v1597
        %v1599 = vpop.f32.mrf.mxu0
        %1600 = vdwg.mxu0
        %v1601 = vsel %vm1257, %v1598, -1e+09
        %v1602 = vsel %vm1513, %v1601, -inf
        %1603 = vmax.xlane.f32.xlu0 %v1602
        %v1604 = vpop.xlane.xlu0 %1603
        %v1605 = vsub.f32 %v1601, %v1604
        %v1606 = vmul.f32 %v1605, 1.442695
        %v1607 = vpow.pop %v1606
        %v1608 = vsel %vm1513, %v1607, 0.0
        %1609 = vadd.xlane.f32.xlu0 %v1608
        %v1610 = vpop.xlane.xlu0 %1609
        %v1611 = vrcp.pop %v1610
        %v1612 = vmul.f32 %v1607, %v1611
        %v1613 = vpack.c.bf16 %v1612, %v1612
        %1615 = vrot.lane.b32.xlu0 %v1491, 96
        %v1616 = vpop.permute.xlu0 %1615
        %v1618 = vsel %vm1513, %v1613, 0
        %v1621 = vsel %vm1529, %v1616, 0
        %1623 = vmatpush.bf16.msra.mxu0 0
        %1624 = vmatpush.bf16.msra.mxu0 0
        %1625 = vmatpush.bf16.msra.mxu0 0
        %1626 = vmatpush.bf16.msra.mxu0 0
        %1627 = vmatpush.bf16.msra.mxu0 0
        %1628 = vmatpush.bf16.msra.mxu0 0
        %1629 = vmatpush.bf16.msra.mxu0 0
        %1630 = vmatpush.bf16.msra.mxu0 %v1621
        %1631 = vmatmul.bf16.gmra.mxu0 %v1618
        %v1632 = vpop.f32.mrf.mxu0
        %v1633 = vadd.f32 0.0, %v1632
        %v1634 = vpop.f32.mrf.mxu0
        %1635 = vdwg.mxu0
        %v1636 = vpack.c.bf16 %v1633, %v1633
        %v1641 = vunpack.c.l.b16 %v1295
        %v1642 = vunpack.c.l.b16 %v1296
        %v1643 = vunpack.c.l.b16 %v1297
        %v1644 = vunpack.c.l.b16 %v1298
        %v1645 = vpack.c.b16 %v1642, %v1641
        %v1646 = vpack.c.b16 %v1644, %v1643
        %v1650 = vsel %vm1492, %v1636, 0
        %1652 = vmatpush.bf16.msra.mxu0 0
        %1653 = vmatpush.bf16.msra.mxu0 0
        %1654 = vmatpush.bf16.msra.mxu0 0
        %1655 = vmatpush.bf16.msra.mxu0 0
        %1656 = vmatpush.bf16.msra.mxu0 0
        %1657 = vmatpush.bf16.msra.mxu0 0
        %1658 = vmatpush.bf16.msra.mxu0 %v1646
        %1659 = vmatpush.bf16.msra.mxu0 %v1645
        %1660 = vmatmul.bf16.gmra.mxu0 %v1650
        %v1661 = vpop.f32.mrf.mxu0
        %v1662 = vadd.f32 0.0, %v1661
        %v1663 = vpop.f32.mrf.mxu0
        %1664 = vdwg.mxu0
        %v1665 = vadd.f32 %v1575, %v1662
        %1666 = vrot.lane.b32.xlu0 %v1489, 64
        %v1667 = vpop.permute.xlu0 %1666
        %1668 = vrot.lane.b32.xlu0 %v1490, 64
        %v1669 = vpop.permute.xlu0 %1668
        %v1671 = vsel %vm1492, %v1667, 0
        %v1674 = vsel %vm1492, %v1669, 0
        %1676 = vmatpush.bf16.xpose.msra.mxu0 0
        %1677 = vmatpush.bf16.xpose.msra.mxu0 0
        %1678 = vmatpush.bf16.xpose.msra.mxu0 0
        %1679 = vmatpush.bf16.xpose.msra.mxu0 0
        %1680 = vmatpush.bf16.xpose.msra.mxu0 0
        %1681 = vmatpush.bf16.xpose.msra.mxu0 0
        %1682 = vmatpush.bf16.xpose.msra.mxu0 0
        %1683 = vmatpush.bf16.xpose.msra.mxu0 %v1674
        %1684 = vmatmul.bf16.gmra.mxu0 %v1671
        %v1685 = vpop.f32.mrf.mxu0
        %v1686 = vadd.f32 0.0, %v1685
        %v1687 = vpop.f32.mrf.mxu0
        %1688 = vdwg.mxu0
        %v1689 = vsel %vm1257, %v1686, -1e+09
        %v1690 = vsel %vm1513, %v1689, -inf
        %1691 = vmax.xlane.f32.xlu0 %v1690
        %v1692 = vpop.xlane.xlu0 %1691
        %v1693 = vsub.f32 %v1689, %v1692
        %v1694 = vmul.f32 %v1693, 1.442695
        %v1695 = vpow.pop %v1694
        %v1696 = vsel %vm1513, %v1695, 0.0
        %1697 = vadd.xlane.f32.xlu0 %v1696
        %v1698 = vpop.xlane.xlu0 %1697
        %v1699 = vrcp.pop %v1698
        %v1700 = vmul.f32 %v1695, %v1699
        %v1701 = vpack.c.bf16 %v1700, %v1700
        %1702 = vrot.lane.b32.xlu0 %v1491, 64
        %v1703 = vpop.permute.xlu0 %1702
        %v1705 = vsel %vm1513, %v1701, 0
        %v1708 = vsel %vm1529, %v1703, 0
        %1710 = vmatpush.bf16.msra.mxu0 0
        %1711 = vmatpush.bf16.msra.mxu0 0
        %1712 = vmatpush.bf16.msra.mxu0 0
        %1713 = vmatpush.bf16.msra.mxu0 0
        %1714 = vmatpush.bf16.msra.mxu0 0
        %1715 = vmatpush.bf16.msra.mxu0 0
        %1716 = vmatpush.bf16.msra.mxu0 0
        %1717 = vmatpush.bf16.msra.mxu0 %v1708
        %1718 = vmatmul.bf16.gmra.mxu0 %v1705
        %v1719 = vpop.f32.mrf.mxu0
        %v1720 = vadd.f32 0.0, %v1719
        %v1721 = vpop.f32.mrf.mxu0
        %1722 = vdwg.mxu0
        %v1723 = vpack.c.bf16 %v1720, %v1720
        %v1728 = vunpack.c.l.b16 %v1299
        %v1729 = vunpack.c.l.b16 %v1300
        %v1730 = vunpack.c.l.b16 %v1301
        %v1731 = vunpack.c.l.b16 %v1302
        %v1732 = vpack.c.b16 %v1729, %v1728
        %v1733 = vpack.c.b16 %v1731, %v1730
        %v1737 = vsel %vm1492, %v1723, 0
        %1739 = vmatpush.bf16.msra.mxu0 0
        %1740 = vmatpush.bf16.msra.mxu0 0
        %1741 = vmatpush.bf16.msra.mxu0 0
        %1742 = vmatpush.bf16.msra.mxu0 0
        %1743 = vmatpush.bf16.msra.mxu0 0
        %1744 = vmatpush.bf16.msra.mxu0 0
        %1745 = vmatpush.bf16.msra.mxu0 %v1733
        %1746 = vmatpush.bf16.msra.mxu0 %v1732
        %1747 = vmatmul.bf16.gmra.mxu0 %v1737
        %v1748 = vpop.f32.mrf.mxu0
        %v1749 = vadd.f32 0.0, %v1748
        %v1750 = vpop.f32.mrf.mxu0
        %1751 = vdwg.mxu0
        %v1752 = vadd.f32 %v1665, %v1749
        %1753 = vrot.lane.b32.xlu0 %v1489, 32
        %v1754 = vpop.permute.xlu0 %1753
        %1755 = vrot.lane.b32.xlu0 %v1490, 32
        %v1756 = vpop.permute.xlu0 %1755
        %v1758 = vsel %vm1492, %v1754, 0
        %v1761 = vsel %vm1492, %v1756, 0
        %1763 = vmatpush.bf16.xpose.msra.mxu0 0
        %1764 = vmatpush.bf16.xpose.msra.mxu0 0
        %1765 = vmatpush.bf16.xpose.msra.mxu0 0
        %1766 = vmatpush.bf16.xpose.msra.mxu0 0
        %1767 = vmatpush.bf16.xpose.msra.mxu0 0
        %1768 = vmatpush.bf16.xpose.msra.mxu0 0
        %1769 = vmatpush.bf16.xpose.msra.mxu0 0
        %1770 = vmatpush.bf16.xpose.msra.mxu0 %v1761
        %1771 = vmatmul.bf16.gmra.mxu0 %v1758
        %v1772 = vpop.f32.mrf.mxu0
        %v1773 = vadd.f32 0.0, %v1772
        %v1774 = vpop.f32.mrf.mxu0
        %1775 = vdwg.mxu0
        %v1776 = vsel %vm1257, %v1773, -1e+09
        %v1777 = vsel %vm1513, %v1776, -inf
        %1778 = vmax.xlane.f32.xlu0 %v1777
        %v1779 = vpop.xlane.xlu0 %1778
        %v1780 = vsub.f32 %v1776, %v1779
        %v1781 = vmul.f32 %v1780, 1.442695
        %v1782 = vpow.pop %v1781
        %v1783 = vsel %vm1513, %v1782, 0.0
        %1784 = vadd.xlane.f32.xlu0 %v1783
        %v1785 = vpop.xlane.xlu0 %1784
        %v1786 = vrcp.pop %v1785
        %v1787 = vmul.f32 %v1782, %v1786
        %v1788 = vpack.c.bf16 %v1787, %v1787
        %1789 = vrot.lane.b32.xlu0 %v1491, 32
        %v1790 = vpop.permute.xlu0 %1789
        %v1792 = vsel %vm1513, %v1788, 0
        %v1795 = vsel %vm1529, %v1790, 0
        %1797 = vmatpush.bf16.msra.mxu0 0
        %1798 = vmatpush.bf16.msra.mxu0 0
        %1799 = vmatpush.bf16.msra.mxu0 0
        %1800 = vmatpush.bf16.msra.mxu0 0
        %1801 = vmatpush.bf16.msra.mxu0 0
        %1802 = vmatpush.bf16.msra.mxu0 0
        %1803 = vmatpush.bf16.msra.mxu0 0
        %1804 = vmatpush.bf16.msra.mxu0 %v1795
        %1805 = vmatmul.bf16.gmra.mxu0 %v1792
        %v1806 = vpop.f32.mrf.mxu0
        %v1807 = vadd.f32 0.0, %v1806
        %v1808 = vpop.f32.mrf.mxu0
        %1809 = vdwg.mxu0
        %v1810 = vpack.c.bf16 %v1807, %v1807
        %v1815 = vunpack.c.l.b16 %v1303
        %v1816 = vunpack.c.l.b16 %v1304
        %v1817 = vunpack.c.l.b16 %v1305
        %v1818 = vunpack.c.l.b16 %v1306
        %v1819 = vpack.c.b16 %v1816, %v1815
        %v1820 = vpack.c.b16 %v1818, %v1817
        %v1824 = vsel %vm1492, %v1810, 0
        %1826 = vmatpush.bf16.msra.mxu0 0
        %1827 = vmatpush.bf16.msra.mxu0 0
        %1828 = vmatpush.bf16.msra.mxu0 0
        %1829 = vmatpush.bf16.msra.mxu0 0
        %1830 = vmatpush.bf16.msra.mxu0 0
        %1831 = vmatpush.bf16.msra.mxu0 0
        %1832 = vmatpush.bf16.msra.mxu0 %v1820
        %1833 = vmatpush.bf16.msra.mxu0 %v1819
        %1834 = vmatmul.bf16.gmra.mxu0 %v1824
        %v1835 = vpop.f32.mrf.mxu0
        %v1836 = vadd.f32 0.0, %v1835
        %v1837 = vpop.f32.mrf.mxu0
        %1838 = vdwg.mxu0
        %v1839 = vadd.f32 %v1752, %v1836
        %1840 = vadd.xlane.f32.xlu0 %v1839
        %v1841 = vpop.xlane.xlu0 %1840
        %v1842 = vrcp.pop 128.0
        %v1843 = vmul.f32 128.0, %v1842
        %v1844 = vsub.f32 1.0, %v1843
        %v1845 = vmul.f32 %v1842, %v1844
        %v1846 = vadd.f32 %v1842, %v1845
        %vm1847 = vweird.f32 %v1842
        %v1848 = vsel %vm1847, %v1842, %v1846
        %v1849 = vmul.f32 %v1841, %v1848
        %v1850 = vsub.f32 %v1839, %v1849
        %v1851 = vmul.f32 %v1850, %v1850
        %1852 = vadd.xlane.f32.xlu0 %v1851
        %v1853 = vpop.xlane.xlu0 %1852
        %v1854 = vmul.f32 %v1853, %v1848
        %v1855 = vadd.f32 %v1854, 1e-05
        %v1856 = vrsqrt.pop %v1855
        %v1857 = vmul.f32 %v1856, %v1855
        %v1858 = vmul.f32 %v1857, %v1856
        %v1859 = vmul.f32 0.5, %v1858
        %v1860 = vsub.f32 1.5, %v1859
        %v1861 = vmul.f32 %v1856, %v1860
        %vm1862 = vweird.f32 %v1855
        %vm1863 = vweird.f32 %v1856
        %vm1864 = vmor %vm1862, %vm1863
        %v1865 = vsel %vm1864, %v1856, %v1861
        %v1866 = vmul.f32 %v1850, %v1865
        %v1868 = vperm.slane %v1308, 0
        %v1870 = vmul.f32 %v1866, %v1868
        %v1872 = vperm.slane %v1309, 0
        %v1874 = vadd.f32 %v1870, %v1872
        %v1875 = vld [vmem:[%s985] sm:$0xf]
        %v1876 = vld [vmem:[%s985 + $0x4] sm:$0xf]
        %v1877 = vld [vmem:[%s985 + $0x8] sm:$0xf]
        %v1878 = vld [vmem:[%s985 + $0xc] sm:$0xf]
        %v1879 = vld [vmem:[%s985 + $0x10] sm:$0xf]
        %v1880 = vld [vmem:[%s985 + $0x14] sm:$0xf]
        %v1881 = vld [vmem:[%s985 + $0x18] sm:$0xf]
        %v1882 = vld [vmem:[%s985 + $0x1c] sm:$0xf]
        %v1883 = vld [vmem:[%s985 + $0x20] sm:$0xf]
        %v1884 = vld [vmem:[%s985 + $0x24] sm:$0xf]
        %v1885 = vld [vmem:[%s985 + $0x28] sm:$0xf]
        %v1886 = vld [vmem:[%s985 + $0x2c] sm:$0xf]
        %v1887 = vld [vmem:[%s985 + $0x30] sm:$0xf]
        %v1888 = vld [vmem:[%s985 + $0x34] sm:$0xf]
        %v1889 = vld [vmem:[%s985 + $0x38] sm:$0xf]
        %v1890 = vld [vmem:[%s985 + $0x3c] sm:$0xf]
        %v1891 = vld [vmem:[%s1183] sm:$0x1]
        %v1892 = vld [vmem:[%s1188] sm:$0xff]
        %v1893 = vld [vmem:[%s1188 + $0x8] sm:$0xff]
        %v1894 = vld [vmem:[%s1188 + $0x10] sm:$0xff]
        %v1895 = vld [vmem:[%s1188 + $0x18] sm:$0xff]
        %v1896 = vld [vmem:[%s1188 + $0x20] sm:$0xff]
        %v1897 = vld [vmem:[%s1188 + $0x28] sm:$0xff]
        %v1898 = vld [vmem:[%s1188 + $0x30] sm:$0xff]
        %v1899 = vld [vmem:[%s1188 + $0x38] sm:$0xff]
        %v1900 = vld [vmem:[%s1188 + $0x40] sm:$0xff]
        %v1901 = vld [vmem:[%s1188 + $0x48] sm:$0xff]
        %v1902 = vld [vmem:[%s1188 + $0x50] sm:$0xff]
        %v1903 = vld [vmem:[%s1188 + $0x58] sm:$0xff]
        %v1904 = vld [vmem:[%s1188 + $0x60] sm:$0xff]
        %v1905 = vld [vmem:[%s1188 + $0x68] sm:$0xff]
        %v1906 = vld [vmem:[%s1188 + $0x70] sm:$0xff]
        %v1907 = vld [vmem:[%s1188 + $0x78] sm:$0xff]
        %v1908 = vld [vmem:[%s1192] sm:$0x3]
        %v1909 = vld [vmem:[%s995] sm:$0xf]
        %v1910 = vld [vmem:[%s995 + $0x4] sm:$0xf]
        %v1911 = vld [vmem:[%s995 + $0x8] sm:$0xf]
        %v1912 = vld [vmem:[%s995 + $0xc] sm:$0xf]
        %v1913 = vld [vmem:[%s995 + $0x10] sm:$0xf]
        %v1914 = vld [vmem:[%s995 + $0x14] sm:$0xf]
        %v1915 = vld [vmem:[%s995 + $0x18] sm:$0xf]
        %v1916 = vld [vmem:[%s995 + $0x1c] sm:$0xf]
        %v1917 = vld [vmem:[%s995 + $0x20] sm:$0xf]
        %v1918 = vld [vmem:[%s995 + $0x24] sm:$0xf]
        %v1919 = vld [vmem:[%s995 + $0x28] sm:$0xf]
        %v1920 = vld [vmem:[%s995 + $0x2c] sm:$0xf]
        %v1921 = vld [vmem:[%s995 + $0x30] sm:$0xf]
        %v1922 = vld [vmem:[%s995 + $0x34] sm:$0xf]
        %v1923 = vld [vmem:[%s995 + $0x38] sm:$0xf]
        %v1924 = vld [vmem:[%s995 + $0x3c] sm:$0xf]
        %v1925 = vld [vmem:[%s1195] sm:$0x1]
        %v1926 = vld [vmem:[%s1198] sm:$0x1]
        %v1927 = vld [vmem:[%s1201] sm:$0x1]
        %v1928 = vpack.c.bf16 %v1874, %v1874
        %v1930 = vperm.slane %v1891, 0
        %v1948 = vunpack.c.l.b16 %v1875
        %v1949 = vunpack.c.l.b16 %v1876
        %v1950 = vunpack.c.l.b16 %v1877
        %v1951 = vunpack.c.l.b16 %v1878
        %v1952 = vunpack.c.l.b16 %v1879
        %v1953 = vunpack.c.l.b16 %v1880
        %v1954 = vunpack.c.l.b16 %v1881
        %v1955 = vunpack.c.l.b16 %v1882
        %v1956 = vunpack.c.l.b16 %v1883
        %v1957 = vunpack.c.l.b16 %v1884
        %v1958 = vunpack.c.l.b16 %v1885
        %v1959 = vunpack.c.l.b16 %v1886
        %v1960 = vunpack.c.l.b16 %v1887
        %v1961 = vunpack.c.l.b16 %v1888
        %v1962 = vunpack.c.l.b16 %v1889
        %v1963 = vunpack.c.l.b16 %v1890
        %v1964 = vpack.c.b16 %v1949, %v1948
        %v1965 = vpack.c.b16 %v1951, %v1950
        %v1966 = vpack.c.b16 %v1953, %v1952
        %v1967 = vpack.c.b16 %v1955, %v1954
        %v1968 = vpack.c.b16 %v1957, %v1956
        %v1969 = vpack.c.b16 %v1959, %v1958
        %v1970 = vpack.c.b16 %v1961, %v1960
        %v1971 = vpack.c.b16 %v1963, %v1962
        %1980 = vmatpush.bf16.msra.mxu0 %v1971
        %1981 = vmatpush.bf16.msra.mxu0 %v1970
        %1982 = vmatpush.bf16.msra.mxu0 %v1969
        %1983 = vmatpush.bf16.msra.mxu0 %v1968
        %1984 = vmatpush.bf16.msra.mxu0 %v1967
        %1985 = vmatpush.bf16.msra.mxu0 %v1966
        %1986 = vmatpush.bf16.msra.mxu0 %v1965
        %1987 = vmatpush.bf16.msra.mxu0 %v1964
        %1988 = vmatmul.bf16.gmra.mxu0 %v1928
        %v1989 = vpop.f32.mrf.mxu0
        %v1990 = vadd.f32 %v1930, %v1989
        %v1991 = vpop.f32.mrf.mxu0
        %1992 = vdwg.mxu0
        %v1994 = vperm.slane %v1908, 0
        %v1995 = vperm.slane %v1908, 1
        %v2014 = vunpack.c.l.b16 %v1892
        %v2015 = vunpack.c.h.b16 %v1892
        %v2016 = vunpack.c.l.b16 %v1893
        %v2017 = vunpack.c.h.b16 %v1893
        %v2018 = vunpack.c.l.b16 %v1894
        %v2019 = vunpack.c.h.b16 %v1894
        %v2020 = vunpack.c.l.b16 %v1895
        %v2021 = vunpack.c.h.b16 %v1895
        %v2022 = vunpack.c.l.b16 %v1896
        %v2023 = vunpack.c.h.b16 %v1896
        %v2024 = vunpack.c.l.b16 %v1897
        %v2025 = vunpack.c.h.b16 %v1897
        %v2026 = vunpack.c.l.b16 %v1898
        %v2027 = vunpack.c.h.b16 %v1898
        %v2028 = vunpack.c.l.b16 %v1899
        %v2029 = vunpack.c.h.b16 %v1899
        %v2030 = vunpack.c.l.b16 %v1900
        %v2031 = vunpack.c.h.b16 %v1900
        %v2032 = vunpack.c.l.b16 %v1901
        %v2033 = vunpack.c.h.b16 %v1901
        %v2034 = vunpack.c.l.b16 %v1902
        %v2035 = vunpack.c.h.b16 %v1902
        %v2036 = vunpack.c.l.b16 %v1903
        %v2037 = vunpack.c.h.b16 %v1903
        %v2038 = vunpack.c.l.b16 %v1904
        %v2039 = vunpack.c.h.b16 %v1904
        %v2040 = vunpack.c.l.b16 %v1905
        %v2041 = vunpack.c.h.b16 %v1905
        %v2042 = vunpack.c.l.b16 %v1906
        %v2043 = vunpack.c.h.b16 %v1906
        %v2044 = vunpack.c.l.b16 %v1907
        %v2045 = vunpack.c.h.b16 %v1907
        %v2046 = vpack.c.b16 %v2016, %v2014
        %v2047 = vpack.c.b16 %v2017, %v2015
        %v2048 = vpack.c.b16 %v2020, %v2018
        %v2049 = vpack.c.b16 %v2021, %v2019
        %v2050 = vpack.c.b16 %v2024, %v2022
        %v2051 = vpack.c.b16 %v2025, %v2023
        %v2052 = vpack.c.b16 %v2028, %v2026
        %v2053 = vpack.c.b16 %v2029, %v2027
        %v2054 = vpack.c.b16 %v2032, %v2030
        %v2055 = vpack.c.b16 %v2033, %v2031
        %v2056 = vpack.c.b16 %v2036, %v2034
        %v2057 = vpack.c.b16 %v2037, %v2035
        %v2058 = vpack.c.b16 %v2040, %v2038
        %v2059 = vpack.c.b16 %v2041, %v2039
        %v2060 = vpack.c.b16 %v2044, %v2042
        %v2061 = vpack.c.b16 %v2045, %v2043
        %2078 = vmatpush.bf16.msra.mxu0 %v2060
        %2079 = vmatpush.bf16.msra.mxu0 %v2058
        %2080 = vmatpush.bf16.msra.mxu0 %v2056
        %2081 = vmatpush.bf16.msra.mxu0 %v2054
        %2082 = vmatpush.bf16.msra.mxu0 %v2052
        %2083 = vmatpush.bf16.msra.mxu0 %v2050
        %2084 = vmatpush.bf16.msra.mxu0 %v2048
        %2085 = vmatpush.bf16.msra.mxu0 %v2046
        %2086 = vmatmul.bf16.gmra.mxu0 %v1228
        %v2087 = vpop.f32.mrf.mxu0
        %v2088 = vadd.f32 %v1994, %v2087
        %v2089 = vpop.f32.mrf.mxu0
        %2090 = vdwg.mxu0
        %2091 = vmatpush.bf16.msra.mxu0 %v2061
        %2092 = vmatpush.bf16.msra.mxu0 %v2059
        %2093 = vmatpush.bf16.msra.mxu0 %v2057
        %2094 = vmatpush.bf16.msra.mxu0 %v2055
        %2095 = vmatpush.bf16.msra.mxu0 %v2053
        %2096 = vmatpush.bf16.msra.mxu0 %v2051
        %2097 = vmatpush.bf16.msra.mxu0 %v2049
        %2098 = vmatpush.bf16.msra.mxu0 %v2047
        %2099 = vmatmul.bf16.gmra.mxu0 %v1228
        %v2100 = vpop.f32.mrf.mxu0
        %v2101 = vadd.f32 %v1995, %v2100
        %v2102 = vpop.f32.mrf.mxu0
        %2103 = vdwg.mxu0
        %v2105 = vperm.slane %v1925, 0
        %v2107 = vadd.f32 %v1874, %v2105
        %v2108 = vpack.c.bf16 %v1990, %v1990
        %v2109 = vpack.c.bf16 %v2088, %v2088
        %v2110 = vpack.c.bf16 %v2101, %v2101
        %v2112 = vsel %vm1492, %v2108, 0
        %v2115 = vsel %vm1492, %v2109, 0
        %2117 = vmatpush.bf16.xpose.msra.mxu0 0
        %2118 = vmatpush.bf16.xpose.msra.mxu0 0
        %2119 = vmatpush.bf16.xpose.msra.mxu0 0
        %2120 = vmatpush.bf16.xpose.msra.mxu0 0
        %2121 = vmatpush.bf16.xpose.msra.mxu0 0
        %2122 = vmatpush.bf16.xpose.msra.mxu0 0
        %2123 = vmatpush.bf16.xpose.msra.mxu0 0
        %2124 = vmatpush.bf16.xpose.msra.mxu0 %v2115
        %2125 = vmatmul.bf16.gmra.mxu0 %v2112
        %v2126 = vpop.f32.mrf.mxu0
        %v2127 = vadd.f32 0.0, %v2126
        %v2128 = vpop.f32.mrf.mxu0
        %2129 = vdwg.mxu0
        %v2130 = vsel %vm1513, %v2127, -inf
        %2131 = vmax.xlane.f32.xlu0 %v2130
        %v2132 = vpop.xlane.xlu0 %2131
        %v2133 = vsub.f32 %v2127, %v2132
        %v2134 = vmul.f32 %v2133, 1.442695
        %v2135 = vpow.pop %v2134
        %v2136 = vsel %vm1513, %v2135, 0.0
        %2137 = vadd.xlane.f32.xlu0 %v2136
        %v2138 = vpop.xlane.xlu0 %2137
        %v2139 = vrcp.pop %v2138
        %v2140 = vmul.f32 %v2135, %v2139
        %v2141 = vpack.c.bf16 %v2140, %v2140
        %v2143 = vsel %vm1513, %v2141, 0
        %v2146 = vsel %vm1529, %v2110, 0
        %2148 = vmatpush.bf16.msra.mxu0 0
        %2149 = vmatpush.bf16.msra.mxu0 0
        %2150 = vmatpush.bf16.msra.mxu0 0
        %2151 = vmatpush.bf16.msra.mxu0 0
        %2152 = vmatpush.bf16.msra.mxu0 0
        %2153 = vmatpush.bf16.msra.mxu0 0
        %2154 = vmatpush.bf16.msra.mxu0 0
        %2155 = vmatpush.bf16.msra.mxu0 %v2146
        %2156 = vmatmul.bf16.gmra.mxu0 %v2143
        %v2157 = vpop.f32.mrf.mxu0
        %v2158 = vadd.f32 0.0, %v2157
        %v2159 = vpop.f32.mrf.mxu0
        %2160 = vdwg.mxu0
        %v2161 = vpack.c.bf16 %v2158, %v2158
        %v2166 = vunpack.c.l.b16 %v1909
        %v2167 = vunpack.c.l.b16 %v1910
        %v2168 = vunpack.c.l.b16 %v1911
        %v2169 = vunpack.c.l.b16 %v1912
        %v2170 = vpack.c.b16 %v2167, %v2166
        %v2171 = vpack.c.b16 %v2169, %v2168
        %v2175 = vsel %vm1492, %v2161, 0
        %2177 = vmatpush.bf16.msra.mxu0 0
        %2178 = vmatpush.bf16.msra.mxu0 0
        %2179 = vmatpush.bf16.msra.mxu0 0
        %2180 = vmatpush.bf16.msra.mxu0 0
        %2181 = vmatpush.bf16.msra.mxu0 0
        %2182 = vmatpush.bf16.msra.mxu0 0
        %2183 = vmatpush.bf16.msra.mxu0 %v2171
        %2184 = vmatpush.bf16.msra.mxu0 %v2170
        %2185 = vmatmul.bf16.gmra.mxu0 %v2175
        %v2186 = vpop.f32.mrf.mxu0
        %v2187 = vadd.f32 0.0, %v2186
        %v2188 = vpop.f32.mrf.mxu0
        %2189 = vdwg.mxu0
        %v2190 = vadd.f32 %v2107, %v2187
        %2192 = vrot.lane.b32.xlu0 %v2108, 96
        %v2193 = vpop.permute.xlu0 %2192
        %2195 = vrot.lane.b32.xlu0 %v2109, 96
        %v2196 = vpop.permute.xlu0 %2195
        %v2198 = vsel %vm1492, %v2193, 0
        %v2201 = vsel %vm1492, %v2196, 0
        %2203 = vmatpush.bf16.xpose.msra.mxu0 0
        %2204 = vmatpush.bf16.xpose.msra.mxu0 0
        %2205 = vmatpush.bf16.xpose.msra.mxu0 0
        %2206 = vmatpush.bf16.xpose.msra.mxu0 0
        %2207 = vmatpush.bf16.xpose.msra.mxu0 0
        %2208 = vmatpush.bf16.xpose.msra.mxu0 0
        %2209 = vmatpush.bf16.xpose.msra.mxu0 0
        %2210 = vmatpush.bf16.xpose.msra.mxu0 %v2201
        %2211 = vmatmul.bf16.gmra.mxu0 %v2198
        %v2212 = vpop.f32.mrf.mxu0
        %v2213 = vadd.f32 0.0, %v2212
        %v2214 = vpop.f32.mrf.mxu0
        %2215 = vdwg.mxu0
        %v2216 = vsel %vm1513, %v2213, -inf
        %2217 = vmax.xlane.f32.xlu0 %v2216
        %v2218 = vpop.xlane.xlu0 %2217
        %v2219 = vsub.f32 %v2213, %v2218
        %v2220 = vmul.f32 %v2219, 1.442695
        %v2221 = vpow.pop %v2220
        %v2222 = vsel %vm1513, %v2221, 0.0
        %2223 = vadd.xlane.f32.xlu0 %v2222
        %v2224 = vpop.xlane.xlu0 %2223
        %v2225 = vrcp.pop %v2224
        %v2226 = vmul.f32 %v2221, %v2225
        %v2227 = vpack.c.bf16 %v2226, %v2226
        %2229 = vrot.lane.b32.xlu0 %v2110, 96
        %v2230 = vpop.permute.xlu0 %2229
        %v2232 = vsel %vm1513, %v2227, 0
        %v2235 = vsel %vm1529, %v2230, 0
        %2237 = vmatpush.bf16.msra.mxu0 0
        %2238 = vmatpush.bf16.msra.mxu0 0
        %2239 = vmatpush.bf16.msra.mxu0 0
        %2240 = vmatpush.bf16.msra.mxu0 0
        %2241 = vmatpush.bf16.msra.mxu0 0
        %2242 = vmatpush.bf16.msra.mxu0 0
        %2243 = vmatpush.bf16.msra.mxu0 0
        %2244 = vmatpush.bf16.msra.mxu0 %v2235
        %2245 = vmatmul.bf16.gmra.mxu0 %v2232
        %v2246 = vpop.f32.mrf.mxu0
        %v2247 = vadd.f32 0.0, %v2246
        %v2248 = vpop.f32.mrf.mxu0
        %2249 = vdwg.mxu0
        %v2250 = vpack.c.bf16 %v2247, %v2247
        %v2255 = vunpack.c.l.b16 %v1913
        %v2256 = vunpack.c.l.b16 %v1914
        %v2257 = vunpack.c.l.b16 %v1915
        %v2258 = vunpack.c.l.b16 %v1916
        %v2259 = vpack.c.b16 %v2256, %v2255
        %v2260 = vpack.c.b16 %v2258, %v2257
        %v2264 = vsel %vm1492, %v2250, 0
        %2266 = vmatpush.bf16.msra.mxu0 0
        %2267 = vmatpush.bf16.msra.mxu0 0
        %2268 = vmatpush.bf16.msra.mxu0 0
        %2269 = vmatpush.bf16.msra.mxu0 0
        %2270 = vmatpush.bf16.msra.mxu0 0
        %2271 = vmatpush.bf16.msra.mxu0 0
        %2272 = vmatpush.bf16.msra.mxu0 %v2260
        %2273 = vmatpush.bf16.msra.mxu0 %v2259
        %2274 = vmatmul.bf16.gmra.mxu0 %v2264
        %v2275 = vpop.f32.mrf.mxu0
        %v2276 = vadd.f32 0.0, %v2275
        %v2277 = vpop.f32.mrf.mxu0
        %2278 = vdwg.mxu0
        %v2279 = vadd.f32 %v2190, %v2276
        %2280 = vrot.lane.b32.xlu0 %v2108, 64
        %v2281 = vpop.permute.xlu0 %2280
        %2282 = vrot.lane.b32.xlu0 %v2109, 64
        %v2283 = vpop.permute.xlu0 %2282
        %v2285 = vsel %vm1492, %v2281, 0
        %v2288 = vsel %vm1492, %v2283, 0
        %2290 = vmatpush.bf16.xpose.msra.mxu0 0
        %2291 = vmatpush.bf16.xpose.msra.mxu0 0
        %2292 = vmatpush.bf16.xpose.msra.mxu0 0
        %2293 = vmatpush.bf16.xpose.msra.mxu0 0
        %2294 = vmatpush.bf16.xpose.msra.mxu0 0
        %2295 = vmatpush.bf16.xpose.msra.mxu0 0
        %2296 = vmatpush.bf16.xpose.msra.mxu0 0
        %2297 = vmatpush.bf16.xpose.msra.mxu0 %v2288
        %2298 = vmatmul.bf16.gmra.mxu0 %v2285
        %v2299 = vpop.f32.mrf.mxu0
        %v2300 = vadd.f32 0.0, %v2299
        %v2301 = vpop.f32.mrf.mxu0
        %2302 = vdwg.mxu0
        %v2303 = vsel %vm1513, %v2300, -inf
        %2304 = vmax.xlane.f32.xlu0 %v2303
        %v2305 = vpop.xlane.xlu0 %2304
        %v2306 = vsub.f32 %v2300, %v2305
        %v2307 = vmul.f32 %v2306, 1.442695
        %v2308 = vpow.pop %v2307
        %v2309 = vsel %vm1513, %v2308, 0.0
        %2310 = vadd.xlane.f32.xlu0 %v2309
        %v2311 = vpop.xlane.xlu0 %2310
        %v2312 = vrcp.pop %v2311
        %v2313 = vmul.f32 %v2308, %v2312
        %v2314 = vpack.c.bf16 %v2313, %v2313
        %2315 = vrot.lane.b32.xlu0 %v2110, 64
        %v2316 = vpop.permute.xlu0 %2315
        %v2318 = vsel %vm1513, %v2314, 0
        %v2321 = vsel %vm1529, %v2316, 0
        %2323 = vmatpush.bf16.msra.mxu0 0
        %2324 = vmatpush.bf16.msra.mxu0 0
        %2325 = vmatpush.bf16.msra.mxu0 0
        %2326 = vmatpush.bf16.msra.mxu0 0
        %2327 = vmatpush.bf16.msra.mxu0 0
        %2328 = vmatpush.bf16.msra.mxu0 0
        %2329 = vmatpush.bf16.msra.mxu0 0
        %2330 = vmatpush.bf16.msra.mxu0 %v2321
        %2331 = vmatmul.bf16.gmra.mxu0 %v2318
        %v2332 = vpop.f32.mrf.mxu0
        %v2333 = vadd.f32 0.0, %v2332
        %v2334 = vpop.f32.mrf.mxu0
        %2335 = vdwg.mxu0
        %v2336 = vpack.c.bf16 %v2333, %v2333
        %v2341 = vunpack.c.l.b16 %v1917
        %v2342 = vunpack.c.l.b16 %v1918
        %v2343 = vunpack.c.l.b16 %v1919
        %v2344 = vunpack.c.l.b16 %v1920
        %v2345 = vpack.c.b16 %v2342, %v2341
        %v2346 = vpack.c.b16 %v2344, %v2343
        %v2350 = vsel %vm1492, %v2336, 0
        %2352 = vmatpush.bf16.msra.mxu0 0
        %2353 = vmatpush.bf16.msra.mxu0 0
        %2354 = vmatpush.bf16.msra.mxu0 0
        %2355 = vmatpush.bf16.msra.mxu0 0
        %2356 = vmatpush.bf16.msra.mxu0 0
        %2357 = vmatpush.bf16.msra.mxu0 0
        %2358 = vmatpush.bf16.msra.mxu0 %v2346
        %2359 = vmatpush.bf16.msra.mxu0 %v2345
        %2360 = vmatmul.bf16.gmra.mxu0 %v2350
        %v2361 = vpop.f32.mrf.mxu0
        %v2362 = vadd.f32 0.0, %v2361
        %v2363 = vpop.f32.mrf.mxu0
        %2364 = vdwg.mxu0
        %v2365 = vadd.f32 %v2279, %v2362
        %2366 = vrot.lane.b32.xlu0 %v2108, 32
        %v2367 = vpop.permute.xlu0 %2366
        %2368 = vrot.lane.b32.xlu0 %v2109, 32
        %v2369 = vpop.permute.xlu0 %2368
        %v2371 = vsel %vm1492, %v2367, 0
        %v2374 = vsel %vm1492, %v2369, 0
        %2376 = vmatpush.bf16.xpose.msra.mxu0 0
        %2377 = vmatpush.bf16.xpose.msra.mxu0 0
        %2378 = vmatpush.bf16.xpose.msra.mxu0 0
        %2379 = vmatpush.bf16.xpose.msra.mxu0 0
        %2380 = vmatpush.bf16.xpose.msra.mxu0 0
        %2381 = vmatpush.bf16.xpose.msra.mxu0 0
        %2382 = vmatpush.bf16.xpose.msra.mxu0 0
        %2383 = vmatpush.bf16.xpose.msra.mxu0 %v2374
        %2384 = vmatmul.bf16.gmra.mxu0 %v2371
        %v2385 = vpop.f32.mrf.mxu0
        %v2386 = vadd.f32 0.0, %v2385
        %v2387 = vpop.f32.mrf.mxu0
        %2388 = vdwg.mxu0
        %v2389 = vsel %vm1513, %v2386, -inf
        %2390 = vmax.xlane.f32.xlu0 %v2389
        %v2391 = vpop.xlane.xlu0 %2390
        %v2392 = vsub.f32 %v2386, %v2391
        %v2393 = vmul.f32 %v2392, 1.442695
        %v2394 = vpow.pop %v2393
        %v2395 = vsel %vm1513, %v2394, 0.0
        %2396 = vadd.xlane.f32.xlu0 %v2395
        %v2397 = vpop.xlane.xlu0 %2396
        %v2398 = vrcp.pop %v2397
        %v2399 = vmul.f32 %v2394, %v2398
        %v2400 = vpack.c.bf16 %v2399, %v2399
        %2401 = vrot.lane.b32.xlu0 %v2110, 32
        %v2402 = vpop.permute.xlu0 %2401
        %v2404 = vsel %vm1513, %v2400, 0
        %v2407 = vsel %vm1529, %v2402, 0
        %2409 = vmatpush.bf16.msra.mxu0 0
        %2410 = vmatpush.bf16.msra.mxu0 0
        %2411 = vmatpush.bf16.msra.mxu0 0
        %2412 = vmatpush.bf16.msra.mxu0 0
        %2413 = vmatpush.bf16.msra.mxu0 0
        %2414 = vmatpush.bf16.msra.mxu0 0
        %2415 = vmatpush.bf16.msra.mxu0 0
        %2416 = vmatpush.bf16.msra.mxu0 %v2407
        %2417 = vmatmul.bf16.gmra.mxu0 %v2404
        %v2418 = vpop.f32.mrf.mxu0
        %v2419 = vadd.f32 0.0, %v2418
        %v2420 = vpop.f32.mrf.mxu0
        %2421 = vdwg.mxu0
        %v2422 = vpack.c.bf16 %v2419, %v2419
        %v2427 = vunpack.c.l.b16 %v1921
        %v2428 = vunpack.c.l.b16 %v1922
        %v2429 = vunpack.c.l.b16 %v1923
        %v2430 = vunpack.c.l.b16 %v1924
        %v2431 = vpack.c.b16 %v2428, %v2427
        %v2432 = vpack.c.b16 %v2430, %v2429
        %v2436 = vsel %vm1492, %v2422, 0
        %2438 = vmatpush.bf16.msra.mxu0 0
        %2439 = vmatpush.bf16.msra.mxu0 0
        %2440 = vmatpush.bf16.msra.mxu0 0
        %2441 = vmatpush.bf16.msra.mxu0 0
        %2442 = vmatpush.bf16.msra.mxu0 0
        %2443 = vmatpush.bf16.msra.mxu0 0
        %2444 = vmatpush.bf16.msra.mxu0 %v2432
        %2445 = vmatpush.bf16.msra.mxu0 %v2431
        %2446 = vmatmul.bf16.gmra.mxu0 %v2436
        %v2447 = vpop.f32.mrf.mxu0
        %v2448 = vadd.f32 0.0, %v2447
        %v2449 = vpop.f32.mrf.mxu0
        %2450 = vdwg.mxu0
        %v2451 = vadd.f32 %v2365, %v2448
        %2452 = vadd.xlane.f32.xlu0 %v2451
        %v2453 = vpop.xlane.xlu0 %2452
        %v2454 = vmul.f32 %v2453, %v1848
        %v2455 = vsub.f32 %v2451, %v2454
        %v2456 = vmul.f32 %v2455, %v2455
        %2457 = vadd.xlane.f32.xlu0 %v2456
        %v2458 = vpop.xlane.xlu0 %2457
        %v2459 = vmul.f32 %v2458, %v1848
        %v2460 = vadd.f32 %v2459, 1e-05
        %v2461 = vrsqrt.pop %v2460
        %v2462 = vmul.f32 %v2461, %v2460
        %v2463 = vmul.f32 %v2462, %v2461
        %v2464 = vmul.f32 0.5, %v2463
        %v2465 = vsub.f32 1.5, %v2464
        %v2466 = vmul.f32 %v2461, %v2465
        %vm2467 = vweird.f32 %v2460
        %vm2468 = vweird.f32 %v2461
        %vm2469 = vmor %vm2467, %vm2468
        %v2470 = vsel %vm2469, %v2461, %v2466
        %v2471 = vmul.f32 %v2455, %v2470
        %v2473 = vperm.slane %v1926, 0
        %v2475 = vmul.f32 %v2471, %v2473
        %v2477 = vperm.slane %v1927, 0
        %v2479 = vadd.f32 %v2475, %v2477
        %v2480 = vld [vmem:[%s1005] sm:$0xff]
        %v2481 = vld [vmem:[%s1005 + $0x8] sm:$0xff]
        %v2482 = vld [vmem:[%s1005 + $0x10] sm:$0xff]
        %v2483 = vld [vmem:[%s1005 + $0x18] sm:$0xff]
        %v2484 = vld [vmem:[%s1005 + $0x20] sm:$0xff]
        %v2485 = vld [vmem:[%s1005 + $0x28] sm:$0xff]
        %v2486 = vld [vmem:[%s1005 + $0x30] sm:$0xff]
        %v2487 = vld [vmem:[%s1005 + $0x38] sm:$0xff]
        %v2488 = vld [vmem:[%s1005 + $0x40] sm:$0xff]
        %v2489 = vld [vmem:[%s1005 + $0x48] sm:$0xff]
        %v2490 = vld [vmem:[%s1005 + $0x50] sm:$0xff]
        %v2491 = vld [vmem:[%s1005 + $0x58] sm:$0xff]
        %v2492 = vld [vmem:[%s1005 + $0x60] sm:$0xff]
        %v2493 = vld [vmem:[%s1005 + $0x68] sm:$0xff]
        %v2494 = vld [vmem:[%s1005 + $0x70] sm:$0xff]
        %v2495 = vld [vmem:[%s1005 + $0x78] sm:$0xff]
        %v2496 = vld [vmem:[%s1005 + $0x80] sm:$0xff]
        %v2497 = vld [vmem:[%s1005 + $0x88] sm:$0xff]
        %v2498 = vld [vmem:[%s1005 + $0x90] sm:$0xff]
        %v2499 = vld [vmem:[%s1005 + $0x98] sm:$0xff]
        %v2500 = vld [vmem:[%s1005 + $0xa0] sm:$0xff]
        %v2501 = vld [vmem:[%s1005 + $0xa8] sm:$0xff]
        %v2502 = vld [vmem:[%s1005 + $0xb0] sm:$0xff]
        %v2503 = vld [vmem:[%s1005 + $0xb8] sm:$0xff]
        %v2504 = vld [vmem:[%s1005 + $0xc0] sm:$0xff]
        %v2505 = vld [vmem:[%s1005 + $0xc8] sm:$0xff]
        %v2506 = vld [vmem:[%s1005 + $0xd0] sm:$0xff]
        %v2507 = vld [vmem:[%s1005 + $0xd8] sm:$0xff]
        %v2508 = vld [vmem:[%s1005 + $0xe0] sm:$0xff]
        %v2509 = vld [vmem:[%s1005 + $0xe8] sm:$0xff]
        %v2510 = vld [vmem:[%s1005 + $0xf0] sm:$0xff]
        %v2511 = vld [vmem:[%s1005 + $0xf8] sm:$0xff]
        %v2512 = vld [vmem:[%s1205] sm:$0xf]
        %v2513 = vld [vmem:[%s1015] sm:$0xf]
        %v2514 = vld [vmem:[%s1015 + $0x4] sm:$0xf]
        %v2515 = vld [vmem:[%s1015 + $0x8] sm:$0xf]
        %v2516 = vld [vmem:[%s1015 + $0xc] sm:$0xf]
        %v2517 = vld [vmem:[%s1015 + $0x10] sm:$0xf]
        %v2518 = vld [vmem:[%s1015 + $0x14] sm:$0xf]
        %v2519 = vld [vmem:[%s1015 + $0x18] sm:$0xf]
        %v2520 = vld [vmem:[%s1015 + $0x1c] sm:$0xf]
        %v2521 = vld [vmem:[%s1015 + $0x20] sm:$0xf]
        %v2522 = vld [vmem:[%s1015 + $0x24] sm:$0xf]
        %v2523 = vld [vmem:[%s1015 + $0x28] sm:$0xf]
        %v2524 = vld [vmem:[%s1015 + $0x2c] sm:$0xf]
        %v2525 = vld [vmem:[%s1015 + $0x30] sm:$0xf]
        %v2526 = vld [vmem:[%s1015 + $0x34] sm:$0xf]
        %v2527 = vld [vmem:[%s1015 + $0x38] sm:$0xf]
        %v2528 = vld [vmem:[%s1015 + $0x3c] sm:$0xf]
        %v2529 = vld [vmem:[%s1015 + $0x40] sm:$0xf]
        %v2530 = vld [vmem:[%s1015 + $0x44] sm:$0xf]
        %v2531 = vld [vmem:[%s1015 + $0x48] sm:$0xf]
        %v2532 = vld [vmem:[%s1015 + $0x4c] sm:$0xf]
        %v2533 = vld [vmem:[%s1015 + $0x50] sm:$0xf]
        %v2534 = vld [vmem:[%s1015 + $0x54] sm:$0xf]
        %v2535 = vld [vmem:[%s1015 + $0x58] sm:$0xf]
        %v2536 = vld [vmem:[%s1015 + $0x5c] sm:$0xf]
        %v2537 = vld [vmem:[%s1015 + $0x60] sm:$0xf]
        %v2538 = vld [vmem:[%s1015 + $0x64] sm:$0xf]
        %v2539 = vld [vmem:[%s1015 + $0x68] sm:$0xf]
        %v2540 = vld [vmem:[%s1015 + $0x6c] sm:$0xf]
        %v2541 = vld [vmem:[%s1015 + $0x70] sm:$0xf]
        %v2542 = vld [vmem:[%s1015 + $0x74] sm:$0xf]
        %v2543 = vld [vmem:[%s1015 + $0x78] sm:$0xf]
        %v2544 = vld [vmem:[%s1015 + $0x7c] sm:$0xf]
        %v2545 = vld [vmem:[%s1015 + $0x80] sm:$0xf]
        %v2546 = vld [vmem:[%s1015 + $0x84] sm:$0xf]
        %v2547 = vld [vmem:[%s1015 + $0x88] sm:$0xf]
        %v2548 = vld [vmem:[%s1015 + $0x8c] sm:$0xf]
        %v2549 = vld [vmem:[%s1015 + $0x90] sm:$0xf]
        %v2550 = vld [vmem:[%s1015 + $0x94] sm:$0xf]
        %v2551 = vld [vmem:[%s1015 + $0x98] sm:$0xf]
        %v2552 = vld [vmem:[%s1015 + $0x9c] sm:$0xf]
        %v2553 = vld [vmem:[%s1015 + $0xa0] sm:$0xf]
        %v2554 = vld [vmem:[%s1015 + $0xa4] sm:$0xf]
        %v2555 = vld [vmem:[%s1015 + $0xa8] sm:$0xf]
        %v2556 = vld [vmem:[%s1015 + $0xac] sm:$0xf]
        %v2557 = vld [vmem:[%s1015 + $0xb0] sm:$0xf]
        %v2558 = vld [vmem:[%s1015 + $0xb4] sm:$0xf]
        %v2559 = vld [vmem:[%s1015 + $0xb8] sm:$0xf]
        %v2560 = vld [vmem:[%s1015 + $0xbc] sm:$0xf]
        %v2561 = vld [vmem:[%s1015 + $0xc0] sm:$0xf]
        %v2562 = vld [vmem:[%s1015 + $0xc4] sm:$0xf]
        %v2563 = vld [vmem:[%s1015 + $0xc8] sm:$0xf]
        %v2564 = vld [vmem:[%s1015 + $0xcc] sm:$0xf]
        %v2565 = vld [vmem:[%s1015 + $0xd0] sm:$0xf]
        %v2566 = vld [vmem:[%s1015 + $0xd4] sm:$0xf]
        %v2567 = vld [vmem:[%s1015 + $0xd8] sm:$0xf]
        %v2568 = vld [vmem:[%s1015 + $0xdc] sm:$0xf]
        %v2569 = vld [vmem:[%s1015 + $0xe0] sm:$0xf]
        %v2570 = vld [vmem:[%s1015 + $0xe4] sm:$0xf]
        %v2571 = vld [vmem:[%s1015 + $0xe8] sm:$0xf]
        %v2572 = vld [vmem:[%s1015 + $0xec] sm:$0xf]
        %v2573 = vld [vmem:[%s1015 + $0xf0] sm:$0xf]
        %v2574 = vld [vmem:[%s1015 + $0xf4] sm:$0xf]
        %v2575 = vld [vmem:[%s1015 + $0xf8] sm:$0xf]
        %v2576 = vld [vmem:[%s1015 + $0xfc] sm:$0xf]
        %v2577 = vld [vmem:[%s1208] sm:$0x1]
        %v2578 = vld [vmem:[%s1211] sm:$0x1]
        %v2579 = vld [vmem:[%s1214] sm:$0x1]
        %v2580 = vpack.c.bf16 %v2479, %v2479
        %v2582 = vperm.slane %v2512, 0
        %v2583 = vperm.slane %v2512, 1
        %v2584 = vperm.slane %v2512, 2
        %v2585 = vperm.slane %v2512, 3
        %v2622 = vunpack.c.l.b16 %v2480
        %v2623 = vunpack.c.h.b16 %v2480
        %v2624 = vunpack.c.l.b16 %v2481
        %v2625 = vunpack.c.h.b16 %v2481
        %v2626 = vunpack.c.l.b16 %v2482
        %v2627 = vunpack.c.h.b16 %v2482
        %v2628 = vunpack.c.l.b16 %v2483
        %v2629 = vunpack.c.h.b16 %v2483
        %v2630 = vunpack.c.l.b16 %v2484
        %v2631 = vunpack.c.h.b16 %v2484
        %v2632 = vunpack.c.l.b16 %v2485
        %v2633 = vunpack.c.h.b16 %v2485
        %v2634 = vunpack.c.l.b16 %v2486
        %v2635 = vunpack.c.h.b16 %v2486
        %v2636 = vunpack.c.l.b16 %v2487
        %v2637 = vunpack.c.h.b16 %v2487
        %v2638 = vunpack.c.l.b16 %v2488
        %v2639 = vunpack.c.h.b16 %v2488
        %v2640 = vunpack.c.l.b16 %v2489
        %v2641 = vunpack.c.h.b16 %v2489
        %v2642 = vunpack.c.l.b16 %v2490
        %v2643 = vunpack.c.h.b16 %v2490
        %v2644 = vunpack.c.l.b16 %v2491
        %v2645 = vunpack.c.h.b16 %v2491
        %v2646 = vunpack.c.l.b16 %v2492
        %v2647 = vunpack.c.h.b16 %v2492
        %v2648 = vunpack.c.l.b16 %v2493
        %v2649 = vunpack.c.h.b16 %v2493
        %v2650 = vunpack.c.l.b16 %v2494
        %v2651 = vunpack.c.h.b16 %v2494
        %v2652 = vunpack.c.l.b16 %v2495
        %v2653 = vunpack.c.h.b16 %v2495
        %v2654 = vunpack.c.l.b16 %v2496
        %v2655 = vunpack.c.h.b16 %v2496
        %v2656 = vunpack.c.l.b16 %v2497
        %v2657 = vunpack.c.h.b16 %v2497
        %v2658 = vunpack.c.l.b16 %v2498
        %v2659 = vunpack.c.h.b16 %v2498
        %v2660 = vunpack.c.l.b16 %v2499
        %v2661 = vunpack.c.h.b16 %v2499
        %v2662 = vunpack.c.l.b16 %v2500
        %v2663 = vunpack.c.h.b16 %v2500
        %v2664 = vunpack.c.l.b16 %v2501
        %v2665 = vunpack.c.h.b16 %v2501
        %v2666 = vunpack.c.l.b16 %v2502
        %v2667 = vunpack.c.h.b16 %v2502
        %v2668 = vunpack.c.l.b16 %v2503
        %v2669 = vunpack.c.h.b16 %v2503
        %v2670 = vunpack.c.l.b16 %v2504
        %v2671 = vunpack.c.h.b16 %v2504
        %v2672 = vunpack.c.l.b16 %v2505
        %v2673 = vunpack.c.h.b16 %v2505
        %v2674 = vunpack.c.l.b16 %v2506
        %v2675 = vunpack.c.h.b16 %v2506
        %v2676 = vunpack.c.l.b16 %v2507
        %v2677 = vunpack.c.h.b16 %v2507
        %v2678 = vunpack.c.l.b16 %v2508
        %v2679 = vunpack.c.h.b16 %v2508
        %v2680 = vunpack.c.l.b16 %v2509
        %v2681 = vunpack.c.h.b16 %v2509
        %v2682 = vunpack.c.l.b16 %v2510
        %v2683 = vunpack.c.h.b16 %v2510
        %v2684 = vunpack.c.l.b16 %v2511
        %v2685 = vunpack.c.h.b16 %v2511
        %v2686 = vpack.c.b16 %v2626, %v2622
        %v2687 = vpack.c.b16 %v2627, %v2623
        %v2688 = vpack.c.b16 %v2628, %v2624
        %v2689 = vpack.c.b16 %v2629, %v2625
        %v2690 = vpack.c.b16 %v2634, %v2630
        %v2691 = vpack.c.b16 %v2635, %v2631
        %v2692 = vpack.c.b16 %v2636, %v2632
        %v2693 = vpack.c.b16 %v2637, %v2633
        %v2694 = vpack.c.b16 %v2642, %v2638
        %v2695 = vpack.c.b16 %v2643, %v2639
        %v2696 = vpack.c.b16 %v2644, %v2640
        %v2697 = vpack.c.b16 %v2645, %v2641
        %v2698 = vpack.c.b16 %v2650, %v2646
        %v2699 = vpack.c.b16 %v2651, %v2647
        %v2700 = vpack.c.b16 %v2652, %v2648
        %v2701 = vpack.c.b16 %v2653, %v2649
        %v2702 = vpack.c.b16 %v2658, %v2654
        %v2703 = vpack.c.b16 %v2659, %v2655
        %v2704 = vpack.c.b16 %v2660, %v2656
        %v2705 = vpack.c.b16 %v2661, %v2657
        %v2706 = vpack.c.b16 %v2666, %v2662
        %v2707 = vpack.c.b16 %v2667, %v2663
        %v2708 = vpack.c.b16 %v2668, %v2664
        %v2709 = vpack.c.b16 %v2669, %v2665
        %v2710 = vpack.c.b16 %v2674, %v2670
        %v2711 = vpack.c.b16 %v2675, %v2671
        %v2712 = vpack.c.b16 %v2676, %v2672
        %v2713 = vpack.c.b16 %v2677, %v2673
        %v2714 = vpack.c.b16 %v2682, %v2678
        %v2715 = vpack.c.b16 %v2683, %v2679
        %v2716 = vpack.c.b16 %v2684, %v2680
        %v2717 = vpack.c.b16 %v2685, %v2681
        %2750 = vmatpush.bf16.msra.mxu0 %v2714
        %2751 = vmatpush.bf16.msra.mxu0 %v2710
        %2752 = vmatpush.bf16.msra.mxu0 %v2706
        %2753 = vmatpush.bf16.msra.mxu0 %v2702
        %2754 = vmatpush.bf16.msra.mxu0 %v2698
        %2755 = vmatpush.bf16.msra.mxu0 %v2694
        %2756 = vmatpush.bf16.msra.mxu0 %v2690
        %2757 = vmatpush.bf16.msra.mxu0 %v2686
        %2758 = vmatmul.bf16.gmra.mxu0 %v2580
        %v2759 = vpop.f32.mrf.mxu0
        %v2760 = vadd.f32 %v2582, %v2759
        %v2761 = vpop.f32.mrf.mxu0
        %2762 = vdwg.mxu0
        %2763 = vmatpush.bf16.msra.mxu0 %v2715
        %2764 = vmatpush.bf16.msra.mxu0 %v2711
        %2765 = vmatpush.bf16.msra.mxu0 %v2707
        %2766 = vmatpush.bf16.msra.mxu0 %v2703
        %2767 = vmatpush.bf16.msra.mxu0 %v2699
        %2768 = vmatpush.bf16.msra.mxu0 %v2695
        %2769 = vmatpush.bf16.msra.mxu0 %v2691
        %2770 = vmatpush.bf16.msra.mxu0 %v2687
        %2771 = vmatmul.bf16.gmra.mxu0 %v2580
        %v2772 = vpop.f32.mrf.mxu0
        %v2773 = vadd.f32 %v2583, %v2772
        %v2774 = vpop.f32.mrf.mxu0
        %2775 = vdwg.mxu0
        %2776 = vmatpush.bf16.msra.mxu0 %v2716
        %2777 = vmatpush.bf16.msra.mxu0 %v2712
        %2778 = vmatpush.bf16.msra.mxu0 %v2708
        %2779 = vmatpush.bf16.msra.mxu0 %v2704
        %2780 = vmatpush.bf16.msra.mxu0 %v2700
        %2781 = vmatpush.bf16.msra.mxu0 %v2696
        %2782 = vmatpush.bf16.msra.mxu0 %v2692
        %2783 = vmatpush.bf16.msra.mxu0 %v2688
        %2784 = vmatmul.bf16.gmra.mxu0 %v2580
        %v2785 = vpop.f32.mrf.mxu0
        %v2786 = vadd.f32 %v2584, %v2785
        %v2787 = vpop.f32.mrf.mxu0
        %2788 = vdwg.mxu0
        %2789 = vmatpush.bf16.msra.mxu0 %v2717
        %2790 = vmatpush.bf16.msra.mxu0 %v2713
        %2791 = vmatpush.bf16.msra.mxu0 %v2709
        %2792 = vmatpush.bf16.msra.mxu0 %v2705
        %2793 = vmatpush.bf16.msra.mxu0 %v2701
        %2794 = vmatpush.bf16.msra.mxu0 %v2697
        %2795 = vmatpush.bf16.msra.mxu0 %v2693
        %2796 = vmatpush.bf16.msra.mxu0 %v2689
        %2797 = vmatmul.bf16.gmra.mxu0 %v2580
        %v2798 = vpop.f32.mrf.mxu0
        %v2799 = vadd.f32 %v2585, %v2798
        %v2800 = vpop.f32.mrf.mxu0
        %2801 = vdwg.mxu0
        %v2802 = vmax.f32 %v2760, 0.0
        %v2803 = vmax.f32 %v2773, 0.0
        %v2804 = vmax.f32 %v2786, 0.0
        %v2805 = vmax.f32 %v2799, 0.0
        %v2806 = vpack.c.bf16 %v2802, %v2802
        %v2807 = vpack.c.bf16 %v2803, %v2803
        %v2808 = vpack.c.bf16 %v2804, %v2804
        %v2809 = vpack.c.bf16 %v2805, %v2805
        %v2811 = vperm.slane %v2577, 0
        %v2877 = vunpack.c.l.b16 %v2513
        %v2878 = vunpack.c.l.b16 %v2514
        %v2879 = vunpack.c.l.b16 %v2515
        %v2880 = vunpack.c.l.b16 %v2516
        %v2881 = vunpack.c.l.b16 %v2517
        %v2882 = vunpack.c.l.b16 %v2518
        %v2883 = vunpack.c.l.b16 %v2519
        %v2884 = vunpack.c.l.b16 %v2520
        %v2885 = vunpack.c.l.b16 %v2521
        %v2886 = vunpack.c.l.b16 %v2522
        %v2887 = vunpack.c.l.b16 %v2523
        %v2888 = vunpack.c.l.b16 %v2524
        %v2889 = vunpack.c.l.b16 %v2525
        %v2890 = vunpack.c.l.b16 %v2526
        %v2891 = vunpack.c.l.b16 %v2527
        %v2892 = vunpack.c.l.b16 %v2528
        %v2893 = vunpack.c.l.b16 %v2529
        %v2894 = vunpack.c.l.b16 %v2530
        %v2895 = vunpack.c.l.b16 %v2531
        %v2896 = vunpack.c.l.b16 %v2532
        %v2897 = vunpack.c.l.b16 %v2533
        %v2898 = vunpack.c.l.b16 %v2534
        %v2899 = vunpack.c.l.b16 %v2535
        %v2900 = vunpack.c.l.b16 %v2536
        %v2901 = vunpack.c.l.b16 %v2537
        %v2902 = vunpack.c.l.b16 %v2538
        %v2903 = vunpack.c.l.b16 %v2539
        %v2904 = vunpack.c.l.b16 %v2540
        %v2905 = vunpack.c.l.b16 %v2541
        %v2906 = vunpack.c.l.b16 %v2542
        %v2907 = vunpack.c.l.b16 %v2543
        %v2908 = vunpack.c.l.b16 %v2544
        %v2909 = vunpack.c.l.b16 %v2545
        %v2910 = vunpack.c.l.b16 %v2546
        %v2911 = vunpack.c.l.b16 %v2547
        %v2912 = vunpack.c.l.b16 %v2548
        %v2913 = vunpack.c.l.b16 %v2549
        %v2914 = vunpack.c.l.b16 %v2550
        %v2915 = vunpack.c.l.b16 %v2551
        %v2916 = vunpack.c.l.b16 %v2552
        %v2917 = vunpack.c.l.b16 %v2553
        %v2918 = vunpack.c.l.b16 %v2554
        %v2919 = vunpack.c.l.b16 %v2555
        %v2920 = vunpack.c.l.b16 %v2556
        %v2921 = vunpack.c.l.b16 %v2557
        %v2922 = vunpack.c.l.b16 %v2558
        %v2923 = vunpack.c.l.b16 %v2559
        %v2924 = vunpack.c.l.b16 %v2560
        %v2925 = vunpack.c.l.b16 %v2561
        %v2926 = vunpack.c.l.b16 %v2562
        %v2927 = vunpack.c.l.b16 %v2563
        %v2928 = vunpack.c.l.b16 %v2564
        %v2929 = vunpack.c.l.b16 %v2565
        %v2930 = vunpack.c.l.b16 %v2566
        %v2931 = vunpack.c.l.b16 %v2567
        %v2932 = vunpack.c.l.b16 %v2568
        %v2933 = vunpack.c.l.b16 %v2569
        %v2934 = vunpack.c.l.b16 %v2570
        %v2935 = vunpack.c.l.b16 %v2571
        %v2936 = vunpack.c.l.b16 %v2572
        %v2937 = vunpack.c.l.b16 %v2573
        %v2938 = vunpack.c.l.b16 %v2574
        %v2939 = vunpack.c.l.b16 %v2575
        %v2940 = vunpack.c.l.b16 %v2576
        %v2941 = vpack.c.b16 %v2878, %v2877
        %v2942 = vpack.c.b16 %v2880, %v2879
        %v2943 = vpack.c.b16 %v2882, %v2881
        %v2944 = vpack.c.b16 %v2884, %v2883
        %v2945 = vpack.c.b16 %v2886, %v2885
        %v2946 = vpack.c.b16 %v2888, %v2887
        %v2947 = vpack.c.b16 %v2890, %v2889
        %v2948 = vpack.c.b16 %v2892, %v2891
        %v2949 = vpack.c.b16 %v2894, %v2893
        %v2950 = vpack.c.b16 %v2896, %v2895
        %v2951 = vpack.c.b16 %v2898, %v2897
        %v2952 = vpack.c.b16 %v2900, %v2899
        %v2953 = vpack.c.b16 %v2902, %v2901
        %v2954 = vpack.c.b16 %v2904, %v2903
        %v2955 = vpack.c.b16 %v2906, %v2905
        %v2956 = vpack.c.b16 %v2908, %v2907
        %v2957 = vpack.c.b16 %v2910, %v2909
        %v2958 = vpack.c.b16 %v2912, %v2911
        %v2959 = vpack.c.b16 %v2914, %v2913
        %v2960 = vpack.c.b16 %v2916, %v2915
        %v2961 = vpack.c.b16 %v2918, %v2917
        %v2962 = vpack.c.b16 %v2920, %v2919
        %v2963 = vpack.c.b16 %v2922, %v2921
        %v2964 = vpack.c.b16 %v2924, %v2923
        %v2965 = vpack.c.b16 %v2926, %v2925
        %v2966 = vpack.c.b16 %v2928, %v2927
        %v2967 = vpack.c.b16 %v2930, %v2929
        %v2968 = vpack.c.b16 %v2932, %v2931
        %v2969 = vpack.c.b16 %v2934, %v2933
        %v2970 = vpack.c.b16 %v2936, %v2935
        %v2971 = vpack.c.b16 %v2938, %v2937
        %v2972 = vpack.c.b16 %v2940, %v2939
        %3005 = vmatpush.bf16.msra.mxu0 %v2948
        %3006 = vmatpush.bf16.msra.mxu0 %v2947
        %3007 = vmatpush.bf16.msra.mxu0 %v2946
        %3008 = vmatpush.bf16.msra.mxu0 %v2945
        %3009 = vmatpush.bf16.msra.mxu0 %v2944
        %3010 = vmatpush.bf16.msra.mxu0 %v2943
        %3011 = vmatpush.bf16.msra.mxu0 %v2942
        %3012 = vmatpush.bf16.msra.mxu0 %v2941
        %3013 = vmatmul.bf16.gmra.mxu0 %v2806
        %v3014 = vpop.f32.mrf.mxu0
        %v3015 = vadd.f32 %v2811, %v3014
        %v3016 = vpop.f32.mrf.mxu0
        %3017 = vdwg.mxu0
        %3018 = vmatpush.bf16.msra.mxu0 %v2956
        %3019 = vmatpush.bf16.msra.mxu0 %v2955
        %3020 = vmatpush.bf16.msra.mxu0 %v2954
        %3021 = vmatpush.bf16.msra.mxu0 %v2953
        %3022 = vmatpush.bf16.msra.mxu0 %v2952
        %3023 = vmatpush.bf16.msra.mxu0 %v2951
        %3024 = vmatpush.bf16.msra.mxu0 %v2950
        %3025 = vmatpush.bf16.msra.mxu0 %v2949
        %3026 = vmatmul.bf16.gmra.mxu0 %v2807
        %v3027 = vpop.f32.mrf.mxu0
        %v3028 = vadd.f32 %v3015, %v3027
        %v3029 = vpop.f32.mrf.mxu0
        %3030 = vdwg.mxu0
        %3031 = vmatpush.bf16.msra.mxu0 %v2964
        %3032 = vmatpush.bf16.msra.mxu0 %v2963
        %3033 = vmatpush.bf16.msra.mxu0 %v2962
        %3034 = vmatpush.bf16.msra.mxu0 %v2961
        %3035 = vmatpush.bf16.msra.mxu0 %v2960
        %3036 = vmatpush.bf16.msra.mxu0 %v2959
        %3037 = vmatpush.bf16.msra.mxu0 %v2958
        %3038 = vmatpush.bf16.msra.mxu0 %v2957
        %3039 = vmatmul.bf16.gmra.mxu0 %v2808
        %v3040 = vpop.f32.mrf.mxu0
        %v3041 = vadd.f32 %v3028, %v3040
        %v3042 = vpop.f32.mrf.mxu0
        %3043 = vdwg.mxu0
        %3044 = vmatpush.bf16.msra.mxu0 %v2972
        %3045 = vmatpush.bf16.msra.mxu0 %v2971
        %3046 = vmatpush.bf16.msra.mxu0 %v2970
        %3047 = vmatpush.bf16.msra.mxu0 %v2969
        %3048 = vmatpush.bf16.msra.mxu0 %v2968
        %3049 = vmatpush.bf16.msra.mxu0 %v2967
        %3050 = vmatpush.bf16.msra.mxu0 %v2966
        %3051 = vmatpush.bf16.msra.mxu0 %v2965
        %3052 = vmatmul.bf16.gmra.mxu0 %v2809
        %v3053 = vpop.f32.mrf.mxu0
        %v3054 = vadd.f32 %v3041, %v3053
        %v3055 = vpop.f32.mrf.mxu0
        %3056 = vdwg.mxu0
        %v3057 = vadd.f32 %v3054, %v2479
        %3058 = vadd.xlane.f32.xlu0 %v3057
        %v3059 = vpop.xlane.xlu0 %3058
        %v3060 = vmul.f32 %v3059, %v1848
        %v3061 = vsub.f32 %v3057, %v3060
        %v3062 = vmul.f32 %v3061, %v3061
        %3063 = vadd.xlane.f32.xlu0 %v3062
        %v3064 = vpop.xlane.xlu0 %3063
        %v3065 = vmul.f32 %v3064, %v1848
        %v3066 = vadd.f32 %v3065, 1e-05
        %v3067 = vrsqrt.pop %v3066
        %v3068 = vmul.f32 %v3067, %v3066
        %v3069 = vmul.f32 %v3068, %v3067
        %v3070 = vmul.f32 0.5, %v3069
        %v3071 = vsub.f32 1.5, %v3070
        %v3072 = vmul.f32 %v3067, %v3071
        %vm3073 = vweird.f32 %v3066
        %vm3074 = vweird.f32 %v3067
        %vm3075 = vmor %vm3073, %vm3074
        %v3076 = vsel %vm3075, %v3067, %v3072
        %v3077 = vmul.f32 %v3061, %v3076
        %v3079 = vperm.slane %v2578, 0
        %v3081 = vmul.f32 %v3077, %v3079
        %v3083 = vperm.slane %v2579, 0
        %v3085 = vadd.f32 %v3081, %v3083
        %3086 = vst [vmem:[#allocation2] sm:$0xff] %v3085
        %p3087 = scmp.eq.s32.totalorder %s52, 1
        // Predicated region
        $region145: #{seq2seq_forward.4} parent=115 // pred_check
          %p3088 = pneg %p3087
        $region146: #{seq2seq_forward.4} parent=115 // pred_check_branch
          %3090 = sbr.rel (%p3088) target = $region148
        $region147: #{seq2seq_forward.4} parent=115 // pred_region
          %v3091 = vld [vmem:[%s22] sm:$0x1]
          %v3092 = vld [vmem:[%s23] sm:$0x1]
          %3093 = vadd.xlane.f32.xlu0 %v3085
          %v3094 = vpop.xlane.xlu0 %3093
          %v3095 = vmul.f32 %v3094, %v1848
          %v3096 = vsub.f32 %v3085, %v3095
          %v3097 = vmul.f32 %v3096, %v3096
          %3098 = vadd.xlane.f32.xlu0 %v3097
          %v3099 = vpop.xlane.xlu0 %3098
          %v3100 = vmul.f32 %v3099, %v1848
          %v3101 = vadd.f32 %v3100, 1e-05
          %v3102 = vrsqrt.pop %v3101
          %v3103 = vmul.f32 %v3102, %v3101
          %v3104 = vmul.f32 %v3103, %v3102
          %v3105 = vmul.f32 0.5, %v3104
          %v3106 = vsub.f32 1.5, %v3105
          %v3107 = vmul.f32 %v3102, %v3106
          %vm3108 = vweird.f32 %v3101
          %vm3109 = vweird.f32 %v3102
          %vm3110 = vmor %vm3108, %vm3109
          %v3111 = vsel %vm3110, %v3102, %v3107
          %v3112 = vmul.f32 %v3096, %v3111
          %v3114 = vperm.slane %v3091, 0
          %v3116 = vmul.f32 %v3112, %v3114
          %v3118 = vperm.slane %v3092, 0
          %v3120 = vadd.f32 %v3116, %v3118
          %v3121 = vpack.c.bf16 %v3120, %v3120
          %3122 = vst [vmem:[%s1218] sm:$0xf] %v3121
        $region148: #{seq2seq_forward.4} parent=115 // pred_fallthru
          _
        %p3123 = scmp.lt.s32.totalorder %s51, 1
        %s3124 = scalar_select %p3123, %s51, 1
        %s3125 = smul.addr %s3124, 4
        %s3126 = scalar_lea.vmem %s24, %s3125
        // Predicated region
        $region149: #{seq2seq_forward.4} parent=115 // pred_check
          %p3127 = pneg %p691
        $region150: #{seq2seq_forward.4} parent=115 // pred_check_branch
          %3129 = sbr.rel (%p3127) target = $region152
        $region151: #{seq2seq_forward.4} parent=115 // pred_region
          _
        $region152: #{seq2seq_forward.4} parent=115 // pred_fallthru
          _
      $region116: #{seq2seq_forward.4} parent=5 // pred_fallthru
        _
      %p3130 = scmp.le.s32.totalorder 2, %s42
      // Predicated region
      $region153: #{seq2seq_forward.4} parent=5 // pred_check
        %p3131 = pneg %p3130
      $region154: #{seq2seq_forward.4} parent=5 // pred_check_branch
        %3133 = sbr.rel (%p3131) target = $region156
      $region155: #{seq2seq_forward.4} parent=5 // pred_region
        %s3134 = ssub.s32 %s42, 2
        // Predicated region
        $region157: #{seq2seq_forward.4} parent=155 // pred_check
          %p3135 = pneg %p697
        $region158: #{seq2seq_forward.4} parent=155 // pred_check_branch
          %3137 = sbr.rel (%p3135) target = $region160
        $region159: #{seq2seq_forward.4} parent=155 // pred_region
          %p3138 = scmp.lt.s32.totalorder %s53, 1
          %s3139 = scalar_select %p3138, %s53, 1
          %s3140 = smul.addr %s3139, 4
          %s3141 = scalar_lea.vmem %s24, %s3140
        $region160: #{seq2seq_forward.4} parent=155 // pred_fallthru
          _
      $region156: #{seq2seq_forward.4} parent=5 // pred_fallthru
        _
    $region6: #{seq2seq_forward.4} parent=1 // loop_footer
      %s46 = sadd.s32 1, %s42
    $region7: #{seq2seq_forward.4} parent=1 // loop_footer_branch
      %41 = sbr.rel target = $region3
    $region8: #{seq2seq_forward.4} parent=1 // loop_exit
      _
    %3142 = vsyncpa [#allocation4], 1
    %s3143 = scalar_lea.sflag [#allocation4], 1
    %3144 = vsyncpa %s3143, 1
    %3145 = vsyncpa [#allocation6], 1
    %s3146 = scalar_lea.sflag [#allocation6], 1
    %3147 = vsyncpa %s3146, 1
    %3148 = vsyncpa [#allocation9], 1
    %s3149 = scalar_lea.sflag [#allocation9], 1
    %3150 = vsyncpa %s3149, 1
    %3151 = vsyncpa [#allocation12], 1
    %s3152 = scalar_lea.sflag [#allocation12], 1
    %3153 = vsyncpa %s3152, 1

</llo_original>
